<compile_context>
chip_gen: v5e
topology: v5e:2x2
jax: 0.10.0
libtpu: 0.0.40
codegen_flags: <defaults>
</compile_context>

<pallas_src>
import functools

import jax
import jax.numpy as jnp
from jax import lax
from jax.experimental import pallas as pl
from jax.experimental.pallas import tpu as pltpu


def _round_up(x, m):
    return (x + m - 1) // m * m


_VMEM_SPEC = pl.BlockSpec(memory_space=pltpu.MemorySpace.VMEM)


# ----------------------------------------------------------------------------
# Kernel 1: fused S2VT LSTM stack (encode + decode), whole sequence in VMEM.
# ----------------------------------------------------------------------------
def s2vt_lstm_kernel(x_ref, words_ref, w1_ref, b1_ref, w2_ref, b2_ref, y2d_ref):
    """Fused encoder + decoder LSTM stack.

    x_ref:     (T,  Bp, Dvp)       bf16  video features (time-major, padded)
    words_ref: (T2, Bp, Wdp)       bf16  teacher-forcing word embeddings
    w1_ref:    (Hp + Dvp, 4*Hp)    bf16  rnn1 weights, K-stacked [hh ; ih]
    b1_ref:    (1, 4*Hp)           f32   rnn1 bias (b_ih + b_hh), per-gate padded
    w2_ref:    (2*Hp + Wdp, 4*Hp)  bf16  rnn2 weights, K-stacked [ih_h ; hh ; ih_word]
    b2_ref:    (1, 4*Hp)           f32
    y2d_ref:   (T2, Bp, Hp)        bf16  decoder rnn2 hidden states (output)

    Invariant: all padded lanes/rows of weights, biases and inputs are exactly
    zero, so sigmoid(0)=0.5 / tanh(0)=0 keep c==0 and h==0 on padded lanes and
    nothing leaks into real lanes.  Do not change the bias padding value.
    """
    T_enc = x_ref.shape[0]
    T_dec = words_ref.shape[0]
    Bp = x_ref.shape[1]
    Hp = b1_ref.shape[1] // 4

    def cell(gates, c):
        # PyTorch gate order [i, f, g, o]; Hp-multiple offsets -> lane-aligned.
        i_g = jax.nn.sigmoid(gates[:, 0 * Hp:1 * Hp])
        f_g = jax.nn.sigmoid(gates[:, 1 * Hp:2 * Hp])
        g_g = jnp.tanh(gates[:, 2 * Hp:3 * Hp])
        o_g = jax.nn.sigmoid(gates[:, 3 * Hp:4 * Hp])
        c_new = f_g * c + i_g * g_g
        h_new = o_g * jnp.tanh(c_new)
        return h_new, c_new

    zeros = jnp.zeros((Bp, Hp), jnp.float32)

    # ---- encoding phase -----------------------------------------------------
    # rnn2's word input is the all-zero padding_words -> that K-block is skipped.
    def enc_step(t, carry):
        h1, c1, h2, c2 = carry
        lhs1 = jnp.concatenate([h1.astype(jnp.bfloat16), x_ref[t]], axis=1)
        g1 = jnp.dot(lhs1, w1_ref[...],
                     preferred_element_type=jnp.float32) + b1_ref[...]
        h1n, c1n = cell(g1, c1)
        lhs2 = jnp.concatenate([h1n.astype(jnp.bfloat16),
                                h2.astype(jnp.bfloat16)], axis=1)
        g2 = jnp.dot(lhs2, w2_ref[:2 * Hp, :],
                     preferred_element_type=jnp.float32) + b2_ref[...]
        h2n, c2n = cell(g2, c2)
        return (h1n, c1n, h2n, c2n)

    carry = lax.fori_loop(0, T_enc, enc_step, (zeros, zeros, zeros, zeros),
                          unroll=True if T_enc <= 32 else 2)

    # ---- decoding phase (teacher forcing) -----------------------------------
    # rnn1's input is the all-zero padding_frames -> its x K-block is skipped.
    def dec_step(t, carry):
        h1, c1, h2, c2 = carry
        g1 = jnp.dot(h1.astype(jnp.bfloat16), w1_ref[:Hp, :],
                     preferred_element_type=jnp.float32) + b1_ref[...]
        h1n, c1n = cell(g1, c1)
        lhs2 = jnp.concatenate([h1n.astype(jnp.bfloat16),
                                h2.astype(jnp.bfloat16),
                                words_ref[t]], axis=1)
        g2 = jnp.dot(lhs2, w2_ref[...],
                     preferred_element_type=jnp.float32) + b2_ref[...]
        h2n, c2n = cell(g2, c2)
        y2d_ref[t] = h2n.astype(jnp.bfloat16)
        return (h1n, c1n, h2n, c2n)

    lax.fori_loop(0, T_dec, dec_step, carry,
                  unroll=True if T_dec <= 32 else 2)


# ----------------------------------------------------------------------------
# Kernels 2+3: tiled Linear(Hp -> Vp) + log_softmax with online logsumexp.
# ----------------------------------------------------------------------------
def proj_lse_kernel(y_ref, w_ref, b_ref, logits_ref, lse_ref, m_sc, l_sc):
    """Pass 1: logits tile + running (max, sum) over the V ('arbitrary') axis."""
    vi = pl.program_id(1)

    @pl.when(vi == 0)
    def _():
        m_sc[...] = jnp.full_like(m_sc, -jnp.inf)
        l_sc[...] = jnp.zeros_like(l_sc)

    logits = jnp.dot(y_ref[...], w_ref[...],
                     preferred_element_type=jnp.float32) + b_ref[...]
    logits_ref[...] = logits

    m_prev = m_sc[...]
    m_new = jnp.maximum(m_prev, jnp.max(logits, axis=-1, keepdims=True))
    l_sc[...] = (l_sc[...] * jnp.exp(m_prev - m_new)
                 + jnp.sum(jnp.exp(logits - m_new), axis=-1, keepdims=True))
    m_sc[...] = m_new

    @pl.when(vi == pl.num_programs(1) - 1)
    def _():
        lse_ref[...] = m_sc[...] + jnp.log(l_sc[...])


def lognorm_kernel(logits_ref, lse_ref, o_ref):
    """Pass 2: log_softmax = logits - logsumexp (pure element-wise)."""
    o_ref[...] = logits_ref[...] - lse_ref[...]


# ----------------------------------------------------------------------------
# Pallas wrappers
# ----------------------------------------------------------------------------
def s2vt_lstm_pallas(x_pad, words_pad, w1, b1, w2, b2):
    T2, Bp, _ = words_pad.shape
    Hp = b1.shape[1] // 4
    operands = (x_pad, words_pad, w1, b1, w2, b2)
    resident = sum(int(a.size) * a.dtype.itemsize for a in operands)
    resident += T2 * Bp * Hp * 2  # y2d output (bf16)
    vmem_limit = min(int(resident * 1.5) + (8 << 20), 96 << 20)
    # TODO(synk): for realistic T*Bp*Dvp (v7x 64 MiB VMEM) keep x/words in HBM
    # (memory_space=pl.ANY) and manually double-buffer the per-step slices with
    # pltpu.make_async_copy; split Bp across v7x's 2 TensorCores once Bp >= 16.
    return pl.pallas_call(
        s2vt_lstm_kernel,
        out_shape=jax.ShapeDtypeStruct((T2, Bp, Hp), jnp.bfloat16),
        in_specs=[_VMEM_SPEC] * 6,
        out_specs=_VMEM_SPEC,
        compiler_params=pltpu.CompilerParams(vmem_limit_bytes=vmem_limit),
    )(*operands)


def proj_logsoftmax_pallas(y_flat, w_pad, b_pad, *, tm, tv):
    Mp, Hp = y_flat.shape
    Vp = w_pad.shape[1]
    grid = (Mp // tm, Vp // tv)

    blk = tm * Hp * 2 + Hp * tv * 2 + tv * 4 + tm * tv * 4 + tm * 4
    vmem_limit = min(2 * blk + (8 << 20), 96 << 20)

    logits, lse = pl.pallas_call(
        proj_lse_kernel,
        out_shape=(jax.ShapeDtypeStruct((Mp, Vp), jnp.float32),
                   jax.ShapeDtypeStruct((Mp, 1), jnp.float32)),
        grid_spec=pltpu.PrefetchScalarGridSpec(
            num_scalar_prefetch=0,
            grid=grid,
            in_specs=[pl.BlockSpec((tm, Hp), lambda mi, vi: (mi, 0)),
                      pl.BlockSpec((Hp, tv), lambda mi, vi: (0, vi)),
                      pl.BlockSpec((1, tv), lambda mi, vi: (0, vi))],
            out_specs=[pl.BlockSpec((tm, tv), lambda mi, vi: (mi, vi)),
                       pl.BlockSpec((tm, 1), lambda mi, vi: (mi, 0))],
            scratch_shapes=[pltpu.VMEM((tm, 1), jnp.float32),
                            pltpu.VMEM((tm, 1), jnp.float32)]),
        compiler_params=pltpu.CompilerParams(
            dimension_semantics=("parallel", "arbitrary"),
            vmem_limit_bytes=vmem_limit),
    )(y_flat, w_pad, b_pad)

    logp = pl.pallas_call(
        lognorm_kernel,
        out_shape=jax.ShapeDtypeStruct((Mp, Vp), jnp.float32),
        grid_spec=pltpu.PrefetchScalarGridSpec(
            num_scalar_prefetch=0,
            grid=grid,
            in_specs=[pl.BlockSpec((tm, tv), lambda mi, vi: (mi, vi)),
                      pl.BlockSpec((tm, 1), lambda mi, vi: (mi, 0))],
            out_specs=pl.BlockSpec((tm, tv), lambda mi, vi: (mi, vi))),
        compiler_params=pltpu.CompilerParams(
            dimension_semantics=("parallel", "parallel"),
            vmem_limit_bytes=min(6 * tm * tv * 4 + (8 << 20), 96 << 20)),
    )(logits, lse)
    return logp


# ----------------------------------------------------------------------------
# Model (parameters + forward)
# ----------------------------------------------------------------------------
def init_params(key, vocab_size, dim_hidden, dim_word, dim_vid):
    ks = jax.random.split(key, 12)
    H = dim_hidden
    s1 = 1.0 / jnp.sqrt(H)

    def u(k, shape, scale):
        return jax.random.uniform(k, shape, jnp.float32, -scale, scale)

    return {
        # rnn1: LSTM(dim_vid -> H)
        "rnn1_w_ih": u(ks[0], (4 * H, dim_vid), s1),
        "rnn1_w_hh": u(ks[1], (4 * H, H), s1),
        "rnn1_b_ih": u(ks[2], (4 * H,), s1),
        "rnn1_b_hh": u(ks[3], (4 * H,), s1),
        # rnn2: LSTM(H + dim_word -> H)
        "rnn2_w_ih": u(ks[4], (4 * H, H + dim_word), s1),
        "rnn2_w_hh": u(ks[5], (4 * H, H), s1),
        "rnn2_b_ih": u(ks[6], (4 * H,), s1),
        "rnn2_b_hh": u(ks[7], (4 * H,), s1),
        # embedding(vocab -> dim_word)
        "embedding": jax.random.normal(ks[8], (vocab_size, dim_word), jnp.float32),
        # out: Linear(H -> vocab)
        "out_w": u(ks[9], (vocab_size, H), s1),
        "out_b": u(ks[10], (vocab_size,), s1),
    }


@functools.partial(jax.jit, static_argnames=("max_len",))
def s2vt_forward_train(params, vid_feats, target_variable, max_len):
    """S2VTModel.forward(vid_feats, target_variable, mode='train').

    vid_feats:       (B, n_frames, dim_vid) float32 (batch_first, like PyTorch)
    target_variable: (B, max_len) int32
    Returns seq_probs of shape (B, max_len - 1, vocab_size).
    """
    B, T, Dv = vid_feats.shape
    H = params["rnn1_w_hh"].shape[1]
    Wd = params["embedding"].shape[1]
    V = params["out_w"].shape[0]
    T2 = max_len - 1

    # Padded (lane / sublane aligned) sizes.
    Bp = _round_up(B, 8)
    Hp = _round_up(H, 128)
    Dvp = _round_up(Dv, 128)
    Wdp = _round_up(Wd, 128)

    # Projection tiles: tile V so the (Hp, tv) weight block stays a few MiB.
    if _round_up(V, 128) <= 2048:
        Vp = _round_up(V, 128)
        tv = Vp
    else:
        tv = 2048
        Vp = _round_up(V, tv)
    M = T2 * Bp
    tm = 256 if M >= 256 else _round_up(M, 8)
    Mp = _round_up(M, tm)

    # ---- weight re-layout: (4H, Din) -> (Din_pad, 4*Hp), per-gate padding ---
    # Padding is exactly zero -> padded lanes stay zero through the recurrence.
    def pad_gate_w(w, d_pad):
        din = w.shape[1]
        w4 = w.reshape(4, H, din)
        w4 = jnp.transpose(w4, (2, 0, 1))                    # (Din, 4, H)
        w4 = jnp.pad(w4, ((0, d_pad - din), (0, 0), (0, Hp - H)))
        return w4.reshape(d_pad, 4 * Hp)

    def pad_gate_b(b_ih, b_hh):
        b = (b_ih + b_hh).reshape(4, H)
        b = jnp.pad(b, ((0, 0), (0, Hp - H)))
        return b.reshape(1, 4 * Hp).astype(jnp.float32)

    # rnn1 weights K-stacked as [hh ; ih]:
    #   encoder:  [h1, x_t] @ w1        decoder:  h1 @ w1[:Hp]
    w1 = jnp.concatenate(
        [pad_gate_w(params["rnn1_w_hh"], Hp),
         pad_gate_w(params["rnn1_w_ih"], Dvp)], axis=0).astype(jnp.bfloat16)
    b1 = pad_gate_b(params["rnn1_b_ih"], params["rnn1_b_hh"])

    # rnn2 weights K-stacked as [ih(h1 part) ; hh ; ih(word part)]:
    #   encoder:  [h1, h2] @ w2[:2Hp]   decoder:  [h1, h2, word] @ w2
    w2_ih = params["rnn2_w_ih"]
    w2 = jnp.concatenate(
        [pad_gate_w(w2_ih[:, :H], Hp),
         pad_gate_w(params["rnn2_w_hh"], Hp),
         pad_gate_w(w2_ih[:, H:], Wdp)], axis=0).astype(jnp.bfloat16)
    b2 = pad_gate_b(params["rnn2_b_ih"], params["rnn2_b_hh"])

    # ---- inputs: time-major, zero padded, bf16 ------------------------------
    x = jnp.transpose(vid_feats, (1, 0, 2))                           # (T, B, Dv)
    x = jnp.pad(x, ((0, 0), (0, Bp - B), (0, Dvp - Dv))).astype(jnp.bfloat16)

    words = params["embedding"][target_variable[:, :T2]]              # (B, T2, Wd)
    words = jnp.transpose(words, (1, 0, 2))                           # (T2, B, Wd)
    words = jnp.pad(words, ((0, 0), (0, Bp - B), (0, Wdp - Wd))).astype(jnp.bfloat16)

    # ---- fused encode + decode LSTM stack -----------------------------------
    y2d = s2vt_lstm_pallas(x, words, w1, b1, w2, b2)                  # (T2, Bp, Hp) bf16

    # ---- tiled output projection + log_softmax ------------------------------
    out_w = jnp.pad(jnp.transpose(params["out_w"]),
                    ((0, Hp - H), (0, Vp - V))).astype(jnp.bfloat16)  # (Hp, Vp)
    out_b = jnp.pad(params["out_b"].astype(jnp.float32), ((0, Vp - V),),
                    constant_values=-1e9).reshape(1, Vp)              # mask padded vocab

    y_flat = jnp.pad(y2d.reshape(M, Hp), ((0, Mp - M), (0, 0)))
    logp = proj_logsoftmax_pallas(y_flat, out_w, out_b, tm=tm, tv=tv)
    logp = logp[:M].reshape(T2, Bp, Vp)[:, :B, :V]                    # strip padding
    return jnp.transpose(logp, (1, 0, 2))                             # (B, T2, V)


# ----------------------------------------------------------------------------
# Pure-JAX reference (unpadded, per-step, mirrors the PyTorch forward)
# ----------------------------------------------------------------------------
def s2vt_reference(params, vid_feats, target_variable, max_len):
    B, T, Dv = vid_feats.shape
    H = params["rnn1_w_hh"].shape[1]
    Wd = params["embedding"].shape[1]

    def lstm_step(x_t, h, c, w_ih, w_hh, b_ih, b_hh):
        gates = x_t @ w_ih.T + h @ w_hh.T + b_ih + b_hh
        i_g = jax.nn.sigmoid(gates[:, 0 * H:1 * H])
        f_g = jax.nn.sigmoid(gates[:, 1 * H:2 * H])
        g_g = jnp.tanh(gates[:, 2 * H:3 * H])
        o_g = jax.nn.sigmoid(gates[:, 3 * H:4 * H])
        c_new = f_g * c + i_g * g_g
        return o_g * jnp.tanh(c_new), c_new

    p = params
    h1 = c1 = h2 = c2 = jnp.zeros((B, H), jnp.float32)
    for t in range(T):
        h1, c1 = lstm_step(vid_feats[:, t], h1, c1, p["rnn1_w_ih"],
                           p["rnn1_w_hh"], p["rnn1_b_ih"], p["rnn1_b_hh"])
        inp2 = jnp.concatenate([h1, jnp.zeros((B, Wd), jnp.float32)], axis=-1)
        h2, c2 = lstm_step(inp2, h2, c2, p["rnn2_w_ih"],
                           p["rnn2_w_hh"], p["rnn2_b_ih"], p["rnn2_b_hh"])
    outs = []
    for i in range(max_len - 1):
        h1, c1 = lstm_step(jnp.zeros((B, Dv), jnp.float32), h1, c1, p["rnn1_w_ih"],
                           p["rnn1_w_hh"], p["rnn1_b_ih"], p["rnn1_b_hh"])
        cw = p["embedding"][target_variable[:, i]]
        inp2 = jnp.concatenate([h1, cw], axis=-1)
        h2, c2 = lstm_step(inp2, h2, c2, p["rnn2_w_ih"],
                           p["rnn2_w_hh"], p["rnn2_b_ih"], p["rnn2_b_hh"])
        logits = h2 @ p["out_w"].T + p["out_b"]
        outs.append(jax.nn.log_softmax(logits, axis=-1))
    return jnp.stack(outs, axis=1)


if __name__ == "__main__":
    # Small shapes consistent with the module's forward.
    B = 2
    n_frames = 8
    dim_vid = 64
    dim_hidden = 32
    dim_word = 16
    vocab_size = 100
    max_len = 8

    key = jax.random.PRNGKey(0)
    k_params, k_feats, k_tgt = jax.random.split(key, 3)

    params = init_params(k_params, vocab_size, dim_hidden, dim_word, dim_vid)
    vid_feats = jax.random.normal(k_feats, (B, n_frames, dim_vid), jnp.float32)
    target_variable = jax.random.randint(k_tgt, (B, max_len), 0, vocab_size,
                                         dtype=jnp.int32)

    seq_probs = s2vt_forward_train(params, vid_feats, target_variable, max_len)
    seq_preds = []  # train mode: PyTorch returns an (empty) list, never concatenated

    jax.block_until_ready(seq_probs)
    assert seq_probs.shape == (B, max_len - 1, vocab_size)
    assert bool(jnp.all(jnp.isfinite(seq_probs)))
    # log_softmax rows should (approximately) sum to 1 after exp.
    assert bool(jnp.all(jnp.abs(jnp.sum(jnp.exp(seq_probs), axis=-1) - 1.0) < 1e-4))

    # Cross-check against the pure-JAX per-step reference.  Loose tolerance:
    # the kernel uses bf16 MXU operands (f32 accumulation), the reference uses
    # f32 with default TPU matmul precision; structural bugs would be O(1).
    ref = s2vt_reference(params, vid_feats, target_variable, max_len)
    max_diff = float(jnp.max(jnp.abs(seq_probs - ref)))
    assert max_diff < 1e-1, f"mismatch vs reference: {max_diff}"

    print("KERNEL_OK")
</pallas_src>

<mosaic_0001>
module attributes {stable_mosaic.version = 11 : i64} {
  func.func @lognorm_kernel(%arg0: i32, %arg1: i32, %arg2: memref<56x128xf32, #tpu.memory_space<vmem>>, %arg3: memref<56x1xf32, #tpu.memory_space<vmem>>, %arg4: memref<56x128xf32, #tpu.memory_space<vmem>>) attributes {dimension_semantics = [#tpu.dimension_semantics<parallel>, #tpu.dimension_semantics<parallel>], iteration_bounds = array<i64: 1, 1>, scalar_prefetch = 0 : i64, scratch_operands = 0 : i64, tpu.core_type = #tpu.core_type<tc>, window_params = [{transform_indices = @transform_0, window_bounds = array<i64: 56, 128>}, {transform_indices = @transform_1, window_bounds = array<i64: 56, 1>}, {transform_indices = @transform_2, window_bounds = array<i64: 56, 128>}]} {
    %c0 = arith.constant 0 : index
    %c0_0 = arith.constant 0 : index
    %0 = vector.load %arg2[%c0, %c0_0] : memref<56x128xf32, #tpu.memory_space<vmem>>, vector<56x128xf32>
    %c0_1 = arith.constant 0 : index
    %c0_2 = arith.constant 0 : index
    %1 = vector.load %arg3[%c0_1, %c0_2] : memref<56x1xf32, #tpu.memory_space<vmem>>, vector<56x1xf32>
    %2 = vector.broadcast %1 : vector<56x1xf32> to vector<56x128xf32>
    %3 = arith.subf %0, %2 : vector<56x128xf32>
    %c0_3 = arith.constant 0 : index
    %c0_4 = arith.constant 0 : index
    %4 = vector.load %arg4[%c0_3, %c0_4] : memref<56x128xf32, #tpu.memory_space<vmem>>, vector<56x128xf32>
    tpu.vector_store %arg4[%c0_3, %c0_4], %3 {strides = array<i32>} : memref<56x128xf32, #tpu.memory_space<vmem>>, vector<56x128xf32>,
    return
  }
  func.func @transform_0(%arg0: i32, %arg1: i32) -> (i32, i32) {
    %c0_i32 = arith.constant 0 : i32
    return %arg0, %arg1 : i32, i32
  }
  func.func @transform_1(%arg0: i32, %arg1: i32) -> (i32, i32) {
    %c0_i32 = arith.constant 0 : i32
    %c0_i32_0 = arith.constant 0 : i32
    return %arg0, %c0_i32 : i32, i32
  }
  func.func @transform_2(%arg0: i32, %arg1: i32) -> (i32, i32) {
    %c0_i32 = arith.constant 0 : i32
    return %arg0, %arg1 : i32, i32
  }
}

module attributes {stable_mosaic.version = 11 : i64} {
  func.func @proj_lse_kernel(%arg0: i32, %arg1: i32, %arg2: memref<56x128xbf16, #tpu.memory_space<vmem>>, %arg3: memref<128x128xbf16, #tpu.memory_space<vmem>>, %arg4: memref<1x128xf32, #tpu.memory_space<vmem>>, %arg5: memref<56x128xf32, #tpu.memory_space<vmem>>, %arg6: memref<56x1xf32, #tpu.memory_space<vmem>>, %arg7: memref<56x1xf32, #tpu.memory_space<vmem>>, %arg8: memref<56x1xf32, #tpu.memory_space<vmem>>) attributes {dimension_semantics = [#tpu.dimension_semantics<parallel>, #tpu.dimension_semantics<arbitrary>], iteration_bounds = array<i64: 1, 1>, scalar_prefetch = 0 : i64, scratch_operands = 2 : i64, tpu.core_type = #tpu.core_type<tc>, window_params = [{transform_indices = @transform_0, window_bounds = array<i64: 56, 128>}, {transform_indices = @transform_1, window_bounds = array<i64: 128, 128>}, {transform_indices = @transform_2, window_bounds = array<i64: 1, 128>}, {transform_indices = @transform_3, window_bounds = array<i64: 56, 128>}, {transform_indices = @transform_4, window_bounds = array<i64: 56, 1>}]} {
    %c0_i32 = arith.constant 0 : i32
    %0 = arith.cmpi eq, %arg1, %c0_i32 : i32
    %1 = arith.extui %0 : i1 to i32
    %c0_i32_0 = arith.constant 0 : i32
    %2 = arith.cmpi ne, %1, %c0_i32_0 : i32
    scf.if %2 {
      %cst_20 = arith.constant 0xFF800000 : f32
      %29 = vector.broadcast %cst_20 : f32 to vector<56x1xf32>
      %c0_21 = arith.constant 0 : index
      %c0_22 = arith.constant 0 : index
      %30 = vector.load %arg7[%c0_21, %c0_22] : memref<56x1xf32, #tpu.memory_space<vmem>>, vector<56x1xf32>
      tpu.vector_store %arg7[%c0_21, %c0_22], %29 {strides = array<i32>} : memref<56x1xf32, #tpu.memory_space<vmem>>, vector<56x1xf32>,
      %cst_23 = arith.constant 0.000000e+00 : f32
      %31 = vector.broadcast %cst_23 : f32 to vector<56x1xf32>
      %c0_24 = arith.constant 0 : index
      %c0_25 = arith.constant 0 : index
      %32 = vector.load %arg8[%c0_24, %c0_25] : memref<56x1xf32, #tpu.memory_space<vmem>>, vector<56x1xf32>
      tpu.vector_store %arg8[%c0_24, %c0_25], %31 {strides = array<i32>} : memref<56x1xf32, #tpu.memory_space<vmem>>, vector<56x1xf32>,
    } else {
    }
    %c0 = arith.constant 0 : index
    %c0_1 = arith.constant 0 : index
    %3 = vector.load %arg2[%c0, %c0_1] : memref<56x128xbf16, #tpu.memory_space<vmem>>, vector<56x128xbf16>
    %c0_2 = arith.constant 0 : index
    %c0_3 = arith.constant 0 : index
    %4 = vector.load %arg3[%c0_2, %c0_3] : memref<128x128xbf16, #tpu.memory_space<vmem>>, vector<128x128xbf16>
    %cst = arith.constant dense<0.000000e+00> : vector<56x128xf32>
    %5 = tpu.matmul %3, %4, %cst {dimension_numbers = #tpu.dot_dimension_numbers<[1], [0], [0], [1], [0, 0, 1, 1], [], []>} : vector<56x128xbf16>, vector<128x128xbf16>, vector<56x128xf32> -> vector<56x128xf32>
    %c0_4 = arith.constant 0 : index
    %c0_5 = arith.constant 0 : index
    %6 = vector.load %arg4[%c0_4, %c0_5] : memref<1x128xf32, #tpu.memory_space<vmem>>, vector<1x128xf32>
    %7 = vector.broadcast %6 : vector<1x128xf32> to vector<56x128xf32>
    %8 = arith.addf %5, %7 : vector<56x128xf32>
    %c0_6 = arith.constant 0 : index
    %c0_7 = arith.constant 0 : index
    %9 = vector.load %arg5[%c0_6, %c0_7] : memref<56x128xf32, #tpu.memory_space<vmem>>, vector<56x128xf32>
    tpu.vector_store %arg5[%c0_6, %c0_7], %8 {strides = array<i32>} : memref<56x128xf32, #tpu.memory_space<vmem>>, vector<56x128xf32>,
    %c0_8 = arith.constant 0 : index
    %c0_9 = arith.constant 0 : index
    %10 = vector.load %arg7[%c0_8, %c0_9] : memref<56x1xf32, #tpu.memory_space<vmem>>, vector<56x1xf32>
    %cst_10 = arith.constant dense<0xFF800000> : vector<56xf32>
    %11 = vector.multi_reduction <maximumf>, %8, %cst_10 [1] : vector<56x128xf32> to vector<56xf32>
    %12 = vector.shape_cast %11 : vector<56xf32> to vector<56x1xf32>
    %13 = arith.maximumf %10, %12 : vector<56x1xf32>
    %c0_11 = arith.constant 0 : index
    %c0_12 = arith.constant 0 : index
    %14 = vector.load %arg8[%c0_11, %c0_12] : memref<56x1xf32, #tpu.memory_space<vmem>>, vector<56x1xf32>
    %15 = arith.subf %10, %13 : vector<56x1xf32>
    %16 = math.exp %15 : vector<56x1xf32>
    %17 = arith.mulf %14, %16 : vector<56x1xf32>
    %18 = vector.broadcast %13 : vector<56x1xf32> to vector<56x128xf32>
    %19 = arith.subf %8, %18 : vector<56x128xf32>
    %20 = math.exp %19 : vector<56x128xf32>
    %cst_13 = arith.constant dense<0.000000e+00> : vector<56xf32>
    %21 = vector.multi_reduction <add>, %20, %cst_13 [1] : vector<56x128xf32> to vector<56xf32>
    %22 = vector.shape_cast %21 : vector<56xf32> to vector<56x1xf32>
    %23 = arith.addf %17, %22 : vector<56x1xf32>
    %c0_14 = arith.constant 0 : index
    %c0_15 = arith.constant 0 : index
    %24 = vector.load %arg8[%c0_14, %c0_15] : memref<56x1xf32, #tpu.memory_space<vmem>>, vector<56x1xf32>
    tpu.vector_store %arg8[%c0_14, %c0_15], %23 {strides = array<i32>} : memref<56x1xf32, #tpu.memory_space<vmem>>, vector<56x1xf32>,
    %c0_16 = arith.constant 0 : index
    %c0_17 = arith.constant 0 : index
    %25 = vector.load %arg7[%c0_16, %c0_17] : memref<56x1xf32, #tpu.memory_space<vmem>>, vector<56x1xf32>
    tpu.vector_store %arg7[%c0_16, %c0_17], %13 {strides = array<i32>} : memref<56x1xf32, #tpu.memory_space<vmem>>, vector<56x1xf32>,
    %c0_i32_18 = arith.constant 0 : i32
    %26 = arith.cmpi eq, %arg1, %c0_i32_18 : i32
    %27 = arith.extui %26 : i1 to i32
    %c0_i32_19 = arith.constant 0 : i32
    %28 = arith.cmpi ne, %27, %c0_i32_19 : i32
    scf.if %28 {
      %c0_20 = arith.constant 0 : index
      %c0_21 = arith.constant 0 : index
      %29 = vector.load %arg7[%c0_20, %c0_21] : memref<56x1xf32, #tpu.memory_space<vmem>>, vector<56x1xf32>
      %c0_22 = arith.constant 0 : index
      %c0_23 = arith.constant 0 : index
      %30 = vector.load %arg8[%c0_22, %c0_23] : memref<56x1xf32, #tpu.memory_space<vmem>>, vector<56x1xf32>
      %31 = math.log %30 : vector<56x1xf32>
      %32 = arith.addf %29, %31 : vector<56x1xf32>
      %c0_24 = arith.constant 0 : index
      %c0_25 = arith.constant 0 : index
      %33 = vector.load %arg6[%c0_24, %c0_25] : memref<56x1xf32, #tpu.memory_space<vmem>>, vector<56x1xf32>
      tpu.vector_store %arg6[%c0_24, %c0_25], %32 {strides = array<i32>} : memref<56x1xf32, #tpu.memory_space<vmem>>, vector<56x1xf32>,
    } else {
    }
    return
  }
  func.func @transform_0(%arg0: i32, %arg1: i32) -> (i32, i32) {
    %c0_i32 = arith.constant 0 : i32
    %c0_i32_0 = arith.constant 0 : i32
    return %arg0, %c0_i32 : i32, i32
  }
  func.func @transform_1(%arg0: i32, %arg1: i32) -> (i32, i32) {
    %c0_i32 = arith.constant 0 : i32
    %c0_i32_0 = arith.constant 0 : i32
    return %c0_i32, %arg1 : i32, i32
  }
  func.func @transform_2(%arg0: i32, %arg1: i32) -> (i32, i32) {
    %c0_i32 = arith.constant 0 : i32
    %c0_i32_0 = arith.constant 0 : i32
    return %c0_i32, %arg1 : i32, i32
  }
  func.func @transform_3(%arg0: i32, %arg1: i32) -> (i32, i32) {
    %c0_i32 = arith.constant 0 : i32
    return %arg0, %arg1 : i32, i32
  }
  func.func @transform_4(%arg0: i32, %arg1: i32) -> (i32, i32) {
    %c0_i32 = arith.constant 0 : i32
    %c0_i32_0 = arith.constant 0 : i32
    return %arg0, %c0_i32 : i32, i32
  }
}

module attributes {stable_mosaic.version = 11 : i64} {
  func.func @s2vt_lstm_kernel(%arg0: memref<8x8x128xbf16, #tpu.memory_space<vmem>>, %arg1: memref<7x8x128xbf16, #tpu.memory_space<vmem>>, %arg2: memref<256x512xbf16, #tpu.memory_space<vmem>>, %arg3: memref<1x512xf32, #tpu.memory_space<vmem>>, %arg4: memref<384x512xbf16, #tpu.memory_space<vmem>>, %arg5: memref<1x512xf32, #tpu.memory_space<vmem>>, %arg6: memref<7x8x128xbf16, #tpu.memory_space<vmem>>) attributes {dimension_semantics = [], scalar_prefetch = 0 : i64, scratch_operands = 0 : i64, tpu.core_type = #tpu.core_type<tc>} {
    %cst = arith.constant 0.000000e+00 : f32
    %0 = vector.broadcast %cst : f32 to vector<8x128xf32>
    %c0_i32 = arith.constant 0 : i32
    %1 = arith.truncf %0 : vector<8x128xf32> to vector<8x128xbf16>
    %2 = arith.index_cast %c0_i32 : i32 to index
    %c0 = arith.constant 0 : index
    %c0_0 = arith.constant 0 : index
    %3 = vector.load %arg0[%2, %c0, %c0_0] : memref<8x8x128xbf16, #tpu.memory_space<vmem>>, vector<1x8x128xbf16>
    %4 = vector.shape_cast %3 : vector<1x8x128xbf16> to vector<8x128xbf16>
    %5 = tpu.concatenate %1, %4 in 1 : vector<8x128xbf16>, vector<8x128xbf16> -> vector<8x256xbf16>
    %c0_1 = arith.constant 0 : index
    %c0_2 = arith.constant 0 : index
    %6 = vector.load %arg2[%c0_1, %c0_2] : memref<256x512xbf16, #tpu.memory_space<vmem>>, vector<256x512xbf16>
    %cst_3 = arith.constant dense<0.000000e+00> : vector<8x512xf32>
    %7 = tpu.matmul %5, %6, %cst_3 {dimension_numbers = #tpu.dot_dimension_numbers<[1], [0], [0], [1], [0, 0, 1, 1], [], []>} : vector<8x256xbf16>, vector<256x512xbf16>, vector<8x512xf32> -> vector<8x512xf32>
    %c0_4 = arith.constant 0 : index
    %c0_5 = arith.constant 0 : index
    %8 = vector.load %arg3[%c0_4, %c0_5] : memref<1x512xf32, #tpu.memory_space<vmem>>, vector<1x512xf32>
    %9 = vector.broadcast %8 : vector<1x512xf32> to vector<8x512xf32>
    %10 = arith.addf %7, %9 : vector<8x512xf32>
    %11 = vector.extract_strided_slice %10 {offsets = [0, 0], sizes = [8, 128], strides = [1, 1]} : vector<8x512xf32> to vector<8x128xf32>
    %12 = arith.negf %11 : vector<8x128xf32>
    %13 = math.exp %12 : vector<8x128xf32>
    %cst_6 = arith.constant 1.000000e+00 : f32
    %14 = vector.broadcast %cst_6 : f32 to vector<8x128xf32>
    %15 = arith.addf %14, %13 : vector<8x128xf32>
    %16 = arith.divf %14, %15 : vector<8x128xf32>
    %17 = vector.extract_strided_slice %10 {offsets = [0, 128], sizes = [8, 128], strides = [1, 1]} : vector<8x512xf32> to vector<8x128xf32>
    %18 = arith.negf %17 : vector<8x128xf32>
    %19 = math.exp %18 : vector<8x128xf32>
    %cst_7 = arith.constant 1.000000e+00 : f32
    %20 = vector.broadcast %cst_7 : f32 to vector<8x128xf32>
    %21 = arith.addf %20, %19 : vector<8x128xf32>
    %22 = arith.divf %20, %21 : vector<8x128xf32>
    %23 = vector.extract_strided_slice %10 {offsets = [0, 256], sizes = [8, 128], strides = [1, 1]} : vector<8x512xf32> to vector<8x128xf32>
    %24 = math.tanh %23 : vector<8x128xf32>
    %25 = vector.extract_strided_slice %10 {offsets = [0, 384], sizes = [8, 128], strides = [1, 1]} : vector<8x512xf32> to vector<8x128xf32>
    %26 = arith.negf %25 : vector<8x128xf32>
    %27 = math.exp %26 : vector<8x128xf32>
    %cst_8 = arith.constant 1.000000e+00 : f32
    %28 = vector.broadcast %cst_8 : f32 to vector<8x128xf32>
    %29 = arith.addf %28, %27 : vector<8x128xf32>
    %30 = arith.divf %28, %29 : vector<8x128xf32>
    %31 = arith.mulf %22, %0 : vector<8x128xf32>
    %32 = arith.mulf %16, %24 : vector<8x128xf32>
    %33 = arith.addf %31, %32 : vector<8x128xf32>
    %34 = math.tanh %33 : vector<8x128xf32>
    %35 = arith.mulf %30, %34 : vector<8x128xf32>
    %36 = arith.truncf %35 : vector<8x128xf32> to vector<8x128xbf16>
    %37 = arith.truncf %0 : vector<8x128xf32> to vector<8x128xbf16>
    %38 = tpu.concatenate %36, %37 in 1 : vector<8x128xbf16>, vector<8x128xbf16> -> vector<8x256xbf16>
    %c0_9 = arith.constant 0 : index
    %c0_10 = arith.constant 0 : index
    %39 = vector.load %arg4[%c0_9, %c0_10] : memref<384x512xbf16, #tpu.memory_space<vmem>>, vector<256x512xbf16>
    %cst_11 = arith.constant dense<0.000000e+00> : vector<8x512xf32>
    %40 = tpu.matmul %38, %39, %cst_11 {dimension_numbers = #tpu.dot_dimension_numbers<[1], [0], [0], [1], [0, 0, 1, 1], [], []>} : vector<8x256xbf16>, vector<256x512xbf16>, vector<8x512xf32> -> vector<8x512xf32>
    %c0_12 = arith.constant 0 : index
    %c0_13 = arith.constant 0 : index
    %41 = vector.load %arg5[%c0_12, %c0_13] : memref<1x512xf32, #tpu.memory_space<vmem>>, vector<1x512xf32>
    %42 = vector.broadcast %41 : vector<1x512xf32> to vector<8x512xf32>
    %43 = arith.addf %40, %42 : vector<8x512xf32>
    %44 = vector.extract_strided_slice %43 {offsets = [0, 0], sizes = [8, 128], strides = [1, 1]} : vector<8x512xf32> to vector<8x128xf32>
    %45 = arith.negf %44 : vector<8x128xf32>
    %46 = math.exp %45 : vector<8x128xf32>
    %cst_14 = arith.constant 1.000000e+00 : f32
    %47 = vector.broadcast %cst_14 : f32 to vector<8x128xf32>
    %48 = arith.addf %47, %46 : vector<8x128xf32>
    %49 = arith.divf %47, %48 : vector<8x128xf32>
    %50 = vector.extract_strided_slice %43 {offsets = [0, 128], sizes = [8, 128], strides = [1, 1]} : vector<8x512xf32> to vector<8x128xf32>
    %51 = arith.negf %50 : vector<8x128xf32>
    %52 = math.exp %51 : vector<8x128xf32>
    %cst_15 = arith.constant 1.000000e+00 : f32
    %53 = vector.broadcast %cst_15 : f32 to vector<8x128xf32>
    %54 = arith.addf %53, %52 : vector<8x128xf32>
    %55 = arith.divf %53, %54 : vector<8x128xf32>
    %56 = vector.extract_strided_slice %43 {offsets = [0, 256], sizes = [8, 128], strides = [1, 1]} : vector<8x512xf32> to vector<8x128xf32>
    %57 = math.tanh %56 : vector<8x128xf32>
    %58 = vector.extract_strided_slice %43 {offsets = [0, 384], sizes = [8, 128], strides = [1, 1]} : vector<8x512xf32> to vector<8x128xf32>
    %59 = arith.negf %58 : vector<8x128xf32>
    %60 = math.exp %59 : vector<8x128xf32>
    %cst_16 = arith.constant 1.000000e+00 : f32
    %61 = vector.broadcast %cst_16 : f32 to vector<8x128xf32>
    %62 = arith.addf %61, %60 : vector<8x128xf32>
    %63 = arith.divf %61, %62 : vector<8x128xf32>
    %64 = arith.mulf %55, %0 : vector<8x128xf32>
    %65 = arith.mulf %49, %57 : vector<8x128xf32>
    %66 = arith.addf %64, %65 : vector<8x128xf32>
    %67 = math.tanh %66 : vector<8x128xf32>
    %68 = arith.mulf %63, %67 : vector<8x128xf32>
    %c1_i32 = arith.constant 1 : i32
    %69 = arith.truncf %35 : vector<8x128xf32> to vector<8x128xbf16>
    %70 = arith.index_cast %c1_i32 : i32 to index
    %c0_17 = arith.constant 0 : index
    %c0_18 = arith.constant 0 : index
    %71 = vector.load %arg0[%70, %c0_17, %c0_18] : memref<8x8x128xbf16, #tpu.memory_space<vmem>>, vector<1x8x128xbf16>
    %72 = vector.shape_cast %71 : vector<1x8x128xbf16> to vector<8x128xbf16>
    %73 = tpu.concatenate %69, %72 in 1 : vector<8x128xbf16>, vector<8x128xbf16> -> vector<8x256xbf16>
    %c0_19 = arith.constant 0 : index
    %c0_20 = arith.constant 0 : index
    %74 = vector.load %arg2[%c0_19, %c0_20] : memref<256x512xbf16, #tpu.memory_space<vmem>>, vector<256x512xbf16>
    %cst_21 = arith.constant dense<0.000000e+00> : vector<8x512xf32>
    %75 = tpu.matmul %73, %74, %cst_21 {dimension_numbers = #tpu.dot_dimension_numbers<[1], [0], [0], [1], [0, 0, 1, 1], [], []>} : vector<8x256xbf16>, vector<256x512xbf16>, vector<8x512xf32> -> vector<8x512xf32>
    %c0_22 = arith.constant 0 : index
    %c0_23 = arith.constant 0 : index
    %76 = vector.load %arg3[%c0_22, %c0_23] : memref<1x512xf32, #tpu.memory_space<vmem>>, vector<1x512xf32>
    %77 = vector.broadcast %76 : vector<1x512xf32> to vector<8x512xf32>
    %78 = arith.addf %75, %77 : vector<8x512xf32>
    %79 = vector.extract_strided_slice %78 {offsets = [0, 0], sizes = [8, 128], strides = [1, 1]} : vector<8x512xf32> to vector<8x128xf32>
    %80 = arith.negf %79 : vector<8x128xf32>
    %81 = math.exp %80 : vector<8x128xf32>
    %cst_24 = arith.constant 1.000000e+00 : f32
    %82 = vector.broadcast %cst_24 : f32 to vector<8x128xf32>
    %83 = arith.addf %82, %81 : vector<8x128xf32>
    %84 = arith.divf %82, %83 : vector<8x128xf32>
    %85 = vector.extract_strided_slice %78 {offsets = [0, 128], sizes = [8, 128], strides = [1, 1]} : vector<8x512xf32> to vector<8x128xf32>
    %86 = arith.negf %85 : vector<8x128xf32>
    %87 = math.exp %86 : vector<8x128xf32>
    %cst_25 = arith.constant 1.000000e+00 : f32
    %88 = vector.broadcast %cst_25 : f32 to vector<8x128xf32>
    %89 = arith.addf %88, %87 : vector<8x128xf32>
    %90 = arith.divf %88, %89 : vector<8x128xf32>
    %91 = vector.extract_strided_slice %78 {offsets = [0, 256], sizes = [8, 128], strides = [1, 1]} : vector<8x512xf32> to vector<8x128xf32>
    %92 = math.tanh %91 : vector<8x128xf32>
    %93 = vector.extract_strided_slice %78 {offsets = [0, 384], sizes = [8, 128], strides = [1, 1]} : vector<8x512xf32> to vector<8x128xf32>
    %94 = arith.negf %93 : vector<8x128xf32>
    %95 = math.exp %94 : vector<8x128xf32>
    %cst_26 = arith.constant 1.000000e+00 : f32
    %96 = vector.broadcast %cst_26 : f32 to vector<8x128xf32>
    %97 = arith.addf %96, %95 : vector<8x128xf32>
    %98 = arith.divf %96, %97 : vector<8x128xf32>
    %99 = arith.mulf %90, %33 : vector<8x128xf32>
    %100 = arith.mulf %84, %92 : vector<8x128xf32>
    %101 = arith.addf %99, %100 : vector<8x128xf32>
    %102 = math.tanh %101 : vector<8x128xf32>
    %103 = arith.mulf %98, %102 : vector<8x128xf32>
    %104 = arith.truncf %103 : vector<8x128xf32> to vector<8x128xbf16>
    %105 = arith.truncf %68 : vector<8x128xf32> to vector<8x128xbf16>
    %106 = tpu.concatenate %104, %105 in 1 : vector<8x128xbf16>, vector<8x128xbf16> -> vector<8x256xbf16>
    %c0_27 = arith.constant 0 : index
    %c0_28 = arith.constant 0 : index
    %107 = vector.load %arg4[%c0_27, %c0_28] : memref<384x512xbf16, #tpu.memory_space<vmem>>, vector<256x512xbf16>
    %cst_29 = arith.constant dense<0.000000e+00> : vector<8x512xf32>
    %108 = tpu.matmul %106, %107, %cst_29 {dimension_numbers = #tpu.dot_dimension_numbers<[1], [0], [0], [1], [0, 0, 1, 1], [], []>} : vector<8x256xbf16>, vector<256x512xbf16>, vector<8x512xf32> -> vector<8x512xf32>
    %c0_30 = arith.constant 0 : index
    %c0_31 = arith.constant 0 : index
    %109 = vector.load %arg5[%c0_30, %c0_31] : memref<1x512xf32, #tpu.memory_space<vmem>>, vector<1x512xf32>
    %110 = vector.broadcast %109 : vector<1x512xf32> to vector<8x512xf32>
    %111 = arith.addf %108, %110 : vector<8x512xf32>
    %112 = vector.extract_strided_slice %111 {offsets = [0, 0], sizes = [8, 128], strides = [1, 1]} : vector<8x512xf32> to vector<8x128xf32>
    %113 = arith.negf %112 : vector<8x128xf32>
    %114 = math.exp %113 : vector<8x128xf32>
    %cst_32 = arith.constant 1.000000e+00 : f32
    %115 = vector.broadcast %cst_32 : f32 to vector<8x128xf32>
    %116 = arith.addf %115, %114 : vector<8x128xf32>
    %117 = arith.divf %115, %116 : vector<8x128xf32>
    %118 = vector.extract_strided_slice %111 {offsets = [0, 128], sizes = [8, 128], strides = [1, 1]} : vector<8x512xf32> to vector<8x128xf32>
    %119 = arith.negf %118 : vector<8x128xf32>
    %120 = math.exp %119 : vector<8x128xf32>
    %cst_33 = arith.constant 1.000000e+00 : f32
    %121 = vector.broadcast %cst_33 : f32 to vector<8x128xf32>
    %122 = arith.addf %121, %120 : vector<8x128xf32>
    %123 = arith.divf %121, %122 : vector<8x128xf32>
    %124 = vector.extract_strided_slice %111 {offsets = [0, 256], sizes = [8, 128], strides = [1, 1]} : vector<8x512xf32> to vector<8x128xf32>
    %125 = math.tanh %124 : vector<8x128xf32>
    %126 = vector.extract_strided_slice %111 {offsets = [0, 384], sizes = [8, 128], strides = [1, 1]} : vector<8x512xf32> to vector<8x128xf32>
    %127 = arith.negf %126 : vector<8x128xf32>
    %128 = math.exp %127 : vector<8x128xf32>
    %cst_34 = arith.constant 1.000000e+00 : f32
    %129 = vector.broadcast %cst_34 : f32 to vector<8x128xf32>
    %130 = arith.addf %129, %128 : vector<8x128xf32>
    %131 = arith.divf %129, %130 : vector<8x128xf32>
    %132 = arith.mulf %123, %66 : vector<8x128xf32>
    %133 = arith.mulf %117, %125 : vector<8x128xf32>
    %134 = arith.addf %132, %133 : vector<8x128xf32>
    %135 = math.tanh %134 : vector<8x128xf32>
    %136 = arith.mulf %131, %135 : vector<8x128xf32>
    %c2_i32 = arith.constant 2 : i32
    %137 = arith.truncf %103 : vector<8x128xf32> to vector<8x128xbf16>
    %138 = arith.index_cast %c2_i32 : i32 to index
    %c0_35 = arith.constant 0 : index
    %c0_36 = arith.constant 0 : index
    %139 = vector.load %arg0[%138, %c0_35, %c0_36] : memref<8x8x128xbf16, #tpu.memory_space<vmem>>, vector<1x8x128xbf16>
    %140 = vector.shape_cast %139 : vector<1x8x128xbf16> to vector<8x128xbf16>
    %141 = tpu.concatenate %137, %140 in 1 : vector<8x128xbf16>, vector<8x128xbf16> -> vector<8x256xbf16>
    %c0_37 = arith.constant 0 : index
    %c0_38 = arith.constant 0 : index
    %142 = vector.load %arg2[%c0_37, %c0_38] : memref<256x512xbf16, #tpu.memory_space<vmem>>, vector<256x512xbf16>
    %cst_39 = arith.constant dense<0.000000e+00> : vector<8x512xf32>
    %143 = tpu.matmul %141, %142, %cst_39 {dimension_numbers = #tpu.dot_dimension_numbers<[1], [0], [0], [1], [0, 0, 1, 1], [], []>} : vector<8x256xbf16>, vector<256x512xbf16>, vector<8x512xf32> -> vector<8x512xf32>
    %c0_40 = arith.constant 0 : index
    %c0_41 = arith.constant 0 : index
    %144 = vector.load %arg3[%c0_40, %c0_41] : memref<1x512xf32, #tpu.memory_space<vmem>>, vector<1x512xf32>
    %145 = vector.broadcast %144 : vector<1x512xf32> to vector<8x512xf32>
    %146 = arith.addf %143, %145 : vector<8x512xf32>
    %147 = vector.extract_strided_slice %146 {offsets = [0, 0], sizes = [8, 128], strides = [1, 1]} : vector<8x512xf32> to vector<8x128xf32>
    %148 = arith.negf %147 : vector<8x128xf32>
    %149 = math.exp %148 : vector<8x128xf32>
    %cst_42 = arith.constant 1.000000e+00 : f32
    %150 = vector.broadcast %cst_42 : f32 to vector<8x128xf32>
    %151 = arith.addf %150, %149 : vector<8x128xf32>
    %152 = arith.divf %150, %151 : vector<8x128xf32>
    %153 = vector.extract_strided_slice %146 {offsets = [0, 128], sizes = [8, 128], strides = [1, 1]} : vector<8x512xf32> to vector<8x128xf32>
    %154 = arith.negf %153 : vector<8x128xf32>
    %155 = math.exp %154 : vector<8x128xf32>
    %cst_43 = arith.constant 1.000000e+00 : f32
    %156 = vector.broadcast %cst_43 : f32 to vector<8x128xf32>
    %157 = arith.addf %156, %155 : vector<8x128xf32>
    %158 = arith.divf %156, %157 : vector<8x128xf32>
    %159 = vector.extract_strided_slice %146 {offsets = [0, 256], sizes = [8, 128], strides = [1, 1]} : vector<8x512xf32> to vector<8x128xf32>
    %160 = math.tanh %159 : vector<8x128xf32>
    %161 = vector.extract_strided_slice %146 {offsets = [0, 384], sizes = [8, 128], strides = [1, 1]} : vector<8x512xf32> to vector<8x128xf32>
    %162 = arith.negf %161 : vector<8x128xf32>
    %163 = math.exp %162 : vector<8x128xf32>
    %cst_44 = arith.constant 1.000000e+00 : f32
    %164 = vector.broadcast %cst_44 : f32 to vector<8x128xf32>
    %165 = arith.addf %164, %163 : vector<8x128xf32>
    %166 = arith.divf %164, %165 : vector<8x128xf32>
    %167 = arith.mulf %158, %101 : vector<8x128xf32>
    %168 = arith.mulf %152, %160 : vector<8x128xf32>
    %169 = arith.addf %167, %168 : vector<8x128xf32>
    %170 = math.tanh %169 : vector<8x128xf32>
    %171 = arith.mulf %166, %170 : vector<8x128xf32>
    %172 = arith.truncf %171 : vector<8x128xf32> to vector<8x128xbf16>
    %173 = arith.truncf %136 : vector<8x128xf32> to vector<8x128xbf16>
    %174 = tpu.concatenate %172, %173 in 1 : vector<8x128xbf16>, vector<8x128xbf16> -> vector<8x256xbf16>
    %c0_45 = arith.constant 0 : index
    %c0_46 = arith.constant 0 : index
    %175 = vector.load %arg4[%c0_45, %c0_46] : memref<384x512xbf16, #tpu.memory_space<vmem>>, vector<256x512xbf16>
    %cst_47 = arith.constant dense<0.000000e+00> : vector<8x512xf32>
    %176 = tpu.matmul %174, %175, %cst_47 {dimension_numbers = #tpu.dot_dimension_numbers<[1], [0], [0], [1], [0, 0, 1, 1], [], []>} : vector<8x256xbf16>, vector<256x512xbf16>, vector<8x512xf32> -> vector<8x512xf32>
    %c0_48 = arith.constant 0 : index
    %c0_49 = arith.constant 0 : index
    %177 = vector.load %arg5[%c0_48, %c0_49] : memref<1x512xf32, #tpu.memory_space<vmem>>, vector<1x512xf32>
    %178 = vector.broadcast %177 : vector<1x512xf32> to vector<8x512xf32>
    %179 = arith.addf %176, %178 : vector<8x512xf32>
    %180 = vector.extract_strided_slice %179 {offsets = [0, 0], sizes = [8, 128], strides = [1, 1]} : vector<8x512xf32> to vector<8x128xf32>
    %181 = arith.negf %180 : vector<8x128xf32>
    %182 = math.exp %181 : vector<8x128xf32>
    %cst_50 = arith.constant 1.000000e+00 : f32
    %183 = vector.broadcast %cst_50 : f32 to vector<8x128xf32>
    %184 = arith.addf %183, %182 : vector<8x128xf32>
    %185 = arith.divf %183, %184 : vector<8x128xf32>
    %186 = vector.extract_strided_slice %179 {offsets = [0, 128], sizes = [8, 128], strides = [1, 1]} : vector<8x512xf32> to vector<8x128xf32>
    %187 = arith.negf %186 : vector<8x128xf32>
    %188 = math.exp %187 : vector<8x128xf32>
    %cst_51 = arith.constant 1.000000e+00 : f32
    %189 = vector.broadcast %cst_51 : f32 to vector<8x128xf32>
    %190 = arith.addf %189, %188 : vector<8x128xf32>
    %191 = arith.divf %189, %190 : vector<8x128xf32>
    %192 = vector.extract_strided_slice %179 {offsets = [0, 256], sizes = [8, 128], strides = [1, 1]} : vector<8x512xf32> to vector<8x128xf32>
    %193 = math.tanh %192 : vector<8x128xf32>
    %194 = vector.extract_strided_slice %179 {offsets = [0, 384], sizes = [8, 128], strides = [1, 1]} : vector<8x512xf32> to vector<8x128xf32>
    %195 = arith.negf %194 : vector<8x128xf32>
    %196 = math.exp %195 : vector<8x128xf32>
    %cst_52 = arith.constant 1.000000e+00 : f32
    %197 = vector.broadcast %cst_52 : f32 to vector<8x128xf32>
    %198 = arith.addf %197, %196 : vector<8x128xf32>
    %199 = arith.divf %197, %198 : vector<8x128xf32>
    %200 = arith.mulf %191, %134 : vector<8x128xf32>
    %201 = arith.mulf %185, %193 : vector<8x128xf32>
    %202 = arith.addf %200, %201 : vector<8x128xf32>
    %203 = math.tanh %202 : vector<8x128xf32>
    %204 = arith.mulf %199, %203 : vector<8x128xf32>
    %c3_i32 = arith.constant 3 : i32
    %205 = arith.truncf %171 : vector<8x128xf32> to vector<8x128xbf16>
    %206 = arith.index_cast %c3_i32 : i32 to index
    %c0_53 = arith.constant 0 : index
    %c0_54 = arith.constant 0 : index
    %207 = vector.load %arg0[%206, %c0_53, %c0_54] : memref<8x8x128xbf16, #tpu.memory_space<vmem>>, vector<1x8x128xbf16>
    %208 = vector.shape_cast %207 : vector<1x8x128xbf16> to vector<8x128xbf16>
    %209 = tpu.concatenate %205, %208 in 1 : vector<8x128xbf16>, vector<8x128xbf16> -> vector<8x256xbf16>
    %c0_55 = arith.constant 0 : index
    %c0_56 = arith.constant 0 : index
    %210 = vector.load %arg2[%c0_55, %c0_56] : memref<256x512xbf16, #tpu.memory_space<vmem>>, vector<256x512xbf16>
    %cst_57 = arith.constant dense<0.000000e+00> : vector<8x512xf32>
    %211 = tpu.matmul %209, %210, %cst_57 {dimension_numbers = #tpu.dot_dimension_numbers<[1], [0], [0], [1], [0, 0, 1, 1], [], []>} : vector<8x256xbf16>, vector<256x512xbf16>, vector<8x512xf32> -> vector<8x512xf32>
    %c0_58 = arith.constant 0 : index
    %c0_59 = arith.constant 0 : index
    %212 = vector.load %arg3[%c0_58, %c0_59] : memref<1x512xf32, #tpu.memory_space<vmem>>, vector<1x512xf32>
    %213 = vector.broadcast %212 : vector<1x512xf32> to vector<8x512xf32>
    %214 = arith.addf %211, %213 : vector<8x512xf32>
    %215 = vector.extract_strided_slice %214 {offsets = [0, 0], sizes = [8, 128], strides = [1, 1]} : vector<8x512xf32> to vector<8x128xf32>
    %216 = arith.negf %215 : vector<8x128xf32>
    %217 = math.exp %216 : vector<8x128xf32>
    %cst_60 = arith.constant 1.000000e+00 : f32
    %218 = vector.broadcast %cst_60 : f32 to vector<8x128xf32>
    %219 = arith.addf %218, %217 : vector<8x128xf32>
    %220 = arith.divf %218, %219 : vector<8x128xf32>
    %221 = vector.extract_strided_slice %214 {offsets = [0, 128], sizes = [8, 128], strides = [1, 1]} : vector<8x512xf32> to vector<8x128xf32>
    %222 = arith.negf %221 : vector<8x128xf32>
    %223 = math.exp %222 : vector<8x128xf32>
    %cst_61 = arith.constant 1.000000e+00 : f32
    %224 = vector.broadcast %cst_61 : f32 to vector<8x128xf32>
    %225 = arith.addf %224, %223 : vector<8x128xf32>
    %226 = arith.divf %224, %225 : vector<8x128xf32>
    %227 = vector.extract_strided_slice %214 {offsets = [0, 256], sizes = [8, 128], strides = [1, 1]} : vector<8x512xf32> to vector<8x128xf32>
    %228 = math.tanh %227 : vector<8x128xf32>
    %229 = vector.extract_strided_slice %214 {offsets = [0, 384], sizes = [8, 128], strides = [1, 1]} : vector<8x512xf32> to vector<8x128xf32>
    %230 = arith.negf %229 : vector<8x128xf32>
    %231 = math.exp %230 : vector<8x128xf32>
    %cst_62 = arith.constant 1.000000e+00 : f32
    %232 = vector.broadcast %cst_62 : f32 to vector<8x128xf32>
    %233 = arith.addf %232, %231 : vector<8x128xf32>
    %234 = arith.divf %232, %233 : vector<8x128xf32>
    %235 = arith.mulf %226, %169 : vector<8x128xf32>
    %236 = arith.mulf %220, %228 : vector<8x128xf32>
    %237 = arith.addf %235, %236 : vector<8x128xf32>
    %238 = math.tanh %237 : vector<8x128xf32>
    %239 = arith.mulf %234, %238 : vector<8x128xf32>
    %240 = arith.truncf %239 : vector<8x128xf32> to vector<8x128xbf16>
    %241 = arith.truncf %204 : vector<8x128xf32> to vector<8x128xbf16>
    %242 = tpu.concatenate %240, %241 in 1 : vector<8x128xbf16>, vector<8x128xbf16> -> vector<8x256xbf16>
    %c0_63 = arith.constant 0 : index
    %c0_64 = arith.constant 0 : index
    %243 = vector.load %arg4[%c0_63, %c0_64] : memref<384x512xbf16, #tpu.memory_space<vmem>>, vector<256x512xbf16>
    %cst_65 = arith.constant dense<0.000000e+00> : vector<8x512xf32>
    %244 = tpu.matmul %242, %243, %cst_65 {dimension_numbers = #tpu.dot_dimension_numbers<[1], [0], [0], [1], [0, 0, 1, 1], [], []>} : vector<8x256xbf16>, vector<256x512xbf16>, vector<8x512xf32> -> vector<8x512xf32>
    %c0_66 = arith.constant 0 : index
    %c0_67 = arith.constant 0 : index
    %245 = vector.load %arg5[%c0_66, %c0_67] : memref<1x512xf32, #tpu.memory_space<vmem>>, vector<1x512xf32>
    %246 = vector.broadcast %245 : vector<1x512xf32> to vector<8x512xf32>
    %247 = arith.addf %244, %246 : vector<8x512xf32>
    %248 = vector.extract_strided_slice %247 {offsets = [0, 0], sizes = [8, 128], strides = [1, 1]} : vector<8x512xf32> to vector<8x128xf32>
    %249 = arith.negf %248 : vector<8x128xf32>
    %250 = math.exp %249 : vector<8x128xf32>
    %cst_68 = arith.constant 1.000000e+00 : f32
    %251 = vector.broadcast %cst_68 : f32 to vector<8x128xf32>
    %252 = arith.addf %251, %250 : vector<8x128xf32>
    %253 = arith.divf %251, %252 : vector<8x128xf32>
    %254 = vector.extract_strided_slice %247 {offsets = [0, 128], sizes = [8, 128], strides = [1, 1]} : vector<8x512xf32> to vector<8x128xf32>
    %255 = arith.negf %254 : vector<8x128xf32>
    %256 = math.exp %255 : vector<8x128xf32>
    %cst_69 = arith.constant 1.000000e+00 : f32
    %257 = vector.broadcast %cst_69 : f32 to vector<8x128xf32>
    %258 = arith.addf %257, %256 : vector<8x128xf32>
    %259 = arith.divf %257, %258 : vector<8x128xf32>
    %260 = vector.extract_strided_slice %247 {offsets = [0, 256], sizes = [8, 128], strides = [1, 1]} : vector<8x512xf32> to vector<8x128xf32>
    %261 = math.tanh %260 : vector<8x128xf32>
    %262 = vector.extract_strided_slice %247 {offsets = [0, 384], sizes = [8, 128], strides = [1, 1]} : vector<8x512xf32> to vector<8x128xf32>
    %263 = arith.negf %262 : vector<8x128xf32>
    %264 = math.exp %263 : vector<8x128xf32>
    %cst_70 = arith.constant 1.000000e+00 : f32
    %265 = vector.broadcast %cst_70 : f32 to vector<8x128xf32>
    %266 = arith.addf %265, %264 : vector<8x128xf32>
    %267 = arith.divf %265, %266 : vector<8x128xf32>
    %268 = arith.mulf %259, %202 : vector<8x128xf32>
    %269 = arith.mulf %253, %261 : vector<8x128xf32>
    %270 = arith.addf %268, %269 : vector<8x128xf32>
    %271 = math.tanh %270 : vector<8x128xf32>
    %272 = arith.mulf %267, %271 : vector<8x128xf32>
    %c4_i32 = arith.constant 4 : i32
    %273 = arith.truncf %239 : vector<8x128xf32> to vector<8x128xbf16>
    %274 = arith.index_cast %c4_i32 : i32 to index
    %c0_71 = arith.constant 0 : index
    %c0_72 = arith.constant 0 : index
    %275 = vector.load %arg0[%274, %c0_71, %c0_72] : memref<8x8x128xbf16, #tpu.memory_space<vmem>>, vector<1x8x128xbf16>
    %276 = vector.shape_cast %275 : vector<1x8x128xbf16> to vector<8x128xbf16>
    %277 = tpu.concatenate %273, %276 in 1 : vector<8x128xbf16>, vector<8x128xbf16> -> vector<8x256xbf16>
    %c0_73 = arith.constant 0 : index
    %c0_74 = arith.constant 0 : index
    %278 = vector.load %arg2[%c0_73, %c0_74] : memref<256x512xbf16, #tpu.memory_space<vmem>>, vector<256x512xbf16>
    %cst_75 = arith.constant dense<0.000000e+00> : vector<8x512xf32>
    %279 = tpu.matmul %277, %278, %cst_75 {dimension_numbers = #tpu.dot_dimension_numbers<[1], [0], [0], [1], [0, 0, 1, 1], [], []>} : vector<8x256xbf16>, vector<256x512xbf16>, vector<8x512xf32> -> vector<8x512xf32>
    %c0_76 = arith.constant 0 : index
    %c0_77 = arith.constant 0 : index
    %280 = vector.load %arg3[%c0_76, %c0_77] : memref<1x512xf32, #tpu.memory_space<vmem>>, vector<1x512xf32>
    %281 = vector.broadcast %280 : vector<1x512xf32> to vector<8x512xf32>
    %282 = arith.addf %279, %281 : vector<8x512xf32>
    %283 = vector.extract_strided_slice %282 {offsets = [0, 0], sizes = [8, 128], strides = [1, 1]} : vector<8x512xf32> to vector<8x128xf32>
    %284 = arith.negf %283 : vector<8x128xf32>
    %285 = math.exp %284 : vector<8x128xf32>
    %cst_78 = arith.constant 1.000000e+00 : f32
    %286 = vector.broadcast %cst_78 : f32 to vector<8x128xf32>
    %287 = arith.addf %286, %285 : vector<8x128xf32>
    %288 = arith.divf %286, %287 : vector<8x128xf32>
    %289 = vector.extract_strided_slice %282 {offsets = [0, 128], sizes = [8, 128], strides = [1, 1]} : vector<8x512xf32> to vector<8x128xf32>
    %290 = arith.negf %289 : vector<8x128xf32>
    %291 = math.exp %290 : vector<8x128xf32>
    %cst_79 = arith.constant 1.000000e+00 : f32
    %292 = vector.broadcast %cst_79 : f32 to vector<8x128xf32>
    %293 = arith.addf %292, %291 : vector<8x128xf32>
    %294 = arith.divf %292, %293 : vector<8x128xf32>
    %295 = vector.extract_strided_slice %282 {offsets = [0, 256], sizes = [8, 128], strides = [1, 1]} : vector<8x512xf32> to vector<8x128xf32>
    %296 = math.tanh %295 : vector<8x128xf32>
    %297 = vector.extract_strided_slice %282 {offsets = [0, 384], sizes = [8, 128], strides = [1, 1]} : vector<8x512xf32> to vector<8x128xf32>
    %298 = arith.negf %297 : vector<8x128xf32>
    %299 = math.exp %298 : vector<8x128xf32>
    %cst_80 = arith.constant 1.000000e+00 : f32
    %300 = vector.broadcast %cst_80 : f32 to vector<8x128xf32>
    %301 = arith.addf %300, %299 : vector<8x128xf32>
    %302 = arith.divf %300, %301 : vector<8x128xf32>
    %303 = arith.mulf %294, %237 : vector<8x128xf32>
    %304 = arith.mulf %288, %296 : vector<8x128xf32>
    %305 = arith.addf %303, %304 : vector<8x128xf32>
    %306 = math.tanh %305 : vector<8x128xf32>
    %307 = arith.mulf %302, %306 : vector<8x128xf32>
    %308 = arith.truncf %307 : vector<8x128xf32> to vector<8x128xbf16>
    %309 = arith.truncf %272 : vector<8x128xf32> to vector<8x128xbf16>
    %310 = tpu.concatenate %308, %309 in 1 : vector<8x128xbf16>, vector<8x128xbf16> -> vector<8x256xbf16>
    %c0_81 = arith.constant 0 : index
    %c0_82 = arith.constant 0 : index
    %311 = vector.load %arg4[%c0_81, %c0_82] : memref<384x512xbf16, #tpu.memory_space<vmem>>, vector<256x512xbf16>
    %cst_83 = arith.constant dense<0.000000e+00> : vector<8x512xf32>
    %312 = tpu.matmul %310, %311, %cst_83 {dimension_numbers = #tpu.dot_dimension_numbers<[1], [0], [0], [1], [0, 0, 1, 1], [], []>} : vector<8x256xbf16>, vector<256x512xbf16>, vector<8x512xf32> -> vector<8x512xf32>
    %c0_84 = arith.constant 0 : index
    %c0_85 = arith.constant 0 : index
    %313 = vector.load %arg5[%c0_84, %c0_85] : memref<1x512xf32, #tpu.memory_space<vmem>>, vector<1x512xf32>
    %314 = vector.broadcast %313 : vector<1x512xf32> to vector<8x512xf32>
    %315 = arith.addf %312, %314 : vector<8x512xf32>
    %316 = vector.extract_strided_slice %315 {offsets = [0, 0], sizes = [8, 128], strides = [1, 1]} : vector<8x512xf32> to vector<8x128xf32>
    %317 = arith.negf %316 : vector<8x128xf32>
    %318 = math.exp %317 : vector<8x128xf32>
    %cst_86 = arith.constant 1.000000e+00 : f32
    %319 = vector.broadcast %cst_86 : f32 to vector<8x128xf32>
    %320 = arith.addf %319, %318 : vector<8x128xf32>
    %321 = arith.divf %319, %320 : vector<8x128xf32>
    %322 = vector.extract_strided_slice %315 {offsets = [0, 128], sizes = [8, 128], strides = [1, 1]} : vector<8x512xf32> to vector<8x128xf32>
    %323 = arith.negf %322 : vector<8x128xf32>
    %324 = math.exp %323 : vector<8x128xf32>
    %cst_87 = arith.constant 1.000000e+00 : f32
    %325 = vector.broadcast %cst_87 : f32 to vector<8x128xf32>
    %326 = arith.addf %325, %324 : vector<8x128xf32>
    %327 = arith.divf %325, %326 : vector<8x128xf32>
    %328 = vector.extract_strided_slice %315 {offsets = [0, 256], sizes = [8, 128], strides = [1, 1]} : vector<8x512xf32> to vector<8x128xf32>
    %329 = math.tanh %328 : vector<8x128xf32>
    %330 = vector.extract_strided_slice %315 {offsets = [0, 384], sizes = [8, 128], strides = [1, 1]} : vector<8x512xf32> to vector<8x128xf32>
    %331 = arith.negf %330 : vector<8x128xf32>
    %332 = math.exp %331 : vector<8x128xf32>
    %cst_88 = arith.constant 1.000000e+00 : f32
    %333 = vector.broadcast %cst_88 : f32 to vector<8x128xf32>
    %334 = arith.addf %333, %332 : vector<8x128xf32>
    %335 = arith.divf %333, %334 : vector<8x128xf32>
    %336 = arith.mulf %327, %270 : vector<8x128xf32>
    %337 = arith.mulf %321, %329 : vector<8x128xf32>
    %338 = arith.addf %336, %337 : vector<8x128xf32>
    %339 = math.tanh %338 : vector<8x128xf32>
    %340 = arith.mulf %335, %339 : vector<8x128xf32>
    %c5_i32 = arith.constant 5 : i32
    %341 = arith.truncf %307 : vector<8x128xf32> to vector<8x128xbf16>
    %342 = arith.index_cast %c5_i32 : i32 to index
    %c0_89 = arith.constant 0 : index
    %c0_90 = arith.constant 0 : index
    %343 = vector.load %arg0[%342, %c0_89, %c0_90] : memref<8x8x128xbf16, #tpu.memory_space<vmem>>, vector<1x8x128xbf16>
    %344 = vector.shape_cast %343 : vector<1x8x128xbf16> to vector<8x128xbf16>
    %345 = tpu.concatenate %341, %344 in 1 : vector<8x128xbf16>, vector<8x128xbf16> -> vector<8x256xbf16>
    %c0_91 = arith.constant 0 : index
    %c0_92 = arith.constant 0 : index
    %346 = vector.load %arg2[%c0_91, %c0_92] : memref<256x512xbf16, #tpu.memory_space<vmem>>, vector<256x512xbf16>
    %cst_93 = arith.constant dense<0.000000e+00> : vector<8x512xf32>
    %347 = tpu.matmul %345, %346, %cst_93 {dimension_numbers = #tpu.dot_dimension_numbers<[1], [0], [0], [1], [0, 0, 1, 1], [], []>} : vector<8x256xbf16>, vector<256x512xbf16>, vector<8x512xf32> -> vector<8x512xf32>
    %c0_94 = arith.constant 0 : index
    %c0_95 = arith.constant 0 : index
    %348 = vector.load %arg3[%c0_94, %c0_95] : memref<1x512xf32, #tpu.memory_space<vmem>>, vector<1x512xf32>
    %349 = vector.broadcast %348 : vector<1x512xf32> to vector<8x512xf32>
    %350 = arith.addf %347, %349 : vector<8x512xf32>
    %351 = vector.extract_strided_slice %350 {offsets = [0, 0], sizes = [8, 128], strides = [1, 1]} : vector<8x512xf32> to vector<8x128xf32>
    %352 = arith.negf %351 : vector<8x128xf32>
    %353 = math.exp %352 : vector<8x128xf32>
    %cst_96 = arith.constant 1.000000e+00 : f32
    %354 = vector.broadcast %cst_96 : f32 to vector<8x128xf32>
    %355 = arith.addf %354, %353 : vector<8x128xf32>
    %356 = arith.divf %354, %355 : vector<8x128xf32>
    %357 = vector.extract_strided_slice %350 {offsets = [0, 128], sizes = [8, 128], strides = [1, 1]} : vector<8x512xf32> to vector<8x128xf32>
    %358 = arith.negf %357 : vector<8x128xf32>
    %359 = math.exp %358 : vector<8x128xf32>
    %cst_97 = arith.constant 1.000000e+00 : f32
    %360 = vector.broadcast %cst_97 : f32 to vector<8x128xf32>
    %361 = arith.addf %360, %359 : vector<8x128xf32>
    %362 = arith.divf %360, %361 : vector<8x128xf32>
    %363 = vector.extract_strided_slice %350 {offsets = [0, 256], sizes = [8, 128], strides = [1, 1]} : vector<8x512xf32> to vector<8x128xf32>
    %364 = math.tanh %363 : vector<8x128xf32>
    %365 = vector.extract_strided_slice %350 {offsets = [0, 384], sizes = [8, 128], strides = [1, 1]} : vector<8x512xf32> to vector<8x128xf32>
    %366 = arith.negf %365 : vector<8x128xf32>
    %367 = math.exp %366 : vector<8x128xf32>
    %cst_98 = arith.constant 1.000000e+00 : f32
    %368 = vector.broadcast %cst_98 : f32 to vector<8x128xf32>
    %369 = arith.addf %368, %367 : vector<8x128xf32>
    %370 = arith.divf %368, %369 : vector<8x128xf32>
    %371 = arith.mulf %362, %305 : vector<8x128xf32>
    %372 = arith.mulf %356, %364 : vector<8x128xf32>
    %373 = arith.addf %371, %372 : vector<8x128xf32>
    %374 = math.tanh %373 : vector<8x128xf32>
    %375 = arith.mulf %370, %374 : vector<8x128xf32>
    %376 = arith.truncf %375 : vector<8x128xf32> to vector<8x128xbf16>
    %377 = arith.truncf %340 : vector<8x128xf32> to vector<8x128xbf16>
    %378 = tpu.concatenate %376, %377 in 1 : vector<8x128xbf16>, vector<8x128xbf16> -> vector<8x256xbf16>
    %c0_99 = arith.constant 0 : index
    %c0_100 = arith.constant 0 : index
    %379 = vector.load %arg4[%c0_99, %c0_100] : memref<384x512xbf16, #tpu.memory_space<vmem>>, vector<256x512xbf16>
    %cst_101 = arith.constant dense<0.000000e+00> : vector<8x512xf32>
    %380 = tpu.matmul %378, %379, %cst_101 {dimension_numbers = #tpu.dot_dimension_numbers<[1], [0], [0], [1], [0, 0, 1, 1], [], []>} : vector<8x256xbf16>, vector<256x512xbf16>, vector<8x512xf32> -> vector<8x512xf32>
    %c0_102 = arith.constant 0 : index
    %c0_103 = arith.constant 0 : index
    %381 = vector.load %arg5[%c0_102, %c0_103] : memref<1x512xf32, #tpu.memory_space<vmem>>, vector<1x512xf32>
    %382 = vector.broadcast %381 : vector<1x512xf32> to vector<8x512xf32>
    %383 = arith.addf %380, %382 : vector<8x512xf32>
    %384 = vector.extract_strided_slice %383 {offsets = [0, 0], sizes = [8, 128], strides = [1, 1]} : vector<8x512xf32> to vector<8x128xf32>
    %385 = arith.negf %384 : vector<8x128xf32>
    %386 = math.exp %385 : vector<8x128xf32>
    %cst_104 = arith.constant 1.000000e+00 : f32
    %387 = vector.broadcast %cst_104 : f32 to vector<8x128xf32>
    %388 = arith.addf %387, %386 : vector<8x128xf32>
    %389 = arith.divf %387, %388 : vector<8x128xf32>
    %390 = vector.extract_strided_slice %383 {offsets = [0, 128], sizes = [8, 128], strides = [1, 1]} : vector<8x512xf32> to vector<8x128xf32>
    %391 = arith.negf %390 : vector<8x128xf32>
    %392 = math.exp %391 : vector<8x128xf32>
    %cst_105 = arith.constant 1.000000e+00 : f32
    %393 = vector.broadcast %cst_105 : f32 to vector<8x128xf32>
    %394 = arith.addf %393, %392 : vector<8x128xf32>
    %395 = arith.divf %393, %394 : vector<8x128xf32>
    %396 = vector.extract_strided_slice %383 {offsets = [0, 256], sizes = [8, 128], strides = [1, 1]} : vector<8x512xf32> to vector<8x128xf32>
    %397 = math.tanh %396 : vector<8x128xf32>
    %398 = vector.extract_strided_slice %383 {offsets = [0, 384], sizes = [8, 128], strides = [1, 1]} : vector<8x512xf32> to vector<8x128xf32>
    %399 = arith.negf %398 : vector<8x128xf32>
    %400 = math.exp %399 : vector<8x128xf32>
    %cst_106 = arith.constant 1.000000e+00 : f32
    %401 = vector.broadcast %cst_106 : f32 to vector<8x128xf32>
    %402 = arith.addf %401, %400 : vector<8x128xf32>
    %403 = arith.divf %401, %402 : vector<8x128xf32>
    %404 = arith.mulf %395, %338 : vector<8x128xf32>
    %405 = arith.mulf %389, %397 : vector<8x128xf32>
    %406 = arith.addf %404, %405 : vector<8x128xf32>
    %407 = math.tanh %406 : vector<8x128xf32>
    %408 = arith.mulf %403, %407 : vector<8x128xf32>
    %c6_i32 = arith.constant 6 : i32
    %409 = arith.truncf %375 : vector<8x128xf32> to vector<8x128xbf16>
    %410 = arith.index_cast %c6_i32 : i32 to index
    %c0_107 = arith.constant 0 : index
    %c0_108 = arith.constant 0 : index
    %411 = vector.load %arg0[%410, %c0_107, %c0_108] : memref<8x8x128xbf16, #tpu.memory_space<vmem>>, vector<1x8x128xbf16>
    %412 = vector.shape_cast %411 : vector<1x8x128xbf16> to vector<8x128xbf16>
    %413 = tpu.concatenate %409, %412 in 1 : vector<8x128xbf16>, vector<8x128xbf16> -> vector<8x256xbf16>
    %c0_109 = arith.constant 0 : index
    %c0_110 = arith.constant 0 : index
    %414 = vector.load %arg2[%c0_109, %c0_110] : memref<256x512xbf16, #tpu.memory_space<vmem>>, vector<256x512xbf16>
    %cst_111 = arith.constant dense<0.000000e+00> : vector<8x512xf32>
    %415 = tpu.matmul %413, %414, %cst_111 {dimension_numbers = #tpu.dot_dimension_numbers<[1], [0], [0], [1], [0, 0, 1, 1], [], []>} : vector<8x256xbf16>, vector<256x512xbf16>, vector<8x512xf32> -> vector<8x512xf32>
    %c0_112 = arith.constant 0 : index
    %c0_113 = arith.constant 0 : index
    %416 = vector.load %arg3[%c0_112, %c0_113] : memref<1x512xf32, #tpu.memory_space<vmem>>, vector<1x512xf32>
    %417 = vector.broadcast %416 : vector<1x512xf32> to vector<8x512xf32>
    %418 = arith.addf %415, %417 : vector<8x512xf32>
    %419 = vector.extract_strided_slice %418 {offsets = [0, 0], sizes = [8, 128], strides = [1, 1]} : vector<8x512xf32> to vector<8x128xf32>
    %420 = arith.negf %419 : vector<8x128xf32>
    %421 = math.exp %420 : vector<8x128xf32>
    %cst_114 = arith.constant 1.000000e+00 : f32
    %422 = vector.broadcast %cst_114 : f32 to vector<8x128xf32>
    %423 = arith.addf %422, %421 : vector<8x128xf32>
    %424 = arith.divf %422, %423 : vector<8x128xf32>
    %425 = vector.extract_strided_slice %418 {offsets = [0, 128], sizes = [8, 128], strides = [1, 1]} : vector<8x512xf32> to vector<8x128xf32>
    %426 = arith.negf %425 : vector<8x128xf32>
    %427 = math.exp %426 : vector<8x128xf32>
    %cst_115 = arith.constant 1.000000e+00 : f32
    %428 = vector.broadcast %cst_115 : f32 to vector<8x128xf32>
    %429 = arith.addf %428, %427 : vector<8x128xf32>
    %430 = arith.divf %428, %429 : vector<8x128xf32>
    %431 = vector.extract_strided_slice %418 {offsets = [0, 256], sizes = [8, 128], strides = [1, 1]} : vector<8x512xf32> to vector<8x128xf32>
    %432 = math.tanh %431 : vector<8x128xf32>
    %433 = vector.extract_strided_slice %418 {offsets = [0, 384], sizes = [8, 128], strides = [1, 1]} : vector<8x512xf32> to vector<8x128xf32>
    %434 = arith.negf %433 : vector<8x128xf32>
    %435 = math.exp %434 : vector<8x128xf32>
    %cst_116 = arith.constant 1.000000e+00 : f32
    %436 = vector.broadcast %cst_116 : f32 to vector<8x128xf32>
    %437 = arith.addf %436, %435 : vector<8x128xf32>
    %438 = arith.divf %436, %437 : vector<8x128xf32>
    %439 = arith.mulf %430, %373 : vector<8x128xf32>
    %440 = arith.mulf %424, %432 : vector<8x128xf32>
    %441 = arith.addf %439, %440 : vector<8x128xf32>
    %442 = math.tanh %441 : vector<8x128xf32>
    %443 = arith.mulf %438, %442 : vector<8x128xf32>
    %444 = arith.truncf %443 : vector<8x128xf32> to vector<8x128xbf16>
    %445 = arith.truncf %408 : vector<8x128xf32> to vector<8x128xbf16>
    %446 = tpu.concatenate %444, %445 in 1 : vector<8x128xbf16>, vector<8x128xbf16> -> vector<8x256xbf16>
    %c0_117 = arith.constant 0 : index
    %c0_118 = arith.constant 0 : index
    %447 = vector.load %arg4[%c0_117, %c0_118] : memref<384x512xbf16, #tpu.memory_space<vmem>>, vector<256x512xbf16>
    %cst_119 = arith.constant dense<0.000000e+00> : vector<8x512xf32>
    %448 = tpu.matmul %446, %447, %cst_119 {dimension_numbers = #tpu.dot_dimension_numbers<[1], [0], [0], [1], [0, 0, 1, 1], [], []>} : vector<8x256xbf16>, vector<256x512xbf16>, vector<8x512xf32> -> vector<8x512xf32>
    %c0_120 = arith.constant 0 : index
    %c0_121 = arith.constant 0 : index
    %449 = vector.load %arg5[%c0_120, %c0_121] : memref<1x512xf32, #tpu.memory_space<vmem>>, vector<1x512xf32>
    %450 = vector.broadcast %449 : vector<1x512xf32> to vector<8x512xf32>
    %451 = arith.addf %448, %450 : vector<8x512xf32>
    %452 = vector.extract_strided_slice %451 {offsets = [0, 0], sizes = [8, 128], strides = [1, 1]} : vector<8x512xf32> to vector<8x128xf32>
    %453 = arith.negf %452 : vector<8x128xf32>
    %454 = math.exp %453 : vector<8x128xf32>
    %cst_122 = arith.constant 1.000000e+00 : f32
    %455 = vector.broadcast %cst_122 : f32 to vector<8x128xf32>
    %456 = arith.addf %455, %454 : vector<8x128xf32>
    %457 = arith.divf %455, %456 : vector<8x128xf32>
    %458 = vector.extract_strided_slice %451 {offsets = [0, 128], sizes = [8, 128], strides = [1, 1]} : vector<8x512xf32> to vector<8x128xf32>
    %459 = arith.negf %458 : vector<8x128xf32>
    %460 = math.exp %459 : vector<8x128xf32>
    %cst_123 = arith.constant 1.000000e+00 : f32
    %461 = vector.broadcast %cst_123 : f32 to vector<8x128xf32>
    %462 = arith.addf %461, %460 : vector<8x128xf32>
    %463 = arith.divf %461, %462 : vector<8x128xf32>
    %464 = vector.extract_strided_slice %451 {offsets = [0, 256], sizes = [8, 128], strides = [1, 1]} : vector<8x512xf32> to vector<8x128xf32>
    %465 = math.tanh %464 : vector<8x128xf32>
    %466 = vector.extract_strided_slice %451 {offsets = [0, 384], sizes = [8, 128], strides = [1, 1]} : vector<8x512xf32> to vector<8x128xf32>
    %467 = arith.negf %466 : vector<8x128xf32>
    %468 = math.exp %467 : vector<8x128xf32>
    %cst_124 = arith.constant 1.000000e+00 : f32
    %469 = vector.broadcast %cst_124 : f32 to vector<8x128xf32>
    %470 = arith.addf %469, %468 : vector<8x128xf32>
    %471 = arith.divf %469, %470 : vector<8x128xf32>
    %472 = arith.mulf %463, %406 : vector<8x128xf32>
    %473 = arith.mulf %457, %465 : vector<8x128xf32>
    %474 = arith.addf %472, %473 : vector<8x128xf32>
    %475 = math.tanh %474 : vector<8x128xf32>
    %476 = arith.mulf %471, %475 : vector<8x128xf32>
    %c7_i32 = arith.constant 7 : i32
    %477 = arith.truncf %443 : vector<8x128xf32> to vector<8x128xbf16>
    %478 = arith.index_cast %c7_i32 : i32 to index
    %c0_125 = arith.constant 0 : index
    %c0_126 = arith.constant 0 : index
    %479 = vector.load %arg0[%478, %c0_125, %c0_126] : memref<8x8x128xbf16, #tpu.memory_space<vmem>>, vector<1x8x128xbf16>
    %480 = vector.shape_cast %479 : vector<1x8x128xbf16> to vector<8x128xbf16>
    %481 = tpu.concatenate %477, %480 in 1 : vector<8x128xbf16>, vector<8x128xbf16> -> vector<8x256xbf16>
    %c0_127 = arith.constant 0 : index
    %c0_128 = arith.constant 0 : index
    %482 = vector.load %arg2[%c0_127, %c0_128] : memref<256x512xbf16, #tpu.memory_space<vmem>>, vector<256x512xbf16>
    %cst_129 = arith.constant dense<0.000000e+00> : vector<8x512xf32>
    %483 = tpu.matmul %481, %482, %cst_129 {dimension_numbers = #tpu.dot_dimension_numbers<[1], [0], [0], [1], [0, 0, 1, 1], [], []>} : vector<8x256xbf16>, vector<256x512xbf16>, vector<8x512xf32> -> vector<8x512xf32>
    %c0_130 = arith.constant 0 : index
    %c0_131 = arith.constant 0 : index
    %484 = vector.load %arg3[%c0_130, %c0_131] : memref<1x512xf32, #tpu.memory_space<vmem>>, vector<1x512xf32>
    %485 = vector.broadcast %484 : vector<1x512xf32> to vector<8x512xf32>
    %486 = arith.addf %483, %485 : vector<8x512xf32>
    %487 = vector.extract_strided_slice %486 {offsets = [0, 0], sizes = [8, 128], strides = [1, 1]} : vector<8x512xf32> to vector<8x128xf32>
    %488 = arith.negf %487 : vector<8x128xf32>
    %489 = math.exp %488 : vector<8x128xf32>
    %cst_132 = arith.constant 1.000000e+00 : f32
    %490 = vector.broadcast %cst_132 : f32 to vector<8x128xf32>
    %491 = arith.addf %490, %489 : vector<8x128xf32>
    %492 = arith.divf %490, %491 : vector<8x128xf32>
    %493 = vector.extract_strided_slice %486 {offsets = [0, 128], sizes = [8, 128], strides = [1, 1]} : vector<8x512xf32> to vector<8x128xf32>
    %494 = arith.negf %493 : vector<8x128xf32>
    %495 = math.exp %494 : vector<8x128xf32>
    %cst_133 = arith.constant 1.000000e+00 : f32
    %496 = vector.broadcast %cst_133 : f32 to vector<8x128xf32>
    %497 = arith.addf %496, %495 : vector<8x128xf32>
    %498 = arith.divf %496, %497 : vector<8x128xf32>
    %499 = vector.extract_strided_slice %486 {offsets = [0, 256], sizes = [8, 128], strides = [1, 1]} : vector<8x512xf32> to vector<8x128xf32>
    %500 = math.tanh %499 : vector<8x128xf32>
    %501 = vector.extract_strided_slice %486 {offsets = [0, 384], sizes = [8, 128], strides = [1, 1]} : vector<8x512xf32> to vector<8x128xf32>
    %502 = arith.negf %501 : vector<8x128xf32>
    %503 = math.exp %502 : vector<8x128xf32>
    %cst_134 = arith.constant 1.000000e+00 : f32
    %504 = vector.broadcast %cst_134 : f32 to vector<8x128xf32>
    %505 = arith.addf %504, %503 : vector<8x128xf32>
    %506 = arith.divf %504, %505 : vector<8x128xf32>
    %507 = arith.mulf %498, %441 : vector<8x128xf32>
    %508 = arith.mulf %492, %500 : vector<8x128xf32>
    %509 = arith.addf %507, %508 : vector<8x128xf32>
    %510 = math.tanh %509 : vector<8x128xf32>
    %511 = arith.mulf %506, %510 : vector<8x128xf32>
    %512 = arith.truncf %511 : vector<8x128xf32> to vector<8x128xbf16>
    %513 = arith.truncf %476 : vector<8x128xf32> to vector<8x128xbf16>
    %514 = tpu.concatenate %512, %513 in 1 : vector<8x128xbf16>, vector<8x128xbf16> -> vector<8x256xbf16>
    %c0_135 = arith.constant 0 : index
    %c0_136 = arith.constant 0 : index
    %515 = vector.load %arg4[%c0_135, %c0_136] : memref<384x512xbf16, #tpu.memory_space<vmem>>, vector<256x512xbf16>
    %cst_137 = arith.constant dense<0.000000e+00> : vector<8x512xf32>
    %516 = tpu.matmul %514, %515, %cst_137 {dimension_numbers = #tpu.dot_dimension_numbers<[1], [0], [0], [1], [0, 0, 1, 1], [], []>} : vector<8x256xbf16>, vector<256x512xbf16>, vector<8x512xf32> -> vector<8x512xf32>
    %c0_138 = arith.constant 0 : index
    %c0_139 = arith.constant 0 : index
    %517 = vector.load %arg5[%c0_138, %c0_139] : memref<1x512xf32, #tpu.memory_space<vmem>>, vector<1x512xf32>
    %518 = vector.broadcast %517 : vector<1x512xf32> to vector<8x512xf32>
    %519 = arith.addf %516, %518 : vector<8x512xf32>
    %520 = vector.extract_strided_slice %519 {offsets = [0, 0], sizes = [8, 128], strides = [1, 1]} : vector<8x512xf32> to vector<8x128xf32>
    %521 = arith.negf %520 : vector<8x128xf32>
    %522 = math.exp %521 : vector<8x128xf32>
    %cst_140 = arith.constant 1.000000e+00 : f32
    %523 = vector.broadcast %cst_140 : f32 to vector<8x128xf32>
    %524 = arith.addf %523, %522 : vector<8x128xf32>
    %525 = arith.divf %523, %524 : vector<8x128xf32>
    %526 = vector.extract_strided_slice %519 {offsets = [0, 128], sizes = [8, 128], strides = [1, 1]} : vector<8x512xf32> to vector<8x128xf32>
    %527 = arith.negf %526 : vector<8x128xf32>
    %528 = math.exp %527 : vector<8x128xf32>
    %cst_141 = arith.constant 1.000000e+00 : f32
    %529 = vector.broadcast %cst_141 : f32 to vector<8x128xf32>
    %530 = arith.addf %529, %528 : vector<8x128xf32>
    %531 = arith.divf %529, %530 : vector<8x128xf32>
    %532 = vector.extract_strided_slice %519 {offsets = [0, 256], sizes = [8, 128], strides = [1, 1]} : vector<8x512xf32> to vector<8x128xf32>
    %533 = math.tanh %532 : vector<8x128xf32>
    %534 = vector.extract_strided_slice %519 {offsets = [0, 384], sizes = [8, 128], strides = [1, 1]} : vector<8x512xf32> to vector<8x128xf32>
    %535 = arith.negf %534 : vector<8x128xf32>
    %536 = math.exp %535 : vector<8x128xf32>
    %cst_142 = arith.constant 1.000000e+00 : f32
    %537 = vector.broadcast %cst_142 : f32 to vector<8x128xf32>
    %538 = arith.addf %537, %536 : vector<8x128xf32>
    %539 = arith.divf %537, %538 : vector<8x128xf32>
    %540 = arith.mulf %531, %474 : vector<8x128xf32>
    %541 = arith.mulf %525, %533 : vector<8x128xf32>
    %542 = arith.addf %540, %541 : vector<8x128xf32>
    %543 = math.tanh %542 : vector<8x128xf32>
    %544 = arith.mulf %539, %543 : vector<8x128xf32>
    %c8_i32 = arith.constant 8 : i32
    %c0_i32_143 = arith.constant 0 : i32
    %545 = arith.truncf %511 : vector<8x128xf32> to vector<8x128xbf16>
    %c0_144 = arith.constant 0 : index
    %c0_145 = arith.constant 0 : index
    %546 = vector.load %arg2[%c0_144, %c0_145] : memref<256x512xbf16, #tpu.memory_space<vmem>>, vector<128x512xbf16>
    %cst_146 = arith.constant dense<0.000000e+00> : vector<8x512xf32>
    %547 = tpu.matmul %545, %546, %cst_146 {dimension_numbers = #tpu.dot_dimension_numbers<[1], [0], [0], [1], [0, 0, 1, 1], [], []>} : vector<8x128xbf16>, vector<128x512xbf16>, vector<8x512xf32> -> vector<8x512xf32>
    %c0_147 = arith.constant 0 : index
    %c0_148 = arith.constant 0 : index
    %548 = vector.load %arg3[%c0_147, %c0_148] : memref<1x512xf32, #tpu.memory_space<vmem>>, vector<1x512xf32>
    %549 = vector.broadcast %548 : vector<1x512xf32> to vector<8x512xf32>
    %550 = arith.addf %547, %549 : vector<8x512xf32>
    %551 = vector.extract_strided_slice %550 {offsets = [0, 0], sizes = [8, 128], strides = [1, 1]} : vector<8x512xf32> to vector<8x128xf32>
    %552 = arith.negf %551 : vector<8x128xf32>
    %553 = math.exp %552 : vector<8x128xf32>
    %cst_149 = arith.constant 1.000000e+00 : f32
    %554 = vector.broadcast %cst_149 : f32 to vector<8x128xf32>
    %555 = arith.addf %554, %553 : vector<8x128xf32>
    %556 = arith.divf %554, %555 : vector<8x128xf32>
    %557 = vector.extract_strided_slice %550 {offsets = [0, 128], sizes = [8, 128], strides = [1, 1]} : vector<8x512xf32> to vector<8x128xf32>
    %558 = arith.negf %557 : vector<8x128xf32>
    %559 = math.exp %558 : vector<8x128xf32>
    %cst_150 = arith.constant 1.000000e+00 : f32
    %560 = vector.broadcast %cst_150 : f32 to vector<8x128xf32>
    %561 = arith.addf %560, %559 : vector<8x128xf32>
    %562 = arith.divf %560, %561 : vector<8x128xf32>
    %563 = vector.extract_strided_slice %550 {offsets = [0, 256], sizes = [8, 128], strides = [1, 1]} : vector<8x512xf32> to vector<8x128xf32>
    %564 = math.tanh %563 : vector<8x128xf32>
    %565 = vector.extract_strided_slice %550 {offsets = [0, 384], sizes = [8, 128], strides = [1, 1]} : vector<8x512xf32> to vector<8x128xf32>
    %566 = arith.negf %565 : vector<8x128xf32>
    %567 = math.exp %566 : vector<8x128xf32>
    %cst_151 = arith.constant 1.000000e+00 : f32
    %568 = vector.broadcast %cst_151 : f32 to vector<8x128xf32>
    %569 = arith.addf %568, %567 : vector<8x128xf32>
    %570 = arith.divf %568, %569 : vector<8x128xf32>
    %571 = arith.mulf %562, %509 : vector<8x128xf32>
    %572 = arith.mulf %556, %564 : vector<8x128xf32>
    %573 = arith.addf %571, %572 : vector<8x128xf32>
    %574 = math.tanh %573 : vector<8x128xf32>
    %575 = arith.mulf %570, %574 : vector<8x128xf32>
    %576 = arith.truncf %575 : vector<8x128xf32> to vector<8x128xbf16>
    %577 = arith.truncf %544 : vector<8x128xf32> to vector<8x128xbf16>
    %578 = arith.index_cast %c0_i32_143 : i32 to index
    %c0_152 = arith.constant 0 : index
    %c0_153 = arith.constant 0 : index
    %579 = vector.load %arg1[%578, %c0_152, %c0_153] : memref<7x8x128xbf16, #tpu.memory_space<vmem>>, vector<1x8x128xbf16>
    %580 = vector.shape_cast %579 : vector<1x8x128xbf16> to vector<8x128xbf16>
    %581 = tpu.concatenate %576, %577, %580 in 1 : vector<8x128xbf16>, vector<8x128xbf16>, vector<8x128xbf16> -> vector<8x384xbf16>
    %c0_154 = arith.constant 0 : index
    %c0_155 = arith.constant 0 : index
    %582 = vector.load %arg4[%c0_154, %c0_155] : memref<384x512xbf16, #tpu.memory_space<vmem>>, vector<384x512xbf16>
    %cst_156 = arith.constant dense<0.000000e+00> : vector<8x512xf32>
    %583 = tpu.matmul %581, %582, %cst_156 {dimension_numbers = #tpu.dot_dimension_numbers<[1], [0], [0], [1], [0, 0, 1, 1], [], []>} : vector<8x384xbf16>, vector<384x512xbf16>, vector<8x512xf32> -> vector<8x512xf32>
    %c0_157 = arith.constant 0 : index
    %c0_158 = arith.constant 0 : index
    %584 = vector.load %arg5[%c0_157, %c0_158] : memref<1x512xf32, #tpu.memory_space<vmem>>, vector<1x512xf32>
    %585 = vector.broadcast %584 : vector<1x512xf32> to vector<8x512xf32>
    %586 = arith.addf %583, %585 : vector<8x512xf32>
    %587 = vector.extract_strided_slice %586 {offsets = [0, 0], sizes = [8, 128], strides = [1, 1]} : vector<8x512xf32> to vector<8x128xf32>
    %588 = arith.negf %587 : vector<8x128xf32>
    %589 = math.exp %588 : vector<8x128xf32>
    %cst_159 = arith.constant 1.000000e+00 : f32
    %590 = vector.broadcast %cst_159 : f32 to vector<8x128xf32>
    %591 = arith.addf %590, %589 : vector<8x128xf32>
    %592 = arith.divf %590, %591 : vector<8x128xf32>
    %593 = vector.extract_strided_slice %586 {offsets = [0, 128], sizes = [8, 128], strides = [1, 1]} : vector<8x512xf32> to vector<8x128xf32>
    %594 = arith.negf %593 : vector<8x128xf32>
    %595 = math.exp %594 : vector<8x128xf32>
    %cst_160 = arith.constant 1.000000e+00 : f32
    %596 = vector.broadcast %cst_160 : f32 to vector<8x128xf32>
    %597 = arith.addf %596, %595 : vector<8x128xf32>
    %598 = arith.divf %596, %597 : vector<8x128xf32>
    %599 = vector.extract_strided_slice %586 {offsets = [0, 256], sizes = [8, 128], strides = [1, 1]} : vector<8x512xf32> to vector<8x128xf32>
    %600 = math.tanh %599 : vector<8x128xf32>
    %601 = vector.extract_strided_slice %586 {offsets = [0, 384], sizes = [8, 128], strides = [1, 1]} : vector<8x512xf32> to vector<8x128xf32>
    %602 = arith.negf %601 : vector<8x128xf32>
    %603 = math.exp %602 : vector<8x128xf32>
    %cst_161 = arith.constant 1.000000e+00 : f32
    %604 = vector.broadcast %cst_161 : f32 to vector<8x128xf32>
    %605 = arith.addf %604, %603 : vector<8x128xf32>
    %606 = arith.divf %604, %605 : vector<8x128xf32>
    %607 = arith.mulf %598, %542 : vector<8x128xf32>
    %608 = arith.mulf %592, %600 : vector<8x128xf32>
    %609 = arith.addf %607, %608 : vector<8x128xf32>
    %610 = math.tanh %609 : vector<8x128xf32>
    %611 = arith.mulf %606, %610 : vector<8x128xf32>
    %612 = arith.truncf %611 : vector<8x128xf32> to vector<8x128xbf16>
    %613 = arith.index_cast %c0_i32_143 : i32 to index
    %c0_162 = arith.constant 0 : index
    %c0_163 = arith.constant 0 : index
    %614 = vector.load %arg6[%613, %c0_162, %c0_163] : memref<7x8x128xbf16, #tpu.memory_space<vmem>>, vector<1x8x128xbf16>
    %615 = vector.shape_cast %614 : vector<1x8x128xbf16> to vector<8x128xbf16>
    %616 = vector.shape_cast %612 : vector<8x128xbf16> to vector<1x8x128xbf16>
    tpu.vector_store %arg6[%613, %c0_162, %c0_163], %616 {strides = array<i32>} : memref<7x8x128xbf16, #tpu.memory_space<vmem>>, vector<1x8x128xbf16>,
    %c1_i32_164 = arith.constant 1 : i32
    %617 = arith.truncf %575 : vector<8x128xf32> to vector<8x128xbf16>
    %c0_165 = arith.constant 0 : index
    %c0_166 = arith.constant 0 : index
    %618 = vector.load %arg2[%c0_165, %c0_166] : memref<256x512xbf16, #tpu.memory_space<vmem>>, vector<128x512xbf16>
    %cst_167 = arith.constant dense<0.000000e+00> : vector<8x512xf32>
    %619 = tpu.matmul %617, %618, %cst_167 {dimension_numbers = #tpu.dot_dimension_numbers<[1], [0], [0], [1], [0, 0, 1, 1], [], []>} : vector<8x128xbf16>, vector<128x512xbf16>, vector<8x512xf32> -> vector<8x512xf32>
    %c0_168 = arith.constant 0 : index
    %c0_169 = arith.constant 0 : index
    %620 = vector.load %arg3[%c0_168, %c0_169] : memref<1x512xf32, #tpu.memory_space<vmem>>, vector<1x512xf32>
    %621 = vector.broadcast %620 : vector<1x512xf32> to vector<8x512xf32>
    %622 = arith.addf %619, %621 : vector<8x512xf32>
    %623 = vector.extract_strided_slice %622 {offsets = [0, 0], sizes = [8, 128], strides = [1, 1]} : vector<8x512xf32> to vector<8x128xf32>
    %624 = arith.negf %623 : vector<8x128xf32>
    %625 = math.exp %624 : vector<8x128xf32>
    %cst_170 = arith.constant 1.000000e+00 : f32
    %626 = vector.broadcast %cst_170 : f32 to vector<8x128xf32>
    %627 = arith.addf %626, %625 : vector<8x128xf32>
    %628 = arith.divf %626, %627 : vector<8x128xf32>
    %629 = vector.extract_strided_slice %622 {offsets = [0, 128], sizes = [8, 128], strides = [1, 1]} : vector<8x512xf32> to vector<8x128xf32>
    %630 = arith.negf %629 : vector<8x128xf32>
    %631 = math.exp %630 : vector<8x128xf32>
    %cst_171 = arith.constant 1.000000e+00 : f32
    %632 = vector.broadcast %cst_171 : f32 to vector<8x128xf32>
    %633 = arith.addf %632, %631 : vector<8x128xf32>
    %634 = arith.divf %632, %633 : vector<8x128xf32>
    %635 = vector.extract_strided_slice %622 {offsets = [0, 256], sizes = [8, 128], strides = [1, 1]} : vector<8x512xf32> to vector<8x128xf32>
    %636 = math.tanh %635 : vector<8x128xf32>
    %637 = vector.extract_strided_slice %622 {offsets = [0, 384], sizes = [8, 128], strides = [1, 1]} : vector<8x512xf32> to vector<8x128xf32>
    %638 = arith.negf %637 : vector<8x128xf32>
    %639 = math.exp %638 : vector<8x128xf32>
    %cst_172 = arith.constant 1.000000e+00 : f32
    %640 = vector.broadcast %cst_172 : f32 to vector<8x128xf32>
    %641 = arith.addf %640, %639 : vector<8x128xf32>
    %642 = arith.divf %640, %641 : vector<8x128xf32>
    %643 = arith.mulf %634, %573 : vector<8x128xf32>
    %644 = arith.mulf %628, %636 : vector<8x128xf32>
    %645 = arith.addf %643, %644 : vector<8x128xf32>
    %646 = math.tanh %645 : vector<8x128xf32>
    %647 = arith.mulf %642, %646 : vector<8x128xf32>
    %648 = arith.truncf %647 : vector<8x128xf32> to vector<8x128xbf16>
    %649 = arith.truncf %611 : vector<8x128xf32> to vector<8x128xbf16>
    %650 = arith.index_cast %c1_i32_164 : i32 to index
    %c0_173 = arith.constant 0 : index
    %c0_174 = arith.constant 0 : index
    %651 = vector.load %arg1[%650, %c0_173, %c0_174] : memref<7x8x128xbf16, #tpu.memory_space<vmem>>, vector<1x8x128xbf16>
    %652 = vector.shape_cast %651 : vector<1x8x128xbf16> to vector<8x128xbf16>
    %653 = tpu.concatenate %648, %649, %652 in 1 : vector<8x128xbf16>, vector<8x128xbf16>, vector<8x128xbf16> -> vector<8x384xbf16>
    %c0_175 = arith.constant 0 : index
    %c0_176 = arith.constant 0 : index
    %654 = vector.load %arg4[%c0_175, %c0_176] : memref<384x512xbf16, #tpu.memory_space<vmem>>, vector<384x512xbf16>
    %cst_177 = arith.constant dense<0.000000e+00> : vector<8x512xf32>
    %655 = tpu.matmul %653, %654, %cst_177 {dimension_numbers = #tpu.dot_dimension_numbers<[1], [0], [0], [1], [0, 0, 1, 1], [], []>} : vector<8x384xbf16>, vector<384x512xbf16>, vector<8x512xf32> -> vector<8x512xf32>
    %c0_178 = arith.constant 0 : index
    %c0_179 = arith.constant 0 : index
    %656 = vector.load %arg5[%c0_178, %c0_179] : memref<1x512xf32, #tpu.memory_space<vmem>>, vector<1x512xf32>
    %657 = vector.broadcast %656 : vector<1x512xf32> to vector<8x512xf32>
    %658 = arith.addf %655, %657 : vector<8x512xf32>
    %659 = vector.extract_strided_slice %658 {offsets = [0, 0], sizes = [8, 128], strides = [1, 1]} : vector<8x512xf32> to vector<8x128xf32>
    %660 = arith.negf %659 : vector<8x128xf32>
    %661 = math.exp %660 : vector<8x128xf32>
    %cst_180 = arith.constant 1.000000e+00 : f32
    %662 = vector.broadcast %cst_180 : f32 to vector<8x128xf32>
    %663 = arith.addf %662, %661 : vector<8x128xf32>
    %664 = arith.divf %662, %663 : vector<8x128xf32>
    %665 = vector.extract_strided_slice %658 {offsets = [0, 128], sizes = [8, 128], strides = [1, 1]} : vector<8x512xf32> to vector<8x128xf32>
    %666 = arith.negf %665 : vector<8x128xf32>
    %667 = math.exp %666 : vector<8x128xf32>
    %cst_181 = arith.constant 1.000000e+00 : f32
    %668 = vector.broadcast %cst_181 : f32 to vector<8x128xf32>
    %669 = arith.addf %668, %667 : vector<8x128xf32>
    %670 = arith.divf %668, %669 : vector<8x128xf32>
    %671 = vector.extract_strided_slice %658 {offsets = [0, 256], sizes = [8, 128], strides = [1, 1]} : vector<8x512xf32> to vector<8x128xf32>
    %672 = math.tanh %671 : vector<8x128xf32>
    %673 = vector.extract_strided_slice %658 {offsets = [0, 384], sizes = [8, 128], strides = [1, 1]} : vector<8x512xf32> to vector<8x128xf32>
    %674 = arith.negf %673 : vector<8x128xf32>
    %675 = math.exp %674 : vector<8x128xf32>
    %cst_182 = arith.constant 1.000000e+00 : f32
    %676 = vector.broadcast %cst_182 : f32 to vector<8x128xf32>
    %677 = arith.addf %676, %675 : vector<8x128xf32>
    %678 = arith.divf %676, %677 : vector<8x128xf32>
    %679 = arith.mulf %670, %609 : vector<8x128xf32>
    %680 = arith.mulf %664, %672 : vector<8x128xf32>
    %681 = arith.addf %679, %680 : vector<8x128xf32>
    %682 = math.tanh %681 : vector<8x128xf32>
    %683 = arith.mulf %678, %682 : vector<8x128xf32>
    %684 = arith.truncf %683 : vector<8x128xf32> to vector<8x128xbf16>
    %685 = arith.index_cast %c1_i32_164 : i32 to index
    %c0_183 = arith.constant 0 : index
    %c0_184 = arith.constant 0 : index
    %686 = vector.load %arg6[%685, %c0_183, %c0_184] : memref<7x8x128xbf16, #tpu.memory_space<vmem>>, vector<1x8x128xbf16>
    %687 = vector.shape_cast %686 : vector<1x8x128xbf16> to vector<8x128xbf16>
    %688 = vector.shape_cast %684 : vector<8x128xbf16> to vector<1x8x128xbf16>
    tpu.vector_store %arg6[%685, %c0_183, %c0_184], %688 {strides = array<i32>} : memref<7x8x128xbf16, #tpu.memory_space<vmem>>, vector<1x8x128xbf16>,
    %c2_i32_185 = arith.constant 2 : i32
    %689 = arith.truncf %647 : vector<8x128xf32> to vector<8x128xbf16>
    %c0_186 = arith.constant 0 : index
    %c0_187 = arith.constant 0 : index
    %690 = vector.load %arg2[%c0_186, %c0_187] : memref<256x512xbf16, #tpu.memory_space<vmem>>, vector<128x512xbf16>
    %cst_188 = arith.constant dense<0.000000e+00> : vector<8x512xf32>
    %691 = tpu.matmul %689, %690, %cst_188 {dimension_numbers = #tpu.dot_dimension_numbers<[1], [0], [0], [1], [0, 0, 1, 1], [], []>} : vector<8x128xbf16>, vector<128x512xbf16>, vector<8x512xf32> -> vector<8x512xf32>
    %c0_189 = arith.constant 0 : index
    %c0_190 = arith.constant 0 : index
    %692 = vector.load %arg3[%c0_189, %c0_190] : memref<1x512xf32, #tpu.memory_space<vmem>>, vector<1x512xf32>
    %693 = vector.broadcast %692 : vector<1x512xf32> to vector<8x512xf32>
    %694 = arith.addf %691, %693 : vector<8x512xf32>
    %695 = vector.extract_strided_slice %694 {offsets = [0, 0], sizes = [8, 128], strides = [1, 1]} : vector<8x512xf32> to vector<8x128xf32>
    %696 = arith.negf %695 : vector<8x128xf32>
    %697 = math.exp %696 : vector<8x128xf32>
    %cst_191 = arith.constant 1.000000e+00 : f32
    %698 = vector.broadcast %cst_191 : f32 to vector<8x128xf32>
    %699 = arith.addf %698, %697 : vector<8x128xf32>
    %700 = arith.divf %698, %699 : vector<8x128xf32>
    %701 = vector.extract_strided_slice %694 {offsets = [0, 128], sizes = [8, 128], strides = [1, 1]} : vector<8x512xf32> to vector<8x128xf32>
    %702 = arith.negf %701 : vector<8x128xf32>
    %703 = math.exp %702 : vector<8x128xf32>
    %cst_192 = arith.constant 1.000000e+00 : f32
    %704 = vector.broadcast %cst_192 : f32 to vector<8x128xf32>
    %705 = arith.addf %704, %703 : vector<8x128xf32>
    %706 = arith.divf %704, %705 : vector<8x128xf32>
    %707 = vector.extract_strided_slice %694 {offsets = [0, 256], sizes = [8, 128], strides = [1, 1]} : vector<8x512xf32> to vector<8x128xf32>
    %708 = math.tanh %707 : vector<8x128xf32>
    %709 = vector.extract_strided_slice %694 {offsets = [0, 384], sizes = [8, 128], strides = [1, 1]} : vector<8x512xf32> to vector<8x128xf32>
    %710 = arith.negf %709 : vector<8x128xf32>
    %711 = math.exp %710 : vector<8x128xf32>
    %cst_193 = arith.constant 1.000000e+00 : f32
    %712 = vector.broadcast %cst_193 : f32 to vector<8x128xf32>
    %713 = arith.addf %712, %711 : vector<8x128xf32>
    %714 = arith.divf %712, %713 : vector<8x128xf32>
    %715 = arith.mulf %706, %645 : vector<8x128xf32>
    %716 = arith.mulf %700, %708 : vector<8x128xf32>
    %717 = arith.addf %715, %716 : vector<8x128xf32>
    %718 = math.tanh %717 : vector<8x128xf32>
    %719 = arith.mulf %714, %718 : vector<8x128xf32>
    %720 = arith.truncf %719 : vector<8x128xf32> to vector<8x128xbf16>
    %721 = arith.truncf %683 : vector<8x128xf32> to vector<8x128xbf16>
    %722 = arith.index_cast %c2_i32_185 : i32 to index
    %c0_194 = arith.constant 0 : index
    %c0_195 = arith.constant 0 : index
    %723 = vector.load %arg1[%722, %c0_194, %c0_195] : memref<7x8x128xbf16, #tpu.memory_space<vmem>>, vector<1x8x128xbf16>
    %724 = vector.shape_cast %723 : vector<1x8x128xbf16> to vector<8x128xbf16>
    %725 = tpu.concatenate %720, %721, %724 in 1 : vector<8x128xbf16>, vector<8x128xbf16>, vector<8x128xbf16> -> vector<8x384xbf16>
    %c0_196 = arith.constant 0 : index
    %c0_197 = arith.constant 0 : index
    %726 = vector.load %arg4[%c0_196, %c0_197] : memref<384x512xbf16, #tpu.memory_space<vmem>>, vector<384x512xbf16>
    %cst_198 = arith.constant dense<0.000000e+00> : vector<8x512xf32>
    %727 = tpu.matmul %725, %726, %cst_198 {dimension_numbers = #tpu.dot_dimension_numbers<[1], [0], [0], [1], [0, 0, 1, 1], [], []>} : vector<8x384xbf16>, vector<384x512xbf16>, vector<8x512xf32> -> vector<8x512xf32>
    %c0_199 = arith.constant 0 : index
    %c0_200 = arith.constant 0 : index
    %728 = vector.load %arg5[%c0_199, %c0_200] : memref<1x512xf32, #tpu.memory_space<vmem>>, vector<1x512xf32>
    %729 = vector.broadcast %728 : vector<1x512xf32> to vector<8x512xf32>
    %730 = arith.addf %727, %729 : vector<8x512xf32>
    %731 = vector.extract_strided_slice %730 {offsets = [0, 0], sizes = [8, 128], strides = [1, 1]} : vector<8x512xf32> to vector<8x128xf32>
    %732 = arith.negf %731 : vector<8x128xf32>
    %733 = math.exp %732 : vector<8x128xf32>
    %cst_201 = arith.constant 1.000000e+00 : f32
    %734 = vector.broadcast %cst_201 : f32 to vector<8x128xf32>
    %735 = arith.addf %734, %733 : vector<8x128xf32>
    %736 = arith.divf %734, %735 : vector<8x128xf32>
    %737 = vector.extract_strided_slice %730 {offsets = [0, 128], sizes = [8, 128], strides = [1, 1]} : vector<8x512xf32> to vector<8x128xf32>
    %738 = arith.negf %737 : vector<8x128xf32>
    %739 = math.exp %738 : vector<8x128xf32>
    %cst_202 = arith.constant 1.000000e+00 : f32
    %740 = vector.broadcast %cst_202 : f32 to vector<8x128xf32>
    %741 = arith.addf %740, %739 : vector<8x128xf32>
    %742 = arith.divf %740, %741 : vector<8x128xf32>
    %743 = vector.extract_strided_slice %730 {offsets = [0, 256], sizes = [8, 128], strides = [1, 1]} : vector<8x512xf32> to vector<8x128xf32>
    %744 = math.tanh %743 : vector<8x128xf32>
    %745 = vector.extract_strided_slice %730 {offsets = [0, 384], sizes = [8, 128], strides = [1, 1]} : vector<8x512xf32> to vector<8x128xf32>
    %746 = arith.negf %745 : vector<8x128xf32>
    %747 = math.exp %746 : vector<8x128xf32>
    %cst_203 = arith.constant 1.000000e+00 : f32
    %748 = vector.broadcast %cst_203 : f32 to vector<8x128xf32>
    %749 = arith.addf %748, %747 : vector<8x128xf32>
    %750 = arith.divf %748, %749 : vector<8x128xf32>
    %751 = arith.mulf %742, %681 : vector<8x128xf32>
    %752 = arith.mulf %736, %744 : vector<8x128xf32>
    %753 = arith.addf %751, %752 : vector<8x128xf32>
    %754 = math.tanh %753 : vector<8x128xf32>
    %755 = arith.mulf %750, %754 : vector<8x128xf32>
    %756 = arith.truncf %755 : vector<8x128xf32> to vector<8x128xbf16>
    %757 = arith.index_cast %c2_i32_185 : i32 to index
    %c0_204 = arith.constant 0 : index
    %c0_205 = arith.constant 0 : index
    %758 = vector.load %arg6[%757, %c0_204, %c0_205] : memref<7x8x128xbf16, #tpu.memory_space<vmem>>, vector<1x8x128xbf16>
    %759 = vector.shape_cast %758 : vector<1x8x128xbf16> to vector<8x128xbf16>
    %760 = vector.shape_cast %756 : vector<8x128xbf16> to vector<1x8x128xbf16>
    tpu.vector_store %arg6[%757, %c0_204, %c0_205], %760 {strides = array<i32>} : memref<7x8x128xbf16, #tpu.memory_space<vmem>>, vector<1x8x128xbf16>,
    %c3_i32_206 = arith.constant 3 : i32
    %761 = arith.truncf %719 : vector<8x128xf32> to vector<8x128xbf16>
    %c0_207 = arith.constant 0 : index
    %c0_208 = arith.constant 0 : index
    %762 = vector.load %arg2[%c0_207, %c0_208] : memref<256x512xbf16, #tpu.memory_space<vmem>>, vector<128x512xbf16>
    %cst_209 = arith.constant dense<0.000000e+00> : vector<8x512xf32>
    %763 = tpu.matmul %761, %762, %cst_209 {dimension_numbers = #tpu.dot_dimension_numbers<[1], [0], [0], [1], [0, 0, 1, 1], [], []>} : vector<8x128xbf16>, vector<128x512xbf16>, vector<8x512xf32> -> vector<8x512xf32>
    %c0_210 = arith.constant 0 : index
    %c0_211 = arith.constant 0 : index
    %764 = vector.load %arg3[%c0_210, %c0_211] : memref<1x512xf32, #tpu.memory_space<vmem>>, vector<1x512xf32>
    %765 = vector.broadcast %764 : vector<1x512xf32> to vector<8x512xf32>
    %766 = arith.addf %763, %765 : vector<8x512xf32>
    %767 = vector.extract_strided_slice %766 {offsets = [0, 0], sizes = [8, 128], strides = [1, 1]} : vector<8x512xf32> to vector<8x128xf32>
    %768 = arith.negf %767 : vector<8x128xf32>
    %769 = math.exp %768 : vector<8x128xf32>
    %cst_212 = arith.constant 1.000000e+00 : f32
    %770 = vector.broadcast %cst_212 : f32 to vector<8x128xf32>
    %771 = arith.addf %770, %769 : vector<8x128xf32>
    %772 = arith.divf %770, %771 : vector<8x128xf32>
    %773 = vector.extract_strided_slice %766 {offsets = [0, 128], sizes = [8, 128], strides = [1, 1]} : vector<8x512xf32> to vector<8x128xf32>
    %774 = arith.negf %773 : vector<8x128xf32>
    %775 = math.exp %774 : vector<8x128xf32>
    %cst_213 = arith.constant 1.000000e+00 : f32
    %776 = vector.broadcast %cst_213 : f32 to vector<8x128xf32>
    %777 = arith.addf %776, %775 : vector<8x128xf32>
    %778 = arith.divf %776, %777 : vector<8x128xf32>
    %779 = vector.extract_strided_slice %766 {offsets = [0, 256], sizes = [8, 128], strides = [1, 1]} : vector<8x512xf32> to vector<8x128xf32>
    %780 = math.tanh %779 : vector<8x128xf32>
    %781 = vector.extract_strided_slice %766 {offsets = [0, 384], sizes = [8, 128], strides = [1, 1]} : vector<8x512xf32> to vector<8x128xf32>
    %782 = arith.negf %781 : vector<8x128xf32>
    %783 = math.exp %782 : vector<8x128xf32>
    %cst_214 = arith.constant 1.000000e+00 : f32
    %784 = vector.broadcast %cst_214 : f32 to vector<8x128xf32>
    %785 = arith.addf %784, %783 : vector<8x128xf32>
    %786 = arith.divf %784, %785 : vector<8x128xf32>
    %787 = arith.mulf %778, %717 : vector<8x128xf32>
    %788 = arith.mulf %772, %780 : vector<8x128xf32>
    %789 = arith.addf %787, %788 : vector<8x128xf32>
    %790 = math.tanh %789 : vector<8x128xf32>
    %791 = arith.mulf %786, %790 : vector<8x128xf32>
    %792 = arith.truncf %791 : vector<8x128xf32> to vector<8x128xbf16>
    %793 = arith.truncf %755 : vector<8x128xf32> to vector<8x128xbf16>
    %794 = arith.index_cast %c3_i32_206 : i32 to index
    %c0_215 = arith.constant 0 : index
    %c0_216 = arith.constant 0 : index
    %795 = vector.load %arg1[%794, %c0_215, %c0_216] : memref<7x8x128xbf16, #tpu.memory_space<vmem>>, vector<1x8x128xbf16>
    %796 = vector.shape_cast %795 : vector<1x8x128xbf16> to vector<8x128xbf16>
    %797 = tpu.concatenate %792, %793, %796 in 1 : vector<8x128xbf16>, vector<8x128xbf16>, vector<8x128xbf16> -> vector<8x384xbf16>
    %c0_217 = arith.constant 0 : index
    %c0_218 = arith.constant 0 : index
    %798 = vector.load %arg4[%c0_217, %c0_218] : memref<384x512xbf16, #tpu.memory_space<vmem>>, vector<384x512xbf16>
    %cst_219 = arith.constant dense<0.000000e+00> : vector<8x512xf32>
    %799 = tpu.matmul %797, %798, %cst_219 {dimension_numbers = #tpu.dot_dimension_numbers<[1], [0], [0], [1], [0, 0, 1, 1], [], []>} : vector<8x384xbf16>, vector<384x512xbf16>, vector<8x512xf32> -> vector<8x512xf32>
    %c0_220 = arith.constant 0 : index
    %c0_221 = arith.constant 0 : index
    %800 = vector.load %arg5[%c0_220, %c0_221] : memref<1x512xf32, #tpu.memory_space<vmem>>, vector<1x512xf32>
    %801 = vector.broadcast %800 : vector<1x512xf32> to vector<8x512xf32>
    %802 = arith.addf %799, %801 : vector<8x512xf32>
    %803 = vector.extract_strided_slice %802 {offsets = [0, 0], sizes = [8, 128], strides = [1, 1]} : vector<8x512xf32> to vector<8x128xf32>
    %804 = arith.negf %803 : vector<8x128xf32>
    %805 = math.exp %804 : vector<8x128xf32>
    %cst_222 = arith.constant 1.000000e+00 : f32
    %806 = vector.broadcast %cst_222 : f32 to vector<8x128xf32>
    %807 = arith.addf %806, %805 : vector<8x128xf32>
    %808 = arith.divf %806, %807 : vector<8x128xf32>
    %809 = vector.extract_strided_slice %802 {offsets = [0, 128], sizes = [8, 128], strides = [1, 1]} : vector<8x512xf32> to vector<8x128xf32>
    %810 = arith.negf %809 : vector<8x128xf32>
    %811 = math.exp %810 : vector<8x128xf32>
    %cst_223 = arith.constant 1.000000e+00 : f32
    %812 = vector.broadcast %cst_223 : f32 to vector<8x128xf32>
    %813 = arith.addf %812, %811 : vector<8x128xf32>
    %814 = arith.divf %812, %813 : vector<8x128xf32>
    %815 = vector.extract_strided_slice %802 {offsets = [0, 256], sizes = [8, 128], strides = [1, 1]} : vector<8x512xf32> to vector<8x128xf32>
    %816 = math.tanh %815 : vector<8x128xf32>
    %817 = vector.extract_strided_slice %802 {offsets = [0, 384], sizes = [8, 128], strides = [1, 1]} : vector<8x512xf32> to vector<8x128xf32>
    %818 = arith.negf %817 : vector<8x128xf32>
    %819 = math.exp %818 : vector<8x128xf32>
    %cst_224 = arith.constant 1.000000e+00 : f32
    %820 = vector.broadcast %cst_224 : f32 to vector<8x128xf32>
    %821 = arith.addf %820, %819 : vector<8x128xf32>
    %822 = arith.divf %820, %821 : vector<8x128xf32>
    %823 = arith.mulf %814, %753 : vector<8x128xf32>
    %824 = arith.mulf %808, %816 : vector<8x128xf32>
    %825 = arith.addf %823, %824 : vector<8x128xf32>
    %826 = math.tanh %825 : vector<8x128xf32>
    %827 = arith.mulf %822, %826 : vector<8x128xf32>
    %828 = arith.truncf %827 : vector<8x128xf32> to vector<8x128xbf16>
    %829 = arith.index_cast %c3_i32_206 : i32 to index
    %c0_225 = arith.constant 0 : index
    %c0_226 = arith.constant 0 : index
    %830 = vector.load %arg6[%829, %c0_225, %c0_226] : memref<7x8x128xbf16, #tpu.memory_space<vmem>>, vector<1x8x128xbf16>
    %831 = vector.shape_cast %830 : vector<1x8x128xbf16> to vector<8x128xbf16>
    %832 = vector.shape_cast %828 : vector<8x128xbf16> to vector<1x8x128xbf16>
    tpu.vector_store %arg6[%829, %c0_225, %c0_226], %832 {strides = array<i32>} : memref<7x8x128xbf16, #tpu.memory_space<vmem>>, vector<1x8x128xbf16>,
    %c4_i32_227 = arith.constant 4 : i32
    %833 = arith.truncf %791 : vector<8x128xf32> to vector<8x128xbf16>
    %c0_228 = arith.constant 0 : index
    %c0_229 = arith.constant 0 : index
    %834 = vector.load %arg2[%c0_228, %c0_229] : memref<256x512xbf16, #tpu.memory_space<vmem>>, vector<128x512xbf16>
    %cst_230 = arith.constant dense<0.000000e+00> : vector<8x512xf32>
    %835 = tpu.matmul %833, %834, %cst_230 {dimension_numbers = #tpu.dot_dimension_numbers<[1], [0], [0], [1], [0, 0, 1, 1], [], []>} : vector<8x128xbf16>, vector<128x512xbf16>, vector<8x512xf32> -> vector<8x512xf32>
    %c0_231 = arith.constant 0 : index
    %c0_232 = arith.constant 0 : index
    %836 = vector.load %arg3[%c0_231, %c0_232] : memref<1x512xf32, #tpu.memory_space<vmem>>, vector<1x512xf32>
    %837 = vector.broadcast %836 : vector<1x512xf32> to vector<8x512xf32>
    %838 = arith.addf %835, %837 : vector<8x512xf32>
    %839 = vector.extract_strided_slice %838 {offsets = [0, 0], sizes = [8, 128], strides = [1, 1]} : vector<8x512xf32> to vector<8x128xf32>
    %840 = arith.negf %839 : vector<8x128xf32>
    %841 = math.exp %840 : vector<8x128xf32>
    %cst_233 = arith.constant 1.000000e+00 : f32
    %842 = vector.broadcast %cst_233 : f32 to vector<8x128xf32>
    %843 = arith.addf %842, %841 : vector<8x128xf32>
    %844 = arith.divf %842, %843 : vector<8x128xf32>
    %845 = vector.extract_strided_slice %838 {offsets = [0, 128], sizes = [8, 128], strides = [1, 1]} : vector<8x512xf32> to vector<8x128xf32>
    %846 = arith.negf %845 : vector<8x128xf32>
    %847 = math.exp %846 : vector<8x128xf32>
    %cst_234 = arith.constant 1.000000e+00 : f32
    %848 = vector.broadcast %cst_234 : f32 to vector<8x128xf32>
    %849 = arith.addf %848, %847 : vector<8x128xf32>
    %850 = arith.divf %848, %849 : vector<8x128xf32>
    %851 = vector.extract_strided_slice %838 {offsets = [0, 256], sizes = [8, 128], strides = [1, 1]} : vector<8x512xf32> to vector<8x128xf32>
    %852 = math.tanh %851 : vector<8x128xf32>
    %853 = vector.extract_strided_slice %838 {offsets = [0, 384], sizes = [8, 128], strides = [1, 1]} : vector<8x512xf32> to vector<8x128xf32>
    %854 = arith.negf %853 : vector<8x128xf32>
    %855 = math.exp %854 : vector<8x128xf32>
    %cst_235 = arith.constant 1.000000e+00 : f32
    %856 = vector.broadcast %cst_235 : f32 to vector<8x128xf32>
    %857 = arith.addf %856, %855 : vector<8x128xf32>
    %858 = arith.divf %856, %857 : vector<8x128xf32>
    %859 = arith.mulf %850, %789 : vector<8x128xf32>
    %860 = arith.mulf %844, %852 : vector<8x128xf32>
    %861 = arith.addf %859, %860 : vector<8x128xf32>
    %862 = math.tanh %861 : vector<8x128xf32>
    %863 = arith.mulf %858, %862 : vector<8x128xf32>
    %864 = arith.truncf %863 : vector<8x128xf32> to vector<8x128xbf16>
    %865 = arith.truncf %827 : vector<8x128xf32> to vector<8x128xbf16>
    %866 = arith.index_cast %c4_i32_227 : i32 to index
    %c0_236 = arith.constant 0 : index
    %c0_237 = arith.constant 0 : index
    %867 = vector.load %arg1[%866, %c0_236, %c0_237] : memref<7x8x128xbf16, #tpu.memory_space<vmem>>, vector<1x8x128xbf16>
    %868 = vector.shape_cast %867 : vector<1x8x128xbf16> to vector<8x128xbf16>
    %869 = tpu.concatenate %864, %865, %868 in 1 : vector<8x128xbf16>, vector<8x128xbf16>, vector<8x128xbf16> -> vector<8x384xbf16>
    %c0_238 = arith.constant 0 : index
    %c0_239 = arith.constant 0 : index
    %870 = vector.load %arg4[%c0_238, %c0_239] : memref<384x512xbf16, #tpu.memory_space<vmem>>, vector<384x512xbf16>
    %cst_240 = arith.constant dense<0.000000e+00> : vector<8x512xf32>
    %871 = tpu.matmul %869, %870, %cst_240 {dimension_numbers = #tpu.dot_dimension_numbers<[1], [0], [0], [1], [0, 0, 1, 1], [], []>} : vector<8x384xbf16>, vector<384x512xbf16>, vector<8x512xf32> -> vector<8x512xf32>
    %c0_241 = arith.constant 0 : index
    %c0_242 = arith.constant 0 : index
    %872 = vector.load %arg5[%c0_241, %c0_242] : memref<1x512xf32, #tpu.memory_space<vmem>>, vector<1x512xf32>
    %873 = vector.broadcast %872 : vector<1x512xf32> to vector<8x512xf32>
    %874 = arith.addf %871, %873 : vector<8x512xf32>
    %875 = vector.extract_strided_slice %874 {offsets = [0, 0], sizes = [8, 128], strides = [1, 1]} : vector<8x512xf32> to vector<8x128xf32>
    %876 = arith.negf %875 : vector<8x128xf32>
    %877 = math.exp %876 : vector<8x128xf32>
    %cst_243 = arith.constant 1.000000e+00 : f32
    %878 = vector.broadcast %cst_243 : f32 to vector<8x128xf32>
    %879 = arith.addf %878, %877 : vector<8x128xf32>
    %880 = arith.divf %878, %879 : vector<8x128xf32>
    %881 = vector.extract_strided_slice %874 {offsets = [0, 128], sizes = [8, 128], strides = [1, 1]} : vector<8x512xf32> to vector<8x128xf32>
    %882 = arith.negf %881 : vector<8x128xf32>
    %883 = math.exp %882 : vector<8x128xf32>
    %cst_244 = arith.constant 1.000000e+00 : f32
    %884 = vector.broadcast %cst_244 : f32 to vector<8x128xf32>
    %885 = arith.addf %884, %883 : vector<8x128xf32>
    %886 = arith.divf %884, %885 : vector<8x128xf32>
    %887 = vector.extract_strided_slice %874 {offsets = [0, 256], sizes = [8, 128], strides = [1, 1]} : vector<8x512xf32> to vector<8x128xf32>
    %888 = math.tanh %887 : vector<8x128xf32>
    %889 = vector.extract_strided_slice %874 {offsets = [0, 384], sizes = [8, 128], strides = [1, 1]} : vector<8x512xf32> to vector<8x128xf32>
    %890 = arith.negf %889 : vector<8x128xf32>
    %891 = math.exp %890 : vector<8x128xf32>
    %cst_245 = arith.constant 1.000000e+00 : f32
    %892 = vector.broadcast %cst_245 : f32 to vector<8x128xf32>
    %893 = arith.addf %892, %891 : vector<8x128xf32>
    %894 = arith.divf %892, %893 : vector<8x128xf32>
    %895 = arith.mulf %886, %825 : vector<8x128xf32>
    %896 = arith.mulf %880, %888 : vector<8x128xf32>
    %897 = arith.addf %895, %896 : vector<8x128xf32>
    %898 = math.tanh %897 : vector<8x128xf32>
    %899 = arith.mulf %894, %898 : vector<8x128xf32>
    %900 = arith.truncf %899 : vector<8x128xf32> to vector<8x128xbf16>
    %901 = arith.index_cast %c4_i32_227 : i32 to index
    %c0_246 = arith.constant 0 : index
    %c0_247 = arith.constant 0 : index
    %902 = vector.load %arg6[%901, %c0_246, %c0_247] : memref<7x8x128xbf16, #tpu.memory_space<vmem>>, vector<1x8x128xbf16>
    %903 = vector.shape_cast %902 : vector<1x8x128xbf16> to vector<8x128xbf16>
    %904 = vector.shape_cast %900 : vector<8x128xbf16> to vector<1x8x128xbf16>
    tpu.vector_store %arg6[%901, %c0_246, %c0_247], %904 {strides = array<i32>} : memref<7x8x128xbf16, #tpu.memory_space<vmem>>, vector<1x8x128xbf16>,
    %c5_i32_248 = arith.constant 5 : i32
    %905 = arith.truncf %863 : vector<8x128xf32> to vector<8x128xbf16>
    %c0_249 = arith.constant 0 : index
    %c0_250 = arith.constant 0 : index
    %906 = vector.load %arg2[%c0_249, %c0_250] : memref<256x512xbf16, #tpu.memory_space<vmem>>, vector<128x512xbf16>
    %cst_251 = arith.constant dense<0.000000e+00> : vector<8x512xf32>
    %907 = tpu.matmul %905, %906, %cst_251 {dimension_numbers = #tpu.dot_dimension_numbers<[1], [0], [0], [1], [0, 0, 1, 1], [], []>} : vector<8x128xbf16>, vector<128x512xbf16>, vector<8x512xf32> -> vector<8x512xf32>
    %c0_252 = arith.constant 0 : index
    %c0_253 = arith.constant 0 : index
    %908 = vector.load %arg3[%c0_252, %c0_253] : memref<1x512xf32, #tpu.memory_space<vmem>>, vector<1x512xf32>
    %909 = vector.broadcast %908 : vector<1x512xf32> to vector<8x512xf32>
    %910 = arith.addf %907, %909 : vector<8x512xf32>
    %911 = vector.extract_strided_slice %910 {offsets = [0, 0], sizes = [8, 128], strides = [1, 1]} : vector<8x512xf32> to vector<8x128xf32>
    %912 = arith.negf %911 : vector<8x128xf32>
    %913 = math.exp %912 : vector<8x128xf32>
    %cst_254 = arith.constant 1.000000e+00 : f32
    %914 = vector.broadcast %cst_254 : f32 to vector<8x128xf32>
    %915 = arith.addf %914, %913 : vector<8x128xf32>
    %916 = arith.divf %914, %915 : vector<8x128xf32>
    %917 = vector.extract_strided_slice %910 {offsets = [0, 128], sizes = [8, 128], strides = [1, 1]} : vector<8x512xf32> to vector<8x128xf32>
    %918 = arith.negf %917 : vector<8x128xf32>
    %919 = math.exp %918 : vector<8x128xf32>
    %cst_255 = arith.constant 1.000000e+00 : f32
    %920 = vector.broadcast %cst_255 : f32 to vector<8x128xf32>
    %921 = arith.addf %920, %919 : vector<8x128xf32>
    %922 = arith.divf %920, %921 : vector<8x128xf32>
    %923 = vector.extract_strided_slice %910 {offsets = [0, 256], sizes = [8, 128], strides = [1, 1]} : vector<8x512xf32> to vector<8x128xf32>
    %924 = math.tanh %923 : vector<8x128xf32>
    %925 = vector.extract_strided_slice %910 {offsets = [0, 384], sizes = [8, 128], strides = [1, 1]} : vector<8x512xf32> to vector<8x128xf32>
    %926 = arith.negf %925 : vector<8x128xf32>
    %927 = math.exp %926 : vector<8x128xf32>
    %cst_256 = arith.constant 1.000000e+00 : f32
    %928 = vector.broadcast %cst_256 : f32 to vector<8x128xf32>
    %929 = arith.addf %928, %927 : vector<8x128xf32>
    %930 = arith.divf %928, %929 : vector<8x128xf32>
    %931 = arith.mulf %922, %861 : vector<8x128xf32>
    %932 = arith.mulf %916, %924 : vector<8x128xf32>
    %933 = arith.addf %931, %932 : vector<8x128xf32>
    %934 = math.tanh %933 : vector<8x128xf32>
    %935 = arith.mulf %930, %934 : vector<8x128xf32>
    %936 = arith.truncf %935 : vector<8x128xf32> to vector<8x128xbf16>
    %937 = arith.truncf %899 : vector<8x128xf32> to vector<8x128xbf16>
    %938 = arith.index_cast %c5_i32_248 : i32 to index
    %c0_257 = arith.constant 0 : index
    %c0_258 = arith.constant 0 : index
    %939 = vector.load %arg1[%938, %c0_257, %c0_258] : memref<7x8x128xbf16, #tpu.memory_space<vmem>>, vector<1x8x128xbf16>
    %940 = vector.shape_cast %939 : vector<1x8x128xbf16> to vector<8x128xbf16>
    %941 = tpu.concatenate %936, %937, %940 in 1 : vector<8x128xbf16>, vector<8x128xbf16>, vector<8x128xbf16> -> vector<8x384xbf16>
    %c0_259 = arith.constant 0 : index
    %c0_260 = arith.constant 0 : index
    %942 = vector.load %arg4[%c0_259, %c0_260] : memref<384x512xbf16, #tpu.memory_space<vmem>>, vector<384x512xbf16>
    %cst_261 = arith.constant dense<0.000000e+00> : vector<8x512xf32>
    %943 = tpu.matmul %941, %942, %cst_261 {dimension_numbers = #tpu.dot_dimension_numbers<[1], [0], [0], [1], [0, 0, 1, 1], [], []>} : vector<8x384xbf16>, vector<384x512xbf16>, vector<8x512xf32> -> vector<8x512xf32>
    %c0_262 = arith.constant 0 : index
    %c0_263 = arith.constant 0 : index
    %944 = vector.load %arg5[%c0_262, %c0_263] : memref<1x512xf32, #tpu.memory_space<vmem>>, vector<1x512xf32>
    %945 = vector.broadcast %944 : vector<1x512xf32> to vector<8x512xf32>
    %946 = arith.addf %943, %945 : vector<8x512xf32>
    %947 = vector.extract_strided_slice %946 {offsets = [0, 0], sizes = [8, 128], strides = [1, 1]} : vector<8x512xf32> to vector<8x128xf32>
    %948 = arith.negf %947 : vector<8x128xf32>
    %949 = math.exp %948 : vector<8x128xf32>
    %cst_264 = arith.constant 1.000000e+00 : f32
    %950 = vector.broadcast %cst_264 : f32 to vector<8x128xf32>
    %951 = arith.addf %950, %949 : vector<8x128xf32>
    %952 = arith.divf %950, %951 : vector<8x128xf32>
    %953 = vector.extract_strided_slice %946 {offsets = [0, 128], sizes = [8, 128], strides = [1, 1]} : vector<8x512xf32> to vector<8x128xf32>
    %954 = arith.negf %953 : vector<8x128xf32>
    %955 = math.exp %954 : vector<8x128xf32>
    %cst_265 = arith.constant 1.000000e+00 : f32
    %956 = vector.broadcast %cst_265 : f32 to vector<8x128xf32>
    %957 = arith.addf %956, %955 : vector<8x128xf32>
    %958 = arith.divf %956, %957 : vector<8x128xf32>
    %959 = vector.extract_strided_slice %946 {offsets = [0, 256], sizes = [8, 128], strides = [1, 1]} : vector<8x512xf32> to vector<8x128xf32>
    %960 = math.tanh %959 : vector<8x128xf32>
    %961 = vector.extract_strided_slice %946 {offsets = [0, 384], sizes = [8, 128], strides = [1, 1]} : vector<8x512xf32> to vector<8x128xf32>
    %962 = arith.negf %961 : vector<8x128xf32>
    %963 = math.exp %962 : vector<8x128xf32>
    %cst_266 = arith.constant 1.000000e+00 : f32
    %964 = vector.broadcast %cst_266 : f32 to vector<8x128xf32>
    %965 = arith.addf %964, %963 : vector<8x128xf32>
    %966 = arith.divf %964, %965 : vector<8x128xf32>
    %967 = arith.mulf %958, %897 : vector<8x128xf32>
    %968 = arith.mulf %952, %960 : vector<8x128xf32>
    %969 = arith.addf %967, %968 : vector<8x128xf32>
    %970 = math.tanh %969 : vector<8x128xf32>
    %971 = arith.mulf %966, %970 : vector<8x128xf32>
    %972 = arith.truncf %971 : vector<8x128xf32> to vector<8x128xbf16>
    %973 = arith.index_cast %c5_i32_248 : i32 to index
    %c0_267 = arith.constant 0 : index
    %c0_268 = arith.constant 0 : index
    %974 = vector.load %arg6[%973, %c0_267, %c0_268] : memref<7x8x128xbf16, #tpu.memory_space<vmem>>, vector<1x8x128xbf16>
    %975 = vector.shape_cast %974 : vector<1x8x128xbf16> to vector<8x128xbf16>
    %976 = vector.shape_cast %972 : vector<8x128xbf16> to vector<1x8x128xbf16>
    tpu.vector_store %arg6[%973, %c0_267, %c0_268], %976 {strides = array<i32>} : memref<7x8x128xbf16, #tpu.memory_space<vmem>>, vector<1x8x128xbf16>,
    %c6_i32_269 = arith.constant 6 : i32
    %977 = arith.truncf %935 : vector<8x128xf32> to vector<8x128xbf16>
    %c0_270 = arith.constant 0 : index
    %c0_271 = arith.constant 0 : index
    %978 = vector.load %arg2[%c0_270, %c0_271] : memref<256x512xbf16, #tpu.memory_space<vmem>>, vector<128x512xbf16>
    %cst_272 = arith.constant dense<0.000000e+00> : vector<8x512xf32>
    %979 = tpu.matmul %977, %978, %cst_272 {dimension_numbers = #tpu.dot_dimension_numbers<[1], [0], [0], [1], [0, 0, 1, 1], [], []>} : vector<8x128xbf16>, vector<128x512xbf16>, vector<8x512xf32> -> vector<8x512xf32>
    %c0_273 = arith.constant 0 : index
    %c0_274 = arith.constant 0 : index
    %980 = vector.load %arg3[%c0_273, %c0_274] : memref<1x512xf32, #tpu.memory_space<vmem>>, vector<1x512xf32>
    %981 = vector.broadcast %980 : vector<1x512xf32> to vector<8x512xf32>
    %982 = arith.addf %979, %981 : vector<8x512xf32>
    %983 = vector.extract_strided_slice %982 {offsets = [0, 0], sizes = [8, 128], strides = [1, 1]} : vector<8x512xf32> to vector<8x128xf32>
    %984 = arith.negf %983 : vector<8x128xf32>
    %985 = math.exp %984 : vector<8x128xf32>
    %cst_275 = arith.constant 1.000000e+00 : f32
    %986 = vector.broadcast %cst_275 : f32 to vector<8x128xf32>
    %987 = arith.addf %986, %985 : vector<8x128xf32>
    %988 = arith.divf %986, %987 : vector<8x128xf32>
    %989 = vector.extract_strided_slice %982 {offsets = [0, 128], sizes = [8, 128], strides = [1, 1]} : vector<8x512xf32> to vector<8x128xf32>
    %990 = arith.negf %989 : vector<8x128xf32>
    %991 = math.exp %990 : vector<8x128xf32>
    %cst_276 = arith.constant 1.000000e+00 : f32
    %992 = vector.broadcast %cst_276 : f32 to vector<8x128xf32>
    %993 = arith.addf %992, %991 : vector<8x128xf32>
    %994 = arith.divf %992, %993 : vector<8x128xf32>
    %995 = vector.extract_strided_slice %982 {offsets = [0, 256], sizes = [8, 128], strides = [1, 1]} : vector<8x512xf32> to vector<8x128xf32>
    %996 = math.tanh %995 : vector<8x128xf32>
    %997 = vector.extract_strided_slice %982 {offsets = [0, 384], sizes = [8, 128], strides = [1, 1]} : vector<8x512xf32> to vector<8x128xf32>
    %998 = arith.negf %997 : vector<8x128xf32>
    %999 = math.exp %998 : vector<8x128xf32>
    %cst_277 = arith.constant 1.000000e+00 : f32
    %1000 = vector.broadcast %cst_277 : f32 to vector<8x128xf32>
    %1001 = arith.addf %1000, %999 : vector<8x128xf32>
    %1002 = arith.divf %1000, %1001 : vector<8x128xf32>
    %1003 = arith.mulf %994, %933 : vector<8x128xf32>
    %1004 = arith.mulf %988, %996 : vector<8x128xf32>
    %1005 = arith.addf %1003, %1004 : vector<8x128xf32>
    %1006 = math.tanh %1005 : vector<8x128xf32>
    %1007 = arith.mulf %1002, %1006 : vector<8x128xf32>
    %1008 = arith.truncf %1007 : vector<8x128xf32> to vector<8x128xbf16>
    %1009 = arith.truncf %971 : vector<8x128xf32> to vector<8x128xbf16>
    %1010 = arith.index_cast %c6_i32_269 : i32 to index
    %c0_278 = arith.constant 0 : index
    %c0_279 = arith.constant 0 : index
    %1011 = vector.load %arg1[%1010, %c0_278, %c0_279] : memref<7x8x128xbf16, #tpu.memory_space<vmem>>, vector<1x8x128xbf16>
    %1012 = vector.shape_cast %1011 : vector<1x8x128xbf16> to vector<8x128xbf16>
    %1013 = tpu.concatenate %1008, %1009, %1012 in 1 : vector<8x128xbf16>, vector<8x128xbf16>, vector<8x128xbf16> -> vector<8x384xbf16>
    %c0_280 = arith.constant 0 : index
    %c0_281 = arith.constant 0 : index
    %1014 = vector.load %arg4[%c0_280, %c0_281] : memref<384x512xbf16, #tpu.memory_space<vmem>>, vector<384x512xbf16>
    %cst_282 = arith.constant dense<0.000000e+00> : vector<8x512xf32>
    %1015 = tpu.matmul %1013, %1014, %cst_282 {dimension_numbers = #tpu.dot_dimension_numbers<[1], [0], [0], [1], [0, 0, 1, 1], [], []>} : vector<8x384xbf16>, vector<384x512xbf16>, vector<8x512xf32> -> vector<8x512xf32>
    %c0_283 = arith.constant 0 : index
    %c0_284 = arith.constant 0 : index
    %1016 = vector.load %arg5[%c0_283, %c0_284] : memref<1x512xf32, #tpu.memory_space<vmem>>, vector<1x512xf32>
    %1017 = vector.broadcast %1016 : vector<1x512xf32> to vector<8x512xf32>
    %1018 = arith.addf %1015, %1017 : vector<8x512xf32>
    %1019 = vector.extract_strided_slice %1018 {offsets = [0, 0], sizes = [8, 128], strides = [1, 1]} : vector<8x512xf32> to vector<8x128xf32>
    %1020 = arith.negf %1019 : vector<8x128xf32>
    %1021 = math.exp %1020 : vector<8x128xf32>
    %cst_285 = arith.constant 1.000000e+00 : f32
    %1022 = vector.broadcast %cst_285 : f32 to vector<8x128xf32>
    %1023 = arith.addf %1022, %1021 : vector<8x128xf32>
    %1024 = arith.divf %1022, %1023 : vector<8x128xf32>
    %1025 = vector.extract_strided_slice %1018 {offsets = [0, 128], sizes = [8, 128], strides = [1, 1]} : vector<8x512xf32> to vector<8x128xf32>
    %1026 = arith.negf %1025 : vector<8x128xf32>
    %1027 = math.exp %1026 : vector<8x128xf32>
    %cst_286 = arith.constant 1.000000e+00 : f32
    %1028 = vector.broadcast %cst_286 : f32 to vector<8x128xf32>
    %1029 = arith.addf %1028, %1027 : vector<8x128xf32>
    %1030 = arith.divf %1028, %1029 : vector<8x128xf32>
    %1031 = vector.extract_strided_slice %1018 {offsets = [0, 256], sizes = [8, 128], strides = [1, 1]} : vector<8x512xf32> to vector<8x128xf32>
    %1032 = math.tanh %1031 : vector<8x128xf32>
    %1033 = vector.extract_strided_slice %1018 {offsets = [0, 384], sizes = [8, 128], strides = [1, 1]} : vector<8x512xf32> to vector<8x128xf32>
    %1034 = arith.negf %1033 : vector<8x128xf32>
    %1035 = math.exp %1034 : vector<8x128xf32>
    %cst_287 = arith.constant 1.000000e+00 : f32
    %1036 = vector.broadcast %cst_287 : f32 to vector<8x128xf32>
    %1037 = arith.addf %1036, %1035 : vector<8x128xf32>
    %1038 = arith.divf %1036, %1037 : vector<8x128xf32>
    %1039 = arith.mulf %1030, %969 : vector<8x128xf32>
    %1040 = arith.mulf %1024, %1032 : vector<8x128xf32>
    %1041 = arith.addf %1039, %1040 : vector<8x128xf32>
    %1042 = math.tanh %1041 : vector<8x128xf32>
    %1043 = arith.mulf %1038, %1042 : vector<8x128xf32>
    %1044 = arith.truncf %1043 : vector<8x128xf32> to vector<8x128xbf16>
    %1045 = arith.index_cast %c6_i32_269 : i32 to index
    %c0_288 = arith.constant 0 : index
    %c0_289 = arith.constant 0 : index
    %1046 = vector.load %arg6[%1045, %c0_288, %c0_289] : memref<7x8x128xbf16, #tpu.memory_space<vmem>>, vector<1x8x128xbf16>
    %1047 = vector.shape_cast %1046 : vector<1x8x128xbf16> to vector<8x128xbf16>
    %1048 = vector.shape_cast %1044 : vector<8x128xbf16> to vector<1x8x128xbf16>
    tpu.vector_store %arg6[%1045, %c0_288, %c0_289], %1048 {strides = array<i32>} : memref<7x8x128xbf16, #tpu.memory_space<vmem>>, vector<1x8x128xbf16>,
    %c7_i32_290 = arith.constant 7 : i32
    return
  }
}

</mosaic_0001>

<llo_original>
// kernel: s2vt_forward_train.5
$region0: #{s2vt_forward_train.5}
  #allocation0 [shape = 'u32[]', space=smem, size = 0x4, offset = 0x4, fixed_abs, tag = 'smem constant byte address 0x4 - core index']
  #allocation1 [shape = 'u32[72,128]{1,0:T(1,128)}', space=vmem, size = 0x9000, scoped, tag = 'internal scratch']
  %s0 = inlined_call_operand.vmem [shape: f32[56,128], index: 0, kind: input, shape index: {}]
  %s1 = inlined_call_operand.vmem [shape: f32[56,1], index: 1, kind: input, shape index: {}]
  %s2 = inlined_call_operand.vmem [shape: f32[56,128], index: 2, kind: output, shape index: {}]
  %s3 = sld [smem:[#allocation0]]
  $region18: #{s2vt_forward_train.5} parent=0
    _
  %s5 = ssub.s32 1, %s3
  %s6 = scalar_select 0, %s5, %s3
  // Predicated region
  $region2: #{s2vt_forward_train.5} parent=0 // pred_check
    _
  $region3: #{s2vt_forward_train.5} parent=0 // pred_check_branch
    %8 = sbr.rel (0) target = $region5
  $region4: #{s2vt_forward_train.5} parent=0 // pred_region
    _
  $region5: #{s2vt_forward_train.5} parent=0 // pred_fallthru
    _
  // Predicated region
  $region6: #{s2vt_forward_train.5} parent=0 // pred_check
    _
  $region7: #{s2vt_forward_train.5} parent=0 // pred_check_branch
    %10 = sbr.rel (0) target = $region9
  $region8: #{s2vt_forward_train.5} parent=0 // pred_region
    _
  $region9: #{s2vt_forward_train.5} parent=0 // pred_fallthru
    _
  %v11 = vld [vmem:[%s0] sm:$0xff]
  %v12 = vld [vmem:[%s0 + $0x8] sm:$0xff]
  %v13 = vld [vmem:[%s0 + $0x10] sm:$0xff]
  %v14 = vld [vmem:[%s0 + $0x18] sm:$0xff]
  %v15 = vld [vmem:[%s0 + $0x20] sm:$0xff]
  %v16 = vld [vmem:[%s0 + $0x28] sm:$0xff]
  %v17 = vld [vmem:[%s0 + $0x30] sm:$0xff]
  %v18 = vld [vmem:[%s1] sm:$0xff]
  %v19 = vld [vmem:[%s1 + $0x8] sm:$0xff]
  %v20 = vld [vmem:[%s1 + $0x10] sm:$0xff]
  %v21 = vld [vmem:[%s1 + $0x18] sm:$0xff]
  %v22 = vld [vmem:[%s1 + $0x20] sm:$0xff]
  %v23 = vld [vmem:[%s1 + $0x28] sm:$0xff]
  %v24 = vld [vmem:[%s1 + $0x30] sm:$0xff]
  %26 = vset.pattern.permute.xlu0 0
  %27 = vperm.xlu0 %26, %v18
  %v28 = vpop.permute.xlu0 %27
  %31 = vset.pattern.permute.xlu0 0
  %32 = vperm.xlu0 %31, %v19
  %v33 = vpop.permute.xlu0 %32
  %36 = vset.pattern.permute.xlu0 0
  %37 = vperm.xlu0 %36, %v20
  %v38 = vpop.permute.xlu0 %37
  %41 = vset.pattern.permute.xlu0 0
  %42 = vperm.xlu0 %41, %v21
  %v43 = vpop.permute.xlu0 %42
  %46 = vset.pattern.permute.xlu0 0
  %47 = vperm.xlu0 %46, %v22
  %v48 = vpop.permute.xlu0 %47
  %51 = vset.pattern.permute.xlu0 0
  %52 = vperm.xlu0 %51, %v23
  %v53 = vpop.permute.xlu0 %52
  %56 = vset.pattern.permute.xlu0 0
  %57 = vperm.xlu0 %56, %v24
  %v58 = vpop.permute.xlu0 %57
  %v60 = vsub.f32 %v11, %v28
  %v61 = vsub.f32 %v12, %v33
  %v62 = vsub.f32 %v13, %v38
  %v63 = vsub.f32 %v14, %v43
  %v64 = vsub.f32 %v15, %v48
  %v65 = vsub.f32 %v16, %v53
  %v66 = vsub.f32 %v17, %v58
  %67 = vst [vmem:[%s2] sm:$0xff] %v60
  %68 = vst [vmem:[%s2 + $0x8] sm:$0xff] %v61
  %69 = vst [vmem:[%s2 + $0x10] sm:$0xff] %v62
  %70 = vst [vmem:[%s2 + $0x18] sm:$0xff] %v63
  %71 = vst [vmem:[%s2 + $0x20] sm:$0xff] %v64
  %72 = vst [vmem:[%s2 + $0x28] sm:$0xff] %v65
  %73 = vst [vmem:[%s2 + $0x30] sm:$0xff] %v66
  // Predicated region
  $region10: #{s2vt_forward_train.5} parent=0 // pred_check
    _
  $region11: #{s2vt_forward_train.5} parent=0 // pred_check_branch
    %75 = sbr.rel (0) target = $region13
  $region12: #{s2vt_forward_train.5} parent=0 // pred_region
    _
  $region13: #{s2vt_forward_train.5} parent=0 // pred_fallthru
    _
  // Predicated region
  $region14: #{s2vt_forward_train.5} parent=0 // pred_check
    _
  $region15: #{s2vt_forward_train.5} parent=0 // pred_check_branch
    %77 = sbr.rel (0) target = $region17
  $region16: #{s2vt_forward_train.5} parent=0 // pred_region
    _
  $region17: #{s2vt_forward_train.5} parent=0 // pred_fallthru
    _

// kernel: s2vt_forward_train.4
$region0: #{s2vt_forward_train.4}
  #allocation0 [shape = 'u32[]', space=smem, size = 0x4, offset = 0x4, fixed_abs, tag = 'smem constant byte address 0x4 - core index']
  #allocation1 [shape = 'u32[72,128]{1,0:T(1,128)}', space=vmem, size = 0x9000, scoped, tag = 'internal scratch']
  #allocation2 [shape = 'f32[56,1]{1,0:T(8,128)}', space=vmem, size = 0x7000, scoped, tag = 'scratch operand']
  #allocation3 [shape = 'f32[56,1]{1,0:T(8,128)}', space=vmem, size = 0x7000, scoped, tag = 'scratch operand']
  %s0 = inlined_call_operand.vmem [shape: bf16[56,128], index: 0, kind: input, shape index: {}]
  %s1 = inlined_call_operand.vmem [shape: bf16[128,128], index: 1, kind: input, shape index: {}]
  %s2 = inlined_call_operand.vmem [shape: f32[1,128], index: 2, kind: input, shape index: {}]
  %s3 = inlined_call_operand.vmem [shape: f32[56,128], index: 3, kind: output, shape index: {0}]
  %s4 = inlined_call_operand.vmem [shape: f32[56,1], index: 4, kind: output, shape index: {1}]
  %5 = xla_tuple %s3, %s4
  %s6 = sld [smem:[#allocation0]]
  $region38: #{s2vt_forward_train.4} parent=0
    _
  %s8 = ssub.s32 1, %s6
  %s9 = scalar_select 0, %s8, %s6
  // Predicated region
  $region2: #{s2vt_forward_train.4} parent=0 // pred_check
    _
  $region3: #{s2vt_forward_train.4} parent=0 // pred_check_branch
    %11 = sbr.rel (0) target = $region5
  $region4: #{s2vt_forward_train.4} parent=0 // pred_region
    _
  $region5: #{s2vt_forward_train.4} parent=0 // pred_fallthru
    _
  // Predicated region
  $region6: #{s2vt_forward_train.4} parent=0 // pred_check
    _
  $region7: #{s2vt_forward_train.4} parent=0 // pred_check_branch
    %13 = sbr.rel (0) target = $region9
  $region8: #{s2vt_forward_train.4} parent=0 // pred_region
    _
  $region9: #{s2vt_forward_train.4} parent=0 // pred_fallthru
    _
  // Predicated region
  $region10: #{s2vt_forward_train.4} parent=0 // pred_check
    _
  $region11: #{s2vt_forward_train.4} parent=0 // pred_check_branch
    %15 = sbr.rel (0) target = $region13
  $region12: #{s2vt_forward_train.4} parent=0 // pred_region
    _
  $region13: #{s2vt_forward_train.4} parent=0 // pred_fallthru
    _
  %p16 = scmp.eq.s32.totalorder 0, 0
  // Predicated region
  $region14: #{s2vt_forward_train.4} parent=0 // pred_check
    %p17 = pneg %p16
  $region15: #{s2vt_forward_train.4} parent=0 // pred_check_branch
    %19 = sbr.rel (%p17) target = $region17
  $region16: #{s2vt_forward_train.4} parent=0 // pred_region
    %vm20 = vcmask 7168
    %21 = vst.msk [vmem:[#allocation2] sm:$0xff] %vm20, -inf
    %22 = vst.msk [vmem:[#allocation2 + $0x8] sm:$0xff] %vm20, -inf
    %23 = vst.msk [vmem:[#allocation2 + $0x10] sm:$0xff] %vm20, -inf
    %24 = vst.msk [vmem:[#allocation2 + $0x18] sm:$0xff] %vm20, -inf
    %25 = vst.msk [vmem:[#allocation2 + $0x20] sm:$0xff] %vm20, -inf
    %26 = vst.msk [vmem:[#allocation2 + $0x28] sm:$0xff] %vm20, -inf
    %27 = vst.msk [vmem:[#allocation2 + $0x30] sm:$0xff] %vm20, -inf
    %28 = vst.msk [vmem:[#allocation3] sm:$0xff] %vm20, 0.0
    %29 = vst.msk [vmem:[#allocation3 + $0x8] sm:$0xff] %vm20, 0.0
    %30 = vst.msk [vmem:[#allocation3 + $0x10] sm:$0xff] %vm20, 0.0
    %31 = vst.msk [vmem:[#allocation3 + $0x18] sm:$0xff] %vm20, 0.0
    %32 = vst.msk [vmem:[#allocation3 + $0x20] sm:$0xff] %vm20, 0.0
    %33 = vst.msk [vmem:[#allocation3 + $0x28] sm:$0xff] %vm20, 0.0
    %34 = vst.msk [vmem:[#allocation3 + $0x30] sm:$0xff] %vm20, 0.0
  $region17: #{s2vt_forward_train.4} parent=0 // pred_fallthru
    _
  %v35 = vld [vmem:[%s0] sm:$0xf]
  %v36 = vld [vmem:[%s0 + $0x4] sm:$0xf]
  %v37 = vld [vmem:[%s0 + $0x8] sm:$0xf]
  %v38 = vld [vmem:[%s0 + $0xc] sm:$0xf]
  %v39 = vld [vmem:[%s0 + $0x10] sm:$0xf]
  %v40 = vld [vmem:[%s0 + $0x14] sm:$0xf]
  %v41 = vld [vmem:[%s0 + $0x18] sm:$0xf]
  %v42 = vld [vmem:[%s1] sm:$0xf]
  %v43 = vld [vmem:[%s1 + $0x4] sm:$0xf]
  %v44 = vld [vmem:[%s1 + $0x8] sm:$0xf]
  %v45 = vld [vmem:[%s1 + $0xc] sm:$0xf]
  %v46 = vld [vmem:[%s1 + $0x10] sm:$0xf]
  %v47 = vld [vmem:[%s1 + $0x14] sm:$0xf]
  %v48 = vld [vmem:[%s1 + $0x18] sm:$0xf]
  %v49 = vld [vmem:[%s1 + $0x1c] sm:$0xf]
  %v50 = vld [vmem:[%s1 + $0x20] sm:$0xf]
  %v51 = vld [vmem:[%s1 + $0x24] sm:$0xf]
  %v52 = vld [vmem:[%s1 + $0x28] sm:$0xf]
  %v53 = vld [vmem:[%s1 + $0x2c] sm:$0xf]
  %v54 = vld [vmem:[%s1 + $0x30] sm:$0xf]
  %v55 = vld [vmem:[%s1 + $0x34] sm:$0xf]
  %v56 = vld [vmem:[%s1 + $0x38] sm:$0xf]
  %v57 = vld [vmem:[%s1 + $0x3c] sm:$0xf]
  %v58 = vld [vmem:[%s2] sm:$0x1]
  %v60 = vperm.slane %v58, 0
  %v69 = vunpack.c.l.b16 %v35
  %v70 = vunpack.c.l.b16 %v36
  %v71 = vunpack.c.l.b16 %v37
  %v72 = vunpack.c.l.b16 %v38
  %v73 = vunpack.c.l.b16 %v39
  %v74 = vunpack.c.l.b16 %v40
  %v75 = vunpack.c.l.b16 %v41
  %v76 = vpack.c.b16 %v70, %v69
  %v77 = vpack.c.b16 %v72, %v71
  %v78 = vpack.c.b16 %v74, %v73
  %v79 = vpack.c.b16 %v75, %v75
  %v100 = vunpack.c.l.b16 %v42
  %v101 = vunpack.c.l.b16 %v43
  %v102 = vunpack.c.l.b16 %v44
  %v103 = vunpack.c.l.b16 %v45
  %v104 = vunpack.c.l.b16 %v46
  %v105 = vunpack.c.l.b16 %v47
  %v106 = vunpack.c.l.b16 %v48
  %v107 = vunpack.c.l.b16 %v49
  %v108 = vunpack.c.l.b16 %v50
  %v109 = vunpack.c.l.b16 %v51
  %v110 = vunpack.c.l.b16 %v52
  %v111 = vunpack.c.l.b16 %v53
  %v112 = vunpack.c.l.b16 %v54
  %v113 = vunpack.c.l.b16 %v55
  %v114 = vunpack.c.l.b16 %v56
  %v115 = vunpack.c.l.b16 %v57
  %v116 = vpack.c.b16 %v101, %v100
  %v117 = vpack.c.b16 %v103, %v102
  %v118 = vpack.c.b16 %v105, %v104
  %v119 = vpack.c.b16 %v107, %v106
  %v120 = vpack.c.b16 %v109, %v108
  %v121 = vpack.c.b16 %v111, %v110
  %v122 = vpack.c.b16 %v113, %v112
  %v123 = vpack.c.b16 %v115, %v114
  %132 = vmatpush.bf16.msra.mxu0 %v123
  %133 = vmatpush.bf16.msra.mxu0 %v122
  %134 = vmatpush.bf16.msra.mxu0 %v121
  %135 = vmatpush.bf16.msra.mxu0 %v120
  %136 = vmatpush.bf16.msra.mxu0 %v119
  %137 = vmatpush.bf16.msra.mxu0 %v118
  %138 = vmatpush.bf16.msra.mxu0 %v117
  %139 = vmatpush.bf16.msra.mxu0 %v116
  %140 = vmatmul.bf16.gmra.mxu0 %v76
  %v141 = vpop.f32.mrf.mxu0
  %v142 = vadd.f32 %v60, %v141
  %v143 = vpop.f32.mrf.mxu0
  %v144 = vadd.f32 %v60, %v143
  %145 = vmatmul.bf16.gmra.mxu0 %v77
  %v146 = vpop.f32.mrf.mxu0
  %v147 = vadd.f32 %v60, %v146
  %v148 = vpop.f32.mrf.mxu0
  %v149 = vadd.f32 %v60, %v148
  %150 = vmatmul.bf16.gmra.mxu0 %v78
  %v151 = vpop.f32.mrf.mxu0
  %v152 = vadd.f32 %v60, %v151
  %v153 = vpop.f32.mrf.mxu0
  %v154 = vadd.f32 %v60, %v153
  %155 = vmatmul.bf16.gmra.mxu0 %v79
  %v156 = vpop.f32.mrf.mxu0
  %v157 = vadd.f32 %v60, %v156
  %v158 = vpop.f32.mrf.mxu0
  %159 = vdwg.mxu0
  %160 = vst [vmem:[%s3] sm:$0xff] %v142
  %161 = vst [vmem:[%s3 + $0x8] sm:$0xff] %v144
  %162 = vst [vmem:[%s3 + $0x10] sm:$0xff] %v147
  %163 = vst [vmem:[%s3 + $0x18] sm:$0xff] %v149
  %164 = vst [vmem:[%s3 + $0x20] sm:$0xff] %v152
  %165 = vst [vmem:[%s3 + $0x28] sm:$0xff] %v154
  %166 = vst [vmem:[%s3 + $0x30] sm:$0xff] %v157
  %v167 = vld [vmem:[#allocation2] sm:$0xff]
  %v168 = vld [vmem:[#allocation2 + $0x8] sm:$0xff]
  %v169 = vld [vmem:[#allocation2 + $0x10] sm:$0xff]
  %v170 = vld [vmem:[#allocation2 + $0x18] sm:$0xff]
  %v171 = vld [vmem:[#allocation2 + $0x20] sm:$0xff]
  %v172 = vld [vmem:[#allocation2 + $0x28] sm:$0xff]
  %v173 = vld [vmem:[#allocation2 + $0x30] sm:$0xff]
  %174 = vmax.xlane.f32.xlu0 %v142
  %v175 = vpop.xlane.xlu0 %174
  %176 = vmax.xlane.f32.xlu0 %v144
  %v177 = vpop.xlane.xlu0 %176
  %178 = vmax.xlane.f32.xlu0 %v147
  %v179 = vpop.xlane.xlu0 %178
  %180 = vmax.xlane.f32.xlu0 %v149
  %v181 = vpop.xlane.xlu0 %180
  %182 = vmax.xlane.f32.xlu0 %v152
  %v183 = vpop.xlane.xlu0 %182
  %184 = vmax.xlane.f32.xlu0 %v154
  %v185 = vpop.xlane.xlu0 %184
  %186 = vmax.xlane.f32.xlu0 %v157
  %v187 = vpop.xlane.xlu0 %186
  %v188 = vmax.f32 %v167, %v175
  %v189 = vmax.f32 %v168, %v177
  %v190 = vmax.f32 %v169, %v179
  %v191 = vmax.f32 %v170, %v181
  %v192 = vmax.f32 %v171, %v183
  %v193 = vmax.f32 %v172, %v185
  %v194 = vmax.f32 %v173, %v187
  %v195 = vld [vmem:[#allocation3] sm:$0xff]
  %v196 = vld [vmem:[#allocation3 + $0x8] sm:$0xff]
  %v197 = vld [vmem:[#allocation3 + $0x10] sm:$0xff]
  %v198 = vld [vmem:[#allocation3 + $0x18] sm:$0xff]
  %v199 = vld [vmem:[#allocation3 + $0x20] sm:$0xff]
  %v200 = vld [vmem:[#allocation3 + $0x28] sm:$0xff]
  %v201 = vld [vmem:[#allocation3 + $0x30] sm:$0xff]
  %v202 = vsub.f32 %v167, %v188
  %v203 = vsub.f32 %v168, %v189
  %v204 = vsub.f32 %v169, %v190
  %v205 = vsub.f32 %v170, %v191
  %v206 = vsub.f32 %v171, %v192
  %v207 = vsub.f32 %v172, %v193
  %v208 = vsub.f32 %v173, %v194
  %v209 = vmul.f32 %v202, 1.442695
  %v210 = vpow.pop %v209
  %v211 = vmul.f32 %v203, 1.442695
  %v212 = vpow.pop %v211
  %v213 = vmul.f32 %v204, 1.442695
  %v214 = vpow.pop %v213
  %v215 = vmul.f32 %v205, 1.442695
  %v216 = vpow.pop %v215
  %v217 = vmul.f32 %v206, 1.442695
  %v218 = vpow.pop %v217
  %v219 = vmul.f32 %v207, 1.442695
  %v220 = vpow.pop %v219
  %v221 = vmul.f32 %v208, 1.442695
  %v222 = vpow.pop %v221
  %v223 = vmul.f32 %v195, %v210
  %v224 = vmul.f32 %v196, %v212
  %v225 = vmul.f32 %v197, %v214
  %v226 = vmul.f32 %v198, %v216
  %v227 = vmul.f32 %v199, %v218
  %v228 = vmul.f32 %v200, %v220
  %v229 = vmul.f32 %v201, %v222
  %231 = vset.pattern.permute.xlu0 0
  %232 = vperm.xlu0 %231, %v188
  %v233 = vpop.permute.xlu0 %232
  %236 = vset.pattern.permute.xlu0 0
  %237 = vperm.xlu0 %236, %v189
  %v238 = vpop.permute.xlu0 %237
  %241 = vset.pattern.permute.xlu0 0
  %242 = vperm.xlu0 %241, %v190
  %v243 = vpop.permute.xlu0 %242
  %246 = vset.pattern.permute.xlu0 0
  %247 = vperm.xlu0 %246, %v191
  %v248 = vpop.permute.xlu0 %247
  %251 = vset.pattern.permute.xlu0 0
  %252 = vperm.xlu0 %251, %v192
  %v253 = vpop.permute.xlu0 %252
  %256 = vset.pattern.permute.xlu0 0
  %257 = vperm.xlu0 %256, %v193
  %v258 = vpop.permute.xlu0 %257
  %261 = vset.pattern.permute.xlu0 0
  %262 = vperm.xlu0 %261, %v194
  %v263 = vpop.permute.xlu0 %262
  %v265 = vsub.f32 %v142, %v233
  %v266 = vsub.f32 %v144, %v238
  %v267 = vsub.f32 %v147, %v243
  %v268 = vsub.f32 %v149, %v248
  %v269 = vsub.f32 %v152, %v253
  %v270 = vsub.f32 %v154, %v258
  %v271 = vsub.f32 %v157, %v263
  %v272 = vmul.f32 %v265, 1.442695
  %v273 = vpow.pop %v272
  %v274 = vmul.f32 %v266, 1.442695
  %v275 = vpow.pop %v274
  %v276 = vmul.f32 %v267, 1.442695
  %v277 = vpow.pop %v276
  %v278 = vmul.f32 %v268, 1.442695
  %v279 = vpow.pop %v278
  %v280 = vmul.f32 %v269, 1.442695
  %v281 = vpow.pop %v280
  %v282 = vmul.f32 %v270, 1.442695
  %v283 = vpow.pop %v282
  %v284 = vmul.f32 %v271, 1.442695
  %v285 = vpow.pop %v284
  %286 = vadd.xlane.f32.xlu0 %v273
  %v287 = vpop.xlane.xlu0 %286
  %288 = vadd.xlane.f32.xlu0 %v275
  %v289 = vpop.xlane.xlu0 %288
  %290 = vadd.xlane.f32.xlu0 %v277
  %v291 = vpop.xlane.xlu0 %290
  %292 = vadd.xlane.f32.xlu0 %v279
  %v293 = vpop.xlane.xlu0 %292
  %294 = vadd.xlane.f32.xlu0 %v281
  %v295 = vpop.xlane.xlu0 %294
  %296 = vadd.xlane.f32.xlu0 %v283
  %v297 = vpop.xlane.xlu0 %296
  %298 = vadd.xlane.f32.xlu0 %v285
  %v299 = vpop.xlane.xlu0 %298
  %v300 = vadd.f32 %v223, %v287
  %v301 = vadd.f32 %v224, %v289
  %v302 = vadd.f32 %v225, %v291
  %v303 = vadd.f32 %v226, %v293
  %v304 = vadd.f32 %v227, %v295
  %v305 = vadd.f32 %v228, %v297
  %v306 = vadd.f32 %v229, %v299
  %vm307 = vcmask 7168
  %308 = vst.msk [vmem:[#allocation3] sm:$0xff] %vm307, %v300
  %309 = vst.msk [vmem:[#allocation3 + $0x8] sm:$0xff] %vm307, %v301
  %310 = vst.msk [vmem:[#allocation3 + $0x10] sm:$0xff] %vm307, %v302
  %311 = vst.msk [vmem:[#allocation3 + $0x18] sm:$0xff] %vm307, %v303
  %312 = vst.msk [vmem:[#allocation3 + $0x20] sm:$0xff] %vm307, %v304
  %313 = vst.msk [vmem:[#allocation3 + $0x28] sm:$0xff] %vm307, %v305
  %314 = vst.msk [vmem:[#allocation3 + $0x30] sm:$0xff] %vm307, %v306
  %315 = vst.msk [vmem:[#allocation2] sm:$0xff] %vm307, %v188
  %316 = vst.msk [vmem:[#allocation2 + $0x8] sm:$0xff] %vm307, %v189
  %317 = vst.msk [vmem:[#allocation2 + $0x10] sm:$0xff] %vm307, %v190
  %318 = vst.msk [vmem:[#allocation2 + $0x18] sm:$0xff] %vm307, %v191
  %319 = vst.msk [vmem:[#allocation2 + $0x20] sm:$0xff] %vm307, %v192
  %320 = vst.msk [vmem:[#allocation2 + $0x28] sm:$0xff] %vm307, %v193
  %321 = vst.msk [vmem:[#allocation2 + $0x30] sm:$0xff] %vm307, %v194
  // Predicated region
  $region18: #{s2vt_forward_train.4} parent=0 // pred_check
    %p322 = pneg %p16
  $region19: #{s2vt_forward_train.4} parent=0 // pred_check_branch
    %324 = sbr.rel (%p322) target = $region21
  $region20: #{s2vt_forward_train.4} parent=0 // pred_region
    %v325 = vld [vmem:[#allocation2] sm:$0xff]
    %v326 = vld [vmem:[#allocation2 + $0x8] sm:$0xff]
    %v327 = vld [vmem:[#allocation2 + $0x10] sm:$0xff]
    %v328 = vld [vmem:[#allocation2 + $0x18] sm:$0xff]
    %v329 = vld [vmem:[#allocation2 + $0x20] sm:$0xff]
    %v330 = vld [vmem:[#allocation2 + $0x28] sm:$0xff]
    %v331 = vld [vmem:[#allocation2 + $0x30] sm:$0xff]
    %v332 = vld [vmem:[#allocation3] sm:$0xff]
    %v333 = vld [vmem:[#allocation3 + $0x8] sm:$0xff]
    %v334 = vld [vmem:[#allocation3 + $0x10] sm:$0xff]
    %v335 = vld [vmem:[#allocation3 + $0x18] sm:$0xff]
    %v336 = vld [vmem:[#allocation3 + $0x20] sm:$0xff]
    %v337 = vld [vmem:[#allocation3 + $0x28] sm:$0xff]
    %v338 = vld [vmem:[#allocation3 + $0x30] sm:$0xff]
    %v339 = vlog2.pop %v332
    %v340 = vmul.f32 %v339, 0.6931472
    %v341 = vlog2.pop %v333
    %v342 = vmul.f32 %v341, 0.6931472
    %v343 = vlog2.pop %v334
    %v344 = vmul.f32 %v343, 0.6931472
    %v345 = vlog2.pop %v335
    %v346 = vmul.f32 %v345, 0.6931472
    %v347 = vlog2.pop %v336
    %v348 = vmul.f32 %v347, 0.6931472
    %v349 = vlog2.pop %v337
    %v350 = vmul.f32 %v349, 0.6931472
    %v351 = vlog2.pop %v338
    %v352 = vmul.f32 %v351, 0.6931472
    %v353 = vadd.f32 %v325, %v340
    %v354 = vadd.f32 %v326, %v342
    %v355 = vadd.f32 %v327, %v344
    %v356 = vadd.f32 %v328, %v346
    %v357 = vadd.f32 %v329, %v348
    %v358 = vadd.f32 %v330, %v350
    %v359 = vadd.f32 %v331, %v352
    %360 = vst.msk [vmem:[%s4] sm:$0xff] %vm307, %v353
    %361 = vst.msk [vmem:[%s4 + $0x8] sm:$0xff] %vm307, %v354
    %362 = vst.msk [vmem:[%s4 + $0x10] sm:$0xff] %vm307, %v355
    %363 = vst.msk [vmem:[%s4 + $0x18] sm:$0xff] %vm307, %v356
    %364 = vst.msk [vmem:[%s4 + $0x20] sm:$0xff] %vm307, %v357
    %365 = vst.msk [vmem:[%s4 + $0x28] sm:$0xff] %vm307, %v358
    %366 = vst.msk [vmem:[%s4 + $0x30] sm:$0xff] %vm307, %v359
  $region21: #{s2vt_forward_train.4} parent=0 // pred_fallthru
    _
  // Predicated region
  $region22: #{s2vt_forward_train.4} parent=0 // pred_check
    _
  $region23: #{s2vt_forward_train.4} parent=0 // pred_check_branch
    %368 = sbr.rel (0) target = $region25
  $region24: #{s2vt_forward_train.4} parent=0 // pred_region
    _
  $region25: #{s2vt_forward_train.4} parent=0 // pred_fallthru
    _
  // Predicated region
  $region26: #{s2vt_forward_train.4} parent=0 // pred_check
    _
  $region27: #{s2vt_forward_train.4} parent=0 // pred_check_branch
    %370 = sbr.rel (0) target = $region29
  $region28: #{s2vt_forward_train.4} parent=0 // pred_region
    _
  $region29: #{s2vt_forward_train.4} parent=0 // pred_fallthru
    _
  // Predicated region
  $region30: #{s2vt_forward_train.4} parent=0 // pred_check
    _
  $region31: #{s2vt_forward_train.4} parent=0 // pred_check_branch
    %372 = sbr.rel (0) target = $region33
  $region32: #{s2vt_forward_train.4} parent=0 // pred_region
    _
  $region33: #{s2vt_forward_train.4} parent=0 // pred_fallthru
    _
  // Predicated region
  $region34: #{s2vt_forward_train.4} parent=0 // pred_check
    _
  $region35: #{s2vt_forward_train.4} parent=0 // pred_check_branch
    %374 = sbr.rel (0) target = $region37
  $region36: #{s2vt_forward_train.4} parent=0 // pred_region
    _
  $region37: #{s2vt_forward_train.4} parent=0 // pred_fallthru
    _

// kernel: s2vt_forward_train.3
$region0: #{s2vt_forward_train.3}
  #allocation0 [shape = 'u32[]', space=smem, size = 0x4, offset = 0x4, fixed_abs, tag = 'smem constant byte address 0x4 - core index']
  #allocation1 [shape = 'u32[72,128]{1,0:T(1,128)}', space=vmem, size = 0x9000, scoped, tag = 'internal scratch']
  %s0 = inlined_call_operand.vmem [shape: bf16[8,8,128], index: 0, kind: input, shape index: {}]
  %s1 = inlined_call_operand.vmem [shape: bf16[7,8,128], index: 1, kind: input, shape index: {}]
  %s2 = inlined_call_operand.vmem [shape: bf16[256,512], index: 2, kind: input, shape index: {}]
  %s3 = inlined_call_operand.vmem [shape: f32[1,512], index: 3, kind: input, shape index: {}]
  %s4 = inlined_call_operand.vmem [shape: bf16[384,512], index: 4, kind: input, shape index: {}]
  %s5 = inlined_call_operand.vmem [shape: f32[1,512], index: 5, kind: input, shape index: {}]
  %s6 = inlined_call_operand.vmem [shape: bf16[7,8,128], index: 6, kind: output, shape index: {}]
  %s7 = sld [smem:[#allocation0]]
  $region34: #{s2vt_forward_train.3} parent=0
    _
  %s9 = ssub.s32 1, %s7
  %s10 = scalar_select 0, %s9, %s7
  // Predicated region
  $region2: #{s2vt_forward_train.3} parent=0 // pred_check
    _
  $region3: #{s2vt_forward_train.3} parent=0 // pred_check_branch
    %12 = sbr.rel (0) target = $region5
  $region4: #{s2vt_forward_train.3} parent=0 // pred_region
    _
  $region5: #{s2vt_forward_train.3} parent=0 // pred_fallthru
    _
  // Predicated region
  $region6: #{s2vt_forward_train.3} parent=0 // pred_check
    _
  $region7: #{s2vt_forward_train.3} parent=0 // pred_check_branch
    %14 = sbr.rel (0) target = $region9
  $region8: #{s2vt_forward_train.3} parent=0 // pred_region
    _
  $region9: #{s2vt_forward_train.3} parent=0 // pred_fallthru
    _
  // Predicated region
  $region10: #{s2vt_forward_train.3} parent=0 // pred_check
    _
  $region11: #{s2vt_forward_train.3} parent=0 // pred_check_branch
    %16 = sbr.rel (0) target = $region13
  $region12: #{s2vt_forward_train.3} parent=0 // pred_region
    _
  $region13: #{s2vt_forward_train.3} parent=0 // pred_fallthru
    _
  // Predicated region
  $region14: #{s2vt_forward_train.3} parent=0 // pred_check
    _
  $region15: #{s2vt_forward_train.3} parent=0 // pred_check_branch
    %18 = sbr.rel (0) target = $region17
  $region16: #{s2vt_forward_train.3} parent=0 // pred_region
    _
  $region17: #{s2vt_forward_train.3} parent=0 // pred_fallthru
    _
  // Predicated region
  $region18: #{s2vt_forward_train.3} parent=0 // pred_check
    _
  $region19: #{s2vt_forward_train.3} parent=0 // pred_check_branch
    %20 = sbr.rel (0) target = $region21
  $region20: #{s2vt_forward_train.3} parent=0 // pred_region
    _
  $region21: #{s2vt_forward_train.3} parent=0 // pred_fallthru
    _
  // Predicated region
  $region22: #{s2vt_forward_train.3} parent=0 // pred_check
    _
  $region23: #{s2vt_forward_train.3} parent=0 // pred_check_branch
    %22 = sbr.rel (0) target = $region25
  $region24: #{s2vt_forward_train.3} parent=0 // pred_region
    _
  $region25: #{s2vt_forward_train.3} parent=0 // pred_fallthru
    _
  %v24 = vld [vmem:[%s0] sm:$0xf]
  %v25 = vld [vmem:[%s2] sm:$0xff]
  %v26 = vld [vmem:[%s2 + $0x8] sm:$0xff]
  %v27 = vld [vmem:[%s2 + $0x10] sm:$0xff]
  %v28 = vld [vmem:[%s2 + $0x18] sm:$0xff]
  %v29 = vld [vmem:[%s2 + $0x20] sm:$0xff]
  %v30 = vld [vmem:[%s2 + $0x28] sm:$0xff]
  %v31 = vld [vmem:[%s2 + $0x30] sm:$0xff]
  %v32 = vld [vmem:[%s2 + $0x38] sm:$0xff]
  %v33 = vld [vmem:[%s2 + $0x40] sm:$0xff]
  %v34 = vld [vmem:[%s2 + $0x48] sm:$0xff]
  %v35 = vld [vmem:[%s2 + $0x50] sm:$0xff]
  %v36 = vld [vmem:[%s2 + $0x58] sm:$0xff]
  %v37 = vld [vmem:[%s2 + $0x60] sm:$0xff]
  %v38 = vld [vmem:[%s2 + $0x68] sm:$0xff]
  %v39 = vld [vmem:[%s2 + $0x70] sm:$0xff]
  %v40 = vld [vmem:[%s2 + $0x78] sm:$0xff]
  %v41 = vld [vmem:[%s2 + $0x80] sm:$0xff]
  %v42 = vld [vmem:[%s2 + $0x88] sm:$0xff]
  %v43 = vld [vmem:[%s2 + $0x90] sm:$0xff]
  %v44 = vld [vmem:[%s2 + $0x98] sm:$0xff]
  %v45 = vld [vmem:[%s2 + $0xa0] sm:$0xff]
  %v46 = vld [vmem:[%s2 + $0xa8] sm:$0xff]
  %v47 = vld [vmem:[%s2 + $0xb0] sm:$0xff]
  %v48 = vld [vmem:[%s2 + $0xb8] sm:$0xff]
  %v49 = vld [vmem:[%s2 + $0xc0] sm:$0xff]
  %v50 = vld [vmem:[%s2 + $0xc8] sm:$0xff]
  %v51 = vld [vmem:[%s2 + $0xd0] sm:$0xff]
  %v52 = vld [vmem:[%s2 + $0xd8] sm:$0xff]
  %v53 = vld [vmem:[%s2 + $0xe0] sm:$0xff]
  %v54 = vld [vmem:[%s2 + $0xe8] sm:$0xff]
  %v55 = vld [vmem:[%s2 + $0xf0] sm:$0xff]
  %v56 = vld [vmem:[%s2 + $0xf8] sm:$0xff]
  %v57 = vld [vmem:[%s2 + $0x100] sm:$0xff]
  %v58 = vld [vmem:[%s2 + $0x108] sm:$0xff]
  %v59 = vld [vmem:[%s2 + $0x110] sm:$0xff]
  %v60 = vld [vmem:[%s2 + $0x118] sm:$0xff]
  %v61 = vld [vmem:[%s2 + $0x120] sm:$0xff]
  %v62 = vld [vmem:[%s2 + $0x128] sm:$0xff]
  %v63 = vld [vmem:[%s2 + $0x130] sm:$0xff]
  %v64 = vld [vmem:[%s2 + $0x138] sm:$0xff]
  %v65 = vld [vmem:[%s2 + $0x140] sm:$0xff]
  %v66 = vld [vmem:[%s2 + $0x148] sm:$0xff]
  %v67 = vld [vmem:[%s2 + $0x150] sm:$0xff]
  %v68 = vld [vmem:[%s2 + $0x158] sm:$0xff]
  %v69 = vld [vmem:[%s2 + $0x160] sm:$0xff]
  %v70 = vld [vmem:[%s2 + $0x168] sm:$0xff]
  %v71 = vld [vmem:[%s2 + $0x170] sm:$0xff]
  %v72 = vld [vmem:[%s2 + $0x178] sm:$0xff]
  %v73 = vld [vmem:[%s2 + $0x180] sm:$0xff]
  %v74 = vld [vmem:[%s2 + $0x188] sm:$0xff]
  %v75 = vld [vmem:[%s2 + $0x190] sm:$0xff]
  %v76 = vld [vmem:[%s2 + $0x198] sm:$0xff]
  %v77 = vld [vmem:[%s2 + $0x1a0] sm:$0xff]
  %v78 = vld [vmem:[%s2 + $0x1a8] sm:$0xff]
  %v79 = vld [vmem:[%s2 + $0x1b0] sm:$0xff]
  %v80 = vld [vmem:[%s2 + $0x1b8] sm:$0xff]
  %v81 = vld [vmem:[%s2 + $0x1c0] sm:$0xff]
  %v82 = vld [vmem:[%s2 + $0x1c8] sm:$0xff]
  %v83 = vld [vmem:[%s2 + $0x1d0] sm:$0xff]
  %v84 = vld [vmem:[%s2 + $0x1d8] sm:$0xff]
  %v85 = vld [vmem:[%s2 + $0x1e0] sm:$0xff]
  %v86 = vld [vmem:[%s2 + $0x1e8] sm:$0xff]
  %v87 = vld [vmem:[%s2 + $0x1f0] sm:$0xff]
  %v88 = vld [vmem:[%s2 + $0x1f8] sm:$0xff]
  %v89 = vld [vmem:[%s3] sm:$0xf]
  %v91 = vperm.slane %v89, 0
  %v92 = vperm.slane %v89, 1
  %v93 = vperm.slane %v89, 2
  %v94 = vperm.slane %v89, 3
  %v163 = vunpack.c.l.b16 %v25
  %v164 = vunpack.c.h.b16 %v25
  %v165 = vunpack.c.l.b16 %v26
  %v166 = vunpack.c.h.b16 %v26
  %v167 = vunpack.c.l.b16 %v27
  %v168 = vunpack.c.h.b16 %v27
  %v169 = vunpack.c.l.b16 %v28
  %v170 = vunpack.c.h.b16 %v28
  %v171 = vunpack.c.l.b16 %v29
  %v172 = vunpack.c.h.b16 %v29
  %v173 = vunpack.c.l.b16 %v30
  %v174 = vunpack.c.h.b16 %v30
  %v175 = vunpack.c.l.b16 %v31
  %v176 = vunpack.c.h.b16 %v31
  %v177 = vunpack.c.l.b16 %v32
  %v178 = vunpack.c.h.b16 %v32
  %v179 = vunpack.c.l.b16 %v33
  %v180 = vunpack.c.h.b16 %v33
  %v181 = vunpack.c.l.b16 %v34
  %v182 = vunpack.c.h.b16 %v34
  %v183 = vunpack.c.l.b16 %v35
  %v184 = vunpack.c.h.b16 %v35
  %v185 = vunpack.c.l.b16 %v36
  %v186 = vunpack.c.h.b16 %v36
  %v187 = vunpack.c.l.b16 %v37
  %v188 = vunpack.c.h.b16 %v37
  %v189 = vunpack.c.l.b16 %v38
  %v190 = vunpack.c.h.b16 %v38
  %v191 = vunpack.c.l.b16 %v39
  %v192 = vunpack.c.h.b16 %v39
  %v193 = vunpack.c.l.b16 %v40
  %v194 = vunpack.c.h.b16 %v40
  %v195 = vunpack.c.l.b16 %v41
  %v196 = vunpack.c.h.b16 %v41
  %v197 = vunpack.c.l.b16 %v42
  %v198 = vunpack.c.h.b16 %v42
  %v199 = vunpack.c.l.b16 %v43
  %v200 = vunpack.c.h.b16 %v43
  %v201 = vunpack.c.l.b16 %v44
  %v202 = vunpack.c.h.b16 %v44
  %v203 = vunpack.c.l.b16 %v45
  %v204 = vunpack.c.h.b16 %v45
  %v205 = vunpack.c.l.b16 %v46
  %v206 = vunpack.c.h.b16 %v46
  %v207 = vunpack.c.l.b16 %v47
  %v208 = vunpack.c.h.b16 %v47
  %v209 = vunpack.c.l.b16 %v48
  %v210 = vunpack.c.h.b16 %v48
  %v211 = vunpack.c.l.b16 %v49
  %v212 = vunpack.c.h.b16 %v49
  %v213 = vunpack.c.l.b16 %v50
  %v214 = vunpack.c.h.b16 %v50
  %v215 = vunpack.c.l.b16 %v51
  %v216 = vunpack.c.h.b16 %v51
  %v217 = vunpack.c.l.b16 %v52
  %v218 = vunpack.c.h.b16 %v52
  %v219 = vunpack.c.l.b16 %v53
  %v220 = vunpack.c.h.b16 %v53
  %v221 = vunpack.c.l.b16 %v54
  %v222 = vunpack.c.h.b16 %v54
  %v223 = vunpack.c.l.b16 %v55
  %v224 = vunpack.c.h.b16 %v55
  %v225 = vunpack.c.l.b16 %v56
  %v226 = vunpack.c.h.b16 %v56
  %v227 = vunpack.c.l.b16 %v57
  %v228 = vunpack.c.h.b16 %v57
  %v229 = vunpack.c.l.b16 %v58
  %v230 = vunpack.c.h.b16 %v58
  %v231 = vunpack.c.l.b16 %v59
  %v232 = vunpack.c.h.b16 %v59
  %v233 = vunpack.c.l.b16 %v60
  %v234 = vunpack.c.h.b16 %v60
  %v235 = vunpack.c.l.b16 %v61
  %v236 = vunpack.c.h.b16 %v61
  %v237 = vunpack.c.l.b16 %v62
  %v238 = vunpack.c.h.b16 %v62
  %v239 = vunpack.c.l.b16 %v63
  %v240 = vunpack.c.h.b16 %v63
  %v241 = vunpack.c.l.b16 %v64
  %v242 = vunpack.c.h.b16 %v64
  %v243 = vunpack.c.l.b16 %v65
  %v244 = vunpack.c.h.b16 %v65
  %v245 = vunpack.c.l.b16 %v66
  %v246 = vunpack.c.h.b16 %v66
  %v247 = vunpack.c.l.b16 %v67
  %v248 = vunpack.c.h.b16 %v67
  %v249 = vunpack.c.l.b16 %v68
  %v250 = vunpack.c.h.b16 %v68
  %v251 = vunpack.c.l.b16 %v69
  %v252 = vunpack.c.h.b16 %v69
  %v253 = vunpack.c.l.b16 %v70
  %v254 = vunpack.c.h.b16 %v70
  %v255 = vunpack.c.l.b16 %v71
  %v256 = vunpack.c.h.b16 %v71
  %v257 = vunpack.c.l.b16 %v72
  %v258 = vunpack.c.h.b16 %v72
  %v259 = vunpack.c.l.b16 %v73
  %v260 = vunpack.c.h.b16 %v73
  %v261 = vunpack.c.l.b16 %v74
  %v262 = vunpack.c.h.b16 %v74
  %v263 = vunpack.c.l.b16 %v75
  %v264 = vunpack.c.h.b16 %v75
  %v265 = vunpack.c.l.b16 %v76
  %v266 = vunpack.c.h.b16 %v76
  %v267 = vunpack.c.l.b16 %v77
  %v268 = vunpack.c.h.b16 %v77
  %v269 = vunpack.c.l.b16 %v78
  %v270 = vunpack.c.h.b16 %v78
  %v271 = vunpack.c.l.b16 %v79
  %v272 = vunpack.c.h.b16 %v79
  %v273 = vunpack.c.l.b16 %v80
  %v274 = vunpack.c.h.b16 %v80
  %v275 = vunpack.c.l.b16 %v81
  %v276 = vunpack.c.h.b16 %v81
  %v277 = vunpack.c.l.b16 %v82
  %v278 = vunpack.c.h.b16 %v82
  %v279 = vunpack.c.l.b16 %v83
  %v280 = vunpack.c.h.b16 %v83
  %v281 = vunpack.c.l.b16 %v84
  %v282 = vunpack.c.h.b16 %v84
  %v283 = vunpack.c.l.b16 %v85
  %v284 = vunpack.c.h.b16 %v85
  %v285 = vunpack.c.l.b16 %v86
  %v286 = vunpack.c.h.b16 %v86
  %v287 = vunpack.c.l.b16 %v87
  %v288 = vunpack.c.h.b16 %v87
  %v289 = vunpack.c.l.b16 %v88
  %v290 = vunpack.c.h.b16 %v88
  %v291 = vpack.c.b16 %v167, %v163
  %v292 = vpack.c.b16 %v168, %v164
  %v293 = vpack.c.b16 %v169, %v165
  %v294 = vpack.c.b16 %v170, %v166
  %v295 = vpack.c.b16 %v175, %v171
  %v296 = vpack.c.b16 %v176, %v172
  %v297 = vpack.c.b16 %v177, %v173
  %v298 = vpack.c.b16 %v178, %v174
  %v299 = vpack.c.b16 %v183, %v179
  %v300 = vpack.c.b16 %v184, %v180
  %v301 = vpack.c.b16 %v185, %v181
  %v302 = vpack.c.b16 %v186, %v182
  %v303 = vpack.c.b16 %v191, %v187
  %v304 = vpack.c.b16 %v192, %v188
  %v305 = vpack.c.b16 %v193, %v189
  %v306 = vpack.c.b16 %v194, %v190
  %v307 = vpack.c.b16 %v199, %v195
  %v308 = vpack.c.b16 %v200, %v196
  %v309 = vpack.c.b16 %v201, %v197
  %v310 = vpack.c.b16 %v202, %v198
  %v311 = vpack.c.b16 %v207, %v203
  %v312 = vpack.c.b16 %v208, %v204
  %v313 = vpack.c.b16 %v209, %v205
  %v314 = vpack.c.b16 %v210, %v206
  %v315 = vpack.c.b16 %v215, %v211
  %v316 = vpack.c.b16 %v216, %v212
  %v317 = vpack.c.b16 %v217, %v213
  %v318 = vpack.c.b16 %v218, %v214
  %v319 = vpack.c.b16 %v223, %v219
  %v320 = vpack.c.b16 %v224, %v220
  %v321 = vpack.c.b16 %v225, %v221
  %v322 = vpack.c.b16 %v226, %v222
  %v323 = vpack.c.b16 %v231, %v227
  %v324 = vpack.c.b16 %v232, %v228
  %v325 = vpack.c.b16 %v233, %v229
  %v326 = vpack.c.b16 %v234, %v230
  %v327 = vpack.c.b16 %v239, %v235
  %v328 = vpack.c.b16 %v240, %v236
  %v329 = vpack.c.b16 %v241, %v237
  %v330 = vpack.c.b16 %v242, %v238
  %v331 = vpack.c.b16 %v247, %v243
  %v332 = vpack.c.b16 %v248, %v244
  %v333 = vpack.c.b16 %v249, %v245
  %v334 = vpack.c.b16 %v250, %v246
  %v335 = vpack.c.b16 %v255, %v251
  %v336 = vpack.c.b16 %v256, %v252
  %v337 = vpack.c.b16 %v257, %v253
  %v338 = vpack.c.b16 %v258, %v254
  %v339 = vpack.c.b16 %v263, %v259
  %v340 = vpack.c.b16 %v264, %v260
  %v341 = vpack.c.b16 %v265, %v261
  %v342 = vpack.c.b16 %v266, %v262
  %v343 = vpack.c.b16 %v271, %v267
  %v344 = vpack.c.b16 %v272, %v268
  %v345 = vpack.c.b16 %v273, %v269
  %v346 = vpack.c.b16 %v274, %v270
  %v347 = vpack.c.b16 %v279, %v275
  %v348 = vpack.c.b16 %v280, %v276
  %v349 = vpack.c.b16 %v281, %v277
  %v350 = vpack.c.b16 %v282, %v278
  %v351 = vpack.c.b16 %v287, %v283
  %v352 = vpack.c.b16 %v288, %v284
  %v353 = vpack.c.b16 %v289, %v285
  %v354 = vpack.c.b16 %v290, %v286
  %419 = vmatpush.bf16.msra.mxu0 %v319
  %420 = vmatpush.bf16.msra.mxu0 %v315
  %421 = vmatpush.bf16.msra.mxu0 %v311
  %422 = vmatpush.bf16.msra.mxu0 %v307
  %423 = vmatpush.bf16.msra.mxu0 %v303
  %424 = vmatpush.bf16.msra.mxu0 %v299
  %425 = vmatpush.bf16.msra.mxu0 %v295
  %426 = vmatpush.bf16.msra.mxu0 %v291
  %427 = vmatmul.bf16.gmra.mxu0 0
  %v428 = vpop.f32.mrf.mxu0
  %v429 = vadd.f32 %v91, %v428
  %v430 = vpop.f32.mrf.mxu0
  %431 = vdwg.mxu0
  %432 = vmatpush.bf16.msra.mxu0 %v351
  %433 = vmatpush.bf16.msra.mxu0 %v347
  %434 = vmatpush.bf16.msra.mxu0 %v343
  %435 = vmatpush.bf16.msra.mxu0 %v339
  %436 = vmatpush.bf16.msra.mxu0 %v335
  %437 = vmatpush.bf16.msra.mxu0 %v331
  %438 = vmatpush.bf16.msra.mxu0 %v327
  %439 = vmatpush.bf16.msra.mxu0 %v323
  %440 = vmatmul.bf16.gmra.mxu0 %v24
  %v441 = vpop.f32.mrf.mxu0
  %v442 = vadd.f32 %v429, %v441
  %v443 = vpop.f32.mrf.mxu0
  %444 = vdwg.mxu0
  %445 = vmatpush.bf16.msra.mxu0 %v320
  %446 = vmatpush.bf16.msra.mxu0 %v316
  %447 = vmatpush.bf16.msra.mxu0 %v312
  %448 = vmatpush.bf16.msra.mxu0 %v308
  %449 = vmatpush.bf16.msra.mxu0 %v304
  %450 = vmatpush.bf16.msra.mxu0 %v300
  %451 = vmatpush.bf16.msra.mxu0 %v296
  %452 = vmatpush.bf16.msra.mxu0 %v292
  %453 = vmatmul.bf16.gmra.mxu0 0
  %v454 = vpop.f32.mrf.mxu0
  %v455 = vadd.f32 %v92, %v454
  %v456 = vpop.f32.mrf.mxu0
  %457 = vdwg.mxu0
  %458 = vmatpush.bf16.msra.mxu0 %v352
  %459 = vmatpush.bf16.msra.mxu0 %v348
  %460 = vmatpush.bf16.msra.mxu0 %v344
  %461 = vmatpush.bf16.msra.mxu0 %v340
  %462 = vmatpush.bf16.msra.mxu0 %v336
  %463 = vmatpush.bf16.msra.mxu0 %v332
  %464 = vmatpush.bf16.msra.mxu0 %v328
  %465 = vmatpush.bf16.msra.mxu0 %v324
  %466 = vmatmul.bf16.gmra.mxu0 %v24
  %v467 = vpop.f32.mrf.mxu0
  %v468 = vadd.f32 %v455, %v467
  %v469 = vpop.f32.mrf.mxu0
  %470 = vdwg.mxu0
  %471 = vmatpush.bf16.msra.mxu0 %v321
  %472 = vmatpush.bf16.msra.mxu0 %v317
  %473 = vmatpush.bf16.msra.mxu0 %v313
  %474 = vmatpush.bf16.msra.mxu0 %v309
  %475 = vmatpush.bf16.msra.mxu0 %v305
  %476 = vmatpush.bf16.msra.mxu0 %v301
  %477 = vmatpush.bf16.msra.mxu0 %v297
  %478 = vmatpush.bf16.msra.mxu0 %v293
  %479 = vmatmul.bf16.gmra.mxu0 0
  %v480 = vpop.f32.mrf.mxu0
  %v481 = vadd.f32 %v93, %v480
  %v482 = vpop.f32.mrf.mxu0
  %483 = vdwg.mxu0
  %484 = vmatpush.bf16.msra.mxu0 %v353
  %485 = vmatpush.bf16.msra.mxu0 %v349
  %486 = vmatpush.bf16.msra.mxu0 %v345
  %487 = vmatpush.bf16.msra.mxu0 %v341
  %488 = vmatpush.bf16.msra.mxu0 %v337
  %489 = vmatpush.bf16.msra.mxu0 %v333
  %490 = vmatpush.bf16.msra.mxu0 %v329
  %491 = vmatpush.bf16.msra.mxu0 %v325
  %492 = vmatmul.bf16.gmra.mxu0 %v24
  %v493 = vpop.f32.mrf.mxu0
  %v494 = vadd.f32 %v481, %v493
  %v495 = vpop.f32.mrf.mxu0
  %496 = vdwg.mxu0
  %497 = vmatpush.bf16.msra.mxu0 %v322
  %498 = vmatpush.bf16.msra.mxu0 %v318
  %499 = vmatpush.bf16.msra.mxu0 %v314
  %500 = vmatpush.bf16.msra.mxu0 %v310
  %501 = vmatpush.bf16.msra.mxu0 %v306
  %502 = vmatpush.bf16.msra.mxu0 %v302
  %503 = vmatpush.bf16.msra.mxu0 %v298
  %504 = vmatpush.bf16.msra.mxu0 %v294
  %505 = vmatmul.bf16.gmra.mxu0 0
  %v506 = vpop.f32.mrf.mxu0
  %v507 = vadd.f32 %v94, %v506
  %v508 = vpop.f32.mrf.mxu0
  %509 = vdwg.mxu0
  %510 = vmatpush.bf16.msra.mxu0 %v354
  %511 = vmatpush.bf16.msra.mxu0 %v350
  %512 = vmatpush.bf16.msra.mxu0 %v346
  %513 = vmatpush.bf16.msra.mxu0 %v342
  %514 = vmatpush.bf16.msra.mxu0 %v338
  %515 = vmatpush.bf16.msra.mxu0 %v334
  %516 = vmatpush.bf16.msra.mxu0 %v330
  %517 = vmatpush.bf16.msra.mxu0 %v326
  %518 = vmatmul.bf16.gmra.mxu0 %v24
  %v519 = vpop.f32.mrf.mxu0
  %v520 = vadd.f32 %v507, %v519
  %v521 = vpop.f32.mrf.mxu0
  %522 = vdwg.mxu0
  %v523 = vxor.u32 %v442, 2147483648
  %v524 = vmul.f32 %v523, 1.442695
  %v525 = vpow.pop %v524
  %v526 = vadd.f32 %v525, 1.0
  %v527 = vrcp.pop %v526
  %v528 = vmul.f32 %v526, %v527
  %v529 = vsub.f32 1.0, %v528
  %v530 = vmul.f32 %v527, %v529
  %v531 = vadd.f32 %v527, %v530
  %vm532 = vweird.f32 %v526
  %vm533 = vweird.f32 %v527
  %vm534 = vmor %vm532, %vm533
  %v535 = vsel %vm534, %v527, %v531
  %v536 = vand.u32 2147483647, %v526
  %vm537 = vcmp.eq.f32.partialorder %v536, 8.507059e+37
  %v538 = vand.u32 %v526, 2147483648
  %v539 = vor.u32 1.1754944e-38, %v538
  %v540 = vsel %vm537, %v539, %v535
  %v541 = vmul.f32 1.0, %v540
  %v542 = vxor.u32 %v468, 2147483648
  %v543 = vmul.f32 %v542, 1.442695
  %v544 = vpow.pop %v543
  %v545 = vadd.f32 %v544, 1.0
  %v546 = vrcp.pop %v545
  %v547 = vmul.f32 %v545, %v546
  %v548 = vsub.f32 1.0, %v547
  %v549 = vmul.f32 %v546, %v548
  %v550 = vadd.f32 %v546, %v549
  %vm551 = vweird.f32 %v545
  %vm552 = vweird.f32 %v546
  %vm553 = vmor %vm551, %vm552
  %v554 = vsel %vm553, %v546, %v550
  %v555 = vand.u32 2147483647, %v545
  %vm556 = vcmp.eq.f32.partialorder %v555, 8.507059e+37
  %v557 = vand.u32 %v545, 2147483648
  %v558 = vor.u32 1.1754944e-38, %v557
  %v559 = vsel %vm556, %v558, %v554
  %v560 = vmul.f32 1.0, %v559
  %v561 = vtanh.pop %v494
  %v562 = vxor.u32 %v520, 2147483648
  %v563 = vmul.f32 %v562, 1.442695
  %v564 = vpow.pop %v563
  %v565 = vadd.f32 %v564, 1.0
  %v566 = vrcp.pop %v565
  %v567 = vmul.f32 %v565, %v566
  %v568 = vsub.f32 1.0, %v567
  %v569 = vmul.f32 %v566, %v568
  %v570 = vadd.f32 %v566, %v569
  %vm571 = vweird.f32 %v565
  %vm572 = vweird.f32 %v566
  %vm573 = vmor %vm571, %vm572
  %v574 = vsel %vm573, %v566, %v570
  %v575 = vand.u32 2147483647, %v565
  %vm576 = vcmp.eq.f32.partialorder %v575, 8.507059e+37
  %v577 = vand.u32 %v565, 2147483648
  %v578 = vor.u32 1.1754944e-38, %v577
  %v579 = vsel %vm576, %v578, %v574
  %v580 = vmul.f32 1.0, %v579
  %v581 = vmul.f32 %v560, 0.0
  %v582 = vmul.f32 %v541, %v561
  %v583 = vadd.f32 %v581, %v582
  %v584 = vtanh.pop %v583
  %v585 = vmul.f32 %v580, %v584
  %v586 = vpack.c.bf16 %v585, %v585
  %v587 = vld [vmem:[%s4] sm:$0xff]
  %v588 = vld [vmem:[%s4 + $0x8] sm:$0xff]
  %v589 = vld [vmem:[%s4 + $0x10] sm:$0xff]
  %v590 = vld [vmem:[%s4 + $0x18] sm:$0xff]
  %v591 = vld [vmem:[%s4 + $0x20] sm:$0xff]
  %v592 = vld [vmem:[%s4 + $0x28] sm:$0xff]
  %v593 = vld [vmem:[%s4 + $0x30] sm:$0xff]
  %v594 = vld [vmem:[%s4 + $0x38] sm:$0xff]
  %v595 = vld [vmem:[%s4 + $0x40] sm:$0xff]
  %v596 = vld [vmem:[%s4 + $0x48] sm:$0xff]
  %v597 = vld [vmem:[%s4 + $0x50] sm:$0xff]
  %v598 = vld [vmem:[%s4 + $0x58] sm:$0xff]
  %v599 = vld [vmem:[%s4 + $0x60] sm:$0xff]
  %v600 = vld [vmem:[%s4 + $0x68] sm:$0xff]
  %v601 = vld [vmem:[%s4 + $0x70] sm:$0xff]
  %v602 = vld [vmem:[%s4 + $0x78] sm:$0xff]
  %v603 = vld [vmem:[%s4 + $0x80] sm:$0xff]
  %v604 = vld [vmem:[%s4 + $0x88] sm:$0xff]
  %v605 = vld [vmem:[%s4 + $0x90] sm:$0xff]
  %v606 = vld [vmem:[%s4 + $0x98] sm:$0xff]
  %v607 = vld [vmem:[%s4 + $0xa0] sm:$0xff]
  %v608 = vld [vmem:[%s4 + $0xa8] sm:$0xff]
  %v609 = vld [vmem:[%s4 + $0xb0] sm:$0xff]
  %v610 = vld [vmem:[%s4 + $0xb8] sm:$0xff]
  %v611 = vld [vmem:[%s4 + $0xc0] sm:$0xff]
  %v612 = vld [vmem:[%s4 + $0xc8] sm:$0xff]
  %v613 = vld [vmem:[%s4 + $0xd0] sm:$0xff]
  %v614 = vld [vmem:[%s4 + $0xd8] sm:$0xff]
  %v615 = vld [vmem:[%s4 + $0xe0] sm:$0xff]
  %v616 = vld [vmem:[%s4 + $0xe8] sm:$0xff]
  %v617 = vld [vmem:[%s4 + $0xf0] sm:$0xff]
  %v618 = vld [vmem:[%s4 + $0xf8] sm:$0xff]
  %v619 = vld [vmem:[%s4 + $0x100] sm:$0xff]
  %v620 = vld [vmem:[%s4 + $0x108] sm:$0xff]
  %v621 = vld [vmem:[%s4 + $0x110] sm:$0xff]
  %v622 = vld [vmem:[%s4 + $0x118] sm:$0xff]
  %v623 = vld [vmem:[%s4 + $0x120] sm:$0xff]
  %v624 = vld [vmem:[%s4 + $0x128] sm:$0xff]
  %v625 = vld [vmem:[%s4 + $0x130] sm:$0xff]
  %v626 = vld [vmem:[%s4 + $0x138] sm:$0xff]
  %v627 = vld [vmem:[%s4 + $0x140] sm:$0xff]
  %v628 = vld [vmem:[%s4 + $0x148] sm:$0xff]
  %v629 = vld [vmem:[%s4 + $0x150] sm:$0xff]
  %v630 = vld [vmem:[%s4 + $0x158] sm:$0xff]
  %v631 = vld [vmem:[%s4 + $0x160] sm:$0xff]
  %v632 = vld [vmem:[%s4 + $0x168] sm:$0xff]
  %v633 = vld [vmem:[%s4 + $0x170] sm:$0xff]
  %v634 = vld [vmem:[%s4 + $0x178] sm:$0xff]
  %v635 = vld [vmem:[%s4 + $0x180] sm:$0xff]
  %v636 = vld [vmem:[%s4 + $0x188] sm:$0xff]
  %v637 = vld [vmem:[%s4 + $0x190] sm:$0xff]
  %v638 = vld [vmem:[%s4 + $0x198] sm:$0xff]
  %v639 = vld [vmem:[%s4 + $0x1a0] sm:$0xff]
  %v640 = vld [vmem:[%s4 + $0x1a8] sm:$0xff]
  %v641 = vld [vmem:[%s4 + $0x1b0] sm:$0xff]
  %v642 = vld [vmem:[%s4 + $0x1b8] sm:$0xff]
  %v643 = vld [vmem:[%s4 + $0x1c0] sm:$0xff]
  %v644 = vld [vmem:[%s4 + $0x1c8] sm:$0xff]
  %v645 = vld [vmem:[%s4 + $0x1d0] sm:$0xff]
  %v646 = vld [vmem:[%s4 + $0x1d8] sm:$0xff]
  %v647 = vld [vmem:[%s4 + $0x1e0] sm:$0xff]
  %v648 = vld [vmem:[%s4 + $0x1e8] sm:$0xff]
  %v649 = vld [vmem:[%s4 + $0x1f0] sm:$0xff]
  %v650 = vld [vmem:[%s4 + $0x1f8] sm:$0xff]
  %v651 = vld [vmem:[%s5] sm:$0xf]
  %v653 = vperm.slane %v651, 0
  %v654 = vperm.slane %v651, 1
  %v655 = vperm.slane %v651, 2
  %v656 = vperm.slane %v651, 3
  %v725 = vunpack.c.l.b16 %v587
  %v726 = vunpack.c.h.b16 %v587
  %v727 = vunpack.c.l.b16 %v588
  %v728 = vunpack.c.h.b16 %v588
  %v729 = vunpack.c.l.b16 %v589
  %v730 = vunpack.c.h.b16 %v589
  %v731 = vunpack.c.l.b16 %v590
  %v732 = vunpack.c.h.b16 %v590
  %v733 = vunpack.c.l.b16 %v591
  %v734 = vunpack.c.h.b16 %v591
  %v735 = vunpack.c.l.b16 %v592
  %v736 = vunpack.c.h.b16 %v592
  %v737 = vunpack.c.l.b16 %v593
  %v738 = vunpack.c.h.b16 %v593
  %v739 = vunpack.c.l.b16 %v594
  %v740 = vunpack.c.h.b16 %v594
  %v741 = vunpack.c.l.b16 %v595
  %v742 = vunpack.c.h.b16 %v595
  %v743 = vunpack.c.l.b16 %v596
  %v744 = vunpack.c.h.b16 %v596
  %v745 = vunpack.c.l.b16 %v597
  %v746 = vunpack.c.h.b16 %v597
  %v747 = vunpack.c.l.b16 %v598
  %v748 = vunpack.c.h.b16 %v598
  %v749 = vunpack.c.l.b16 %v599
  %v750 = vunpack.c.h.b16 %v599
  %v751 = vunpack.c.l.b16 %v600
  %v752 = vunpack.c.h.b16 %v600
  %v753 = vunpack.c.l.b16 %v601
  %v754 = vunpack.c.h.b16 %v601
  %v755 = vunpack.c.l.b16 %v602
  %v756 = vunpack.c.h.b16 %v602
  %v757 = vunpack.c.l.b16 %v603
  %v758 = vunpack.c.h.b16 %v603
  %v759 = vunpack.c.l.b16 %v604
  %v760 = vunpack.c.h.b16 %v604
  %v761 = vunpack.c.l.b16 %v605
  %v762 = vunpack.c.h.b16 %v605
  %v763 = vunpack.c.l.b16 %v606
  %v764 = vunpack.c.h.b16 %v606
  %v765 = vunpack.c.l.b16 %v607
  %v766 = vunpack.c.h.b16 %v607
  %v767 = vunpack.c.l.b16 %v608
  %v768 = vunpack.c.h.b16 %v608
  %v769 = vunpack.c.l.b16 %v609
  %v770 = vunpack.c.h.b16 %v609
  %v771 = vunpack.c.l.b16 %v610
  %v772 = vunpack.c.h.b16 %v610
  %v773 = vunpack.c.l.b16 %v611
  %v774 = vunpack.c.h.b16 %v611
  %v775 = vunpack.c.l.b16 %v612
  %v776 = vunpack.c.h.b16 %v612
  %v777 = vunpack.c.l.b16 %v613
  %v778 = vunpack.c.h.b16 %v613
  %v779 = vunpack.c.l.b16 %v614
  %v780 = vunpack.c.h.b16 %v614
  %v781 = vunpack.c.l.b16 %v615
  %v782 = vunpack.c.h.b16 %v615
  %v783 = vunpack.c.l.b16 %v616
  %v784 = vunpack.c.h.b16 %v616
  %v785 = vunpack.c.l.b16 %v617
  %v786 = vunpack.c.h.b16 %v617
  %v787 = vunpack.c.l.b16 %v618
  %v788 = vunpack.c.h.b16 %v618
  %v789 = vunpack.c.l.b16 %v619
  %v790 = vunpack.c.h.b16 %v619
  %v791 = vunpack.c.l.b16 %v620
  %v792 = vunpack.c.h.b16 %v620
  %v793 = vunpack.c.l.b16 %v621
  %v794 = vunpack.c.h.b16 %v621
  %v795 = vunpack.c.l.b16 %v622
  %v796 = vunpack.c.h.b16 %v622
  %v797 = vunpack.c.l.b16 %v623
  %v798 = vunpack.c.h.b16 %v623
  %v799 = vunpack.c.l.b16 %v624
  %v800 = vunpack.c.h.b16 %v624
  %v801 = vunpack.c.l.b16 %v625
  %v802 = vunpack.c.h.b16 %v625
  %v803 = vunpack.c.l.b16 %v626
  %v804 = vunpack.c.h.b16 %v626
  %v805 = vunpack.c.l.b16 %v627
  %v806 = vunpack.c.h.b16 %v627
  %v807 = vunpack.c.l.b16 %v628
  %v808 = vunpack.c.h.b16 %v628
  %v809 = vunpack.c.l.b16 %v629
  %v810 = vunpack.c.h.b16 %v629
  %v811 = vunpack.c.l.b16 %v630
  %v812 = vunpack.c.h.b16 %v630
  %v813 = vunpack.c.l.b16 %v631
  %v814 = vunpack.c.h.b16 %v631
  %v815 = vunpack.c.l.b16 %v632
  %v816 = vunpack.c.h.b16 %v632
  %v817 = vunpack.c.l.b16 %v633
  %v818 = vunpack.c.h.b16 %v633
  %v819 = vunpack.c.l.b16 %v634
  %v820 = vunpack.c.h.b16 %v634
  %v821 = vunpack.c.l.b16 %v635
  %v822 = vunpack.c.h.b16 %v635
  %v823 = vunpack.c.l.b16 %v636
  %v824 = vunpack.c.h.b16 %v636
  %v825 = vunpack.c.l.b16 %v637
  %v826 = vunpack.c.h.b16 %v637
  %v827 = vunpack.c.l.b16 %v638
  %v828 = vunpack.c.h.b16 %v638
  %v829 = vunpack.c.l.b16 %v639
  %v830 = vunpack.c.h.b16 %v639
  %v831 = vunpack.c.l.b16 %v640
  %v832 = vunpack.c.h.b16 %v640
  %v833 = vunpack.c.l.b16 %v641
  %v834 = vunpack.c.h.b16 %v641
  %v835 = vunpack.c.l.b16 %v642
  %v836 = vunpack.c.h.b16 %v642
  %v837 = vunpack.c.l.b16 %v643
  %v838 = vunpack.c.h.b16 %v643
  %v839 = vunpack.c.l.b16 %v644
  %v840 = vunpack.c.h.b16 %v644
  %v841 = vunpack.c.l.b16 %v645
  %v842 = vunpack.c.h.b16 %v645
  %v843 = vunpack.c.l.b16 %v646
  %v844 = vunpack.c.h.b16 %v646
  %v845 = vunpack.c.l.b16 %v647
  %v846 = vunpack.c.h.b16 %v647
  %v847 = vunpack.c.l.b16 %v648
  %v848 = vunpack.c.h.b16 %v648
  %v849 = vunpack.c.l.b16 %v649
  %v850 = vunpack.c.h.b16 %v649
  %v851 = vunpack.c.l.b16 %v650
  %v852 = vunpack.c.h.b16 %v650
  %v853 = vpack.c.b16 %v729, %v725
  %v854 = vpack.c.b16 %v730, %v726
  %v855 = vpack.c.b16 %v731, %v727
  %v856 = vpack.c.b16 %v732, %v728
  %v857 = vpack.c.b16 %v737, %v733
  %v858 = vpack.c.b16 %v738, %v734
  %v859 = vpack.c.b16 %v739, %v735
  %v860 = vpack.c.b16 %v740, %v736
  %v861 = vpack.c.b16 %v745, %v741
  %v862 = vpack.c.b16 %v746, %v742
  %v863 = vpack.c.b16 %v747, %v743
  %v864 = vpack.c.b16 %v748, %v744
  %v865 = vpack.c.b16 %v753, %v749
  %v866 = vpack.c.b16 %v754, %v750
  %v867 = vpack.c.b16 %v755, %v751
  %v868 = vpack.c.b16 %v756, %v752
  %v869 = vpack.c.b16 %v761, %v757
  %v870 = vpack.c.b16 %v762, %v758
  %v871 = vpack.c.b16 %v763, %v759
  %v872 = vpack.c.b16 %v764, %v760
  %v873 = vpack.c.b16 %v769, %v765
  %v874 = vpack.c.b16 %v770, %v766
  %v875 = vpack.c.b16 %v771, %v767
  %v876 = vpack.c.b16 %v772, %v768
  %v877 = vpack.c.b16 %v777, %v773
  %v878 = vpack.c.b16 %v778, %v774
  %v879 = vpack.c.b16 %v779, %v775
  %v880 = vpack.c.b16 %v780, %v776
  %v881 = vpack.c.b16 %v785, %v781
  %v882 = vpack.c.b16 %v786, %v782
  %v883 = vpack.c.b16 %v787, %v783
  %v884 = vpack.c.b16 %v788, %v784
  %v885 = vpack.c.b16 %v793, %v789
  %v886 = vpack.c.b16 %v794, %v790
  %v887 = vpack.c.b16 %v795, %v791
  %v888 = vpack.c.b16 %v796, %v792
  %v889 = vpack.c.b16 %v801, %v797
  %v890 = vpack.c.b16 %v802, %v798
  %v891 = vpack.c.b16 %v803, %v799
  %v892 = vpack.c.b16 %v804, %v800
  %v893 = vpack.c.b16 %v809, %v805
  %v894 = vpack.c.b16 %v810, %v806
  %v895 = vpack.c.b16 %v811, %v807
  %v896 = vpack.c.b16 %v812, %v808
  %v897 = vpack.c.b16 %v817, %v813
  %v898 = vpack.c.b16 %v818, %v814
  %v899 = vpack.c.b16 %v819, %v815
  %v900 = vpack.c.b16 %v820, %v816
  %v901 = vpack.c.b16 %v825, %v821
  %v902 = vpack.c.b16 %v826, %v822
  %v903 = vpack.c.b16 %v827, %v823
  %v904 = vpack.c.b16 %v828, %v824
  %v905 = vpack.c.b16 %v833, %v829
  %v906 = vpack.c.b16 %v834, %v830
  %v907 = vpack.c.b16 %v835, %v831
  %v908 = vpack.c.b16 %v836, %v832
  %v909 = vpack.c.b16 %v841, %v837
  %v910 = vpack.c.b16 %v842, %v838
  %v911 = vpack.c.b16 %v843, %v839
  %v912 = vpack.c.b16 %v844, %v840
  %v913 = vpack.c.b16 %v849, %v845
  %v914 = vpack.c.b16 %v850, %v846
  %v915 = vpack.c.b16 %v851, %v847
  %v916 = vpack.c.b16 %v852, %v848
  %981 = vmatpush.bf16.msra.mxu0 %v881
  %982 = vmatpush.bf16.msra.mxu0 %v877
  %983 = vmatpush.bf16.msra.mxu0 %v873
  %984 = vmatpush.bf16.msra.mxu0 %v869
  %985 = vmatpush.bf16.msra.mxu0 %v865
  %986 = vmatpush.bf16.msra.mxu0 %v861
  %987 = vmatpush.bf16.msra.mxu0 %v857
  %988 = vmatpush.bf16.msra.mxu0 %v853
  %989 = vmatmul.bf16.gmra.mxu0 %v586
  %v990 = vpop.f32.mrf.mxu0
  %v991 = vadd.f32 %v653, %v990
  %v992 = vpop.f32.mrf.mxu0
  %993 = vdwg.mxu0
  %994 = vmatpush.bf16.msra.mxu0 %v913
  %995 = vmatpush.bf16.msra.mxu0 %v909
  %996 = vmatpush.bf16.msra.mxu0 %v905
  %997 = vmatpush.bf16.msra.mxu0 %v901
  %998 = vmatpush.bf16.msra.mxu0 %v897
  %999 = vmatpush.bf16.msra.mxu0 %v893
  %1000 = vmatpush.bf16.msra.mxu0 %v889
  %1001 = vmatpush.bf16.msra.mxu0 %v885
  %1002 = vmatmul.bf16.gmra.mxu0 0
  %v1003 = vpop.f32.mrf.mxu0
  %v1004 = vadd.f32 %v991, %v1003
  %v1005 = vpop.f32.mrf.mxu0
  %1006 = vdwg.mxu0
  %1007 = vmatpush.bf16.msra.mxu0 %v882
  %1008 = vmatpush.bf16.msra.mxu0 %v878
  %1009 = vmatpush.bf16.msra.mxu0 %v874
  %1010 = vmatpush.bf16.msra.mxu0 %v870
  %1011 = vmatpush.bf16.msra.mxu0 %v866
  %1012 = vmatpush.bf16.msra.mxu0 %v862
  %1013 = vmatpush.bf16.msra.mxu0 %v858
  %1014 = vmatpush.bf16.msra.mxu0 %v854
  %1015 = vmatmul.bf16.gmra.mxu0 %v586
  %v1016 = vpop.f32.mrf.mxu0
  %v1017 = vadd.f32 %v654, %v1016
  %v1018 = vpop.f32.mrf.mxu0
  %1019 = vdwg.mxu0
  %1020 = vmatpush.bf16.msra.mxu0 %v914
  %1021 = vmatpush.bf16.msra.mxu0 %v910
  %1022 = vmatpush.bf16.msra.mxu0 %v906
  %1023 = vmatpush.bf16.msra.mxu0 %v902
  %1024 = vmatpush.bf16.msra.mxu0 %v898
  %1025 = vmatpush.bf16.msra.mxu0 %v894
  %1026 = vmatpush.bf16.msra.mxu0 %v890
  %1027 = vmatpush.bf16.msra.mxu0 %v886
  %1028 = vmatmul.bf16.gmra.mxu0 0
  %v1029 = vpop.f32.mrf.mxu0
  %v1030 = vadd.f32 %v1017, %v1029
  %v1031 = vpop.f32.mrf.mxu0
  %1032 = vdwg.mxu0
  %1033 = vmatpush.bf16.msra.mxu0 %v883
  %1034 = vmatpush.bf16.msra.mxu0 %v879
  %1035 = vmatpush.bf16.msra.mxu0 %v875
  %1036 = vmatpush.bf16.msra.mxu0 %v871
  %1037 = vmatpush.bf16.msra.mxu0 %v867
  %1038 = vmatpush.bf16.msra.mxu0 %v863
  %1039 = vmatpush.bf16.msra.mxu0 %v859
  %1040 = vmatpush.bf16.msra.mxu0 %v855
  %1041 = vmatmul.bf16.gmra.mxu0 %v586
  %v1042 = vpop.f32.mrf.mxu0
  %v1043 = vadd.f32 %v655, %v1042
  %v1044 = vpop.f32.mrf.mxu0
  %1045 = vdwg.mxu0
  %1046 = vmatpush.bf16.msra.mxu0 %v915
  %1047 = vmatpush.bf16.msra.mxu0 %v911
  %1048 = vmatpush.bf16.msra.mxu0 %v907
  %1049 = vmatpush.bf16.msra.mxu0 %v903
  %1050 = vmatpush.bf16.msra.mxu0 %v899
  %1051 = vmatpush.bf16.msra.mxu0 %v895
  %1052 = vmatpush.bf16.msra.mxu0 %v891
  %1053 = vmatpush.bf16.msra.mxu0 %v887
  %1054 = vmatmul.bf16.gmra.mxu0 0
  %v1055 = vpop.f32.mrf.mxu0
  %v1056 = vadd.f32 %v1043, %v1055
  %v1057 = vpop.f32.mrf.mxu0
  %1058 = vdwg.mxu0
  %1059 = vmatpush.bf16.msra.mxu0 %v884
  %1060 = vmatpush.bf16.msra.mxu0 %v880
  %1061 = vmatpush.bf16.msra.mxu0 %v876
  %1062 = vmatpush.bf16.msra.mxu0 %v872
  %1063 = vmatpush.bf16.msra.mxu0 %v868
  %1064 = vmatpush.bf16.msra.mxu0 %v864
  %1065 = vmatpush.bf16.msra.mxu0 %v860
  %1066 = vmatpush.bf16.msra.mxu0 %v856
  %1067 = vmatmul.bf16.gmra.mxu0 %v586
  %v1068 = vpop.f32.mrf.mxu0
  %v1069 = vadd.f32 %v656, %v1068
  %v1070 = vpop.f32.mrf.mxu0
  %1071 = vdwg.mxu0
  %1072 = vmatpush.bf16.msra.mxu0 %v916
  %1073 = vmatpush.bf16.msra.mxu0 %v912
  %1074 = vmatpush.bf16.msra.mxu0 %v908
  %1075 = vmatpush.bf16.msra.mxu0 %v904
  %1076 = vmatpush.bf16.msra.mxu0 %v900
  %1077 = vmatpush.bf16.msra.mxu0 %v896
  %1078 = vmatpush.bf16.msra.mxu0 %v892
  %1079 = vmatpush.bf16.msra.mxu0 %v888
  %1080 = vmatmul.bf16.gmra.mxu0 0
  %v1081 = vpop.f32.mrf.mxu0
  %v1082 = vadd.f32 %v1069, %v1081
  %v1083 = vpop.f32.mrf.mxu0
  %1084 = vdwg.mxu0
  %v1085 = vxor.u32 %v1004, 2147483648
  %v1086 = vmul.f32 %v1085, 1.442695
  %v1087 = vpow.pop %v1086
  %v1088 = vadd.f32 %v1087, 1.0
  %v1089 = vrcp.pop %v1088
  %v1090 = vmul.f32 %v1088, %v1089
  %v1091 = vsub.f32 1.0, %v1090
  %v1092 = vmul.f32 %v1089, %v1091
  %v1093 = vadd.f32 %v1089, %v1092
  %vm1094 = vweird.f32 %v1088
  %vm1095 = vweird.f32 %v1089
  %vm1096 = vmor %vm1094, %vm1095
  %v1097 = vsel %vm1096, %v1089, %v1093
  %v1098 = vand.u32 2147483647, %v1088
  %vm1099 = vcmp.eq.f32.partialorder %v1098, 8.507059e+37
  %v1100 = vand.u32 %v1088, 2147483648
  %v1101 = vor.u32 1.1754944e-38, %v1100
  %v1102 = vsel %vm1099, %v1101, %v1097
  %v1103 = vmul.f32 1.0, %v1102
  %v1104 = vxor.u32 %v1030, 2147483648
  %v1105 = vmul.f32 %v1104, 1.442695
  %v1106 = vpow.pop %v1105
  %v1107 = vadd.f32 %v1106, 1.0
  %v1108 = vrcp.pop %v1107
  %v1109 = vmul.f32 %v1107, %v1108
  %v1110 = vsub.f32 1.0, %v1109
  %v1111 = vmul.f32 %v1108, %v1110
  %v1112 = vadd.f32 %v1108, %v1111
  %vm1113 = vweird.f32 %v1107
  %vm1114 = vweird.f32 %v1108
  %vm1115 = vmor %vm1113, %vm1114
  %v1116 = vsel %vm1115, %v1108, %v1112
  %v1117 = vand.u32 2147483647, %v1107
  %vm1118 = vcmp.eq.f32.partialorder %v1117, 8.507059e+37
  %v1119 = vand.u32 %v1107, 2147483648
  %v1120 = vor.u32 1.1754944e-38, %v1119
  %v1121 = vsel %vm1118, %v1120, %v1116
  %v1122 = vmul.f32 1.0, %v1121
  %v1123 = vtanh.pop %v1056
  %v1124 = vxor.u32 %v1082, 2147483648
  %v1125 = vmul.f32 %v1124, 1.442695
  %v1126 = vpow.pop %v1125
  %v1127 = vadd.f32 %v1126, 1.0
  %v1128 = vrcp.pop %v1127
  %v1129 = vmul.f32 %v1127, %v1128
  %v1130 = vsub.f32 1.0, %v1129
  %v1131 = vmul.f32 %v1128, %v1130
  %v1132 = vadd.f32 %v1128, %v1131
  %vm1133 = vweird.f32 %v1127
  %vm1134 = vweird.f32 %v1128
  %vm1135 = vmor %vm1133, %vm1134
  %v1136 = vsel %vm1135, %v1128, %v1132
  %v1137 = vand.u32 2147483647, %v1127
  %vm1138 = vcmp.eq.f32.partialorder %v1137, 8.507059e+37
  %v1139 = vand.u32 %v1127, 2147483648
  %v1140 = vor.u32 1.1754944e-38, %v1139
  %v1141 = vsel %vm1138, %v1140, %v1136
  %v1142 = vmul.f32 1.0, %v1141
  %v1143 = vmul.f32 %v1122, 0.0
  %v1144 = vmul.f32 %v1103, %v1123
  %v1145 = vadd.f32 %v1143, %v1144
  %v1146 = vtanh.pop %v1145
  %v1147 = vmul.f32 %v1142, %v1146
  %s1148 = scalar_lea.vmem %s0, 4
  %v1149 = vld [vmem:[%s1148] sm:$0xf]
  %1150 = vmatpush.bf16.msra.mxu0 %v319
  %1151 = vmatpush.bf16.msra.mxu0 %v315
  %1152 = vmatpush.bf16.msra.mxu0 %v311
  %1153 = vmatpush.bf16.msra.mxu0 %v307
  %1154 = vmatpush.bf16.msra.mxu0 %v303
  %1155 = vmatpush.bf16.msra.mxu0 %v299
  %1156 = vmatpush.bf16.msra.mxu0 %v295
  %1157 = vmatpush.bf16.msra.mxu0 %v291
  %1158 = vmatmul.bf16.gmra.mxu0 %v586
  %v1159 = vpop.f32.mrf.mxu0
  %v1160 = vadd.f32 %v91, %v1159
  %v1161 = vpop.f32.mrf.mxu0
  %1162 = vdwg.mxu0
  %1163 = vmatpush.bf16.msra.mxu0 %v351
  %1164 = vmatpush.bf16.msra.mxu0 %v347
  %1165 = vmatpush.bf16.msra.mxu0 %v343
  %1166 = vmatpush.bf16.msra.mxu0 %v339
  %1167 = vmatpush.bf16.msra.mxu0 %v335
  %1168 = vmatpush.bf16.msra.mxu0 %v331
  %1169 = vmatpush.bf16.msra.mxu0 %v327
  %1170 = vmatpush.bf16.msra.mxu0 %v323
  %1171 = vmatmul.bf16.gmra.mxu0 %v1149
  %v1172 = vpop.f32.mrf.mxu0
  %v1173 = vadd.f32 %v1160, %v1172
  %v1174 = vpop.f32.mrf.mxu0
  %1175 = vdwg.mxu0
  %1176 = vmatpush.bf16.msra.mxu0 %v320
  %1177 = vmatpush.bf16.msra.mxu0 %v316
  %1178 = vmatpush.bf16.msra.mxu0 %v312
  %1179 = vmatpush.bf16.msra.mxu0 %v308
  %1180 = vmatpush.bf16.msra.mxu0 %v304
  %1181 = vmatpush.bf16.msra.mxu0 %v300
  %1182 = vmatpush.bf16.msra.mxu0 %v296
  %1183 = vmatpush.bf16.msra.mxu0 %v292
  %1184 = vmatmul.bf16.gmra.mxu0 %v586
  %v1185 = vpop.f32.mrf.mxu0
  %v1186 = vadd.f32 %v92, %v1185
  %v1187 = vpop.f32.mrf.mxu0
  %1188 = vdwg.mxu0
  %1189 = vmatpush.bf16.msra.mxu0 %v352
  %1190 = vmatpush.bf16.msra.mxu0 %v348
  %1191 = vmatpush.bf16.msra.mxu0 %v344
  %1192 = vmatpush.bf16.msra.mxu0 %v340
  %1193 = vmatpush.bf16.msra.mxu0 %v336
  %1194 = vmatpush.bf16.msra.mxu0 %v332
  %1195 = vmatpush.bf16.msra.mxu0 %v328
  %1196 = vmatpush.bf16.msra.mxu0 %v324
  %1197 = vmatmul.bf16.gmra.mxu0 %v1149
  %v1198 = vpop.f32.mrf.mxu0
  %v1199 = vadd.f32 %v1186, %v1198
  %v1200 = vpop.f32.mrf.mxu0
  %1201 = vdwg.mxu0
  %1202 = vmatpush.bf16.msra.mxu0 %v321
  %1203 = vmatpush.bf16.msra.mxu0 %v317
  %1204 = vmatpush.bf16.msra.mxu0 %v313
  %1205 = vmatpush.bf16.msra.mxu0 %v309
  %1206 = vmatpush.bf16.msra.mxu0 %v305
  %1207 = vmatpush.bf16.msra.mxu0 %v301
  %1208 = vmatpush.bf16.msra.mxu0 %v297
  %1209 = vmatpush.bf16.msra.mxu0 %v293
  %1210 = vmatmul.bf16.gmra.mxu0 %v586
  %v1211 = vpop.f32.mrf.mxu0
  %v1212 = vadd.f32 %v93, %v1211
  %v1213 = vpop.f32.mrf.mxu0
  %1214 = vdwg.mxu0
  %1215 = vmatpush.bf16.msra.mxu0 %v353
  %1216 = vmatpush.bf16.msra.mxu0 %v349
  %1217 = vmatpush.bf16.msra.mxu0 %v345
  %1218 = vmatpush.bf16.msra.mxu0 %v341
  %1219 = vmatpush.bf16.msra.mxu0 %v337
  %1220 = vmatpush.bf16.msra.mxu0 %v333
  %1221 = vmatpush.bf16.msra.mxu0 %v329
  %1222 = vmatpush.bf16.msra.mxu0 %v325
  %1223 = vmatmul.bf16.gmra.mxu0 %v1149
  %v1224 = vpop.f32.mrf.mxu0
  %v1225 = vadd.f32 %v1212, %v1224
  %v1226 = vpop.f32.mrf.mxu0
  %1227 = vdwg.mxu0
  %1228 = vmatpush.bf16.msra.mxu0 %v322
  %1229 = vmatpush.bf16.msra.mxu0 %v318
  %1230 = vmatpush.bf16.msra.mxu0 %v314
  %1231 = vmatpush.bf16.msra.mxu0 %v310
  %1232 = vmatpush.bf16.msra.mxu0 %v306
  %1233 = vmatpush.bf16.msra.mxu0 %v302
  %1234 = vmatpush.bf16.msra.mxu0 %v298
  %1235 = vmatpush.bf16.msra.mxu0 %v294
  %1236 = vmatmul.bf16.gmra.mxu0 %v586
  %v1237 = vpop.f32.mrf.mxu0
  %v1238 = vadd.f32 %v94, %v1237
  %v1239 = vpop.f32.mrf.mxu0
  %1240 = vdwg.mxu0
  %1241 = vmatpush.bf16.msra.mxu0 %v354
  %1242 = vmatpush.bf16.msra.mxu0 %v350
  %1243 = vmatpush.bf16.msra.mxu0 %v346
  %1244 = vmatpush.bf16.msra.mxu0 %v342
  %1245 = vmatpush.bf16.msra.mxu0 %v338
  %1246 = vmatpush.bf16.msra.mxu0 %v334
  %1247 = vmatpush.bf16.msra.mxu0 %v330
  %1248 = vmatpush.bf16.msra.mxu0 %v326
  %1249 = vmatmul.bf16.gmra.mxu0 %v1149
  %v1250 = vpop.f32.mrf.mxu0
  %v1251 = vadd.f32 %v1238, %v1250
  %v1252 = vpop.f32.mrf.mxu0
  %1253 = vdwg.mxu0
  %v1254 = vxor.u32 %v1173, 2147483648
  %v1255 = vmul.f32 %v1254, 1.442695
  %v1256 = vpow.pop %v1255
  %v1257 = vadd.f32 %v1256, 1.0
  %v1258 = vrcp.pop %v1257
  %v1259 = vmul.f32 %v1257, %v1258
  %v1260 = vsub.f32 1.0, %v1259
  %v1261 = vmul.f32 %v1258, %v1260
  %v1262 = vadd.f32 %v1258, %v1261
  %vm1263 = vweird.f32 %v1257
  %vm1264 = vweird.f32 %v1258
  %vm1265 = vmor %vm1263, %vm1264
  %v1266 = vsel %vm1265, %v1258, %v1262
  %v1267 = vand.u32 2147483647, %v1257
  %vm1268 = vcmp.eq.f32.partialorder %v1267, 8.507059e+37
  %v1269 = vand.u32 %v1257, 2147483648
  %v1270 = vor.u32 1.1754944e-38, %v1269
  %v1271 = vsel %vm1268, %v1270, %v1266
  %v1272 = vmul.f32 1.0, %v1271
  %v1273 = vxor.u32 %v1199, 2147483648
  %v1274 = vmul.f32 %v1273, 1.442695
  %v1275 = vpow.pop %v1274
  %v1276 = vadd.f32 %v1275, 1.0
  %v1277 = vrcp.pop %v1276
  %v1278 = vmul.f32 %v1276, %v1277
  %v1279 = vsub.f32 1.0, %v1278
  %v1280 = vmul.f32 %v1277, %v1279
  %v1281 = vadd.f32 %v1277, %v1280
  %vm1282 = vweird.f32 %v1276
  %vm1283 = vweird.f32 %v1277
  %vm1284 = vmor %vm1282, %vm1283
  %v1285 = vsel %vm1284, %v1277, %v1281
  %v1286 = vand.u32 2147483647, %v1276
  %vm1287 = vcmp.eq.f32.partialorder %v1286, 8.507059e+37
  %v1288 = vand.u32 %v1276, 2147483648
  %v1289 = vor.u32 1.1754944e-38, %v1288
  %v1290 = vsel %vm1287, %v1289, %v1285
  %v1291 = vmul.f32 1.0, %v1290
  %v1292 = vtanh.pop %v1225
  %v1293 = vxor.u32 %v1251, 2147483648
  %v1294 = vmul.f32 %v1293, 1.442695
  %v1295 = vpow.pop %v1294
  %v1296 = vadd.f32 %v1295, 1.0
  %v1297 = vrcp.pop %v1296
  %v1298 = vmul.f32 %v1296, %v1297
  %v1299 = vsub.f32 1.0, %v1298
  %v1300 = vmul.f32 %v1297, %v1299
  %v1301 = vadd.f32 %v1297, %v1300
  %vm1302 = vweird.f32 %v1296
  %vm1303 = vweird.f32 %v1297
  %vm1304 = vmor %vm1302, %vm1303
  %v1305 = vsel %vm1304, %v1297, %v1301
  %v1306 = vand.u32 2147483647, %v1296
  %vm1307 = vcmp.eq.f32.partialorder %v1306, 8.507059e+37
  %v1308 = vand.u32 %v1296, 2147483648
  %v1309 = vor.u32 1.1754944e-38, %v1308
  %v1310 = vsel %vm1307, %v1309, %v1305
  %v1311 = vmul.f32 1.0, %v1310
  %v1312 = vmul.f32 %v1291, %v583
  %v1313 = vmul.f32 %v1272, %v1292
  %v1314 = vadd.f32 %v1312, %v1313
  %v1315 = vtanh.pop %v1314
  %v1316 = vmul.f32 %v1311, %v1315
  %v1317 = vpack.c.bf16 %v1316, %v1316
  %v1318 = vpack.c.bf16 %v1147, %v1147
  %1319 = vmatpush.bf16.msra.mxu0 %v881
  %1320 = vmatpush.bf16.msra.mxu0 %v877
  %1321 = vmatpush.bf16.msra.mxu0 %v873
  %1322 = vmatpush.bf16.msra.mxu0 %v869
  %1323 = vmatpush.bf16.msra.mxu0 %v865
  %1324 = vmatpush.bf16.msra.mxu0 %v861
  %1325 = vmatpush.bf16.msra.mxu0 %v857
  %1326 = vmatpush.bf16.msra.mxu0 %v853
  %1327 = vmatmul.bf16.gmra.mxu0 %v1317
  %v1328 = vpop.f32.mrf.mxu0
  %v1329 = vadd.f32 %v653, %v1328
  %v1330 = vpop.f32.mrf.mxu0
  %1331 = vdwg.mxu0
  %1332 = vmatpush.bf16.msra.mxu0 %v913
  %1333 = vmatpush.bf16.msra.mxu0 %v909
  %1334 = vmatpush.bf16.msra.mxu0 %v905
  %1335 = vmatpush.bf16.msra.mxu0 %v901
  %1336 = vmatpush.bf16.msra.mxu0 %v897
  %1337 = vmatpush.bf16.msra.mxu0 %v893
  %1338 = vmatpush.bf16.msra.mxu0 %v889
  %1339 = vmatpush.bf16.msra.mxu0 %v885
  %1340 = vmatmul.bf16.gmra.mxu0 %v1318
  %v1341 = vpop.f32.mrf.mxu0
  %v1342 = vadd.f32 %v1329, %v1341
  %v1343 = vpop.f32.mrf.mxu0
  %1344 = vdwg.mxu0
  %1345 = vmatpush.bf16.msra.mxu0 %v882
  %1346 = vmatpush.bf16.msra.mxu0 %v878
  %1347 = vmatpush.bf16.msra.mxu0 %v874
  %1348 = vmatpush.bf16.msra.mxu0 %v870
  %1349 = vmatpush.bf16.msra.mxu0 %v866
  %1350 = vmatpush.bf16.msra.mxu0 %v862
  %1351 = vmatpush.bf16.msra.mxu0 %v858
  %1352 = vmatpush.bf16.msra.mxu0 %v854
  %1353 = vmatmul.bf16.gmra.mxu0 %v1317
  %v1354 = vpop.f32.mrf.mxu0
  %v1355 = vadd.f32 %v654, %v1354
  %v1356 = vpop.f32.mrf.mxu0
  %1357 = vdwg.mxu0
  %1358 = vmatpush.bf16.msra.mxu0 %v914
  %1359 = vmatpush.bf16.msra.mxu0 %v910
  %1360 = vmatpush.bf16.msra.mxu0 %v906
  %1361 = vmatpush.bf16.msra.mxu0 %v902
  %1362 = vmatpush.bf16.msra.mxu0 %v898
  %1363 = vmatpush.bf16.msra.mxu0 %v894
  %1364 = vmatpush.bf16.msra.mxu0 %v890
  %1365 = vmatpush.bf16.msra.mxu0 %v886
  %1366 = vmatmul.bf16.gmra.mxu0 %v1318
  %v1367 = vpop.f32.mrf.mxu0
  %v1368 = vadd.f32 %v1355, %v1367
  %v1369 = vpop.f32.mrf.mxu0
  %1370 = vdwg.mxu0
  %1371 = vmatpush.bf16.msra.mxu0 %v883
  %1372 = vmatpush.bf16.msra.mxu0 %v879
  %1373 = vmatpush.bf16.msra.mxu0 %v875
  %1374 = vmatpush.bf16.msra.mxu0 %v871
  %1375 = vmatpush.bf16.msra.mxu0 %v867
  %1376 = vmatpush.bf16.msra.mxu0 %v863
  %1377 = vmatpush.bf16.msra.mxu0 %v859
  %1378 = vmatpush.bf16.msra.mxu0 %v855
  %1379 = vmatmul.bf16.gmra.mxu0 %v1317
  %v1380 = vpop.f32.mrf.mxu0
  %v1381 = vadd.f32 %v655, %v1380
  %v1382 = vpop.f32.mrf.mxu0
  %1383 = vdwg.mxu0
  %1384 = vmatpush.bf16.msra.mxu0 %v915
  %1385 = vmatpush.bf16.msra.mxu0 %v911
  %1386 = vmatpush.bf16.msra.mxu0 %v907
  %1387 = vmatpush.bf16.msra.mxu0 %v903
  %1388 = vmatpush.bf16.msra.mxu0 %v899
  %1389 = vmatpush.bf16.msra.mxu0 %v895
  %1390 = vmatpush.bf16.msra.mxu0 %v891
  %1391 = vmatpush.bf16.msra.mxu0 %v887
  %1392 = vmatmul.bf16.gmra.mxu0 %v1318
  %v1393 = vpop.f32.mrf.mxu0
  %v1394 = vadd.f32 %v1381, %v1393
  %v1395 = vpop.f32.mrf.mxu0
  %1396 = vdwg.mxu0
  %1397 = vmatpush.bf16.msra.mxu0 %v884
  %1398 = vmatpush.bf16.msra.mxu0 %v880
  %1399 = vmatpush.bf16.msra.mxu0 %v876
  %1400 = vmatpush.bf16.msra.mxu0 %v872
  %1401 = vmatpush.bf16.msra.mxu0 %v868
  %1402 = vmatpush.bf16.msra.mxu0 %v864
  %1403 = vmatpush.bf16.msra.mxu0 %v860
  %1404 = vmatpush.bf16.msra.mxu0 %v856
  %1405 = vmatmul.bf16.gmra.mxu0 %v1317
  %v1406 = vpop.f32.mrf.mxu0
  %v1407 = vadd.f32 %v656, %v1406
  %v1408 = vpop.f32.mrf.mxu0
  %1409 = vdwg.mxu0
  %1410 = vmatpush.bf16.msra.mxu0 %v916
  %1411 = vmatpush.bf16.msra.mxu0 %v912
  %1412 = vmatpush.bf16.msra.mxu0 %v908
  %1413 = vmatpush.bf16.msra.mxu0 %v904
  %1414 = vmatpush.bf16.msra.mxu0 %v900
  %1415 = vmatpush.bf16.msra.mxu0 %v896
  %1416 = vmatpush.bf16.msra.mxu0 %v892
  %1417 = vmatpush.bf16.msra.mxu0 %v888
  %1418 = vmatmul.bf16.gmra.mxu0 %v1318
  %v1419 = vpop.f32.mrf.mxu0
  %v1420 = vadd.f32 %v1407, %v1419
  %v1421 = vpop.f32.mrf.mxu0
  %1422 = vdwg.mxu0
  %v1423 = vxor.u32 %v1342, 2147483648
  %v1424 = vmul.f32 %v1423, 1.442695
  %v1425 = vpow.pop %v1424
  %v1426 = vadd.f32 %v1425, 1.0
  %v1427 = vrcp.pop %v1426
  %v1428 = vmul.f32 %v1426, %v1427
  %v1429 = vsub.f32 1.0, %v1428
  %v1430 = vmul.f32 %v1427, %v1429
  %v1431 = vadd.f32 %v1427, %v1430
  %vm1432 = vweird.f32 %v1426
  %vm1433 = vweird.f32 %v1427
  %vm1434 = vmor %vm1432, %vm1433
  %v1435 = vsel %vm1434, %v1427, %v1431
  %v1436 = vand.u32 2147483647, %v1426
  %vm1437 = vcmp.eq.f32.partialorder %v1436, 8.507059e+37
  %v1438 = vand.u32 %v1426, 2147483648
  %v1439 = vor.u32 1.1754944e-38, %v1438
  %v1440 = vsel %vm1437, %v1439, %v1435
  %v1441 = vmul.f32 1.0, %v1440
  %v1442 = vxor.u32 %v1368, 2147483648
  %v1443 = vmul.f32 %v1442, 1.442695
  %v1444 = vpow.pop %v1443
  %v1445 = vadd.f32 %v1444, 1.0
  %v1446 = vrcp.pop %v1445
  %v1447 = vmul.f32 %v1445, %v1446
  %v1448 = vsub.f32 1.0, %v1447
  %v1449 = vmul.f32 %v1446, %v1448
  %v1450 = vadd.f32 %v1446, %v1449
  %vm1451 = vweird.f32 %v1445
  %vm1452 = vweird.f32 %v1446
  %vm1453 = vmor %vm1451, %vm1452
  %v1454 = vsel %vm1453, %v1446, %v1450
  %v1455 = vand.u32 2147483647, %v1445
  %vm1456 = vcmp.eq.f32.partialorder %v1455, 8.507059e+37
  %v1457 = vand.u32 %v1445, 2147483648
  %v1458 = vor.u32 1.1754944e-38, %v1457
  %v1459 = vsel %vm1456, %v1458, %v1454
  %v1460 = vmul.f32 1.0, %v1459
  %v1461 = vtanh.pop %v1394
  %v1462 = vxor.u32 %v1420, 2147483648
  %v1463 = vmul.f32 %v1462, 1.442695
  %v1464 = vpow.pop %v1463
  %v1465 = vadd.f32 %v1464, 1.0
  %v1466 = vrcp.pop %v1465
  %v1467 = vmul.f32 %v1465, %v1466
  %v1468 = vsub.f32 1.0, %v1467
  %v1469 = vmul.f32 %v1466, %v1468
  %v1470 = vadd.f32 %v1466, %v1469
  %vm1471 = vweird.f32 %v1465
  %vm1472 = vweird.f32 %v1466
  %vm1473 = vmor %vm1471, %vm1472
  %v1474 = vsel %vm1473, %v1466, %v1470
  %v1475 = vand.u32 2147483647, %v1465
  %vm1476 = vcmp.eq.f32.partialorder %v1475, 8.507059e+37
  %v1477 = vand.u32 %v1465, 2147483648
  %v1478 = vor.u32 1.1754944e-38, %v1477
  %v1479 = vsel %vm1476, %v1478, %v1474
  %v1480 = vmul.f32 1.0, %v1479
  %v1481 = vmul.f32 %v1460, %v1145
  %v1482 = vmul.f32 %v1441, %v1461
  %v1483 = vadd.f32 %v1481, %v1482
  %v1484 = vtanh.pop %v1483
  %v1485 = vmul.f32 %v1480, %v1484
  %s1486 = scalar_lea.vmem %s0, 8
  %v1487 = vld [vmem:[%s1486] sm:$0xf]
  %1488 = vmatpush.bf16.msra.mxu0 %v319
  %1489 = vmatpush.bf16.msra.mxu0 %v315
  %1490 = vmatpush.bf16.msra.mxu0 %v311
  %1491 = vmatpush.bf16.msra.mxu0 %v307
  %1492 = vmatpush.bf16.msra.mxu0 %v303
  %1493 = vmatpush.bf16.msra.mxu0 %v299
  %1494 = vmatpush.bf16.msra.mxu0 %v295
  %1495 = vmatpush.bf16.msra.mxu0 %v291
  %1496 = vmatmul.bf16.gmra.mxu0 %v1317
  %v1497 = vpop.f32.mrf.mxu0
  %v1498 = vadd.f32 %v91, %v1497
  %v1499 = vpop.f32.mrf.mxu0
  %1500 = vdwg.mxu0
  %1501 = vmatpush.bf16.msra.mxu0 %v351
  %1502 = vmatpush.bf16.msra.mxu0 %v347
  %1503 = vmatpush.bf16.msra.mxu0 %v343
  %1504 = vmatpush.bf16.msra.mxu0 %v339
  %1505 = vmatpush.bf16.msra.mxu0 %v335
  %1506 = vmatpush.bf16.msra.mxu0 %v331
  %1507 = vmatpush.bf16.msra.mxu0 %v327
  %1508 = vmatpush.bf16.msra.mxu0 %v323
  %1509 = vmatmul.bf16.gmra.mxu0 %v1487
  %v1510 = vpop.f32.mrf.mxu0
  %v1511 = vadd.f32 %v1498, %v1510
  %v1512 = vpop.f32.mrf.mxu0
  %1513 = vdwg.mxu0
  %1514 = vmatpush.bf16.msra.mxu0 %v320
  %1515 = vmatpush.bf16.msra.mxu0 %v316
  %1516 = vmatpush.bf16.msra.mxu0 %v312
  %1517 = vmatpush.bf16.msra.mxu0 %v308
  %1518 = vmatpush.bf16.msra.mxu0 %v304
  %1519 = vmatpush.bf16.msra.mxu0 %v300
  %1520 = vmatpush.bf16.msra.mxu0 %v296
  %1521 = vmatpush.bf16.msra.mxu0 %v292
  %1522 = vmatmul.bf16.gmra.mxu0 %v1317
  %v1523 = vpop.f32.mrf.mxu0
  %v1524 = vadd.f32 %v92, %v1523
  %v1525 = vpop.f32.mrf.mxu0
  %1526 = vdwg.mxu0
  %1527 = vmatpush.bf16.msra.mxu0 %v352
  %1528 = vmatpush.bf16.msra.mxu0 %v348
  %1529 = vmatpush.bf16.msra.mxu0 %v344
  %1530 = vmatpush.bf16.msra.mxu0 %v340
  %1531 = vmatpush.bf16.msra.mxu0 %v336
  %1532 = vmatpush.bf16.msra.mxu0 %v332
  %1533 = vmatpush.bf16.msra.mxu0 %v328
  %1534 = vmatpush.bf16.msra.mxu0 %v324
  %1535 = vmatmul.bf16.gmra.mxu0 %v1487
  %v1536 = vpop.f32.mrf.mxu0
  %v1537 = vadd.f32 %v1524, %v1536
  %v1538 = vpop.f32.mrf.mxu0
  %1539 = vdwg.mxu0
  %1540 = vmatpush.bf16.msra.mxu0 %v321
  %1541 = vmatpush.bf16.msra.mxu0 %v317
  %1542 = vmatpush.bf16.msra.mxu0 %v313
  %1543 = vmatpush.bf16.msra.mxu0 %v309
  %1544 = vmatpush.bf16.msra.mxu0 %v305
  %1545 = vmatpush.bf16.msra.mxu0 %v301
  %1546 = vmatpush.bf16.msra.mxu0 %v297
  %1547 = vmatpush.bf16.msra.mxu0 %v293
  %1548 = vmatmul.bf16.gmra.mxu0 %v1317
  %v1549 = vpop.f32.mrf.mxu0
  %v1550 = vadd.f32 %v93, %v1549
  %v1551 = vpop.f32.mrf.mxu0
  %1552 = vdwg.mxu0
  %1553 = vmatpush.bf16.msra.mxu0 %v353
  %1554 = vmatpush.bf16.msra.mxu0 %v349
  %1555 = vmatpush.bf16.msra.mxu0 %v345
  %1556 = vmatpush.bf16.msra.mxu0 %v341
  %1557 = vmatpush.bf16.msra.mxu0 %v337
  %1558 = vmatpush.bf16.msra.mxu0 %v333
  %1559 = vmatpush.bf16.msra.mxu0 %v329
  %1560 = vmatpush.bf16.msra.mxu0 %v325
  %1561 = vmatmul.bf16.gmra.mxu0 %v1487
  %v1562 = vpop.f32.mrf.mxu0
  %v1563 = vadd.f32 %v1550, %v1562
  %v1564 = vpop.f32.mrf.mxu0
  %1565 = vdwg.mxu0
  %1566 = vmatpush.bf16.msra.mxu0 %v322
  %1567 = vmatpush.bf16.msra.mxu0 %v318
  %1568 = vmatpush.bf16.msra.mxu0 %v314
  %1569 = vmatpush.bf16.msra.mxu0 %v310
  %1570 = vmatpush.bf16.msra.mxu0 %v306
  %1571 = vmatpush.bf16.msra.mxu0 %v302
  %1572 = vmatpush.bf16.msra.mxu0 %v298
  %1573 = vmatpush.bf16.msra.mxu0 %v294
  %1574 = vmatmul.bf16.gmra.mxu0 %v1317
  %v1575 = vpop.f32.mrf.mxu0
  %v1576 = vadd.f32 %v94, %v1575
  %v1577 = vpop.f32.mrf.mxu0
  %1578 = vdwg.mxu0
  %1579 = vmatpush.bf16.msra.mxu0 %v354
  %1580 = vmatpush.bf16.msra.mxu0 %v350
  %1581 = vmatpush.bf16.msra.mxu0 %v346
  %1582 = vmatpush.bf16.msra.mxu0 %v342
  %1583 = vmatpush.bf16.msra.mxu0 %v338
  %1584 = vmatpush.bf16.msra.mxu0 %v334
  %1585 = vmatpush.bf16.msra.mxu0 %v330
  %1586 = vmatpush.bf16.msra.mxu0 %v326
  %1587 = vmatmul.bf16.gmra.mxu0 %v1487
  %v1588 = vpop.f32.mrf.mxu0
  %v1589 = vadd.f32 %v1576, %v1588
  %v1590 = vpop.f32.mrf.mxu0
  %1591 = vdwg.mxu0
  %v1592 = vxor.u32 %v1511, 2147483648
  %v1593 = vmul.f32 %v1592, 1.442695
  %v1594 = vpow.pop %v1593
  %v1595 = vadd.f32 %v1594, 1.0
  %v1596 = vrcp.pop %v1595
  %v1597 = vmul.f32 %v1595, %v1596
  %v1598 = vsub.f32 1.0, %v1597
  %v1599 = vmul.f32 %v1596, %v1598
  %v1600 = vadd.f32 %v1596, %v1599
  %vm1601 = vweird.f32 %v1595
  %vm1602 = vweird.f32 %v1596
  %vm1603 = vmor %vm1601, %vm1602
  %v1604 = vsel %vm1603, %v1596, %v1600
  %v1605 = vand.u32 2147483647, %v1595
  %vm1606 = vcmp.eq.f32.partialorder %v1605, 8.507059e+37
  %v1607 = vand.u32 %v1595, 2147483648
  %v1608 = vor.u32 1.1754944e-38, %v1607
  %v1609 = vsel %vm1606, %v1608, %v1604
  %v1610 = vmul.f32 1.0, %v1609
  %v1611 = vxor.u32 %v1537, 2147483648
  %v1612 = vmul.f32 %v1611, 1.442695
  %v1613 = vpow.pop %v1612
  %v1614 = vadd.f32 %v1613, 1.0
  %v1615 = vrcp.pop %v1614
  %v1616 = vmul.f32 %v1614, %v1615
  %v1617 = vsub.f32 1.0, %v1616
  %v1618 = vmul.f32 %v1615, %v1617
  %v1619 = vadd.f32 %v1615, %v1618
  %vm1620 = vweird.f32 %v1614
  %vm1621 = vweird.f32 %v1615
  %vm1622 = vmor %vm1620, %vm1621
  %v1623 = vsel %vm1622, %v1615, %v1619
  %v1624 = vand.u32 2147483647, %v1614
  %vm1625 = vcmp.eq.f32.partialorder %v1624, 8.507059e+37
  %v1626 = vand.u32 %v1614, 2147483648
  %v1627 = vor.u32 1.1754944e-38, %v1626
  %v1628 = vsel %vm1625, %v1627, %v1623
  %v1629 = vmul.f32 1.0, %v1628
  %v1630 = vtanh.pop %v1563
  %v1631 = vxor.u32 %v1589, 2147483648
  %v1632 = vmul.f32 %v1631, 1.442695
  %v1633 = vpow.pop %v1632
  %v1634 = vadd.f32 %v1633, 1.0
  %v1635 = vrcp.pop %v1634
  %v1636 = vmul.f32 %v1634, %v1635
  %v1637 = vsub.f32 1.0, %v1636
  %v1638 = vmul.f32 %v1635, %v1637
  %v1639 = vadd.f32 %v1635, %v1638
  %vm1640 = vweird.f32 %v1634
  %vm1641 = vweird.f32 %v1635
  %vm1642 = vmor %vm1640, %vm1641
  %v1643 = vsel %vm1642, %v1635, %v1639
  %v1644 = vand.u32 2147483647, %v1634
  %vm1645 = vcmp.eq.f32.partialorder %v1644, 8.507059e+37
  %v1646 = vand.u32 %v1634, 2147483648
  %v1647 = vor.u32 1.1754944e-38, %v1646
  %v1648 = vsel %vm1645, %v1647, %v1643
  %v1649 = vmul.f32 1.0, %v1648
  %v1650 = vmul.f32 %v1629, %v1314
  %v1651 = vmul.f32 %v1610, %v1630
  %v1652 = vadd.f32 %v1650, %v1651
  %v1653 = vtanh.pop %v1652
  %v1654 = vmul.f32 %v1649, %v1653
  %v1655 = vpack.c.bf16 %v1654, %v1654
  %v1656 = vpack.c.bf16 %v1485, %v1485
  %1657 = vmatpush.bf16.msra.mxu0 %v881
  %1658 = vmatpush.bf16.msra.mxu0 %v877
  %1659 = vmatpush.bf16.msra.mxu0 %v873
  %1660 = vmatpush.bf16.msra.mxu0 %v869
  %1661 = vmatpush.bf16.msra.mxu0 %v865
  %1662 = vmatpush.bf16.msra.mxu0 %v861
  %1663 = vmatpush.bf16.msra.mxu0 %v857
  %1664 = vmatpush.bf16.msra.mxu0 %v853
  %1665 = vmatmul.bf16.gmra.mxu0 %v1655
  %v1666 = vpop.f32.mrf.mxu0
  %v1667 = vadd.f32 %v653, %v1666
  %v1668 = vpop.f32.mrf.mxu0
  %1669 = vdwg.mxu0
  %1670 = vmatpush.bf16.msra.mxu0 %v913
  %1671 = vmatpush.bf16.msra.mxu0 %v909
  %1672 = vmatpush.bf16.msra.mxu0 %v905
  %1673 = vmatpush.bf16.msra.mxu0 %v901
  %1674 = vmatpush.bf16.msra.mxu0 %v897
  %1675 = vmatpush.bf16.msra.mxu0 %v893
  %1676 = vmatpush.bf16.msra.mxu0 %v889
  %1677 = vmatpush.bf16.msra.mxu0 %v885
  %1678 = vmatmul.bf16.gmra.mxu0 %v1656
  %v1679 = vpop.f32.mrf.mxu0
  %v1680 = vadd.f32 %v1667, %v1679
  %v1681 = vpop.f32.mrf.mxu0
  %1682 = vdwg.mxu0
  %1683 = vmatpush.bf16.msra.mxu0 %v882
  %1684 = vmatpush.bf16.msra.mxu0 %v878
  %1685 = vmatpush.bf16.msra.mxu0 %v874
  %1686 = vmatpush.bf16.msra.mxu0 %v870
  %1687 = vmatpush.bf16.msra.mxu0 %v866
  %1688 = vmatpush.bf16.msra.mxu0 %v862
  %1689 = vmatpush.bf16.msra.mxu0 %v858
  %1690 = vmatpush.bf16.msra.mxu0 %v854
  %1691 = vmatmul.bf16.gmra.mxu0 %v1655
  %v1692 = vpop.f32.mrf.mxu0
  %v1693 = vadd.f32 %v654, %v1692
  %v1694 = vpop.f32.mrf.mxu0
  %1695 = vdwg.mxu0
  %1696 = vmatpush.bf16.msra.mxu0 %v914
  %1697 = vmatpush.bf16.msra.mxu0 %v910
  %1698 = vmatpush.bf16.msra.mxu0 %v906
  %1699 = vmatpush.bf16.msra.mxu0 %v902
  %1700 = vmatpush.bf16.msra.mxu0 %v898
  %1701 = vmatpush.bf16.msra.mxu0 %v894
  %1702 = vmatpush.bf16.msra.mxu0 %v890
  %1703 = vmatpush.bf16.msra.mxu0 %v886
  %1704 = vmatmul.bf16.gmra.mxu0 %v1656
  %v1705 = vpop.f32.mrf.mxu0
  %v1706 = vadd.f32 %v1693, %v1705
  %v1707 = vpop.f32.mrf.mxu0
  %1708 = vdwg.mxu0
  %1709 = vmatpush.bf16.msra.mxu0 %v883
  %1710 = vmatpush.bf16.msra.mxu0 %v879
  %1711 = vmatpush.bf16.msra.mxu0 %v875
  %1712 = vmatpush.bf16.msra.mxu0 %v871
  %1713 = vmatpush.bf16.msra.mxu0 %v867
  %1714 = vmatpush.bf16.msra.mxu0 %v863
  %1715 = vmatpush.bf16.msra.mxu0 %v859
  %1716 = vmatpush.bf16.msra.mxu0 %v855
  %1717 = vmatmul.bf16.gmra.mxu0 %v1655
  %v1718 = vpop.f32.mrf.mxu0
  %v1719 = vadd.f32 %v655, %v1718
  %v1720 = vpop.f32.mrf.mxu0
  %1721 = vdwg.mxu0
  %1722 = vmatpush.bf16.msra.mxu0 %v915
  %1723 = vmatpush.bf16.msra.mxu0 %v911
  %1724 = vmatpush.bf16.msra.mxu0 %v907
  %1725 = vmatpush.bf16.msra.mxu0 %v903
  %1726 = vmatpush.bf16.msra.mxu0 %v899
  %1727 = vmatpush.bf16.msra.mxu0 %v895
  %1728 = vmatpush.bf16.msra.mxu0 %v891
  %1729 = vmatpush.bf16.msra.mxu0 %v887
  %1730 = vmatmul.bf16.gmra.mxu0 %v1656
  %v1731 = vpop.f32.mrf.mxu0
  %v1732 = vadd.f32 %v1719, %v1731
  %v1733 = vpop.f32.mrf.mxu0
  %1734 = vdwg.mxu0
  %1735 = vmatpush.bf16.msra.mxu0 %v884
  %1736 = vmatpush.bf16.msra.mxu0 %v880
  %1737 = vmatpush.bf16.msra.mxu0 %v876
  %1738 = vmatpush.bf16.msra.mxu0 %v872
  %1739 = vmatpush.bf16.msra.mxu0 %v868
  %1740 = vmatpush.bf16.msra.mxu0 %v864
  %1741 = vmatpush.bf16.msra.mxu0 %v860
  %1742 = vmatpush.bf16.msra.mxu0 %v856
  %1743 = vmatmul.bf16.gmra.mxu0 %v1655
  %v1744 = vpop.f32.mrf.mxu0
  %v1745 = vadd.f32 %v656, %v1744
  %v1746 = vpop.f32.mrf.mxu0
  %1747 = vdwg.mxu0
  %1748 = vmatpush.bf16.msra.mxu0 %v916
  %1749 = vmatpush.bf16.msra.mxu0 %v912
  %1750 = vmatpush.bf16.msra.mxu0 %v908
  %1751 = vmatpush.bf16.msra.mxu0 %v904
  %1752 = vmatpush.bf16.msra.mxu0 %v900
  %1753 = vmatpush.bf16.msra.mxu0 %v896
  %1754 = vmatpush.bf16.msra.mxu0 %v892
  %1755 = vmatpush.bf16.msra.mxu0 %v888
  %1756 = vmatmul.bf16.gmra.mxu0 %v1656
  %v1757 = vpop.f32.mrf.mxu0
  %v1758 = vadd.f32 %v1745, %v1757
  %v1759 = vpop.f32.mrf.mxu0
  %1760 = vdwg.mxu0
  %v1761 = vxor.u32 %v1680, 2147483648
  %v1762 = vmul.f32 %v1761, 1.442695
  %v1763 = vpow.pop %v1762
  %v1764 = vadd.f32 %v1763, 1.0
  %v1765 = vrcp.pop %v1764
  %v1766 = vmul.f32 %v1764, %v1765
  %v1767 = vsub.f32 1.0, %v1766
  %v1768 = vmul.f32 %v1765, %v1767
  %v1769 = vadd.f32 %v1765, %v1768
  %vm1770 = vweird.f32 %v1764
  %vm1771 = vweird.f32 %v1765
  %vm1772 = vmor %vm1770, %vm1771
  %v1773 = vsel %vm1772, %v1765, %v1769
  %v1774 = vand.u32 2147483647, %v1764
  %vm1775 = vcmp.eq.f32.partialorder %v1774, 8.507059e+37
  %v1776 = vand.u32 %v1764, 2147483648
  %v1777 = vor.u32 1.1754944e-38, %v1776
  %v1778 = vsel %vm1775, %v1777, %v1773
  %v1779 = vmul.f32 1.0, %v1778
  %v1780 = vxor.u32 %v1706, 2147483648
  %v1781 = vmul.f32 %v1780, 1.442695
  %v1782 = vpow.pop %v1781
  %v1783 = vadd.f32 %v1782, 1.0
  %v1784 = vrcp.pop %v1783
  %v1785 = vmul.f32 %v1783, %v1784
  %v1786 = vsub.f32 1.0, %v1785
  %v1787 = vmul.f32 %v1784, %v1786
  %v1788 = vadd.f32 %v1784, %v1787
  %vm1789 = vweird.f32 %v1783
  %vm1790 = vweird.f32 %v1784
  %vm1791 = vmor %vm1789, %vm1790
  %v1792 = vsel %vm1791, %v1784, %v1788
  %v1793 = vand.u32 2147483647, %v1783
  %vm1794 = vcmp.eq.f32.partialorder %v1793, 8.507059e+37
  %v1795 = vand.u32 %v1783, 2147483648
  %v1796 = vor.u32 1.1754944e-38, %v1795
  %v1797 = vsel %vm1794, %v1796, %v1792
  %v1798 = vmul.f32 1.0, %v1797
  %v1799 = vtanh.pop %v1732
  %v1800 = vxor.u32 %v1758, 2147483648
  %v1801 = vmul.f32 %v1800, 1.442695
  %v1802 = vpow.pop %v1801
  %v1803 = vadd.f32 %v1802, 1.0
  %v1804 = vrcp.pop %v1803
  %v1805 = vmul.f32 %v1803, %v1804
  %v1806 = vsub.f32 1.0, %v1805
  %v1807 = vmul.f32 %v1804, %v1806
  %v1808 = vadd.f32 %v1804, %v1807
  %vm1809 = vweird.f32 %v1803
  %vm1810 = vweird.f32 %v1804
  %vm1811 = vmor %vm1809, %vm1810
  %v1812 = vsel %vm1811, %v1804, %v1808
  %v1813 = vand.u32 2147483647, %v1803
  %vm1814 = vcmp.eq.f32.partialorder %v1813, 8.507059e+37
  %v1815 = vand.u32 %v1803, 2147483648
  %v1816 = vor.u32 1.1754944e-38, %v1815
  %v1817 = vsel %vm1814, %v1816, %v1812
  %v1818 = vmul.f32 1.0, %v1817
  %v1819 = vmul.f32 %v1798, %v1483
  %v1820 = vmul.f32 %v1779, %v1799
  %v1821 = vadd.f32 %v1819, %v1820
  %v1822 = vtanh.pop %v1821
  %v1823 = vmul.f32 %v1818, %v1822
  %s1824 = scalar_lea.vmem %s0, 12
  %v1825 = vld [vmem:[%s1824] sm:$0xf]
  %1826 = vmatpush.bf16.msra.mxu0 %v319
  %1827 = vmatpush.bf16.msra.mxu0 %v315
  %1828 = vmatpush.bf16.msra.mxu0 %v311
  %1829 = vmatpush.bf16.msra.mxu0 %v307
  %1830 = vmatpush.bf16.msra.mxu0 %v303
  %1831 = vmatpush.bf16.msra.mxu0 %v299
  %1832 = vmatpush.bf16.msra.mxu0 %v295
  %1833 = vmatpush.bf16.msra.mxu0 %v291
  %1834 = vmatmul.bf16.gmra.mxu0 %v1655
  %v1835 = vpop.f32.mrf.mxu0
  %v1836 = vadd.f32 %v91, %v1835
  %v1837 = vpop.f32.mrf.mxu0
  %1838 = vdwg.mxu0
  %1839 = vmatpush.bf16.msra.mxu0 %v351
  %1840 = vmatpush.bf16.msra.mxu0 %v347
  %1841 = vmatpush.bf16.msra.mxu0 %v343
  %1842 = vmatpush.bf16.msra.mxu0 %v339
  %1843 = vmatpush.bf16.msra.mxu0 %v335
  %1844 = vmatpush.bf16.msra.mxu0 %v331
  %1845 = vmatpush.bf16.msra.mxu0 %v327
  %1846 = vmatpush.bf16.msra.mxu0 %v323
  %1847 = vmatmul.bf16.gmra.mxu0 %v1825
  %v1848 = vpop.f32.mrf.mxu0
  %v1849 = vadd.f32 %v1836, %v1848
  %v1850 = vpop.f32.mrf.mxu0
  %1851 = vdwg.mxu0
  %1852 = vmatpush.bf16.msra.mxu0 %v320
  %1853 = vmatpush.bf16.msra.mxu0 %v316
  %1854 = vmatpush.bf16.msra.mxu0 %v312
  %1855 = vmatpush.bf16.msra.mxu0 %v308
  %1856 = vmatpush.bf16.msra.mxu0 %v304
  %1857 = vmatpush.bf16.msra.mxu0 %v300
  %1858 = vmatpush.bf16.msra.mxu0 %v296
  %1859 = vmatpush.bf16.msra.mxu0 %v292
  %1860 = vmatmul.bf16.gmra.mxu0 %v1655
  %v1861 = vpop.f32.mrf.mxu0
  %v1862 = vadd.f32 %v92, %v1861
  %v1863 = vpop.f32.mrf.mxu0
  %1864 = vdwg.mxu0
  %1865 = vmatpush.bf16.msra.mxu0 %v352
  %1866 = vmatpush.bf16.msra.mxu0 %v348
  %1867 = vmatpush.bf16.msra.mxu0 %v344
  %1868 = vmatpush.bf16.msra.mxu0 %v340
  %1869 = vmatpush.bf16.msra.mxu0 %v336
  %1870 = vmatpush.bf16.msra.mxu0 %v332
  %1871 = vmatpush.bf16.msra.mxu0 %v328
  %1872 = vmatpush.bf16.msra.mxu0 %v324
  %1873 = vmatmul.bf16.gmra.mxu0 %v1825
  %v1874 = vpop.f32.mrf.mxu0
  %v1875 = vadd.f32 %v1862, %v1874
  %v1876 = vpop.f32.mrf.mxu0
  %1877 = vdwg.mxu0
  %1878 = vmatpush.bf16.msra.mxu0 %v321
  %1879 = vmatpush.bf16.msra.mxu0 %v317
  %1880 = vmatpush.bf16.msra.mxu0 %v313
  %1881 = vmatpush.bf16.msra.mxu0 %v309
  %1882 = vmatpush.bf16.msra.mxu0 %v305
  %1883 = vmatpush.bf16.msra.mxu0 %v301
  %1884 = vmatpush.bf16.msra.mxu0 %v297
  %1885 = vmatpush.bf16.msra.mxu0 %v293
  %1886 = vmatmul.bf16.gmra.mxu0 %v1655
  %v1887 = vpop.f32.mrf.mxu0
  %v1888 = vadd.f32 %v93, %v1887
  %v1889 = vpop.f32.mrf.mxu0
  %1890 = vdwg.mxu0
  %1891 = vmatpush.bf16.msra.mxu0 %v353
  %1892 = vmatpush.bf16.msra.mxu0 %v349
  %1893 = vmatpush.bf16.msra.mxu0 %v345
  %1894 = vmatpush.bf16.msra.mxu0 %v341
  %1895 = vmatpush.bf16.msra.mxu0 %v337
  %1896 = vmatpush.bf16.msra.mxu0 %v333
  %1897 = vmatpush.bf16.msra.mxu0 %v329
  %1898 = vmatpush.bf16.msra.mxu0 %v325
  %1899 = vmatmul.bf16.gmra.mxu0 %v1825
  %v1900 = vpop.f32.mrf.mxu0
  %v1901 = vadd.f32 %v1888, %v1900
  %v1902 = vpop.f32.mrf.mxu0
  %1903 = vdwg.mxu0
  %1904 = vmatpush.bf16.msra.mxu0 %v322
  %1905 = vmatpush.bf16.msra.mxu0 %v318
  %1906 = vmatpush.bf16.msra.mxu0 %v314
  %1907 = vmatpush.bf16.msra.mxu0 %v310
  %1908 = vmatpush.bf16.msra.mxu0 %v306
  %1909 = vmatpush.bf16.msra.mxu0 %v302
  %1910 = vmatpush.bf16.msra.mxu0 %v298
  %1911 = vmatpush.bf16.msra.mxu0 %v294
  %1912 = vmatmul.bf16.gmra.mxu0 %v1655
  %v1913 = vpop.f32.mrf.mxu0
  %v1914 = vadd.f32 %v94, %v1913
  %v1915 = vpop.f32.mrf.mxu0
  %1916 = vdwg.mxu0
  %1917 = vmatpush.bf16.msra.mxu0 %v354
  %1918 = vmatpush.bf16.msra.mxu0 %v350
  %1919 = vmatpush.bf16.msra.mxu0 %v346
  %1920 = vmatpush.bf16.msra.mxu0 %v342
  %1921 = vmatpush.bf16.msra.mxu0 %v338
  %1922 = vmatpush.bf16.msra.mxu0 %v334
  %1923 = vmatpush.bf16.msra.mxu0 %v330
  %1924 = vmatpush.bf16.msra.mxu0 %v326
  %1925 = vmatmul.bf16.gmra.mxu0 %v1825
  %v1926 = vpop.f32.mrf.mxu0
  %v1927 = vadd.f32 %v1914, %v1926
  %v1928 = vpop.f32.mrf.mxu0
  %1929 = vdwg.mxu0
  %v1930 = vxor.u32 %v1849, 2147483648
  %v1931 = vmul.f32 %v1930, 1.442695
  %v1932 = vpow.pop %v1931
  %v1933 = vadd.f32 %v1932, 1.0
  %v1934 = vrcp.pop %v1933
  %v1935 = vmul.f32 %v1933, %v1934
  %v1936 = vsub.f32 1.0, %v1935
  %v1937 = vmul.f32 %v1934, %v1936
  %v1938 = vadd.f32 %v1934, %v1937
  %vm1939 = vweird.f32 %v1933
  %vm1940 = vweird.f32 %v1934
  %vm1941 = vmor %vm1939, %vm1940
  %v1942 = vsel %vm1941, %v1934, %v1938
  %v1943 = vand.u32 2147483647, %v1933
  %vm1944 = vcmp.eq.f32.partialorder %v1943, 8.507059e+37
  %v1945 = vand.u32 %v1933, 2147483648
  %v1946 = vor.u32 1.1754944e-38, %v1945
  %v1947 = vsel %vm1944, %v1946, %v1942
  %v1948 = vmul.f32 1.0, %v1947
  %v1949 = vxor.u32 %v1875, 2147483648
  %v1950 = vmul.f32 %v1949, 1.442695
  %v1951 = vpow.pop %v1950
  %v1952 = vadd.f32 %v1951, 1.0
  %v1953 = vrcp.pop %v1952
  %v1954 = vmul.f32 %v1952, %v1953
  %v1955 = vsub.f32 1.0, %v1954
  %v1956 = vmul.f32 %v1953, %v1955
  %v1957 = vadd.f32 %v1953, %v1956
  %vm1958 = vweird.f32 %v1952
  %vm1959 = vweird.f32 %v1953
  %vm1960 = vmor %vm1958, %vm1959
  %v1961 = vsel %vm1960, %v1953, %v1957
  %v1962 = vand.u32 2147483647, %v1952
  %vm1963 = vcmp.eq.f32.partialorder %v1962, 8.507059e+37
  %v1964 = vand.u32 %v1952, 2147483648
  %v1965 = vor.u32 1.1754944e-38, %v1964
  %v1966 = vsel %vm1963, %v1965, %v1961
  %v1967 = vmul.f32 1.0, %v1966
  %v1968 = vtanh.pop %v1901
  %v1969 = vxor.u32 %v1927, 2147483648
  %v1970 = vmul.f32 %v1969, 1.442695
  %v1971 = vpow.pop %v1970
  %v1972 = vadd.f32 %v1971, 1.0
  %v1973 = vrcp.pop %v1972
  %v1974 = vmul.f32 %v1972, %v1973
  %v1975 = vsub.f32 1.0, %v1974
  %v1976 = vmul.f32 %v1973, %v1975
  %v1977 = vadd.f32 %v1973, %v1976
  %vm1978 = vweird.f32 %v1972
  %vm1979 = vweird.f32 %v1973
  %vm1980 = vmor %vm1978, %vm1979
  %v1981 = vsel %vm1980, %v1973, %v1977
  %v1982 = vand.u32 2147483647, %v1972
  %vm1983 = vcmp.eq.f32.partialorder %v1982, 8.507059e+37
  %v1984 = vand.u32 %v1972, 2147483648
  %v1985 = vor.u32 1.1754944e-38, %v1984
  %v1986 = vsel %vm1983, %v1985, %v1981
  %v1987 = vmul.f32 1.0, %v1986
  %v1988 = vmul.f32 %v1967, %v1652
  %v1989 = vmul.f32 %v1948, %v1968
  %v1990 = vadd.f32 %v1988, %v1989
  %v1991 = vtanh.pop %v1990
  %v1992 = vmul.f32 %v1987, %v1991
  %v1993 = vpack.c.bf16 %v1992, %v1992
  %v1994 = vpack.c.bf16 %v1823, %v1823
  %1995 = vmatpush.bf16.msra.mxu0 %v881
  %1996 = vmatpush.bf16.msra.mxu0 %v877
  %1997 = vmatpush.bf16.msra.mxu0 %v873
  %1998 = vmatpush.bf16.msra.mxu0 %v869
  %1999 = vmatpush.bf16.msra.mxu0 %v865
  %2000 = vmatpush.bf16.msra.mxu0 %v861
  %2001 = vmatpush.bf16.msra.mxu0 %v857
  %2002 = vmatpush.bf16.msra.mxu0 %v853
  %2003 = vmatmul.bf16.gmra.mxu0 %v1993
  %v2004 = vpop.f32.mrf.mxu0
  %v2005 = vadd.f32 %v653, %v2004
  %v2006 = vpop.f32.mrf.mxu0
  %2007 = vdwg.mxu0
  %2008 = vmatpush.bf16.msra.mxu0 %v913
  %2009 = vmatpush.bf16.msra.mxu0 %v909
  %2010 = vmatpush.bf16.msra.mxu0 %v905
  %2011 = vmatpush.bf16.msra.mxu0 %v901
  %2012 = vmatpush.bf16.msra.mxu0 %v897
  %2013 = vmatpush.bf16.msra.mxu0 %v893
  %2014 = vmatpush.bf16.msra.mxu0 %v889
  %2015 = vmatpush.bf16.msra.mxu0 %v885
  %2016 = vmatmul.bf16.gmra.mxu0 %v1994
  %v2017 = vpop.f32.mrf.mxu0
  %v2018 = vadd.f32 %v2005, %v2017
  %v2019 = vpop.f32.mrf.mxu0
  %2020 = vdwg.mxu0
  %2021 = vmatpush.bf16.msra.mxu0 %v882
  %2022 = vmatpush.bf16.msra.mxu0 %v878
  %2023 = vmatpush.bf16.msra.mxu0 %v874
  %2024 = vmatpush.bf16.msra.mxu0 %v870
  %2025 = vmatpush.bf16.msra.mxu0 %v866
  %2026 = vmatpush.bf16.msra.mxu0 %v862
  %2027 = vmatpush.bf16.msra.mxu0 %v858
  %2028 = vmatpush.bf16.msra.mxu0 %v854
  %2029 = vmatmul.bf16.gmra.mxu0 %v1993
  %v2030 = vpop.f32.mrf.mxu0
  %v2031 = vadd.f32 %v654, %v2030
  %v2032 = vpop.f32.mrf.mxu0
  %2033 = vdwg.mxu0
  %2034 = vmatpush.bf16.msra.mxu0 %v914
  %2035 = vmatpush.bf16.msra.mxu0 %v910
  %2036 = vmatpush.bf16.msra.mxu0 %v906
  %2037 = vmatpush.bf16.msra.mxu0 %v902
  %2038 = vmatpush.bf16.msra.mxu0 %v898
  %2039 = vmatpush.bf16.msra.mxu0 %v894
  %2040 = vmatpush.bf16.msra.mxu0 %v890
  %2041 = vmatpush.bf16.msra.mxu0 %v886
  %2042 = vmatmul.bf16.gmra.mxu0 %v1994
  %v2043 = vpop.f32.mrf.mxu0
  %v2044 = vadd.f32 %v2031, %v2043
  %v2045 = vpop.f32.mrf.mxu0
  %2046 = vdwg.mxu0
  %2047 = vmatpush.bf16.msra.mxu0 %v883
  %2048 = vmatpush.bf16.msra.mxu0 %v879
  %2049 = vmatpush.bf16.msra.mxu0 %v875
  %2050 = vmatpush.bf16.msra.mxu0 %v871
  %2051 = vmatpush.bf16.msra.mxu0 %v867
  %2052 = vmatpush.bf16.msra.mxu0 %v863
  %2053 = vmatpush.bf16.msra.mxu0 %v859
  %2054 = vmatpush.bf16.msra.mxu0 %v855
  %2055 = vmatmul.bf16.gmra.mxu0 %v1993
  %v2056 = vpop.f32.mrf.mxu0
  %v2057 = vadd.f32 %v655, %v2056
  %v2058 = vpop.f32.mrf.mxu0
  %2059 = vdwg.mxu0
  %2060 = vmatpush.bf16.msra.mxu0 %v915
  %2061 = vmatpush.bf16.msra.mxu0 %v911
  %2062 = vmatpush.bf16.msra.mxu0 %v907
  %2063 = vmatpush.bf16.msra.mxu0 %v903
  %2064 = vmatpush.bf16.msra.mxu0 %v899
  %2065 = vmatpush.bf16.msra.mxu0 %v895
  %2066 = vmatpush.bf16.msra.mxu0 %v891
  %2067 = vmatpush.bf16.msra.mxu0 %v887
  %2068 = vmatmul.bf16.gmra.mxu0 %v1994
  %v2069 = vpop.f32.mrf.mxu0
  %v2070 = vadd.f32 %v2057, %v2069
  %v2071 = vpop.f32.mrf.mxu0
  %2072 = vdwg.mxu0
  %2073 = vmatpush.bf16.msra.mxu0 %v884
  %2074 = vmatpush.bf16.msra.mxu0 %v880
  %2075 = vmatpush.bf16.msra.mxu0 %v876
  %2076 = vmatpush.bf16.msra.mxu0 %v872
  %2077 = vmatpush.bf16.msra.mxu0 %v868
  %2078 = vmatpush.bf16.msra.mxu0 %v864
  %2079 = vmatpush.bf16.msra.mxu0 %v860
  %2080 = vmatpush.bf16.msra.mxu0 %v856
  %2081 = vmatmul.bf16.gmra.mxu0 %v1993
  %v2082 = vpop.f32.mrf.mxu0
  %v2083 = vadd.f32 %v656, %v2082
  %v2084 = vpop.f32.mrf.mxu0
  %2085 = vdwg.mxu0
  %2086 = vmatpush.bf16.msra.mxu0 %v916
  %2087 = vmatpush.bf16.msra.mxu0 %v912
  %2088 = vmatpush.bf16.msra.mxu0 %v908
  %2089 = vmatpush.bf16.msra.mxu0 %v904
  %2090 = vmatpush.bf16.msra.mxu0 %v900
  %2091 = vmatpush.bf16.msra.mxu0 %v896
  %2092 = vmatpush.bf16.msra.mxu0 %v892
  %2093 = vmatpush.bf16.msra.mxu0 %v888
  %2094 = vmatmul.bf16.gmra.mxu0 %v1994
  %v2095 = vpop.f32.mrf.mxu0
  %v2096 = vadd.f32 %v2083, %v2095
  %v2097 = vpop.f32.mrf.mxu0
  %2098 = vdwg.mxu0
  %v2099 = vxor.u32 %v2018, 2147483648
  %v2100 = vmul.f32 %v2099, 1.442695
  %v2101 = vpow.pop %v2100
  %v2102 = vadd.f32 %v2101, 1.0
  %v2103 = vrcp.pop %v2102
  %v2104 = vmul.f32 %v2102, %v2103
  %v2105 = vsub.f32 1.0, %v2104
  %v2106 = vmul.f32 %v2103, %v2105
  %v2107 = vadd.f32 %v2103, %v2106
  %vm2108 = vweird.f32 %v2102
  %vm2109 = vweird.f32 %v2103
  %vm2110 = vmor %vm2108, %vm2109
  %v2111 = vsel %vm2110, %v2103, %v2107
  %v2112 = vand.u32 2147483647, %v2102
  %vm2113 = vcmp.eq.f32.partialorder %v2112, 8.507059e+37
  %v2114 = vand.u32 %v2102, 2147483648
  %v2115 = vor.u32 1.1754944e-38, %v2114
  %v2116 = vsel %vm2113, %v2115, %v2111
  %v2117 = vmul.f32 1.0, %v2116
  %v2118 = vxor.u32 %v2044, 2147483648
  %v2119 = vmul.f32 %v2118, 1.442695
  %v2120 = vpow.pop %v2119
  %v2121 = vadd.f32 %v2120, 1.0
  %v2122 = vrcp.pop %v2121
  %v2123 = vmul.f32 %v2121, %v2122
  %v2124 = vsub.f32 1.0, %v2123
  %v2125 = vmul.f32 %v2122, %v2124
  %v2126 = vadd.f32 %v2122, %v2125
  %vm2127 = vweird.f32 %v2121
  %vm2128 = vweird.f32 %v2122
  %vm2129 = vmor %vm2127, %vm2128
  %v2130 = vsel %vm2129, %v2122, %v2126
  %v2131 = vand.u32 2147483647, %v2121
  %vm2132 = vcmp.eq.f32.partialorder %v2131, 8.507059e+37
  %v2133 = vand.u32 %v2121, 2147483648
  %v2134 = vor.u32 1.1754944e-38, %v2133
  %v2135 = vsel %vm2132, %v2134, %v2130
  %v2136 = vmul.f32 1.0, %v2135
  %v2137 = vtanh.pop %v2070
  %v2138 = vxor.u32 %v2096, 2147483648
  %v2139 = vmul.f32 %v2138, 1.442695
  %v2140 = vpow.pop %v2139
  %v2141 = vadd.f32 %v2140, 1.0
  %v2142 = vrcp.pop %v2141
  %v2143 = vmul.f32 %v2141, %v2142
  %v2144 = vsub.f32 1.0, %v2143
  %v2145 = vmul.f32 %v2142, %v2144
  %v2146 = vadd.f32 %v2142, %v2145
  %vm2147 = vweird.f32 %v2141
  %vm2148 = vweird.f32 %v2142
  %vm2149 = vmor %vm2147, %vm2148
  %v2150 = vsel %vm2149, %v2142, %v2146
  %v2151 = vand.u32 2147483647, %v2141
  %vm2152 = vcmp.eq.f32.partialorder %v2151, 8.507059e+37
  %v2153 = vand.u32 %v2141, 2147483648
  %v2154 = vor.u32 1.1754944e-38, %v2153
  %v2155 = vsel %vm2152, %v2154, %v2150
  %v2156 = vmul.f32 1.0, %v2155
  %v2157 = vmul.f32 %v2136, %v1821
  %v2158 = vmul.f32 %v2117, %v2137
  %v2159 = vadd.f32 %v2157, %v2158
  %v2160 = vtanh.pop %v2159
  %v2161 = vmul.f32 %v2156, %v2160
  %s2162 = scalar_lea.vmem %s0, 16
  %v2163 = vld [vmem:[%s2162] sm:$0xf]
  %2164 = vmatpush.bf16.msra.mxu0 %v319
  %2165 = vmatpush.bf16.msra.mxu0 %v315
  %2166 = vmatpush.bf16.msra.mxu0 %v311
  %2167 = vmatpush.bf16.msra.mxu0 %v307
  %2168 = vmatpush.bf16.msra.mxu0 %v303
  %2169 = vmatpush.bf16.msra.mxu0 %v299
  %2170 = vmatpush.bf16.msra.mxu0 %v295
  %2171 = vmatpush.bf16.msra.mxu0 %v291
  %2172 = vmatmul.bf16.gmra.mxu0 %v1993
  %v2173 = vpop.f32.mrf.mxu0
  %v2174 = vadd.f32 %v91, %v2173
  %v2175 = vpop.f32.mrf.mxu0
  %2176 = vdwg.mxu0
  %2177 = vmatpush.bf16.msra.mxu0 %v351
  %2178 = vmatpush.bf16.msra.mxu0 %v347
  %2179 = vmatpush.bf16.msra.mxu0 %v343
  %2180 = vmatpush.bf16.msra.mxu0 %v339
  %2181 = vmatpush.bf16.msra.mxu0 %v335
  %2182 = vmatpush.bf16.msra.mxu0 %v331
  %2183 = vmatpush.bf16.msra.mxu0 %v327
  %2184 = vmatpush.bf16.msra.mxu0 %v323
  %2185 = vmatmul.bf16.gmra.mxu0 %v2163
  %v2186 = vpop.f32.mrf.mxu0
  %v2187 = vadd.f32 %v2174, %v2186
  %v2188 = vpop.f32.mrf.mxu0
  %2189 = vdwg.mxu0
  %2190 = vmatpush.bf16.msra.mxu0 %v320
  %2191 = vmatpush.bf16.msra.mxu0 %v316
  %2192 = vmatpush.bf16.msra.mxu0 %v312
  %2193 = vmatpush.bf16.msra.mxu0 %v308
  %2194 = vmatpush.bf16.msra.mxu0 %v304
  %2195 = vmatpush.bf16.msra.mxu0 %v300
  %2196 = vmatpush.bf16.msra.mxu0 %v296
  %2197 = vmatpush.bf16.msra.mxu0 %v292
  %2198 = vmatmul.bf16.gmra.mxu0 %v1993
  %v2199 = vpop.f32.mrf.mxu0
  %v2200 = vadd.f32 %v92, %v2199
  %v2201 = vpop.f32.mrf.mxu0
  %2202 = vdwg.mxu0
  %2203 = vmatpush.bf16.msra.mxu0 %v352
  %2204 = vmatpush.bf16.msra.mxu0 %v348
  %2205 = vmatpush.bf16.msra.mxu0 %v344
  %2206 = vmatpush.bf16.msra.mxu0 %v340
  %2207 = vmatpush.bf16.msra.mxu0 %v336
  %2208 = vmatpush.bf16.msra.mxu0 %v332
  %2209 = vmatpush.bf16.msra.mxu0 %v328
  %2210 = vmatpush.bf16.msra.mxu0 %v324
  %2211 = vmatmul.bf16.gmra.mxu0 %v2163
  %v2212 = vpop.f32.mrf.mxu0
  %v2213 = vadd.f32 %v2200, %v2212
  %v2214 = vpop.f32.mrf.mxu0
  %2215 = vdwg.mxu0
  %2216 = vmatpush.bf16.msra.mxu0 %v321
  %2217 = vmatpush.bf16.msra.mxu0 %v317
  %2218 = vmatpush.bf16.msra.mxu0 %v313
  %2219 = vmatpush.bf16.msra.mxu0 %v309
  %2220 = vmatpush.bf16.msra.mxu0 %v305
  %2221 = vmatpush.bf16.msra.mxu0 %v301
  %2222 = vmatpush.bf16.msra.mxu0 %v297
  %2223 = vmatpush.bf16.msra.mxu0 %v293
  %2224 = vmatmul.bf16.gmra.mxu0 %v1993
  %v2225 = vpop.f32.mrf.mxu0
  %v2226 = vadd.f32 %v93, %v2225
  %v2227 = vpop.f32.mrf.mxu0
  %2228 = vdwg.mxu0
  %2229 = vmatpush.bf16.msra.mxu0 %v353
  %2230 = vmatpush.bf16.msra.mxu0 %v349
  %2231 = vmatpush.bf16.msra.mxu0 %v345
  %2232 = vmatpush.bf16.msra.mxu0 %v341
  %2233 = vmatpush.bf16.msra.mxu0 %v337
  %2234 = vmatpush.bf16.msra.mxu0 %v333
  %2235 = vmatpush.bf16.msra.mxu0 %v329
  %2236 = vmatpush.bf16.msra.mxu0 %v325
  %2237 = vmatmul.bf16.gmra.mxu0 %v2163
  %v2238 = vpop.f32.mrf.mxu0
  %v2239 = vadd.f32 %v2226, %v2238
  %v2240 = vpop.f32.mrf.mxu0
  %2241 = vdwg.mxu0
  %2242 = vmatpush.bf16.msra.mxu0 %v322
  %2243 = vmatpush.bf16.msra.mxu0 %v318
  %2244 = vmatpush.bf16.msra.mxu0 %v314
  %2245 = vmatpush.bf16.msra.mxu0 %v310
  %2246 = vmatpush.bf16.msra.mxu0 %v306
  %2247 = vmatpush.bf16.msra.mxu0 %v302
  %2248 = vmatpush.bf16.msra.mxu0 %v298
  %2249 = vmatpush.bf16.msra.mxu0 %v294
  %2250 = vmatmul.bf16.gmra.mxu0 %v1993
  %v2251 = vpop.f32.mrf.mxu0
  %v2252 = vadd.f32 %v94, %v2251
  %v2253 = vpop.f32.mrf.mxu0
  %2254 = vdwg.mxu0
  %2255 = vmatpush.bf16.msra.mxu0 %v354
  %2256 = vmatpush.bf16.msra.mxu0 %v350
  %2257 = vmatpush.bf16.msra.mxu0 %v346
  %2258 = vmatpush.bf16.msra.mxu0 %v342
  %2259 = vmatpush.bf16.msra.mxu0 %v338
  %2260 = vmatpush.bf16.msra.mxu0 %v334
  %2261 = vmatpush.bf16.msra.mxu0 %v330
  %2262 = vmatpush.bf16.msra.mxu0 %v326
  %2263 = vmatmul.bf16.gmra.mxu0 %v2163
  %v2264 = vpop.f32.mrf.mxu0
  %v2265 = vadd.f32 %v2252, %v2264
  %v2266 = vpop.f32.mrf.mxu0
  %2267 = vdwg.mxu0
  %v2268 = vxor.u32 %v2187, 2147483648
  %v2269 = vmul.f32 %v2268, 1.442695
  %v2270 = vpow.pop %v2269
  %v2271 = vadd.f32 %v2270, 1.0
  %v2272 = vrcp.pop %v2271
  %v2273 = vmul.f32 %v2271, %v2272
  %v2274 = vsub.f32 1.0, %v2273
  %v2275 = vmul.f32 %v2272, %v2274
  %v2276 = vadd.f32 %v2272, %v2275
  %vm2277 = vweird.f32 %v2271
  %vm2278 = vweird.f32 %v2272
  %vm2279 = vmor %vm2277, %vm2278
  %v2280 = vsel %vm2279, %v2272, %v2276
  %v2281 = vand.u32 2147483647, %v2271
  %vm2282 = vcmp.eq.f32.partialorder %v2281, 8.507059e+37
  %v2283 = vand.u32 %v2271, 2147483648
  %v2284 = vor.u32 1.1754944e-38, %v2283
  %v2285 = vsel %vm2282, %v2284, %v2280
  %v2286 = vmul.f32 1.0, %v2285
  %v2287 = vxor.u32 %v2213, 2147483648
  %v2288 = vmul.f32 %v2287, 1.442695
  %v2289 = vpow.pop %v2288
  %v2290 = vadd.f32 %v2289, 1.0
  %v2291 = vrcp.pop %v2290
  %v2292 = vmul.f32 %v2290, %v2291
  %v2293 = vsub.f32 1.0, %v2292
  %v2294 = vmul.f32 %v2291, %v2293
  %v2295 = vadd.f32 %v2291, %v2294
  %vm2296 = vweird.f32 %v2290
  %vm2297 = vweird.f32 %v2291
  %vm2298 = vmor %vm2296, %vm2297
  %v2299 = vsel %vm2298, %v2291, %v2295
  %v2300 = vand.u32 2147483647, %v2290
  %vm2301 = vcmp.eq.f32.partialorder %v2300, 8.507059e+37
  %v2302 = vand.u32 %v2290, 2147483648
  %v2303 = vor.u32 1.1754944e-38, %v2302
  %v2304 = vsel %vm2301, %v2303, %v2299
  %v2305 = vmul.f32 1.0, %v2304
  %v2306 = vtanh.pop %v2239
  %v2307 = vxor.u32 %v2265, 2147483648
  %v2308 = vmul.f32 %v2307, 1.442695
  %v2309 = vpow.pop %v2308
  %v2310 = vadd.f32 %v2309, 1.0
  %v2311 = vrcp.pop %v2310
  %v2312 = vmul.f32 %v2310, %v2311
  %v2313 = vsub.f32 1.0, %v2312
  %v2314 = vmul.f32 %v2311, %v2313
  %v2315 = vadd.f32 %v2311, %v2314
  %vm2316 = vweird.f32 %v2310
  %vm2317 = vweird.f32 %v2311
  %vm2318 = vmor %vm2316, %vm2317
  %v2319 = vsel %vm2318, %v2311, %v2315
  %v2320 = vand.u32 2147483647, %v2310
  %vm2321 = vcmp.eq.f32.partialorder %v2320, 8.507059e+37
  %v2322 = vand.u32 %v2310, 2147483648
  %v2323 = vor.u32 1.1754944e-38, %v2322
  %v2324 = vsel %vm2321, %v2323, %v2319
  %v2325 = vmul.f32 1.0, %v2324
  %v2326 = vmul.f32 %v2305, %v1990
  %v2327 = vmul.f32 %v2286, %v2306
  %v2328 = vadd.f32 %v2326, %v2327
  %v2329 = vtanh.pop %v2328
  %v2330 = vmul.f32 %v2325, %v2329
  %v2331 = vpack.c.bf16 %v2330, %v2330
  %v2332 = vpack.c.bf16 %v2161, %v2161
  %2333 = vmatpush.bf16.msra.mxu0 %v881
  %2334 = vmatpush.bf16.msra.mxu0 %v877
  %2335 = vmatpush.bf16.msra.mxu0 %v873
  %2336 = vmatpush.bf16.msra.mxu0 %v869
  %2337 = vmatpush.bf16.msra.mxu0 %v865
  %2338 = vmatpush.bf16.msra.mxu0 %v861
  %2339 = vmatpush.bf16.msra.mxu0 %v857
  %2340 = vmatpush.bf16.msra.mxu0 %v853
  %2341 = vmatmul.bf16.gmra.mxu0 %v2331
  %v2342 = vpop.f32.mrf.mxu0
  %v2343 = vadd.f32 %v653, %v2342
  %v2344 = vpop.f32.mrf.mxu0
  %2345 = vdwg.mxu0
  %2346 = vmatpush.bf16.msra.mxu0 %v913
  %2347 = vmatpush.bf16.msra.mxu0 %v909
  %2348 = vmatpush.bf16.msra.mxu0 %v905
  %2349 = vmatpush.bf16.msra.mxu0 %v901
  %2350 = vmatpush.bf16.msra.mxu0 %v897
  %2351 = vmatpush.bf16.msra.mxu0 %v893
  %2352 = vmatpush.bf16.msra.mxu0 %v889
  %2353 = vmatpush.bf16.msra.mxu0 %v885
  %2354 = vmatmul.bf16.gmra.mxu0 %v2332
  %v2355 = vpop.f32.mrf.mxu0
  %v2356 = vadd.f32 %v2343, %v2355
  %v2357 = vpop.f32.mrf.mxu0
  %2358 = vdwg.mxu0
  %2359 = vmatpush.bf16.msra.mxu0 %v882
  %2360 = vmatpush.bf16.msra.mxu0 %v878
  %2361 = vmatpush.bf16.msra.mxu0 %v874
  %2362 = vmatpush.bf16.msra.mxu0 %v870
  %2363 = vmatpush.bf16.msra.mxu0 %v866
  %2364 = vmatpush.bf16.msra.mxu0 %v862
  %2365 = vmatpush.bf16.msra.mxu0 %v858
  %2366 = vmatpush.bf16.msra.mxu0 %v854
  %2367 = vmatmul.bf16.gmra.mxu0 %v2331
  %v2368 = vpop.f32.mrf.mxu0
  %v2369 = vadd.f32 %v654, %v2368
  %v2370 = vpop.f32.mrf.mxu0
  %2371 = vdwg.mxu0
  %2372 = vmatpush.bf16.msra.mxu0 %v914
  %2373 = vmatpush.bf16.msra.mxu0 %v910
  %2374 = vmatpush.bf16.msra.mxu0 %v906
  %2375 = vmatpush.bf16.msra.mxu0 %v902
  %2376 = vmatpush.bf16.msra.mxu0 %v898
  %2377 = vmatpush.bf16.msra.mxu0 %v894
  %2378 = vmatpush.bf16.msra.mxu0 %v890
  %2379 = vmatpush.bf16.msra.mxu0 %v886
  %2380 = vmatmul.bf16.gmra.mxu0 %v2332
  %v2381 = vpop.f32.mrf.mxu0
  %v2382 = vadd.f32 %v2369, %v2381
  %v2383 = vpop.f32.mrf.mxu0
  %2384 = vdwg.mxu0
  %2385 = vmatpush.bf16.msra.mxu0 %v883
  %2386 = vmatpush.bf16.msra.mxu0 %v879
  %2387 = vmatpush.bf16.msra.mxu0 %v875
  %2388 = vmatpush.bf16.msra.mxu0 %v871
  %2389 = vmatpush.bf16.msra.mxu0 %v867
  %2390 = vmatpush.bf16.msra.mxu0 %v863
  %2391 = vmatpush.bf16.msra.mxu0 %v859
  %2392 = vmatpush.bf16.msra.mxu0 %v855
  %2393 = vmatmul.bf16.gmra.mxu0 %v2331
  %v2394 = vpop.f32.mrf.mxu0
  %v2395 = vadd.f32 %v655, %v2394
  %v2396 = vpop.f32.mrf.mxu0
  %2397 = vdwg.mxu0
  %2398 = vmatpush.bf16.msra.mxu0 %v915
  %2399 = vmatpush.bf16.msra.mxu0 %v911
  %2400 = vmatpush.bf16.msra.mxu0 %v907
  %2401 = vmatpush.bf16.msra.mxu0 %v903
  %2402 = vmatpush.bf16.msra.mxu0 %v899
  %2403 = vmatpush.bf16.msra.mxu0 %v895
  %2404 = vmatpush.bf16.msra.mxu0 %v891
  %2405 = vmatpush.bf16.msra.mxu0 %v887
  %2406 = vmatmul.bf16.gmra.mxu0 %v2332
  %v2407 = vpop.f32.mrf.mxu0
  %v2408 = vadd.f32 %v2395, %v2407
  %v2409 = vpop.f32.mrf.mxu0
  %2410 = vdwg.mxu0
  %2411 = vmatpush.bf16.msra.mxu0 %v884
  %2412 = vmatpush.bf16.msra.mxu0 %v880
  %2413 = vmatpush.bf16.msra.mxu0 %v876
  %2414 = vmatpush.bf16.msra.mxu0 %v872
  %2415 = vmatpush.bf16.msra.mxu0 %v868
  %2416 = vmatpush.bf16.msra.mxu0 %v864
  %2417 = vmatpush.bf16.msra.mxu0 %v860
  %2418 = vmatpush.bf16.msra.mxu0 %v856
  %2419 = vmatmul.bf16.gmra.mxu0 %v2331
  %v2420 = vpop.f32.mrf.mxu0
  %v2421 = vadd.f32 %v656, %v2420
  %v2422 = vpop.f32.mrf.mxu0
  %2423 = vdwg.mxu0
  %2424 = vmatpush.bf16.msra.mxu0 %v916
  %2425 = vmatpush.bf16.msra.mxu0 %v912
  %2426 = vmatpush.bf16.msra.mxu0 %v908
  %2427 = vmatpush.bf16.msra.mxu0 %v904
  %2428 = vmatpush.bf16.msra.mxu0 %v900
  %2429 = vmatpush.bf16.msra.mxu0 %v896
  %2430 = vmatpush.bf16.msra.mxu0 %v892
  %2431 = vmatpush.bf16.msra.mxu0 %v888
  %2432 = vmatmul.bf16.gmra.mxu0 %v2332
  %v2433 = vpop.f32.mrf.mxu0
  %v2434 = vadd.f32 %v2421, %v2433
  %v2435 = vpop.f32.mrf.mxu0
  %2436 = vdwg.mxu0
  %v2437 = vxor.u32 %v2356, 2147483648
  %v2438 = vmul.f32 %v2437, 1.442695
  %v2439 = vpow.pop %v2438
  %v2440 = vadd.f32 %v2439, 1.0
  %v2441 = vrcp.pop %v2440
  %v2442 = vmul.f32 %v2440, %v2441
  %v2443 = vsub.f32 1.0, %v2442
  %v2444 = vmul.f32 %v2441, %v2443
  %v2445 = vadd.f32 %v2441, %v2444
  %vm2446 = vweird.f32 %v2440
  %vm2447 = vweird.f32 %v2441
  %vm2448 = vmor %vm2446, %vm2447
  %v2449 = vsel %vm2448, %v2441, %v2445
  %v2450 = vand.u32 2147483647, %v2440
  %vm2451 = vcmp.eq.f32.partialorder %v2450, 8.507059e+37
  %v2452 = vand.u32 %v2440, 2147483648
  %v2453 = vor.u32 1.1754944e-38, %v2452
  %v2454 = vsel %vm2451, %v2453, %v2449
  %v2455 = vmul.f32 1.0, %v2454
  %v2456 = vxor.u32 %v2382, 2147483648
  %v2457 = vmul.f32 %v2456, 1.442695
  %v2458 = vpow.pop %v2457
  %v2459 = vadd.f32 %v2458, 1.0
  %v2460 = vrcp.pop %v2459
  %v2461 = vmul.f32 %v2459, %v2460
  %v2462 = vsub.f32 1.0, %v2461
  %v2463 = vmul.f32 %v2460, %v2462
  %v2464 = vadd.f32 %v2460, %v2463
  %vm2465 = vweird.f32 %v2459
  %vm2466 = vweird.f32 %v2460
  %vm2467 = vmor %vm2465, %vm2466
  %v2468 = vsel %vm2467, %v2460, %v2464
  %v2469 = vand.u32 2147483647, %v2459
  %vm2470 = vcmp.eq.f32.partialorder %v2469, 8.507059e+37
  %v2471 = vand.u32 %v2459, 2147483648
  %v2472 = vor.u32 1.1754944e-38, %v2471
  %v2473 = vsel %vm2470, %v2472, %v2468
  %v2474 = vmul.f32 1.0, %v2473
  %v2475 = vtanh.pop %v2408
  %v2476 = vxor.u32 %v2434, 2147483648
  %v2477 = vmul.f32 %v2476, 1.442695
  %v2478 = vpow.pop %v2477
  %v2479 = vadd.f32 %v2478, 1.0
  %v2480 = vrcp.pop %v2479
  %v2481 = vmul.f32 %v2479, %v2480
  %v2482 = vsub.f32 1.0, %v2481
  %v2483 = vmul.f32 %v2480, %v2482
  %v2484 = vadd.f32 %v2480, %v2483
  %vm2485 = vweird.f32 %v2479
  %vm2486 = vweird.f32 %v2480
  %vm2487 = vmor %vm2485, %vm2486
  %v2488 = vsel %vm2487, %v2480, %v2484
  %v2489 = vand.u32 2147483647, %v2479
  %vm2490 = vcmp.eq.f32.partialorder %v2489, 8.507059e+37
  %v2491 = vand.u32 %v2479, 2147483648
  %v2492 = vor.u32 1.1754944e-38, %v2491
  %v2493 = vsel %vm2490, %v2492, %v2488
  %v2494 = vmul.f32 1.0, %v2493
  %v2495 = vmul.f32 %v2474, %v2159
  %v2496 = vmul.f32 %v2455, %v2475
  %v2497 = vadd.f32 %v2495, %v2496
  %v2498 = vtanh.pop %v2497
  %v2499 = vmul.f32 %v2494, %v2498
  %s2500 = scalar_lea.vmem %s0, 20
  %v2501 = vld [vmem:[%s2500] sm:$0xf]
  %2502 = vmatpush.bf16.msra.mxu0 %v319
  %2503 = vmatpush.bf16.msra.mxu0 %v315
  %2504 = vmatpush.bf16.msra.mxu0 %v311
  %2505 = vmatpush.bf16.msra.mxu0 %v307
  %2506 = vmatpush.bf16.msra.mxu0 %v303
  %2507 = vmatpush.bf16.msra.mxu0 %v299
  %2508 = vmatpush.bf16.msra.mxu0 %v295
  %2509 = vmatpush.bf16.msra.mxu0 %v291
  %2510 = vmatmul.bf16.gmra.mxu0 %v2331
  %v2511 = vpop.f32.mrf.mxu0
  %v2512 = vadd.f32 %v91, %v2511
  %v2513 = vpop.f32.mrf.mxu0
  %2514 = vdwg.mxu0
  %2515 = vmatpush.bf16.msra.mxu0 %v351
  %2516 = vmatpush.bf16.msra.mxu0 %v347
  %2517 = vmatpush.bf16.msra.mxu0 %v343
  %2518 = vmatpush.bf16.msra.mxu0 %v339
  %2519 = vmatpush.bf16.msra.mxu0 %v335
  %2520 = vmatpush.bf16.msra.mxu0 %v331
  %2521 = vmatpush.bf16.msra.mxu0 %v327
  %2522 = vmatpush.bf16.msra.mxu0 %v323
  %2523 = vmatmul.bf16.gmra.mxu0 %v2501
  %v2524 = vpop.f32.mrf.mxu0
  %v2525 = vadd.f32 %v2512, %v2524
  %v2526 = vpop.f32.mrf.mxu0
  %2527 = vdwg.mxu0
  %2528 = vmatpush.bf16.msra.mxu0 %v320
  %2529 = vmatpush.bf16.msra.mxu0 %v316
  %2530 = vmatpush.bf16.msra.mxu0 %v312
  %2531 = vmatpush.bf16.msra.mxu0 %v308
  %2532 = vmatpush.bf16.msra.mxu0 %v304
  %2533 = vmatpush.bf16.msra.mxu0 %v300
  %2534 = vmatpush.bf16.msra.mxu0 %v296
  %2535 = vmatpush.bf16.msra.mxu0 %v292
  %2536 = vmatmul.bf16.gmra.mxu0 %v2331
  %v2537 = vpop.f32.mrf.mxu0
  %v2538 = vadd.f32 %v92, %v2537
  %v2539 = vpop.f32.mrf.mxu0
  %2540 = vdwg.mxu0
  %2541 = vmatpush.bf16.msra.mxu0 %v352
  %2542 = vmatpush.bf16.msra.mxu0 %v348
  %2543 = vmatpush.bf16.msra.mxu0 %v344
  %2544 = vmatpush.bf16.msra.mxu0 %v340
  %2545 = vmatpush.bf16.msra.mxu0 %v336
  %2546 = vmatpush.bf16.msra.mxu0 %v332
  %2547 = vmatpush.bf16.msra.mxu0 %v328
  %2548 = vmatpush.bf16.msra.mxu0 %v324
  %2549 = vmatmul.bf16.gmra.mxu0 %v2501
  %v2550 = vpop.f32.mrf.mxu0
  %v2551 = vadd.f32 %v2538, %v2550
  %v2552 = vpop.f32.mrf.mxu0
  %2553 = vdwg.mxu0
  %2554 = vmatpush.bf16.msra.mxu0 %v321
  %2555 = vmatpush.bf16.msra.mxu0 %v317
  %2556 = vmatpush.bf16.msra.mxu0 %v313
  %2557 = vmatpush.bf16.msra.mxu0 %v309
  %2558 = vmatpush.bf16.msra.mxu0 %v305
  %2559 = vmatpush.bf16.msra.mxu0 %v301
  %2560 = vmatpush.bf16.msra.mxu0 %v297
  %2561 = vmatpush.bf16.msra.mxu0 %v293
  %2562 = vmatmul.bf16.gmra.mxu0 %v2331
  %v2563 = vpop.f32.mrf.mxu0
  %v2564 = vadd.f32 %v93, %v2563
  %v2565 = vpop.f32.mrf.mxu0
  %2566 = vdwg.mxu0
  %2567 = vmatpush.bf16.msra.mxu0 %v353
  %2568 = vmatpush.bf16.msra.mxu0 %v349
  %2569 = vmatpush.bf16.msra.mxu0 %v345
  %2570 = vmatpush.bf16.msra.mxu0 %v341
  %2571 = vmatpush.bf16.msra.mxu0 %v337
  %2572 = vmatpush.bf16.msra.mxu0 %v333
  %2573 = vmatpush.bf16.msra.mxu0 %v329
  %2574 = vmatpush.bf16.msra.mxu0 %v325
  %2575 = vmatmul.bf16.gmra.mxu0 %v2501
  %v2576 = vpop.f32.mrf.mxu0
  %v2577 = vadd.f32 %v2564, %v2576
  %v2578 = vpop.f32.mrf.mxu0
  %2579 = vdwg.mxu0
  %2580 = vmatpush.bf16.msra.mxu0 %v322
  %2581 = vmatpush.bf16.msra.mxu0 %v318
  %2582 = vmatpush.bf16.msra.mxu0 %v314
  %2583 = vmatpush.bf16.msra.mxu0 %v310
  %2584 = vmatpush.bf16.msra.mxu0 %v306
  %2585 = vmatpush.bf16.msra.mxu0 %v302
  %2586 = vmatpush.bf16.msra.mxu0 %v298
  %2587 = vmatpush.bf16.msra.mxu0 %v294
  %2588 = vmatmul.bf16.gmra.mxu0 %v2331
  %v2589 = vpop.f32.mrf.mxu0
  %v2590 = vadd.f32 %v94, %v2589
  %v2591 = vpop.f32.mrf.mxu0
  %2592 = vdwg.mxu0
  %2593 = vmatpush.bf16.msra.mxu0 %v354
  %2594 = vmatpush.bf16.msra.mxu0 %v350
  %2595 = vmatpush.bf16.msra.mxu0 %v346
  %2596 = vmatpush.bf16.msra.mxu0 %v342
  %2597 = vmatpush.bf16.msra.mxu0 %v338
  %2598 = vmatpush.bf16.msra.mxu0 %v334
  %2599 = vmatpush.bf16.msra.mxu0 %v330
  %2600 = vmatpush.bf16.msra.mxu0 %v326
  %2601 = vmatmul.bf16.gmra.mxu0 %v2501
  %v2602 = vpop.f32.mrf.mxu0
  %v2603 = vadd.f32 %v2590, %v2602
  %v2604 = vpop.f32.mrf.mxu0
  %2605 = vdwg.mxu0
  %v2606 = vxor.u32 %v2525, 2147483648
  %v2607 = vmul.f32 %v2606, 1.442695
  %v2608 = vpow.pop %v2607
  %v2609 = vadd.f32 %v2608, 1.0
  %v2610 = vrcp.pop %v2609
  %v2611 = vmul.f32 %v2609, %v2610
  %v2612 = vsub.f32 1.0, %v2611
  %v2613 = vmul.f32 %v2610, %v2612
  %v2614 = vadd.f32 %v2610, %v2613
  %vm2615 = vweird.f32 %v2609
  %vm2616 = vweird.f32 %v2610
  %vm2617 = vmor %vm2615, %vm2616
  %v2618 = vsel %vm2617, %v2610, %v2614
  %v2619 = vand.u32 2147483647, %v2609
  %vm2620 = vcmp.eq.f32.partialorder %v2619, 8.507059e+37
  %v2621 = vand.u32 %v2609, 2147483648
  %v2622 = vor.u32 1.1754944e-38, %v2621
  %v2623 = vsel %vm2620, %v2622, %v2618
  %v2624 = vmul.f32 1.0, %v2623
  %v2625 = vxor.u32 %v2551, 2147483648
  %v2626 = vmul.f32 %v2625, 1.442695
  %v2627 = vpow.pop %v2626
  %v2628 = vadd.f32 %v2627, 1.0
  %v2629 = vrcp.pop %v2628
  %v2630 = vmul.f32 %v2628, %v2629
  %v2631 = vsub.f32 1.0, %v2630
  %v2632 = vmul.f32 %v2629, %v2631
  %v2633 = vadd.f32 %v2629, %v2632
  %vm2634 = vweird.f32 %v2628
  %vm2635 = vweird.f32 %v2629
  %vm2636 = vmor %vm2634, %vm2635
  %v2637 = vsel %vm2636, %v2629, %v2633
  %v2638 = vand.u32 2147483647, %v2628
  %vm2639 = vcmp.eq.f32.partialorder %v2638, 8.507059e+37
  %v2640 = vand.u32 %v2628, 2147483648
  %v2641 = vor.u32 1.1754944e-38, %v2640
  %v2642 = vsel %vm2639, %v2641, %v2637
  %v2643 = vmul.f32 1.0, %v2642
  %v2644 = vtanh.pop %v2577
  %v2645 = vxor.u32 %v2603, 2147483648
  %v2646 = vmul.f32 %v2645, 1.442695
  %v2647 = vpow.pop %v2646
  %v2648 = vadd.f32 %v2647, 1.0
  %v2649 = vrcp.pop %v2648
  %v2650 = vmul.f32 %v2648, %v2649
  %v2651 = vsub.f32 1.0, %v2650
  %v2652 = vmul.f32 %v2649, %v2651
  %v2653 = vadd.f32 %v2649, %v2652
  %vm2654 = vweird.f32 %v2648
  %vm2655 = vweird.f32 %v2649
  %vm2656 = vmor %vm2654, %vm2655
  %v2657 = vsel %vm2656, %v2649, %v2653
  %v2658 = vand.u32 2147483647, %v2648
  %vm2659 = vcmp.eq.f32.partialorder %v2658, 8.507059e+37
  %v2660 = vand.u32 %v2648, 2147483648
  %v2661 = vor.u32 1.1754944e-38, %v2660
  %v2662 = vsel %vm2659, %v2661, %v2657
  %v2663 = vmul.f32 1.0, %v2662
  %v2664 = vmul.f32 %v2643, %v2328
  %v2665 = vmul.f32 %v2624, %v2644
  %v2666 = vadd.f32 %v2664, %v2665
  %v2667 = vtanh.pop %v2666
  %v2668 = vmul.f32 %v2663, %v2667
  %v2669 = vpack.c.bf16 %v2668, %v2668
  %v2670 = vpack.c.bf16 %v2499, %v2499
  %2671 = vmatpush.bf16.msra.mxu0 %v881
  %2672 = vmatpush.bf16.msra.mxu0 %v877
  %2673 = vmatpush.bf16.msra.mxu0 %v873
  %2674 = vmatpush.bf16.msra.mxu0 %v869
  %2675 = vmatpush.bf16.msra.mxu0 %v865
  %2676 = vmatpush.bf16.msra.mxu0 %v861
  %2677 = vmatpush.bf16.msra.mxu0 %v857
  %2678 = vmatpush.bf16.msra.mxu0 %v853
  %2679 = vmatmul.bf16.gmra.mxu0 %v2669
  %v2680 = vpop.f32.mrf.mxu0
  %v2681 = vadd.f32 %v653, %v2680
  %v2682 = vpop.f32.mrf.mxu0
  %2683 = vdwg.mxu0
  %2684 = vmatpush.bf16.msra.mxu0 %v913
  %2685 = vmatpush.bf16.msra.mxu0 %v909
  %2686 = vmatpush.bf16.msra.mxu0 %v905
  %2687 = vmatpush.bf16.msra.mxu0 %v901
  %2688 = vmatpush.bf16.msra.mxu0 %v897
  %2689 = vmatpush.bf16.msra.mxu0 %v893
  %2690 = vmatpush.bf16.msra.mxu0 %v889
  %2691 = vmatpush.bf16.msra.mxu0 %v885
  %2692 = vmatmul.bf16.gmra.mxu0 %v2670
  %v2693 = vpop.f32.mrf.mxu0
  %v2694 = vadd.f32 %v2681, %v2693
  %v2695 = vpop.f32.mrf.mxu0
  %2696 = vdwg.mxu0
  %2697 = vmatpush.bf16.msra.mxu0 %v882
  %2698 = vmatpush.bf16.msra.mxu0 %v878
  %2699 = vmatpush.bf16.msra.mxu0 %v874
  %2700 = vmatpush.bf16.msra.mxu0 %v870
  %2701 = vmatpush.bf16.msra.mxu0 %v866
  %2702 = vmatpush.bf16.msra.mxu0 %v862
  %2703 = vmatpush.bf16.msra.mxu0 %v858
  %2704 = vmatpush.bf16.msra.mxu0 %v854
  %2705 = vmatmul.bf16.gmra.mxu0 %v2669
  %v2706 = vpop.f32.mrf.mxu0
  %v2707 = vadd.f32 %v654, %v2706
  %v2708 = vpop.f32.mrf.mxu0
  %2709 = vdwg.mxu0
  %2710 = vmatpush.bf16.msra.mxu0 %v914
  %2711 = vmatpush.bf16.msra.mxu0 %v910
  %2712 = vmatpush.bf16.msra.mxu0 %v906
  %2713 = vmatpush.bf16.msra.mxu0 %v902
  %2714 = vmatpush.bf16.msra.mxu0 %v898
  %2715 = vmatpush.bf16.msra.mxu0 %v894
  %2716 = vmatpush.bf16.msra.mxu0 %v890
  %2717 = vmatpush.bf16.msra.mxu0 %v886
  %2718 = vmatmul.bf16.gmra.mxu0 %v2670
  %v2719 = vpop.f32.mrf.mxu0
  %v2720 = vadd.f32 %v2707, %v2719
  %v2721 = vpop.f32.mrf.mxu0
  %2722 = vdwg.mxu0
  %2723 = vmatpush.bf16.msra.mxu0 %v883
  %2724 = vmatpush.bf16.msra.mxu0 %v879
  %2725 = vmatpush.bf16.msra.mxu0 %v875
  %2726 = vmatpush.bf16.msra.mxu0 %v871
  %2727 = vmatpush.bf16.msra.mxu0 %v867
  %2728 = vmatpush.bf16.msra.mxu0 %v863
  %2729 = vmatpush.bf16.msra.mxu0 %v859
  %2730 = vmatpush.bf16.msra.mxu0 %v855
  %2731 = vmatmul.bf16.gmra.mxu0 %v2669
  %v2732 = vpop.f32.mrf.mxu0
  %v2733 = vadd.f32 %v655, %v2732
  %v2734 = vpop.f32.mrf.mxu0
  %2735 = vdwg.mxu0
  %2736 = vmatpush.bf16.msra.mxu0 %v915
  %2737 = vmatpush.bf16.msra.mxu0 %v911
  %2738 = vmatpush.bf16.msra.mxu0 %v907
  %2739 = vmatpush.bf16.msra.mxu0 %v903
  %2740 = vmatpush.bf16.msra.mxu0 %v899
  %2741 = vmatpush.bf16.msra.mxu0 %v895
  %2742 = vmatpush.bf16.msra.mxu0 %v891
  %2743 = vmatpush.bf16.msra.mxu0 %v887
  %2744 = vmatmul.bf16.gmra.mxu0 %v2670
  %v2745 = vpop.f32.mrf.mxu0
  %v2746 = vadd.f32 %v2733, %v2745
  %v2747 = vpop.f32.mrf.mxu0
  %2748 = vdwg.mxu0
  %2749 = vmatpush.bf16.msra.mxu0 %v884
  %2750 = vmatpush.bf16.msra.mxu0 %v880
  %2751 = vmatpush.bf16.msra.mxu0 %v876
  %2752 = vmatpush.bf16.msra.mxu0 %v872
  %2753 = vmatpush.bf16.msra.mxu0 %v868
  %2754 = vmatpush.bf16.msra.mxu0 %v864
  %2755 = vmatpush.bf16.msra.mxu0 %v860
  %2756 = vmatpush.bf16.msra.mxu0 %v856
  %2757 = vmatmul.bf16.gmra.mxu0 %v2669
  %v2758 = vpop.f32.mrf.mxu0
  %v2759 = vadd.f32 %v656, %v2758
  %v2760 = vpop.f32.mrf.mxu0
  %2761 = vdwg.mxu0
  %2762 = vmatpush.bf16.msra.mxu0 %v916
  %2763 = vmatpush.bf16.msra.mxu0 %v912
  %2764 = vmatpush.bf16.msra.mxu0 %v908
  %2765 = vmatpush.bf16.msra.mxu0 %v904
  %2766 = vmatpush.bf16.msra.mxu0 %v900
  %2767 = vmatpush.bf16.msra.mxu0 %v896
  %2768 = vmatpush.bf16.msra.mxu0 %v892
  %2769 = vmatpush.bf16.msra.mxu0 %v888
  %2770 = vmatmul.bf16.gmra.mxu0 %v2670
  %v2771 = vpop.f32.mrf.mxu0
  %v2772 = vadd.f32 %v2759, %v2771
  %v2773 = vpop.f32.mrf.mxu0
  %2774 = vdwg.mxu0
  %v2775 = vxor.u32 %v2694, 2147483648
  %v2776 = vmul.f32 %v2775, 1.442695
  %v2777 = vpow.pop %v2776
  %v2778 = vadd.f32 %v2777, 1.0
  %v2779 = vrcp.pop %v2778
  %v2780 = vmul.f32 %v2778, %v2779
  %v2781 = vsub.f32 1.0, %v2780
  %v2782 = vmul.f32 %v2779, %v2781
  %v2783 = vadd.f32 %v2779, %v2782
  %vm2784 = vweird.f32 %v2778
  %vm2785 = vweird.f32 %v2779
  %vm2786 = vmor %vm2784, %vm2785
  %v2787 = vsel %vm2786, %v2779, %v2783
  %v2788 = vand.u32 2147483647, %v2778
  %vm2789 = vcmp.eq.f32.partialorder %v2788, 8.507059e+37
  %v2790 = vand.u32 %v2778, 2147483648
  %v2791 = vor.u32 1.1754944e-38, %v2790
  %v2792 = vsel %vm2789, %v2791, %v2787
  %v2793 = vmul.f32 1.0, %v2792
  %v2794 = vxor.u32 %v2720, 2147483648
  %v2795 = vmul.f32 %v2794, 1.442695
  %v2796 = vpow.pop %v2795
  %v2797 = vadd.f32 %v2796, 1.0
  %v2798 = vrcp.pop %v2797
  %v2799 = vmul.f32 %v2797, %v2798
  %v2800 = vsub.f32 1.0, %v2799
  %v2801 = vmul.f32 %v2798, %v2800
  %v2802 = vadd.f32 %v2798, %v2801
  %vm2803 = vweird.f32 %v2797
  %vm2804 = vweird.f32 %v2798
  %vm2805 = vmor %vm2803, %vm2804
  %v2806 = vsel %vm2805, %v2798, %v2802
  %v2807 = vand.u32 2147483647, %v2797
  %vm2808 = vcmp.eq.f32.partialorder %v2807, 8.507059e+37
  %v2809 = vand.u32 %v2797, 2147483648
  %v2810 = vor.u32 1.1754944e-38, %v2809
  %v2811 = vsel %vm2808, %v2810, %v2806
  %v2812 = vmul.f32 1.0, %v2811
  %v2813 = vtanh.pop %v2746
  %v2814 = vxor.u32 %v2772, 2147483648
  %v2815 = vmul.f32 %v2814, 1.442695
  %v2816 = vpow.pop %v2815
  %v2817 = vadd.f32 %v2816, 1.0
  %v2818 = vrcp.pop %v2817
  %v2819 = vmul.f32 %v2817, %v2818
  %v2820 = vsub.f32 1.0, %v2819
  %v2821 = vmul.f32 %v2818, %v2820
  %v2822 = vadd.f32 %v2818, %v2821
  %vm2823 = vweird.f32 %v2817
  %vm2824 = vweird.f32 %v2818
  %vm2825 = vmor %vm2823, %vm2824
  %v2826 = vsel %vm2825, %v2818, %v2822
  %v2827 = vand.u32 2147483647, %v2817
  %vm2828 = vcmp.eq.f32.partialorder %v2827, 8.507059e+37
  %v2829 = vand.u32 %v2817, 2147483648
  %v2830 = vor.u32 1.1754944e-38, %v2829
  %v2831 = vsel %vm2828, %v2830, %v2826
  %v2832 = vmul.f32 1.0, %v2831
  %v2833 = vmul.f32 %v2812, %v2497
  %v2834 = vmul.f32 %v2793, %v2813
  %v2835 = vadd.f32 %v2833, %v2834
  %v2836 = vtanh.pop %v2835
  %v2837 = vmul.f32 %v2832, %v2836
  %s2838 = scalar_lea.vmem %s0, 24
  %v2839 = vld [vmem:[%s2838] sm:$0xf]
  %2840 = vmatpush.bf16.msra.mxu0 %v319
  %2841 = vmatpush.bf16.msra.mxu0 %v315
  %2842 = vmatpush.bf16.msra.mxu0 %v311
  %2843 = vmatpush.bf16.msra.mxu0 %v307
  %2844 = vmatpush.bf16.msra.mxu0 %v303
  %2845 = vmatpush.bf16.msra.mxu0 %v299
  %2846 = vmatpush.bf16.msra.mxu0 %v295
  %2847 = vmatpush.bf16.msra.mxu0 %v291
  %2848 = vmatmul.bf16.gmra.mxu0 %v2669
  %v2849 = vpop.f32.mrf.mxu0
  %v2850 = vadd.f32 %v91, %v2849
  %v2851 = vpop.f32.mrf.mxu0
  %2852 = vdwg.mxu0
  %2853 = vmatpush.bf16.msra.mxu0 %v351
  %2854 = vmatpush.bf16.msra.mxu0 %v347
  %2855 = vmatpush.bf16.msra.mxu0 %v343
  %2856 = vmatpush.bf16.msra.mxu0 %v339
  %2857 = vmatpush.bf16.msra.mxu0 %v335
  %2858 = vmatpush.bf16.msra.mxu0 %v331
  %2859 = vmatpush.bf16.msra.mxu0 %v327
  %2860 = vmatpush.bf16.msra.mxu0 %v323
  %2861 = vmatmul.bf16.gmra.mxu0 %v2839
  %v2862 = vpop.f32.mrf.mxu0
  %v2863 = vadd.f32 %v2850, %v2862
  %v2864 = vpop.f32.mrf.mxu0
  %2865 = vdwg.mxu0
  %2866 = vmatpush.bf16.msra.mxu0 %v320
  %2867 = vmatpush.bf16.msra.mxu0 %v316
  %2868 = vmatpush.bf16.msra.mxu0 %v312
  %2869 = vmatpush.bf16.msra.mxu0 %v308
  %2870 = vmatpush.bf16.msra.mxu0 %v304
  %2871 = vmatpush.bf16.msra.mxu0 %v300
  %2872 = vmatpush.bf16.msra.mxu0 %v296
  %2873 = vmatpush.bf16.msra.mxu0 %v292
  %2874 = vmatmul.bf16.gmra.mxu0 %v2669
  %v2875 = vpop.f32.mrf.mxu0
  %v2876 = vadd.f32 %v92, %v2875
  %v2877 = vpop.f32.mrf.mxu0
  %2878 = vdwg.mxu0
  %2879 = vmatpush.bf16.msra.mxu0 %v352
  %2880 = vmatpush.bf16.msra.mxu0 %v348
  %2881 = vmatpush.bf16.msra.mxu0 %v344
  %2882 = vmatpush.bf16.msra.mxu0 %v340
  %2883 = vmatpush.bf16.msra.mxu0 %v336
  %2884 = vmatpush.bf16.msra.mxu0 %v332
  %2885 = vmatpush.bf16.msra.mxu0 %v328
  %2886 = vmatpush.bf16.msra.mxu0 %v324
  %2887 = vmatmul.bf16.gmra.mxu0 %v2839
  %v2888 = vpop.f32.mrf.mxu0
  %v2889 = vadd.f32 %v2876, %v2888
  %v2890 = vpop.f32.mrf.mxu0
  %2891 = vdwg.mxu0
  %2892 = vmatpush.bf16.msra.mxu0 %v321
  %2893 = vmatpush.bf16.msra.mxu0 %v317
  %2894 = vmatpush.bf16.msra.mxu0 %v313
  %2895 = vmatpush.bf16.msra.mxu0 %v309
  %2896 = vmatpush.bf16.msra.mxu0 %v305
  %2897 = vmatpush.bf16.msra.mxu0 %v301
  %2898 = vmatpush.bf16.msra.mxu0 %v297
  %2899 = vmatpush.bf16.msra.mxu0 %v293
  %2900 = vmatmul.bf16.gmra.mxu0 %v2669
  %v2901 = vpop.f32.mrf.mxu0
  %v2902 = vadd.f32 %v93, %v2901
  %v2903 = vpop.f32.mrf.mxu0
  %2904 = vdwg.mxu0
  %2905 = vmatpush.bf16.msra.mxu0 %v353
  %2906 = vmatpush.bf16.msra.mxu0 %v349
  %2907 = vmatpush.bf16.msra.mxu0 %v345
  %2908 = vmatpush.bf16.msra.mxu0 %v341
  %2909 = vmatpush.bf16.msra.mxu0 %v337
  %2910 = vmatpush.bf16.msra.mxu0 %v333
  %2911 = vmatpush.bf16.msra.mxu0 %v329
  %2912 = vmatpush.bf16.msra.mxu0 %v325
  %2913 = vmatmul.bf16.gmra.mxu0 %v2839
  %v2914 = vpop.f32.mrf.mxu0
  %v2915 = vadd.f32 %v2902, %v2914
  %v2916 = vpop.f32.mrf.mxu0
  %2917 = vdwg.mxu0
  %2918 = vmatpush.bf16.msra.mxu0 %v322
  %2919 = vmatpush.bf16.msra.mxu0 %v318
  %2920 = vmatpush.bf16.msra.mxu0 %v314
  %2921 = vmatpush.bf16.msra.mxu0 %v310
  %2922 = vmatpush.bf16.msra.mxu0 %v306
  %2923 = vmatpush.bf16.msra.mxu0 %v302
  %2924 = vmatpush.bf16.msra.mxu0 %v298
  %2925 = vmatpush.bf16.msra.mxu0 %v294
  %2926 = vmatmul.bf16.gmra.mxu0 %v2669
  %v2927 = vpop.f32.mrf.mxu0
  %v2928 = vadd.f32 %v94, %v2927
  %v2929 = vpop.f32.mrf.mxu0
  %2930 = vdwg.mxu0
  %2931 = vmatpush.bf16.msra.mxu0 %v354
  %2932 = vmatpush.bf16.msra.mxu0 %v350
  %2933 = vmatpush.bf16.msra.mxu0 %v346
  %2934 = vmatpush.bf16.msra.mxu0 %v342
  %2935 = vmatpush.bf16.msra.mxu0 %v338
  %2936 = vmatpush.bf16.msra.mxu0 %v334
  %2937 = vmatpush.bf16.msra.mxu0 %v330
  %2938 = vmatpush.bf16.msra.mxu0 %v326
  %2939 = vmatmul.bf16.gmra.mxu0 %v2839
  %v2940 = vpop.f32.mrf.mxu0
  %v2941 = vadd.f32 %v2928, %v2940
  %v2942 = vpop.f32.mrf.mxu0
  %2943 = vdwg.mxu0
  %v2944 = vxor.u32 %v2863, 2147483648
  %v2945 = vmul.f32 %v2944, 1.442695
  %v2946 = vpow.pop %v2945
  %v2947 = vadd.f32 %v2946, 1.0
  %v2948 = vrcp.pop %v2947
  %v2949 = vmul.f32 %v2947, %v2948
  %v2950 = vsub.f32 1.0, %v2949
  %v2951 = vmul.f32 %v2948, %v2950
  %v2952 = vadd.f32 %v2948, %v2951
  %vm2953 = vweird.f32 %v2947
  %vm2954 = vweird.f32 %v2948
  %vm2955 = vmor %vm2953, %vm2954
  %v2956 = vsel %vm2955, %v2948, %v2952
  %v2957 = vand.u32 2147483647, %v2947
  %vm2958 = vcmp.eq.f32.partialorder %v2957, 8.507059e+37
  %v2959 = vand.u32 %v2947, 2147483648
  %v2960 = vor.u32 1.1754944e-38, %v2959
  %v2961 = vsel %vm2958, %v2960, %v2956
  %v2962 = vmul.f32 1.0, %v2961
  %v2963 = vxor.u32 %v2889, 2147483648
  %v2964 = vmul.f32 %v2963, 1.442695
  %v2965 = vpow.pop %v2964
  %v2966 = vadd.f32 %v2965, 1.0
  %v2967 = vrcp.pop %v2966
  %v2968 = vmul.f32 %v2966, %v2967
  %v2969 = vsub.f32 1.0, %v2968
  %v2970 = vmul.f32 %v2967, %v2969
  %v2971 = vadd.f32 %v2967, %v2970
  %vm2972 = vweird.f32 %v2966
  %vm2973 = vweird.f32 %v2967
  %vm2974 = vmor %vm2972, %vm2973
  %v2975 = vsel %vm2974, %v2967, %v2971
  %v2976 = vand.u32 2147483647, %v2966
  %vm2977 = vcmp.eq.f32.partialorder %v2976, 8.507059e+37
  %v2978 = vand.u32 %v2966, 2147483648
  %v2979 = vor.u32 1.1754944e-38, %v2978
  %v2980 = vsel %vm2977, %v2979, %v2975
  %v2981 = vmul.f32 1.0, %v2980
  %v2982 = vtanh.pop %v2915
  %v2983 = vxor.u32 %v2941, 2147483648
  %v2984 = vmul.f32 %v2983, 1.442695
  %v2985 = vpow.pop %v2984
  %v2986 = vadd.f32 %v2985, 1.0
  %v2987 = vrcp.pop %v2986
  %v2988 = vmul.f32 %v2986, %v2987
  %v2989 = vsub.f32 1.0, %v2988
  %v2990 = vmul.f32 %v2987, %v2989
  %v2991 = vadd.f32 %v2987, %v2990
  %vm2992 = vweird.f32 %v2986
  %vm2993 = vweird.f32 %v2987
  %vm2994 = vmor %vm2992, %vm2993
  %v2995 = vsel %vm2994, %v2987, %v2991
  %v2996 = vand.u32 2147483647, %v2986
  %vm2997 = vcmp.eq.f32.partialorder %v2996, 8.507059e+37
  %v2998 = vand.u32 %v2986, 2147483648
  %v2999 = vor.u32 1.1754944e-38, %v2998
  %v3000 = vsel %vm2997, %v2999, %v2995
  %v3001 = vmul.f32 1.0, %v3000
  %v3002 = vmul.f32 %v2981, %v2666
  %v3003 = vmul.f32 %v2962, %v2982
  %v3004 = vadd.f32 %v3002, %v3003
  %v3005 = vtanh.pop %v3004
  %v3006 = vmul.f32 %v3001, %v3005
  %v3007 = vpack.c.bf16 %v3006, %v3006
  %v3008 = vpack.c.bf16 %v2837, %v2837
  %3009 = vmatpush.bf16.msra.mxu0 %v881
  %3010 = vmatpush.bf16.msra.mxu0 %v877
  %3011 = vmatpush.bf16.msra.mxu0 %v873
  %3012 = vmatpush.bf16.msra.mxu0 %v869
  %3013 = vmatpush.bf16.msra.mxu0 %v865
  %3014 = vmatpush.bf16.msra.mxu0 %v861
  %3015 = vmatpush.bf16.msra.mxu0 %v857
  %3016 = vmatpush.bf16.msra.mxu0 %v853
  %3017 = vmatmul.bf16.gmra.mxu0 %v3007
  %v3018 = vpop.f32.mrf.mxu0
  %v3019 = vadd.f32 %v653, %v3018
  %v3020 = vpop.f32.mrf.mxu0
  %3021 = vdwg.mxu0
  %3022 = vmatpush.bf16.msra.mxu0 %v913
  %3023 = vmatpush.bf16.msra.mxu0 %v909
  %3024 = vmatpush.bf16.msra.mxu0 %v905
  %3025 = vmatpush.bf16.msra.mxu0 %v901
  %3026 = vmatpush.bf16.msra.mxu0 %v897
  %3027 = vmatpush.bf16.msra.mxu0 %v893
  %3028 = vmatpush.bf16.msra.mxu0 %v889
  %3029 = vmatpush.bf16.msra.mxu0 %v885
  %3030 = vmatmul.bf16.gmra.mxu0 %v3008
  %v3031 = vpop.f32.mrf.mxu0
  %v3032 = vadd.f32 %v3019, %v3031
  %v3033 = vpop.f32.mrf.mxu0
  %3034 = vdwg.mxu0
  %3035 = vmatpush.bf16.msra.mxu0 %v882
  %3036 = vmatpush.bf16.msra.mxu0 %v878
  %3037 = vmatpush.bf16.msra.mxu0 %v874
  %3038 = vmatpush.bf16.msra.mxu0 %v870
  %3039 = vmatpush.bf16.msra.mxu0 %v866
  %3040 = vmatpush.bf16.msra.mxu0 %v862
  %3041 = vmatpush.bf16.msra.mxu0 %v858
  %3042 = vmatpush.bf16.msra.mxu0 %v854
  %3043 = vmatmul.bf16.gmra.mxu0 %v3007
  %v3044 = vpop.f32.mrf.mxu0
  %v3045 = vadd.f32 %v654, %v3044
  %v3046 = vpop.f32.mrf.mxu0
  %3047 = vdwg.mxu0
  %3048 = vmatpush.bf16.msra.mxu0 %v914
  %3049 = vmatpush.bf16.msra.mxu0 %v910
  %3050 = vmatpush.bf16.msra.mxu0 %v906
  %3051 = vmatpush.bf16.msra.mxu0 %v902
  %3052 = vmatpush.bf16.msra.mxu0 %v898
  %3053 = vmatpush.bf16.msra.mxu0 %v894
  %3054 = vmatpush.bf16.msra.mxu0 %v890
  %3055 = vmatpush.bf16.msra.mxu0 %v886
  %3056 = vmatmul.bf16.gmra.mxu0 %v3008
  %v3057 = vpop.f32.mrf.mxu0
  %v3058 = vadd.f32 %v3045, %v3057
  %v3059 = vpop.f32.mrf.mxu0
  %3060 = vdwg.mxu0
  %3061 = vmatpush.bf16.msra.mxu0 %v883
  %3062 = vmatpush.bf16.msra.mxu0 %v879
  %3063 = vmatpush.bf16.msra.mxu0 %v875
  %3064 = vmatpush.bf16.msra.mxu0 %v871
  %3065 = vmatpush.bf16.msra.mxu0 %v867
  %3066 = vmatpush.bf16.msra.mxu0 %v863
  %3067 = vmatpush.bf16.msra.mxu0 %v859
  %3068 = vmatpush.bf16.msra.mxu0 %v855
  %3069 = vmatmul.bf16.gmra.mxu0 %v3007
  %v3070 = vpop.f32.mrf.mxu0
  %v3071 = vadd.f32 %v655, %v3070
  %v3072 = vpop.f32.mrf.mxu0
  %3073 = vdwg.mxu0
  %3074 = vmatpush.bf16.msra.mxu0 %v915
  %3075 = vmatpush.bf16.msra.mxu0 %v911
  %3076 = vmatpush.bf16.msra.mxu0 %v907
  %3077 = vmatpush.bf16.msra.mxu0 %v903
  %3078 = vmatpush.bf16.msra.mxu0 %v899
  %3079 = vmatpush.bf16.msra.mxu0 %v895
  %3080 = vmatpush.bf16.msra.mxu0 %v891
  %3081 = vmatpush.bf16.msra.mxu0 %v887
  %3082 = vmatmul.bf16.gmra.mxu0 %v3008
  %v3083 = vpop.f32.mrf.mxu0
  %v3084 = vadd.f32 %v3071, %v3083
  %v3085 = vpop.f32.mrf.mxu0
  %3086 = vdwg.mxu0
  %3087 = vmatpush.bf16.msra.mxu0 %v884
  %3088 = vmatpush.bf16.msra.mxu0 %v880
  %3089 = vmatpush.bf16.msra.mxu0 %v876
  %3090 = vmatpush.bf16.msra.mxu0 %v872
  %3091 = vmatpush.bf16.msra.mxu0 %v868
  %3092 = vmatpush.bf16.msra.mxu0 %v864
  %3093 = vmatpush.bf16.msra.mxu0 %v860
  %3094 = vmatpush.bf16.msra.mxu0 %v856
  %3095 = vmatmul.bf16.gmra.mxu0 %v3007
  %v3096 = vpop.f32.mrf.mxu0
  %v3097 = vadd.f32 %v656, %v3096
  %v3098 = vpop.f32.mrf.mxu0
  %3099 = vdwg.mxu0
  %3100 = vmatpush.bf16.msra.mxu0 %v916
  %3101 = vmatpush.bf16.msra.mxu0 %v912
  %3102 = vmatpush.bf16.msra.mxu0 %v908
  %3103 = vmatpush.bf16.msra.mxu0 %v904
  %3104 = vmatpush.bf16.msra.mxu0 %v900
  %3105 = vmatpush.bf16.msra.mxu0 %v896
  %3106 = vmatpush.bf16.msra.mxu0 %v892
  %3107 = vmatpush.bf16.msra.mxu0 %v888
  %3108 = vmatmul.bf16.gmra.mxu0 %v3008
  %v3109 = vpop.f32.mrf.mxu0
  %v3110 = vadd.f32 %v3097, %v3109
  %v3111 = vpop.f32.mrf.mxu0
  %3112 = vdwg.mxu0
  %v3113 = vxor.u32 %v3032, 2147483648
  %v3114 = vmul.f32 %v3113, 1.442695
  %v3115 = vpow.pop %v3114
  %v3116 = vadd.f32 %v3115, 1.0
  %v3117 = vrcp.pop %v3116
  %v3118 = vmul.f32 %v3116, %v3117
  %v3119 = vsub.f32 1.0, %v3118
  %v3120 = vmul.f32 %v3117, %v3119
  %v3121 = vadd.f32 %v3117, %v3120
  %vm3122 = vweird.f32 %v3116
  %vm3123 = vweird.f32 %v3117
  %vm3124 = vmor %vm3122, %vm3123
  %v3125 = vsel %vm3124, %v3117, %v3121
  %v3126 = vand.u32 2147483647, %v3116
  %vm3127 = vcmp.eq.f32.partialorder %v3126, 8.507059e+37
  %v3128 = vand.u32 %v3116, 2147483648
  %v3129 = vor.u32 1.1754944e-38, %v3128
  %v3130 = vsel %vm3127, %v3129, %v3125
  %v3131 = vmul.f32 1.0, %v3130
  %v3132 = vxor.u32 %v3058, 2147483648
  %v3133 = vmul.f32 %v3132, 1.442695
  %v3134 = vpow.pop %v3133
  %v3135 = vadd.f32 %v3134, 1.0
  %v3136 = vrcp.pop %v3135
  %v3137 = vmul.f32 %v3135, %v3136
  %v3138 = vsub.f32 1.0, %v3137
  %v3139 = vmul.f32 %v3136, %v3138
  %v3140 = vadd.f32 %v3136, %v3139
  %vm3141 = vweird.f32 %v3135
  %vm3142 = vweird.f32 %v3136
  %vm3143 = vmor %vm3141, %vm3142
  %v3144 = vsel %vm3143, %v3136, %v3140
  %v3145 = vand.u32 2147483647, %v3135
  %vm3146 = vcmp.eq.f32.partialorder %v3145, 8.507059e+37
  %v3147 = vand.u32 %v3135, 2147483648
  %v3148 = vor.u32 1.1754944e-38, %v3147
  %v3149 = vsel %vm3146, %v3148, %v3144
  %v3150 = vmul.f32 1.0, %v3149
  %v3151 = vtanh.pop %v3084
  %v3152 = vxor.u32 %v3110, 2147483648
  %v3153 = vmul.f32 %v3152, 1.442695
  %v3154 = vpow.pop %v3153
  %v3155 = vadd.f32 %v3154, 1.0
  %v3156 = vrcp.pop %v3155
  %v3157 = vmul.f32 %v3155, %v3156
  %v3158 = vsub.f32 1.0, %v3157
  %v3159 = vmul.f32 %v3156, %v3158
  %v3160 = vadd.f32 %v3156, %v3159
  %vm3161 = vweird.f32 %v3155
  %vm3162 = vweird.f32 %v3156
  %vm3163 = vmor %vm3161, %vm3162
  %v3164 = vsel %vm3163, %v3156, %v3160
  %v3165 = vand.u32 2147483647, %v3155
  %vm3166 = vcmp.eq.f32.partialorder %v3165, 8.507059e+37
  %v3167 = vand.u32 %v3155, 2147483648
  %v3168 = vor.u32 1.1754944e-38, %v3167
  %v3169 = vsel %vm3166, %v3168, %v3164
  %v3170 = vmul.f32 1.0, %v3169
  %v3171 = vmul.f32 %v3150, %v2835
  %v3172 = vmul.f32 %v3131, %v3151
  %v3173 = vadd.f32 %v3171, %v3172
  %v3174 = vtanh.pop %v3173
  %v3175 = vmul.f32 %v3170, %v3174
  %s3176 = scalar_lea.vmem %s0, 28
  %v3177 = vld [vmem:[%s3176] sm:$0xf]
  %3178 = vmatpush.bf16.msra.mxu0 %v319
  %3179 = vmatpush.bf16.msra.mxu0 %v315
  %3180 = vmatpush.bf16.msra.mxu0 %v311
  %3181 = vmatpush.bf16.msra.mxu0 %v307
  %3182 = vmatpush.bf16.msra.mxu0 %v303
  %3183 = vmatpush.bf16.msra.mxu0 %v299
  %3184 = vmatpush.bf16.msra.mxu0 %v295
  %3185 = vmatpush.bf16.msra.mxu0 %v291
  %3186 = vmatmul.bf16.gmra.mxu0 %v3007
  %v3187 = vpop.f32.mrf.mxu0
  %v3188 = vadd.f32 %v91, %v3187
  %v3189 = vpop.f32.mrf.mxu0
  %3190 = vdwg.mxu0
  %3191 = vmatpush.bf16.msra.mxu0 %v351
  %3192 = vmatpush.bf16.msra.mxu0 %v347
  %3193 = vmatpush.bf16.msra.mxu0 %v343
  %3194 = vmatpush.bf16.msra.mxu0 %v339
  %3195 = vmatpush.bf16.msra.mxu0 %v335
  %3196 = vmatpush.bf16.msra.mxu0 %v331
  %3197 = vmatpush.bf16.msra.mxu0 %v327
  %3198 = vmatpush.bf16.msra.mxu0 %v323
  %3199 = vmatmul.bf16.gmra.mxu0 %v3177
  %v3200 = vpop.f32.mrf.mxu0
  %v3201 = vadd.f32 %v3188, %v3200
  %v3202 = vpop.f32.mrf.mxu0
  %3203 = vdwg.mxu0
  %3204 = vmatpush.bf16.msra.mxu0 %v320
  %3205 = vmatpush.bf16.msra.mxu0 %v316
  %3206 = vmatpush.bf16.msra.mxu0 %v312
  %3207 = vmatpush.bf16.msra.mxu0 %v308
  %3208 = vmatpush.bf16.msra.mxu0 %v304
  %3209 = vmatpush.bf16.msra.mxu0 %v300
  %3210 = vmatpush.bf16.msra.mxu0 %v296
  %3211 = vmatpush.bf16.msra.mxu0 %v292
  %3212 = vmatmul.bf16.gmra.mxu0 %v3007
  %v3213 = vpop.f32.mrf.mxu0
  %v3214 = vadd.f32 %v92, %v3213
  %v3215 = vpop.f32.mrf.mxu0
  %3216 = vdwg.mxu0
  %3217 = vmatpush.bf16.msra.mxu0 %v352
  %3218 = vmatpush.bf16.msra.mxu0 %v348
  %3219 = vmatpush.bf16.msra.mxu0 %v344
  %3220 = vmatpush.bf16.msra.mxu0 %v340
  %3221 = vmatpush.bf16.msra.mxu0 %v336
  %3222 = vmatpush.bf16.msra.mxu0 %v332
  %3223 = vmatpush.bf16.msra.mxu0 %v328
  %3224 = vmatpush.bf16.msra.mxu0 %v324
  %3225 = vmatmul.bf16.gmra.mxu0 %v3177
  %v3226 = vpop.f32.mrf.mxu0
  %v3227 = vadd.f32 %v3214, %v3226
  %v3228 = vpop.f32.mrf.mxu0
  %3229 = vdwg.mxu0
  %3230 = vmatpush.bf16.msra.mxu0 %v321
  %3231 = vmatpush.bf16.msra.mxu0 %v317
  %3232 = vmatpush.bf16.msra.mxu0 %v313
  %3233 = vmatpush.bf16.msra.mxu0 %v309
  %3234 = vmatpush.bf16.msra.mxu0 %v305
  %3235 = vmatpush.bf16.msra.mxu0 %v301
  %3236 = vmatpush.bf16.msra.mxu0 %v297
  %3237 = vmatpush.bf16.msra.mxu0 %v293
  %3238 = vmatmul.bf16.gmra.mxu0 %v3007
  %v3239 = vpop.f32.mrf.mxu0
  %v3240 = vadd.f32 %v93, %v3239
  %v3241 = vpop.f32.mrf.mxu0
  %3242 = vdwg.mxu0
  %3243 = vmatpush.bf16.msra.mxu0 %v353
  %3244 = vmatpush.bf16.msra.mxu0 %v349
  %3245 = vmatpush.bf16.msra.mxu0 %v345
  %3246 = vmatpush.bf16.msra.mxu0 %v341
  %3247 = vmatpush.bf16.msra.mxu0 %v337
  %3248 = vmatpush.bf16.msra.mxu0 %v333
  %3249 = vmatpush.bf16.msra.mxu0 %v329
  %3250 = vmatpush.bf16.msra.mxu0 %v325
  %3251 = vmatmul.bf16.gmra.mxu0 %v3177
  %v3252 = vpop.f32.mrf.mxu0
  %v3253 = vadd.f32 %v3240, %v3252
  %v3254 = vpop.f32.mrf.mxu0
  %3255 = vdwg.mxu0
  %3256 = vmatpush.bf16.msra.mxu0 %v322
  %3257 = vmatpush.bf16.msra.mxu0 %v318
  %3258 = vmatpush.bf16.msra.mxu0 %v314
  %3259 = vmatpush.bf16.msra.mxu0 %v310
  %3260 = vmatpush.bf16.msra.mxu0 %v306
  %3261 = vmatpush.bf16.msra.mxu0 %v302
  %3262 = vmatpush.bf16.msra.mxu0 %v298
  %3263 = vmatpush.bf16.msra.mxu0 %v294
  %3264 = vmatmul.bf16.gmra.mxu0 %v3007
  %v3265 = vpop.f32.mrf.mxu0
  %v3266 = vadd.f32 %v94, %v3265
  %v3267 = vpop.f32.mrf.mxu0
  %3268 = vdwg.mxu0
  %3269 = vmatpush.bf16.msra.mxu0 %v354
  %3270 = vmatpush.bf16.msra.mxu0 %v350
  %3271 = vmatpush.bf16.msra.mxu0 %v346
  %3272 = vmatpush.bf16.msra.mxu0 %v342
  %3273 = vmatpush.bf16.msra.mxu0 %v338
  %3274 = vmatpush.bf16.msra.mxu0 %v334
  %3275 = vmatpush.bf16.msra.mxu0 %v330
  %3276 = vmatpush.bf16.msra.mxu0 %v326
  %3277 = vmatmul.bf16.gmra.mxu0 %v3177
  %v3278 = vpop.f32.mrf.mxu0
  %v3279 = vadd.f32 %v3266, %v3278
  %v3280 = vpop.f32.mrf.mxu0
  %3281 = vdwg.mxu0
  %v3282 = vxor.u32 %v3201, 2147483648
  %v3283 = vmul.f32 %v3282, 1.442695
  %v3284 = vpow.pop %v3283
  %v3285 = vadd.f32 %v3284, 1.0
  %v3286 = vrcp.pop %v3285
  %v3287 = vmul.f32 %v3285, %v3286
  %v3288 = vsub.f32 1.0, %v3287
  %v3289 = vmul.f32 %v3286, %v3288
  %v3290 = vadd.f32 %v3286, %v3289
  %vm3291 = vweird.f32 %v3285
  %vm3292 = vweird.f32 %v3286
  %vm3293 = vmor %vm3291, %vm3292
  %v3294 = vsel %vm3293, %v3286, %v3290
  %v3295 = vand.u32 2147483647, %v3285
  %vm3296 = vcmp.eq.f32.partialorder %v3295, 8.507059e+37
  %v3297 = vand.u32 %v3285, 2147483648
  %v3298 = vor.u32 1.1754944e-38, %v3297
  %v3299 = vsel %vm3296, %v3298, %v3294
  %v3300 = vmul.f32 1.0, %v3299
  %v3301 = vxor.u32 %v3227, 2147483648
  %v3302 = vmul.f32 %v3301, 1.442695
  %v3303 = vpow.pop %v3302
  %v3304 = vadd.f32 %v3303, 1.0
  %v3305 = vrcp.pop %v3304
  %v3306 = vmul.f32 %v3304, %v3305
  %v3307 = vsub.f32 1.0, %v3306
  %v3308 = vmul.f32 %v3305, %v3307
  %v3309 = vadd.f32 %v3305, %v3308
  %vm3310 = vweird.f32 %v3304
  %vm3311 = vweird.f32 %v3305
  %vm3312 = vmor %vm3310, %vm3311
  %v3313 = vsel %vm3312, %v3305, %v3309
  %v3314 = vand.u32 2147483647, %v3304
  %vm3315 = vcmp.eq.f32.partialorder %v3314, 8.507059e+37
  %v3316 = vand.u32 %v3304, 2147483648
  %v3317 = vor.u32 1.1754944e-38, %v3316
  %v3318 = vsel %vm3315, %v3317, %v3313
  %v3319 = vmul.f32 1.0, %v3318
  %v3320 = vtanh.pop %v3253
  %v3321 = vxor.u32 %v3279, 2147483648
  %v3322 = vmul.f32 %v3321, 1.442695
  %v3323 = vpow.pop %v3322
  %v3324 = vadd.f32 %v3323, 1.0
  %v3325 = vrcp.pop %v3324
  %v3326 = vmul.f32 %v3324, %v3325
  %v3327 = vsub.f32 1.0, %v3326
  %v3328 = vmul.f32 %v3325, %v3327
  %v3329 = vadd.f32 %v3325, %v3328
  %vm3330 = vweird.f32 %v3324
  %vm3331 = vweird.f32 %v3325
  %vm3332 = vmor %vm3330, %vm3331
  %v3333 = vsel %vm3332, %v3325, %v3329
  %v3334 = vand.u32 2147483647, %v3324
  %vm3335 = vcmp.eq.f32.partialorder %v3334, 8.507059e+37
  %v3336 = vand.u32 %v3324, 2147483648
  %v3337 = vor.u32 1.1754944e-38, %v3336
  %v3338 = vsel %vm3335, %v3337, %v3333
  %v3339 = vmul.f32 1.0, %v3338
  %v3340 = vmul.f32 %v3319, %v3004
  %v3341 = vmul.f32 %v3300, %v3320
  %v3342 = vadd.f32 %v3340, %v3341
  %v3343 = vtanh.pop %v3342
  %v3344 = vmul.f32 %v3339, %v3343
  %v3345 = vpack.c.bf16 %v3344, %v3344
  %v3346 = vpack.c.bf16 %v3175, %v3175
  %3347 = vmatpush.bf16.msra.mxu0 %v881
  %3348 = vmatpush.bf16.msra.mxu0 %v877
  %3349 = vmatpush.bf16.msra.mxu0 %v873
  %3350 = vmatpush.bf16.msra.mxu0 %v869
  %3351 = vmatpush.bf16.msra.mxu0 %v865
  %3352 = vmatpush.bf16.msra.mxu0 %v861
  %3353 = vmatpush.bf16.msra.mxu0 %v857
  %3354 = vmatpush.bf16.msra.mxu0 %v853
  %3355 = vmatmul.bf16.gmra.mxu0 %v3345
  %v3356 = vpop.f32.mrf.mxu0
  %v3357 = vadd.f32 %v653, %v3356
  %v3358 = vpop.f32.mrf.mxu0
  %3359 = vdwg.mxu0
  %3360 = vmatpush.bf16.msra.mxu0 %v913
  %3361 = vmatpush.bf16.msra.mxu0 %v909
  %3362 = vmatpush.bf16.msra.mxu0 %v905
  %3363 = vmatpush.bf16.msra.mxu0 %v901
  %3364 = vmatpush.bf16.msra.mxu0 %v897
  %3365 = vmatpush.bf16.msra.mxu0 %v893
  %3366 = vmatpush.bf16.msra.mxu0 %v889
  %3367 = vmatpush.bf16.msra.mxu0 %v885
  %3368 = vmatmul.bf16.gmra.mxu0 %v3346
  %v3369 = vpop.f32.mrf.mxu0
  %v3370 = vadd.f32 %v3357, %v3369
  %v3371 = vpop.f32.mrf.mxu0
  %3372 = vdwg.mxu0
  %3373 = vmatpush.bf16.msra.mxu0 %v882
  %3374 = vmatpush.bf16.msra.mxu0 %v878
  %3375 = vmatpush.bf16.msra.mxu0 %v874
  %3376 = vmatpush.bf16.msra.mxu0 %v870
  %3377 = vmatpush.bf16.msra.mxu0 %v866
  %3378 = vmatpush.bf16.msra.mxu0 %v862
  %3379 = vmatpush.bf16.msra.mxu0 %v858
  %3380 = vmatpush.bf16.msra.mxu0 %v854
  %3381 = vmatmul.bf16.gmra.mxu0 %v3345
  %v3382 = vpop.f32.mrf.mxu0
  %v3383 = vadd.f32 %v654, %v3382
  %v3384 = vpop.f32.mrf.mxu0
  %3385 = vdwg.mxu0
  %3386 = vmatpush.bf16.msra.mxu0 %v914
  %3387 = vmatpush.bf16.msra.mxu0 %v910
  %3388 = vmatpush.bf16.msra.mxu0 %v906
  %3389 = vmatpush.bf16.msra.mxu0 %v902
  %3390 = vmatpush.bf16.msra.mxu0 %v898
  %3391 = vmatpush.bf16.msra.mxu0 %v894
  %3392 = vmatpush.bf16.msra.mxu0 %v890
  %3393 = vmatpush.bf16.msra.mxu0 %v886
  %3394 = vmatmul.bf16.gmra.mxu0 %v3346
  %v3395 = vpop.f32.mrf.mxu0
  %v3396 = vadd.f32 %v3383, %v3395
  %v3397 = vpop.f32.mrf.mxu0
  %3398 = vdwg.mxu0
  %3399 = vmatpush.bf16.msra.mxu0 %v883
  %3400 = vmatpush.bf16.msra.mxu0 %v879
  %3401 = vmatpush.bf16.msra.mxu0 %v875
  %3402 = vmatpush.bf16.msra.mxu0 %v871
  %3403 = vmatpush.bf16.msra.mxu0 %v867
  %3404 = vmatpush.bf16.msra.mxu0 %v863
  %3405 = vmatpush.bf16.msra.mxu0 %v859
  %3406 = vmatpush.bf16.msra.mxu0 %v855
  %3407 = vmatmul.bf16.gmra.mxu0 %v3345
  %v3408 = vpop.f32.mrf.mxu0
  %v3409 = vadd.f32 %v655, %v3408
  %v3410 = vpop.f32.mrf.mxu0
  %3411 = vdwg.mxu0
  %3412 = vmatpush.bf16.msra.mxu0 %v915
  %3413 = vmatpush.bf16.msra.mxu0 %v911
  %3414 = vmatpush.bf16.msra.mxu0 %v907
  %3415 = vmatpush.bf16.msra.mxu0 %v903
  %3416 = vmatpush.bf16.msra.mxu0 %v899
  %3417 = vmatpush.bf16.msra.mxu0 %v895
  %3418 = vmatpush.bf16.msra.mxu0 %v891
  %3419 = vmatpush.bf16.msra.mxu0 %v887
  %3420 = vmatmul.bf16.gmra.mxu0 %v3346
  %v3421 = vpop.f32.mrf.mxu0
  %v3422 = vadd.f32 %v3409, %v3421
  %v3423 = vpop.f32.mrf.mxu0
  %3424 = vdwg.mxu0
  %3425 = vmatpush.bf16.msra.mxu0 %v884
  %3426 = vmatpush.bf16.msra.mxu0 %v880
  %3427 = vmatpush.bf16.msra.mxu0 %v876
  %3428 = vmatpush.bf16.msra.mxu0 %v872
  %3429 = vmatpush.bf16.msra.mxu0 %v868
  %3430 = vmatpush.bf16.msra.mxu0 %v864
  %3431 = vmatpush.bf16.msra.mxu0 %v860
  %3432 = vmatpush.bf16.msra.mxu0 %v856
  %3433 = vmatmul.bf16.gmra.mxu0 %v3345
  %v3434 = vpop.f32.mrf.mxu0
  %v3435 = vadd.f32 %v656, %v3434
  %v3436 = vpop.f32.mrf.mxu0
  %3437 = vdwg.mxu0
  %3438 = vmatpush.bf16.msra.mxu0 %v916
  %3439 = vmatpush.bf16.msra.mxu0 %v912
  %3440 = vmatpush.bf16.msra.mxu0 %v908
  %3441 = vmatpush.bf16.msra.mxu0 %v904
  %3442 = vmatpush.bf16.msra.mxu0 %v900
  %3443 = vmatpush.bf16.msra.mxu0 %v896
  %3444 = vmatpush.bf16.msra.mxu0 %v892
  %3445 = vmatpush.bf16.msra.mxu0 %v888
  %3446 = vmatmul.bf16.gmra.mxu0 %v3346
  %v3447 = vpop.f32.mrf.mxu0
  %v3448 = vadd.f32 %v3435, %v3447
  %v3449 = vpop.f32.mrf.mxu0
  %3450 = vdwg.mxu0
  %v3451 = vxor.u32 %v3370, 2147483648
  %v3452 = vmul.f32 %v3451, 1.442695
  %v3453 = vpow.pop %v3452
  %v3454 = vadd.f32 %v3453, 1.0
  %v3455 = vrcp.pop %v3454
  %v3456 = vmul.f32 %v3454, %v3455
  %v3457 = vsub.f32 1.0, %v3456
  %v3458 = vmul.f32 %v3455, %v3457
  %v3459 = vadd.f32 %v3455, %v3458
  %vm3460 = vweird.f32 %v3454
  %vm3461 = vweird.f32 %v3455
  %vm3462 = vmor %vm3460, %vm3461
  %v3463 = vsel %vm3462, %v3455, %v3459
  %v3464 = vand.u32 2147483647, %v3454
  %vm3465 = vcmp.eq.f32.partialorder %v3464, 8.507059e+37
  %v3466 = vand.u32 %v3454, 2147483648
  %v3467 = vor.u32 1.1754944e-38, %v3466
  %v3468 = vsel %vm3465, %v3467, %v3463
  %v3469 = vmul.f32 1.0, %v3468
  %v3470 = vxor.u32 %v3396, 2147483648
  %v3471 = vmul.f32 %v3470, 1.442695
  %v3472 = vpow.pop %v3471
  %v3473 = vadd.f32 %v3472, 1.0
  %v3474 = vrcp.pop %v3473
  %v3475 = vmul.f32 %v3473, %v3474
  %v3476 = vsub.f32 1.0, %v3475
  %v3477 = vmul.f32 %v3474, %v3476
  %v3478 = vadd.f32 %v3474, %v3477
  %vm3479 = vweird.f32 %v3473
  %vm3480 = vweird.f32 %v3474
  %vm3481 = vmor %vm3479, %vm3480
  %v3482 = vsel %vm3481, %v3474, %v3478
  %v3483 = vand.u32 2147483647, %v3473
  %vm3484 = vcmp.eq.f32.partialorder %v3483, 8.507059e+37
  %v3485 = vand.u32 %v3473, 2147483648
  %v3486 = vor.u32 1.1754944e-38, %v3485
  %v3487 = vsel %vm3484, %v3486, %v3482
  %v3488 = vmul.f32 1.0, %v3487
  %v3489 = vtanh.pop %v3422
  %v3490 = vxor.u32 %v3448, 2147483648
  %v3491 = vmul.f32 %v3490, 1.442695
  %v3492 = vpow.pop %v3491
  %v3493 = vadd.f32 %v3492, 1.0
  %v3494 = vrcp.pop %v3493
  %v3495 = vmul.f32 %v3493, %v3494
  %v3496 = vsub.f32 1.0, %v3495
  %v3497 = vmul.f32 %v3494, %v3496
  %v3498 = vadd.f32 %v3494, %v3497
  %vm3499 = vweird.f32 %v3493
  %vm3500 = vweird.f32 %v3494
  %vm3501 = vmor %vm3499, %vm3500
  %v3502 = vsel %vm3501, %v3494, %v3498
  %v3503 = vand.u32 2147483647, %v3493
  %vm3504 = vcmp.eq.f32.partialorder %v3503, 8.507059e+37
  %v3505 = vand.u32 %v3493, 2147483648
  %v3506 = vor.u32 1.1754944e-38, %v3505
  %v3507 = vsel %vm3504, %v3506, %v3502
  %v3508 = vmul.f32 1.0, %v3507
  %v3509 = vmul.f32 %v3488, %v3173
  %v3510 = vmul.f32 %v3469, %v3489
  %v3511 = vadd.f32 %v3509, %v3510
  %v3512 = vtanh.pop %v3511
  %v3513 = vmul.f32 %v3508, %v3512
  %v3514 = vld [vmem:[%s2] sm:$0xff]
  %v3515 = vld [vmem:[%s2 + $0x8] sm:$0xff]
  %v3516 = vld [vmem:[%s2 + $0x10] sm:$0xff]
  %v3517 = vld [vmem:[%s2 + $0x18] sm:$0xff]
  %v3518 = vld [vmem:[%s2 + $0x20] sm:$0xff]
  %v3519 = vld [vmem:[%s2 + $0x28] sm:$0xff]
  %v3520 = vld [vmem:[%s2 + $0x30] sm:$0xff]
  %v3521 = vld [vmem:[%s2 + $0x38] sm:$0xff]
  %v3522 = vld [vmem:[%s2 + $0x40] sm:$0xff]
  %v3523 = vld [vmem:[%s2 + $0x48] sm:$0xff]
  %v3524 = vld [vmem:[%s2 + $0x50] sm:$0xff]
  %v3525 = vld [vmem:[%s2 + $0x58] sm:$0xff]
  %v3526 = vld [vmem:[%s2 + $0x60] sm:$0xff]
  %v3527 = vld [vmem:[%s2 + $0x68] sm:$0xff]
  %v3528 = vld [vmem:[%s2 + $0x70] sm:$0xff]
  %v3529 = vld [vmem:[%s2 + $0x78] sm:$0xff]
  %v3530 = vld [vmem:[%s2 + $0x80] sm:$0xff]
  %v3531 = vld [vmem:[%s2 + $0x88] sm:$0xff]
  %v3532 = vld [vmem:[%s2 + $0x90] sm:$0xff]
  %v3533 = vld [vmem:[%s2 + $0x98] sm:$0xff]
  %v3534 = vld [vmem:[%s2 + $0xa0] sm:$0xff]
  %v3535 = vld [vmem:[%s2 + $0xa8] sm:$0xff]
  %v3536 = vld [vmem:[%s2 + $0xb0] sm:$0xff]
  %v3537 = vld [vmem:[%s2 + $0xb8] sm:$0xff]
  %v3538 = vld [vmem:[%s2 + $0xc0] sm:$0xff]
  %v3539 = vld [vmem:[%s2 + $0xc8] sm:$0xff]
  %v3540 = vld [vmem:[%s2 + $0xd0] sm:$0xff]
  %v3541 = vld [vmem:[%s2 + $0xd8] sm:$0xff]
  %v3542 = vld [vmem:[%s2 + $0xe0] sm:$0xff]
  %v3543 = vld [vmem:[%s2 + $0xe8] sm:$0xff]
  %v3544 = vld [vmem:[%s2 + $0xf0] sm:$0xff]
  %v3545 = vld [vmem:[%s2 + $0xf8] sm:$0xff]
  %v3578 = vunpack.c.l.b16 %v3514
  %v3579 = vunpack.c.h.b16 %v3514
  %v3580 = vunpack.c.l.b16 %v3515
  %v3581 = vunpack.c.h.b16 %v3515
  %v3582 = vunpack.c.l.b16 %v3516
  %v3583 = vunpack.c.h.b16 %v3516
  %v3584 = vunpack.c.l.b16 %v3517
  %v3585 = vunpack.c.h.b16 %v3517
  %v3586 = vunpack.c.l.b16 %v3518
  %v3587 = vunpack.c.h.b16 %v3518
  %v3588 = vunpack.c.l.b16 %v3519
  %v3589 = vunpack.c.h.b16 %v3519
  %v3590 = vunpack.c.l.b16 %v3520
  %v3591 = vunpack.c.h.b16 %v3520
  %v3592 = vunpack.c.l.b16 %v3521
  %v3593 = vunpack.c.h.b16 %v3521
  %v3594 = vunpack.c.l.b16 %v3522
  %v3595 = vunpack.c.h.b16 %v3522
  %v3596 = vunpack.c.l.b16 %v3523
  %v3597 = vunpack.c.h.b16 %v3523
  %v3598 = vunpack.c.l.b16 %v3524
  %v3599 = vunpack.c.h.b16 %v3524
  %v3600 = vunpack.c.l.b16 %v3525
  %v3601 = vunpack.c.h.b16 %v3525
  %v3602 = vunpack.c.l.b16 %v3526
  %v3603 = vunpack.c.h.b16 %v3526
  %v3604 = vunpack.c.l.b16 %v3527
  %v3605 = vunpack.c.h.b16 %v3527
  %v3606 = vunpack.c.l.b16 %v3528
  %v3607 = vunpack.c.h.b16 %v3528
  %v3608 = vunpack.c.l.b16 %v3529
  %v3609 = vunpack.c.h.b16 %v3529
  %v3610 = vunpack.c.l.b16 %v3530
  %v3611 = vunpack.c.h.b16 %v3530
  %v3612 = vunpack.c.l.b16 %v3531
  %v3613 = vunpack.c.h.b16 %v3531
  %v3614 = vunpack.c.l.b16 %v3532
  %v3615 = vunpack.c.h.b16 %v3532
  %v3616 = vunpack.c.l.b16 %v3533
  %v3617 = vunpack.c.h.b16 %v3533
  %v3618 = vunpack.c.l.b16 %v3534
  %v3619 = vunpack.c.h.b16 %v3534
  %v3620 = vunpack.c.l.b16 %v3535
  %v3621 = vunpack.c.h.b16 %v3535
  %v3622 = vunpack.c.l.b16 %v3536
  %v3623 = vunpack.c.h.b16 %v3536
  %v3624 = vunpack.c.l.b16 %v3537
  %v3625 = vunpack.c.h.b16 %v3537
  %v3626 = vunpack.c.l.b16 %v3538
  %v3627 = vunpack.c.h.b16 %v3538
  %v3628 = vunpack.c.l.b16 %v3539
  %v3629 = vunpack.c.h.b16 %v3539
  %v3630 = vunpack.c.l.b16 %v3540
  %v3631 = vunpack.c.h.b16 %v3540
  %v3632 = vunpack.c.l.b16 %v3541
  %v3633 = vunpack.c.h.b16 %v3541
  %v3634 = vunpack.c.l.b16 %v3542
  %v3635 = vunpack.c.h.b16 %v3542
  %v3636 = vunpack.c.l.b16 %v3543
  %v3637 = vunpack.c.h.b16 %v3543
  %v3638 = vunpack.c.l.b16 %v3544
  %v3639 = vunpack.c.h.b16 %v3544
  %v3640 = vunpack.c.l.b16 %v3545
  %v3641 = vunpack.c.h.b16 %v3545
  %v3642 = vpack.c.b16 %v3582, %v3578
  %v3643 = vpack.c.b16 %v3583, %v3579
  %v3644 = vpack.c.b16 %v3584, %v3580
  %v3645 = vpack.c.b16 %v3585, %v3581
  %v3646 = vpack.c.b16 %v3590, %v3586
  %v3647 = vpack.c.b16 %v3591, %v3587
  %v3648 = vpack.c.b16 %v3592, %v3588
  %v3649 = vpack.c.b16 %v3593, %v3589
  %v3650 = vpack.c.b16 %v3598, %v3594
  %v3651 = vpack.c.b16 %v3599, %v3595
  %v3652 = vpack.c.b16 %v3600, %v3596
  %v3653 = vpack.c.b16 %v3601, %v3597
  %v3654 = vpack.c.b16 %v3606, %v3602
  %v3655 = vpack.c.b16 %v3607, %v3603
  %v3656 = vpack.c.b16 %v3608, %v3604
  %v3657 = vpack.c.b16 %v3609, %v3605
  %v3658 = vpack.c.b16 %v3614, %v3610
  %v3659 = vpack.c.b16 %v3615, %v3611
  %v3660 = vpack.c.b16 %v3616, %v3612
  %v3661 = vpack.c.b16 %v3617, %v3613
  %v3662 = vpack.c.b16 %v3622, %v3618
  %v3663 = vpack.c.b16 %v3623, %v3619
  %v3664 = vpack.c.b16 %v3624, %v3620
  %v3665 = vpack.c.b16 %v3625, %v3621
  %v3666 = vpack.c.b16 %v3630, %v3626
  %v3667 = vpack.c.b16 %v3631, %v3627
  %v3668 = vpack.c.b16 %v3632, %v3628
  %v3669 = vpack.c.b16 %v3633, %v3629
  %v3670 = vpack.c.b16 %v3638, %v3634
  %v3671 = vpack.c.b16 %v3639, %v3635
  %v3672 = vpack.c.b16 %v3640, %v3636
  %v3673 = vpack.c.b16 %v3641, %v3637
  %3706 = vmatpush.bf16.msra.mxu0 %v3670
  %3707 = vmatpush.bf16.msra.mxu0 %v3666
  %3708 = vmatpush.bf16.msra.mxu0 %v3662
  %3709 = vmatpush.bf16.msra.mxu0 %v3658
  %3710 = vmatpush.bf16.msra.mxu0 %v3654
  %3711 = vmatpush.bf16.msra.mxu0 %v3650
  %3712 = vmatpush.bf16.msra.mxu0 %v3646
  %3713 = vmatpush.bf16.msra.mxu0 %v3642
  %3714 = vmatmul.bf16.gmra.mxu0 %v3345
  %v3715 = vpop.f32.mrf.mxu0
  %v3716 = vadd.f32 %v91, %v3715
  %v3717 = vpop.f32.mrf.mxu0
  %3718 = vdwg.mxu0
  %3719 = vmatpush.bf16.msra.mxu0 %v3671
  %3720 = vmatpush.bf16.msra.mxu0 %v3667
  %3721 = vmatpush.bf16.msra.mxu0 %v3663
  %3722 = vmatpush.bf16.msra.mxu0 %v3659
  %3723 = vmatpush.bf16.msra.mxu0 %v3655
  %3724 = vmatpush.bf16.msra.mxu0 %v3651
  %3725 = vmatpush.bf16.msra.mxu0 %v3647
  %3726 = vmatpush.bf16.msra.mxu0 %v3643
  %3727 = vmatmul.bf16.gmra.mxu0 %v3345
  %v3728 = vpop.f32.mrf.mxu0
  %v3729 = vadd.f32 %v92, %v3728
  %v3730 = vpop.f32.mrf.mxu0
  %3731 = vdwg.mxu0
  %3732 = vmatpush.bf16.msra.mxu0 %v3672
  %3733 = vmatpush.bf16.msra.mxu0 %v3668
  %3734 = vmatpush.bf16.msra.mxu0 %v3664
  %3735 = vmatpush.bf16.msra.mxu0 %v3660
  %3736 = vmatpush.bf16.msra.mxu0 %v3656
  %3737 = vmatpush.bf16.msra.mxu0 %v3652
  %3738 = vmatpush.bf16.msra.mxu0 %v3648
  %3739 = vmatpush.bf16.msra.mxu0 %v3644
  %3740 = vmatmul.bf16.gmra.mxu0 %v3345
  %v3741 = vpop.f32.mrf.mxu0
  %v3742 = vadd.f32 %v93, %v3741
  %v3743 = vpop.f32.mrf.mxu0
  %3744 = vdwg.mxu0
  %3745 = vmatpush.bf16.msra.mxu0 %v3673
  %3746 = vmatpush.bf16.msra.mxu0 %v3669
  %3747 = vmatpush.bf16.msra.mxu0 %v3665
  %3748 = vmatpush.bf16.msra.mxu0 %v3661
  %3749 = vmatpush.bf16.msra.mxu0 %v3657
  %3750 = vmatpush.bf16.msra.mxu0 %v3653
  %3751 = vmatpush.bf16.msra.mxu0 %v3649
  %3752 = vmatpush.bf16.msra.mxu0 %v3645
  %3753 = vmatmul.bf16.gmra.mxu0 %v3345
  %v3754 = vpop.f32.mrf.mxu0
  %v3755 = vadd.f32 %v94, %v3754
  %v3756 = vpop.f32.mrf.mxu0
  %3757 = vdwg.mxu0
  %v3758 = vxor.u32 %v3716, 2147483648
  %v3759 = vmul.f32 %v3758, 1.442695
  %v3760 = vpow.pop %v3759
  %v3761 = vadd.f32 %v3760, 1.0
  %v3762 = vrcp.pop %v3761
  %v3763 = vmul.f32 %v3761, %v3762
  %v3764 = vsub.f32 1.0, %v3763
  %v3765 = vmul.f32 %v3762, %v3764
  %v3766 = vadd.f32 %v3762, %v3765
  %vm3767 = vweird.f32 %v3761
  %vm3768 = vweird.f32 %v3762
  %vm3769 = vmor %vm3767, %vm3768
  %v3770 = vsel %vm3769, %v3762, %v3766
  %v3771 = vand.u32 2147483647, %v3761
  %vm3772 = vcmp.eq.f32.partialorder %v3771, 8.507059e+37
  %v3773 = vand.u32 %v3761, 2147483648
  %v3774 = vor.u32 1.1754944e-38, %v3773
  %v3775 = vsel %vm3772, %v3774, %v3770
  %v3776 = vmul.f32 1.0, %v3775
  %v3777 = vxor.u32 %v3729, 2147483648
  %v3778 = vmul.f32 %v3777, 1.442695
  %v3779 = vpow.pop %v3778
  %v3780 = vadd.f32 %v3779, 1.0
  %v3781 = vrcp.pop %v3780
  %v3782 = vmul.f32 %v3780, %v3781
  %v3783 = vsub.f32 1.0, %v3782
  %v3784 = vmul.f32 %v3781, %v3783
  %v3785 = vadd.f32 %v3781, %v3784
  %vm3786 = vweird.f32 %v3780
  %vm3787 = vweird.f32 %v3781
  %vm3788 = vmor %vm3786, %vm3787
  %v3789 = vsel %vm3788, %v3781, %v3785
  %v3790 = vand.u32 2147483647, %v3780
  %vm3791 = vcmp.eq.f32.partialorder %v3790, 8.507059e+37
  %v3792 = vand.u32 %v3780, 2147483648
  %v3793 = vor.u32 1.1754944e-38, %v3792
  %v3794 = vsel %vm3791, %v3793, %v3789
  %v3795 = vmul.f32 1.0, %v3794
  %v3796 = vtanh.pop %v3742
  %v3797 = vxor.u32 %v3755, 2147483648
  %v3798 = vmul.f32 %v3797, 1.442695
  %v3799 = vpow.pop %v3798
  %v3800 = vadd.f32 %v3799, 1.0
  %v3801 = vrcp.pop %v3800
  %v3802 = vmul.f32 %v3800, %v3801
  %v3803 = vsub.f32 1.0, %v3802
  %v3804 = vmul.f32 %v3801, %v3803
  %v3805 = vadd.f32 %v3801, %v3804
  %vm3806 = vweird.f32 %v3800
  %vm3807 = vweird.f32 %v3801
  %vm3808 = vmor %vm3806, %vm3807
  %v3809 = vsel %vm3808, %v3801, %v3805
  %v3810 = vand.u32 2147483647, %v3800
  %vm3811 = vcmp.eq.f32.partialorder %v3810, 8.507059e+37
  %v3812 = vand.u32 %v3800, 2147483648
  %v3813 = vor.u32 1.1754944e-38, %v3812
  %v3814 = vsel %vm3811, %v3813, %v3809
  %v3815 = vmul.f32 1.0, %v3814
  %v3816 = vmul.f32 %v3795, %v3342
  %v3817 = vmul.f32 %v3776, %v3796
  %v3818 = vadd.f32 %v3816, %v3817
  %v3819 = vtanh.pop %v3818
  %v3820 = vmul.f32 %v3815, %v3819
  %v3821 = vpack.c.bf16 %v3820, %v3820
  %v3822 = vpack.c.bf16 %v3513, %v3513
  %v3823 = vld [vmem:[%s1] sm:$0xf]
  %v3824 = vld [vmem:[%s4] sm:$0xff]
  %v3825 = vld [vmem:[%s4 + $0x8] sm:$0xff]
  %v3826 = vld [vmem:[%s4 + $0x10] sm:$0xff]
  %v3827 = vld [vmem:[%s4 + $0x18] sm:$0xff]
  %v3828 = vld [vmem:[%s4 + $0x20] sm:$0xff]
  %v3829 = vld [vmem:[%s4 + $0x28] sm:$0xff]
  %v3830 = vld [vmem:[%s4 + $0x30] sm:$0xff]
  %v3831 = vld [vmem:[%s4 + $0x38] sm:$0xff]
  %v3832 = vld [vmem:[%s4 + $0x40] sm:$0xff]
  %v3833 = vld [vmem:[%s4 + $0x48] sm:$0xff]
  %v3834 = vld [vmem:[%s4 + $0x50] sm:$0xff]
  %v3835 = vld [vmem:[%s4 + $0x58] sm:$0xff]
  %v3836 = vld [vmem:[%s4 + $0x60] sm:$0xff]
  %v3837 = vld [vmem:[%s4 + $0x68] sm:$0xff]
  %v3838 = vld [vmem:[%s4 + $0x70] sm:$0xff]
  %v3839 = vld [vmem:[%s4 + $0x78] sm:$0xff]
  %v3840 = vld [vmem:[%s4 + $0x80] sm:$0xff]
  %v3841 = vld [vmem:[%s4 + $0x88] sm:$0xff]
  %v3842 = vld [vmem:[%s4 + $0x90] sm:$0xff]
  %v3843 = vld [vmem:[%s4 + $0x98] sm:$0xff]
  %v3844 = vld [vmem:[%s4 + $0xa0] sm:$0xff]
  %v3845 = vld [vmem:[%s4 + $0xa8] sm:$0xff]
  %v3846 = vld [vmem:[%s4 + $0xb0] sm:$0xff]
  %v3847 = vld [vmem:[%s4 + $0xb8] sm:$0xff]
  %v3848 = vld [vmem:[%s4 + $0xc0] sm:$0xff]
  %v3849 = vld [vmem:[%s4 + $0xc8] sm:$0xff]
  %v3850 = vld [vmem:[%s4 + $0xd0] sm:$0xff]
  %v3851 = vld [vmem:[%s4 + $0xd8] sm:$0xff]
  %v3852 = vld [vmem:[%s4 + $0xe0] sm:$0xff]
  %v3853 = vld [vmem:[%s4 + $0xe8] sm:$0xff]
  %v3854 = vld [vmem:[%s4 + $0xf0] sm:$0xff]
  %v3855 = vld [vmem:[%s4 + $0xf8] sm:$0xff]
  %v3856 = vld [vmem:[%s4 + $0x100] sm:$0xff]
  %v3857 = vld [vmem:[%s4 + $0x108] sm:$0xff]
  %v3858 = vld [vmem:[%s4 + $0x110] sm:$0xff]
  %v3859 = vld [vmem:[%s4 + $0x118] sm:$0xff]
  %v3860 = vld [vmem:[%s4 + $0x120] sm:$0xff]
  %v3861 = vld [vmem:[%s4 + $0x128] sm:$0xff]
  %v3862 = vld [vmem:[%s4 + $0x130] sm:$0xff]
  %v3863 = vld [vmem:[%s4 + $0x138] sm:$0xff]
  %v3864 = vld [vmem:[%s4 + $0x140] sm:$0xff]
  %v3865 = vld [vmem:[%s4 + $0x148] sm:$0xff]
  %v3866 = vld [vmem:[%s4 + $0x150] sm:$0xff]
  %v3867 = vld [vmem:[%s4 + $0x158] sm:$0xff]
  %v3868 = vld [vmem:[%s4 + $0x160] sm:$0xff]
  %v3869 = vld [vmem:[%s4 + $0x168] sm:$0xff]
  %v3870 = vld [vmem:[%s4 + $0x170] sm:$0xff]
  %v3871 = vld [vmem:[%s4 + $0x178] sm:$0xff]
  %v3872 = vld [vmem:[%s4 + $0x180] sm:$0xff]
  %v3873 = vld [vmem:[%s4 + $0x188] sm:$0xff]
  %v3874 = vld [vmem:[%s4 + $0x190] sm:$0xff]
  %v3875 = vld [vmem:[%s4 + $0x198] sm:$0xff]
  %v3876 = vld [vmem:[%s4 + $0x1a0] sm:$0xff]
  %v3877 = vld [vmem:[%s4 + $0x1a8] sm:$0xff]
  %v3878 = vld [vmem:[%s4 + $0x1b0] sm:$0xff]
  %v3879 = vld [vmem:[%s4 + $0x1b8] sm:$0xff]
  %v3880 = vld [vmem:[%s4 + $0x1c0] sm:$0xff]
  %v3881 = vld [vmem:[%s4 + $0x1c8] sm:$0xff]
  %v3882 = vld [vmem:[%s4 + $0x1d0] sm:$0xff]
  %v3883 = vld [vmem:[%s4 + $0x1d8] sm:$0xff]
  %v3884 = vld [vmem:[%s4 + $0x1e0] sm:$0xff]
  %v3885 = vld [vmem:[%s4 + $0x1e8] sm:$0xff]
  %v3886 = vld [vmem:[%s4 + $0x1f0] sm:$0xff]
  %v3887 = vld [vmem:[%s4 + $0x1f8] sm:$0xff]
  %v3888 = vld [vmem:[%s4 + $0x200] sm:$0xff]
  %v3889 = vld [vmem:[%s4 + $0x208] sm:$0xff]
  %v3890 = vld [vmem:[%s4 + $0x210] sm:$0xff]
  %v3891 = vld [vmem:[%s4 + $0x218] sm:$0xff]
  %v3892 = vld [vmem:[%s4 + $0x220] sm:$0xff]
  %v3893 = vld [vmem:[%s4 + $0x228] sm:$0xff]
  %v3894 = vld [vmem:[%s4 + $0x230] sm:$0xff]
  %v3895 = vld [vmem:[%s4 + $0x238] sm:$0xff]
  %v3896 = vld [vmem:[%s4 + $0x240] sm:$0xff]
  %v3897 = vld [vmem:[%s4 + $0x248] sm:$0xff]
  %v3898 = vld [vmem:[%s4 + $0x250] sm:$0xff]
  %v3899 = vld [vmem:[%s4 + $0x258] sm:$0xff]
  %v3900 = vld [vmem:[%s4 + $0x260] sm:$0xff]
  %v3901 = vld [vmem:[%s4 + $0x268] sm:$0xff]
  %v3902 = vld [vmem:[%s4 + $0x270] sm:$0xff]
  %v3903 = vld [vmem:[%s4 + $0x278] sm:$0xff]
  %v3904 = vld [vmem:[%s4 + $0x280] sm:$0xff]
  %v3905 = vld [vmem:[%s4 + $0x288] sm:$0xff]
  %v3906 = vld [vmem:[%s4 + $0x290] sm:$0xff]
  %v3907 = vld [vmem:[%s4 + $0x298] sm:$0xff]
  %v3908 = vld [vmem:[%s4 + $0x2a0] sm:$0xff]
  %v3909 = vld [vmem:[%s4 + $0x2a8] sm:$0xff]
  %v3910 = vld [vmem:[%s4 + $0x2b0] sm:$0xff]
  %v3911 = vld [vmem:[%s4 + $0x2b8] sm:$0xff]
  %v3912 = vld [vmem:[%s4 + $0x2c0] sm:$0xff]
  %v3913 = vld [vmem:[%s4 + $0x2c8] sm:$0xff]
  %v3914 = vld [vmem:[%s4 + $0x2d0] sm:$0xff]
  %v3915 = vld [vmem:[%s4 + $0x2d8] sm:$0xff]
  %v3916 = vld [vmem:[%s4 + $0x2e0] sm:$0xff]
  %v3917 = vld [vmem:[%s4 + $0x2e8] sm:$0xff]
  %v3918 = vld [vmem:[%s4 + $0x2f0] sm:$0xff]
  %v3919 = vld [vmem:[%s4 + $0x2f8] sm:$0xff]
  %v4016 = vunpack.c.l.b16 %v3824
  %v4017 = vunpack.c.h.b16 %v3824
  %v4018 = vunpack.c.l.b16 %v3825
  %v4019 = vunpack.c.h.b16 %v3825
  %v4020 = vunpack.c.l.b16 %v3826
  %v4021 = vunpack.c.h.b16 %v3826
  %v4022 = vunpack.c.l.b16 %v3827
  %v4023 = vunpack.c.h.b16 %v3827
  %v4024 = vunpack.c.l.b16 %v3828
  %v4025 = vunpack.c.h.b16 %v3828
  %v4026 = vunpack.c.l.b16 %v3829
  %v4027 = vunpack.c.h.b16 %v3829
  %v4028 = vunpack.c.l.b16 %v3830
  %v4029 = vunpack.c.h.b16 %v3830
  %v4030 = vunpack.c.l.b16 %v3831
  %v4031 = vunpack.c.h.b16 %v3831
  %v4032 = vunpack.c.l.b16 %v3832
  %v4033 = vunpack.c.h.b16 %v3832
  %v4034 = vunpack.c.l.b16 %v3833
  %v4035 = vunpack.c.h.b16 %v3833
  %v4036 = vunpack.c.l.b16 %v3834
  %v4037 = vunpack.c.h.b16 %v3834
  %v4038 = vunpack.c.l.b16 %v3835
  %v4039 = vunpack.c.h.b16 %v3835
  %v4040 = vunpack.c.l.b16 %v3836
  %v4041 = vunpack.c.h.b16 %v3836
  %v4042 = vunpack.c.l.b16 %v3837
  %v4043 = vunpack.c.h.b16 %v3837
  %v4044 = vunpack.c.l.b16 %v3838
  %v4045 = vunpack.c.h.b16 %v3838
  %v4046 = vunpack.c.l.b16 %v3839
  %v4047 = vunpack.c.h.b16 %v3839
  %v4048 = vunpack.c.l.b16 %v3840
  %v4049 = vunpack.c.h.b16 %v3840
  %v4050 = vunpack.c.l.b16 %v3841
  %v4051 = vunpack.c.h.b16 %v3841
  %v4052 = vunpack.c.l.b16 %v3842
  %v4053 = vunpack.c.h.b16 %v3842
  %v4054 = vunpack.c.l.b16 %v3843
  %v4055 = vunpack.c.h.b16 %v3843
  %v4056 = vunpack.c.l.b16 %v3844
  %v4057 = vunpack.c.h.b16 %v3844
  %v4058 = vunpack.c.l.b16 %v3845
  %v4059 = vunpack.c.h.b16 %v3845
  %v4060 = vunpack.c.l.b16 %v3846
  %v4061 = vunpack.c.h.b16 %v3846
  %v4062 = vunpack.c.l.b16 %v3847
  %v4063 = vunpack.c.h.b16 %v3847
  %v4064 = vunpack.c.l.b16 %v3848
  %v4065 = vunpack.c.h.b16 %v3848
  %v4066 = vunpack.c.l.b16 %v3849
  %v4067 = vunpack.c.h.b16 %v3849
  %v4068 = vunpack.c.l.b16 %v3850
  %v4069 = vunpack.c.h.b16 %v3850
  %v4070 = vunpack.c.l.b16 %v3851
  %v4071 = vunpack.c.h.b16 %v3851
  %v4072 = vunpack.c.l.b16 %v3852
  %v4073 = vunpack.c.h.b16 %v3852
  %v4074 = vunpack.c.l.b16 %v3853
  %v4075 = vunpack.c.h.b16 %v3853
  %v4076 = vunpack.c.l.b16 %v3854
  %v4077 = vunpack.c.h.b16 %v3854
  %v4078 = vunpack.c.l.b16 %v3855
  %v4079 = vunpack.c.h.b16 %v3855
  %v4080 = vunpack.c.l.b16 %v3856
  %v4081 = vunpack.c.h.b16 %v3856
  %v4082 = vunpack.c.l.b16 %v3857
  %v4083 = vunpack.c.h.b16 %v3857
  %v4084 = vunpack.c.l.b16 %v3858
  %v4085 = vunpack.c.h.b16 %v3858
  %v4086 = vunpack.c.l.b16 %v3859
  %v4087 = vunpack.c.h.b16 %v3859
  %v4088 = vunpack.c.l.b16 %v3860
  %v4089 = vunpack.c.h.b16 %v3860
  %v4090 = vunpack.c.l.b16 %v3861
  %v4091 = vunpack.c.h.b16 %v3861
  %v4092 = vunpack.c.l.b16 %v3862
  %v4093 = vunpack.c.h.b16 %v3862
  %v4094 = vunpack.c.l.b16 %v3863
  %v4095 = vunpack.c.h.b16 %v3863
  %v4096 = vunpack.c.l.b16 %v3864
  %v4097 = vunpack.c.h.b16 %v3864
  %v4098 = vunpack.c.l.b16 %v3865
  %v4099 = vunpack.c.h.b16 %v3865
  %v4100 = vunpack.c.l.b16 %v3866
  %v4101 = vunpack.c.h.b16 %v3866
  %v4102 = vunpack.c.l.b16 %v3867
  %v4103 = vunpack.c.h.b16 %v3867
  %v4104 = vunpack.c.l.b16 %v3868
  %v4105 = vunpack.c.h.b16 %v3868
  %v4106 = vunpack.c.l.b16 %v3869
  %v4107 = vunpack.c.h.b16 %v3869
  %v4108 = vunpack.c.l.b16 %v3870
  %v4109 = vunpack.c.h.b16 %v3870
  %v4110 = vunpack.c.l.b16 %v3871
  %v4111 = vunpack.c.h.b16 %v3871
  %v4112 = vunpack.c.l.b16 %v3872
  %v4113 = vunpack.c.h.b16 %v3872
  %v4114 = vunpack.c.l.b16 %v3873
  %v4115 = vunpack.c.h.b16 %v3873
  %v4116 = vunpack.c.l.b16 %v3874
  %v4117 = vunpack.c.h.b16 %v3874
  %v4118 = vunpack.c.l.b16 %v3875
  %v4119 = vunpack.c.h.b16 %v3875
  %v4120 = vunpack.c.l.b16 %v3876
  %v4121 = vunpack.c.h.b16 %v3876
  %v4122 = vunpack.c.l.b16 %v3877
  %v4123 = vunpack.c.h.b16 %v3877
  %v4124 = vunpack.c.l.b16 %v3878
  %v4125 = vunpack.c.h.b16 %v3878
  %v4126 = vunpack.c.l.b16 %v3879
  %v4127 = vunpack.c.h.b16 %v3879
  %v4128 = vunpack.c.l.b16 %v3880
  %v4129 = vunpack.c.h.b16 %v3880
  %v4130 = vunpack.c.l.b16 %v3881
  %v4131 = vunpack.c.h.b16 %v3881
  %v4132 = vunpack.c.l.b16 %v3882
  %v4133 = vunpack.c.h.b16 %v3882
  %v4134 = vunpack.c.l.b16 %v3883
  %v4135 = vunpack.c.h.b16 %v3883
  %v4136 = vunpack.c.l.b16 %v3884
  %v4137 = vunpack.c.h.b16 %v3884
  %v4138 = vunpack.c.l.b16 %v3885
  %v4139 = vunpack.c.h.b16 %v3885
  %v4140 = vunpack.c.l.b16 %v3886
  %v4141 = vunpack.c.h.b16 %v3886
  %v4142 = vunpack.c.l.b16 %v3887
  %v4143 = vunpack.c.h.b16 %v3887
  %v4144 = vunpack.c.l.b16 %v3888
  %v4145 = vunpack.c.h.b16 %v3888
  %v4146 = vunpack.c.l.b16 %v3889
  %v4147 = vunpack.c.h.b16 %v3889
  %v4148 = vunpack.c.l.b16 %v3890
  %v4149 = vunpack.c.h.b16 %v3890
  %v4150 = vunpack.c.l.b16 %v3891
  %v4151 = vunpack.c.h.b16 %v3891
  %v4152 = vunpack.c.l.b16 %v3892
  %v4153 = vunpack.c.h.b16 %v3892
  %v4154 = vunpack.c.l.b16 %v3893
  %v4155 = vunpack.c.h.b16 %v3893
  %v4156 = vunpack.c.l.b16 %v3894
  %v4157 = vunpack.c.h.b16 %v3894
  %v4158 = vunpack.c.l.b16 %v3895
  %v4159 = vunpack.c.h.b16 %v3895
  %v4160 = vunpack.c.l.b16 %v3896
  %v4161 = vunpack.c.h.b16 %v3896
  %v4162 = vunpack.c.l.b16 %v3897
  %v4163 = vunpack.c.h.b16 %v3897
  %v4164 = vunpack.c.l.b16 %v3898
  %v4165 = vunpack.c.h.b16 %v3898
  %v4166 = vunpack.c.l.b16 %v3899
  %v4167 = vunpack.c.h.b16 %v3899
  %v4168 = vunpack.c.l.b16 %v3900
  %v4169 = vunpack.c.h.b16 %v3900
  %v4170 = vunpack.c.l.b16 %v3901
  %v4171 = vunpack.c.h.b16 %v3901
  %v4172 = vunpack.c.l.b16 %v3902
  %v4173 = vunpack.c.h.b16 %v3902
  %v4174 = vunpack.c.l.b16 %v3903
  %v4175 = vunpack.c.h.b16 %v3903
  %v4176 = vunpack.c.l.b16 %v3904
  %v4177 = vunpack.c.h.b16 %v3904
  %v4178 = vunpack.c.l.b16 %v3905
  %v4179 = vunpack.c.h.b16 %v3905
  %v4180 = vunpack.c.l.b16 %v3906
  %v4181 = vunpack.c.h.b16 %v3906
  %v4182 = vunpack.c.l.b16 %v3907
  %v4183 = vunpack.c.h.b16 %v3907
  %v4184 = vunpack.c.l.b16 %v3908
  %v4185 = vunpack.c.h.b16 %v3908
  %v4186 = vunpack.c.l.b16 %v3909
  %v4187 = vunpack.c.h.b16 %v3909
  %v4188 = vunpack.c.l.b16 %v3910
  %v4189 = vunpack.c.h.b16 %v3910
  %v4190 = vunpack.c.l.b16 %v3911
  %v4191 = vunpack.c.h.b16 %v3911
  %v4192 = vunpack.c.l.b16 %v3912
  %v4193 = vunpack.c.h.b16 %v3912
  %v4194 = vunpack.c.l.b16 %v3913
  %v4195 = vunpack.c.h.b16 %v3913
  %v4196 = vunpack.c.l.b16 %v3914
  %v4197 = vunpack.c.h.b16 %v3914
  %v4198 = vunpack.c.l.b16 %v3915
  %v4199 = vunpack.c.h.b16 %v3915
  %v4200 = vunpack.c.l.b16 %v3916
  %v4201 = vunpack.c.h.b16 %v3916
  %v4202 = vunpack.c.l.b16 %v3917
  %v4203 = vunpack.c.h.b16 %v3917
  %v4204 = vunpack.c.l.b16 %v3918
  %v4205 = vunpack.c.h.b16 %v3918
  %v4206 = vunpack.c.l.b16 %v3919
  %v4207 = vunpack.c.h.b16 %v3919
  %v4208 = vpack.c.b16 %v4020, %v4016
  %v4209 = vpack.c.b16 %v4021, %v4017
  %v4210 = vpack.c.b16 %v4022, %v4018
  %v4211 = vpack.c.b16 %v4023, %v4019
  %v4212 = vpack.c.b16 %v4028, %v4024
  %v4213 = vpack.c.b16 %v4029, %v4025
  %v4214 = vpack.c.b16 %v4030, %v4026
  %v4215 = vpack.c.b16 %v4031, %v4027
  %v4216 = vpack.c.b16 %v4036, %v4032
  %v4217 = vpack.c.b16 %v4037, %v4033
  %v4218 = vpack.c.b16 %v4038, %v4034
  %v4219 = vpack.c.b16 %v4039, %v4035
  %v4220 = vpack.c.b16 %v4044, %v4040
  %v4221 = vpack.c.b16 %v4045, %v4041
  %v4222 = vpack.c.b16 %v4046, %v4042
  %v4223 = vpack.c.b16 %v4047, %v4043
  %v4224 = vpack.c.b16 %v4052, %v4048
  %v4225 = vpack.c.b16 %v4053, %v4049
  %v4226 = vpack.c.b16 %v4054, %v4050
  %v4227 = vpack.c.b16 %v4055, %v4051
  %v4228 = vpack.c.b16 %v4060, %v4056
  %v4229 = vpack.c.b16 %v4061, %v4057
  %v4230 = vpack.c.b16 %v4062, %v4058
  %v4231 = vpack.c.b16 %v4063, %v4059
  %v4232 = vpack.c.b16 %v4068, %v4064
  %v4233 = vpack.c.b16 %v4069, %v4065
  %v4234 = vpack.c.b16 %v4070, %v4066
  %v4235 = vpack.c.b16 %v4071, %v4067
  %v4236 = vpack.c.b16 %v4076, %v4072
  %v4237 = vpack.c.b16 %v4077, %v4073
  %v4238 = vpack.c.b16 %v4078, %v4074
  %v4239 = vpack.c.b16 %v4079, %v4075
  %v4240 = vpack.c.b16 %v4084, %v4080
  %v4241 = vpack.c.b16 %v4085, %v4081
  %v4242 = vpack.c.b16 %v4086, %v4082
  %v4243 = vpack.c.b16 %v4087, %v4083
  %v4244 = vpack.c.b16 %v4092, %v4088
  %v4245 = vpack.c.b16 %v4093, %v4089
  %v4246 = vpack.c.b16 %v4094, %v4090
  %v4247 = vpack.c.b16 %v4095, %v4091
  %v4248 = vpack.c.b16 %v4100, %v4096
  %v4249 = vpack.c.b16 %v4101, %v4097
  %v4250 = vpack.c.b16 %v4102, %v4098
  %v4251 = vpack.c.b16 %v4103, %v4099
  %v4252 = vpack.c.b16 %v4108, %v4104
  %v4253 = vpack.c.b16 %v4109, %v4105
  %v4254 = vpack.c.b16 %v4110, %v4106
  %v4255 = vpack.c.b16 %v4111, %v4107
  %v4256 = vpack.c.b16 %v4116, %v4112
  %v4257 = vpack.c.b16 %v4117, %v4113
  %v4258 = vpack.c.b16 %v4118, %v4114
  %v4259 = vpack.c.b16 %v4119, %v4115
  %v4260 = vpack.c.b16 %v4124, %v4120
  %v4261 = vpack.c.b16 %v4125, %v4121
  %v4262 = vpack.c.b16 %v4126, %v4122
  %v4263 = vpack.c.b16 %v4127, %v4123
  %v4264 = vpack.c.b16 %v4132, %v4128
  %v4265 = vpack.c.b16 %v4133, %v4129
  %v4266 = vpack.c.b16 %v4134, %v4130
  %v4267 = vpack.c.b16 %v4135, %v4131
  %v4268 = vpack.c.b16 %v4140, %v4136
  %v4269 = vpack.c.b16 %v4141, %v4137
  %v4270 = vpack.c.b16 %v4142, %v4138
  %v4271 = vpack.c.b16 %v4143, %v4139
  %v4272 = vpack.c.b16 %v4148, %v4144
  %v4273 = vpack.c.b16 %v4149, %v4145
  %v4274 = vpack.c.b16 %v4150, %v4146
  %v4275 = vpack.c.b16 %v4151, %v4147
  %v4276 = vpack.c.b16 %v4156, %v4152
  %v4277 = vpack.c.b16 %v4157, %v4153
  %v4278 = vpack.c.b16 %v4158, %v4154
  %v4279 = vpack.c.b16 %v4159, %v4155
  %v4280 = vpack.c.b16 %v4164, %v4160
  %v4281 = vpack.c.b16 %v4165, %v4161
  %v4282 = vpack.c.b16 %v4166, %v4162
  %v4283 = vpack.c.b16 %v4167, %v4163
  %v4284 = vpack.c.b16 %v4172, %v4168
  %v4285 = vpack.c.b16 %v4173, %v4169
  %v4286 = vpack.c.b16 %v4174, %v4170
  %v4287 = vpack.c.b16 %v4175, %v4171
  %v4288 = vpack.c.b16 %v4180, %v4176
  %v4289 = vpack.c.b16 %v4181, %v4177
  %v4290 = vpack.c.b16 %v4182, %v4178
  %v4291 = vpack.c.b16 %v4183, %v4179
  %v4292 = vpack.c.b16 %v4188, %v4184
  %v4293 = vpack.c.b16 %v4189, %v4185
  %v4294 = vpack.c.b16 %v4190, %v4186
  %v4295 = vpack.c.b16 %v4191, %v4187
  %v4296 = vpack.c.b16 %v4196, %v4192
  %v4297 = vpack.c.b16 %v4197, %v4193
  %v4298 = vpack.c.b16 %v4198, %v4194
  %v4299 = vpack.c.b16 %v4199, %v4195
  %v4300 = vpack.c.b16 %v4204, %v4200
  %v4301 = vpack.c.b16 %v4205, %v4201
  %v4302 = vpack.c.b16 %v4206, %v4202
  %v4303 = vpack.c.b16 %v4207, %v4203
  %4400 = vmatpush.bf16.msra.mxu0 %v4236
  %4401 = vmatpush.bf16.msra.mxu0 %v4232
  %4402 = vmatpush.bf16.msra.mxu0 %v4228
  %4403 = vmatpush.bf16.msra.mxu0 %v4224
  %4404 = vmatpush.bf16.msra.mxu0 %v4220
  %4405 = vmatpush.bf16.msra.mxu0 %v4216
  %4406 = vmatpush.bf16.msra.mxu0 %v4212
  %4407 = vmatpush.bf16.msra.mxu0 %v4208
  %4408 = vmatmul.bf16.gmra.mxu0 %v3821
  %v4409 = vpop.f32.mrf.mxu0
  %v4410 = vadd.f32 %v653, %v4409
  %v4411 = vpop.f32.mrf.mxu0
  %4412 = vdwg.mxu0
  %4413 = vmatpush.bf16.msra.mxu0 %v4268
  %4414 = vmatpush.bf16.msra.mxu0 %v4264
  %4415 = vmatpush.bf16.msra.mxu0 %v4260
  %4416 = vmatpush.bf16.msra.mxu0 %v4256
  %4417 = vmatpush.bf16.msra.mxu0 %v4252
  %4418 = vmatpush.bf16.msra.mxu0 %v4248
  %4419 = vmatpush.bf16.msra.mxu0 %v4244
  %4420 = vmatpush.bf16.msra.mxu0 %v4240
  %4421 = vmatmul.bf16.gmra.mxu0 %v3822
  %v4422 = vpop.f32.mrf.mxu0
  %v4423 = vadd.f32 %v4410, %v4422
  %v4424 = vpop.f32.mrf.mxu0
  %4425 = vdwg.mxu0
  %4426 = vmatpush.bf16.msra.mxu0 %v4300
  %4427 = vmatpush.bf16.msra.mxu0 %v4296
  %4428 = vmatpush.bf16.msra.mxu0 %v4292
  %4429 = vmatpush.bf16.msra.mxu0 %v4288
  %4430 = vmatpush.bf16.msra.mxu0 %v4284
  %4431 = vmatpush.bf16.msra.mxu0 %v4280
  %4432 = vmatpush.bf16.msra.mxu0 %v4276
  %4433 = vmatpush.bf16.msra.mxu0 %v4272
  %4434 = vmatmul.bf16.gmra.mxu0 %v3823
  %v4435 = vpop.f32.mrf.mxu0
  %v4436 = vadd.f32 %v4423, %v4435
  %v4437 = vpop.f32.mrf.mxu0
  %4438 = vdwg.mxu0
  %4439 = vmatpush.bf16.msra.mxu0 %v4237
  %4440 = vmatpush.bf16.msra.mxu0 %v4233
  %4441 = vmatpush.bf16.msra.mxu0 %v4229
  %4442 = vmatpush.bf16.msra.mxu0 %v4225
  %4443 = vmatpush.bf16.msra.mxu0 %v4221
  %4444 = vmatpush.bf16.msra.mxu0 %v4217
  %4445 = vmatpush.bf16.msra.mxu0 %v4213
  %4446 = vmatpush.bf16.msra.mxu0 %v4209
  %4447 = vmatmul.bf16.gmra.mxu0 %v3821
  %v4448 = vpop.f32.mrf.mxu0
  %v4449 = vadd.f32 %v654, %v4448
  %v4450 = vpop.f32.mrf.mxu0
  %4451 = vdwg.mxu0
  %4452 = vmatpush.bf16.msra.mxu0 %v4269
  %4453 = vmatpush.bf16.msra.mxu0 %v4265
  %4454 = vmatpush.bf16.msra.mxu0 %v4261
  %4455 = vmatpush.bf16.msra.mxu0 %v4257
  %4456 = vmatpush.bf16.msra.mxu0 %v4253
  %4457 = vmatpush.bf16.msra.mxu0 %v4249
  %4458 = vmatpush.bf16.msra.mxu0 %v4245
  %4459 = vmatpush.bf16.msra.mxu0 %v4241
  %4460 = vmatmul.bf16.gmra.mxu0 %v3822
  %v4461 = vpop.f32.mrf.mxu0
  %v4462 = vadd.f32 %v4449, %v4461
  %v4463 = vpop.f32.mrf.mxu0
  %4464 = vdwg.mxu0
  %4465 = vmatpush.bf16.msra.mxu0 %v4301
  %4466 = vmatpush.bf16.msra.mxu0 %v4297
  %4467 = vmatpush.bf16.msra.mxu0 %v4293
  %4468 = vmatpush.bf16.msra.mxu0 %v4289
  %4469 = vmatpush.bf16.msra.mxu0 %v4285
  %4470 = vmatpush.bf16.msra.mxu0 %v4281
  %4471 = vmatpush.bf16.msra.mxu0 %v4277
  %4472 = vmatpush.bf16.msra.mxu0 %v4273
  %4473 = vmatmul.bf16.gmra.mxu0 %v3823
  %v4474 = vpop.f32.mrf.mxu0
  %v4475 = vadd.f32 %v4462, %v4474
  %v4476 = vpop.f32.mrf.mxu0
  %4477 = vdwg.mxu0
  %4478 = vmatpush.bf16.msra.mxu0 %v4238
  %4479 = vmatpush.bf16.msra.mxu0 %v4234
  %4480 = vmatpush.bf16.msra.mxu0 %v4230
  %4481 = vmatpush.bf16.msra.mxu0 %v4226
  %4482 = vmatpush.bf16.msra.mxu0 %v4222
  %4483 = vmatpush.bf16.msra.mxu0 %v4218
  %4484 = vmatpush.bf16.msra.mxu0 %v4214
  %4485 = vmatpush.bf16.msra.mxu0 %v4210
  %4486 = vmatmul.bf16.gmra.mxu0 %v3821
  %v4487 = vpop.f32.mrf.mxu0
  %v4488 = vadd.f32 %v655, %v4487
  %v4489 = vpop.f32.mrf.mxu0
  %4490 = vdwg.mxu0
  %4491 = vmatpush.bf16.msra.mxu0 %v4270
  %4492 = vmatpush.bf16.msra.mxu0 %v4266
  %4493 = vmatpush.bf16.msra.mxu0 %v4262
  %4494 = vmatpush.bf16.msra.mxu0 %v4258
  %4495 = vmatpush.bf16.msra.mxu0 %v4254
  %4496 = vmatpush.bf16.msra.mxu0 %v4250
  %4497 = vmatpush.bf16.msra.mxu0 %v4246
  %4498 = vmatpush.bf16.msra.mxu0 %v4242
  %4499 = vmatmul.bf16.gmra.mxu0 %v3822
  %v4500 = vpop.f32.mrf.mxu0
  %v4501 = vadd.f32 %v4488, %v4500
  %v4502 = vpop.f32.mrf.mxu0
  %4503 = vdwg.mxu0
  %4504 = vmatpush.bf16.msra.mxu0 %v4302
  %4505 = vmatpush.bf16.msra.mxu0 %v4298
  %4506 = vmatpush.bf16.msra.mxu0 %v4294
  %4507 = vmatpush.bf16.msra.mxu0 %v4290
  %4508 = vmatpush.bf16.msra.mxu0 %v4286
  %4509 = vmatpush.bf16.msra.mxu0 %v4282
  %4510 = vmatpush.bf16.msra.mxu0 %v4278
  %4511 = vmatpush.bf16.msra.mxu0 %v4274
  %4512 = vmatmul.bf16.gmra.mxu0 %v3823
  %v4513 = vpop.f32.mrf.mxu0
  %v4514 = vadd.f32 %v4501, %v4513
  %v4515 = vpop.f32.mrf.mxu0
  %4516 = vdwg.mxu0
  %4517 = vmatpush.bf16.msra.mxu0 %v4239
  %4518 = vmatpush.bf16.msra.mxu0 %v4235
  %4519 = vmatpush.bf16.msra.mxu0 %v4231
  %4520 = vmatpush.bf16.msra.mxu0 %v4227
  %4521 = vmatpush.bf16.msra.mxu0 %v4223
  %4522 = vmatpush.bf16.msra.mxu0 %v4219
  %4523 = vmatpush.bf16.msra.mxu0 %v4215
  %4524 = vmatpush.bf16.msra.mxu0 %v4211
  %4525 = vmatmul.bf16.gmra.mxu0 %v3821
  %v4526 = vpop.f32.mrf.mxu0
  %v4527 = vadd.f32 %v656, %v4526
  %v4528 = vpop.f32.mrf.mxu0
  %4529 = vdwg.mxu0
  %4530 = vmatpush.bf16.msra.mxu0 %v4271
  %4531 = vmatpush.bf16.msra.mxu0 %v4267
  %4532 = vmatpush.bf16.msra.mxu0 %v4263
  %4533 = vmatpush.bf16.msra.mxu0 %v4259
  %4534 = vmatpush.bf16.msra.mxu0 %v4255
  %4535 = vmatpush.bf16.msra.mxu0 %v4251
  %4536 = vmatpush.bf16.msra.mxu0 %v4247
  %4537 = vmatpush.bf16.msra.mxu0 %v4243
  %4538 = vmatmul.bf16.gmra.mxu0 %v3822
  %v4539 = vpop.f32.mrf.mxu0
  %v4540 = vadd.f32 %v4527, %v4539
  %v4541 = vpop.f32.mrf.mxu0
  %4542 = vdwg.mxu0
  %4543 = vmatpush.bf16.msra.mxu0 %v4303
  %4544 = vmatpush.bf16.msra.mxu0 %v4299
  %4545 = vmatpush.bf16.msra.mxu0 %v4295
  %4546 = vmatpush.bf16.msra.mxu0 %v4291
  %4547 = vmatpush.bf16.msra.mxu0 %v4287
  %4548 = vmatpush.bf16.msra.mxu0 %v4283
  %4549 = vmatpush.bf16.msra.mxu0 %v4279
  %4550 = vmatpush.bf16.msra.mxu0 %v4275
  %4551 = vmatmul.bf16.gmra.mxu0 %v3823
  %v4552 = vpop.f32.mrf.mxu0
  %v4553 = vadd.f32 %v4540, %v4552
  %v4554 = vpop.f32.mrf.mxu0
  %4555 = vdwg.mxu0
  %v4556 = vxor.u32 %v4436, 2147483648
  %v4557 = vmul.f32 %v4556, 1.442695
  %v4558 = vpow.pop %v4557
  %v4559 = vadd.f32 %v4558, 1.0
  %v4560 = vrcp.pop %v4559
  %v4561 = vmul.f32 %v4559, %v4560
  %v4562 = vsub.f32 1.0, %v4561
  %v4563 = vmul.f32 %v4560, %v4562
  %v4564 = vadd.f32 %v4560, %v4563
  %vm4565 = vweird.f32 %v4559
  %vm4566 = vweird.f32 %v4560
  %vm4567 = vmor %vm4565, %vm4566
  %v4568 = vsel %vm4567, %v4560, %v4564
  %v4569 = vand.u32 2147483647, %v4559
  %vm4570 = vcmp.eq.f32.partialorder %v4569, 8.507059e+37
  %v4571 = vand.u32 %v4559, 2147483648
  %v4572 = vor.u32 1.1754944e-38, %v4571
  %v4573 = vsel %vm4570, %v4572, %v4568
  %v4574 = vmul.f32 1.0, %v4573
  %v4575 = vxor.u32 %v4475, 2147483648
  %v4576 = vmul.f32 %v4575, 1.442695
  %v4577 = vpow.pop %v4576
  %v4578 = vadd.f32 %v4577, 1.0
  %v4579 = vrcp.pop %v4578
  %v4580 = vmul.f32 %v4578, %v4579
  %v4581 = vsub.f32 1.0, %v4580
  %v4582 = vmul.f32 %v4579, %v4581
  %v4583 = vadd.f32 %v4579, %v4582
  %vm4584 = vweird.f32 %v4578
  %vm4585 = vweird.f32 %v4579
  %vm4586 = vmor %vm4584, %vm4585
  %v4587 = vsel %vm4586, %v4579, %v4583
  %v4588 = vand.u32 2147483647, %v4578
  %vm4589 = vcmp.eq.f32.partialorder %v4588, 8.507059e+37
  %v4590 = vand.u32 %v4578, 2147483648
  %v4591 = vor.u32 1.1754944e-38, %v4590
  %v4592 = vsel %vm4589, %v4591, %v4587
  %v4593 = vmul.f32 1.0, %v4592
  %v4594 = vtanh.pop %v4514
  %v4595 = vxor.u32 %v4553, 2147483648
  %v4596 = vmul.f32 %v4595, 1.442695
  %v4597 = vpow.pop %v4596
  %v4598 = vadd.f32 %v4597, 1.0
  %v4599 = vrcp.pop %v4598
  %v4600 = vmul.f32 %v4598, %v4599
  %v4601 = vsub.f32 1.0, %v4600
  %v4602 = vmul.f32 %v4599, %v4601
  %v4603 = vadd.f32 %v4599, %v4602
  %vm4604 = vweird.f32 %v4598
  %vm4605 = vweird.f32 %v4599
  %vm4606 = vmor %vm4604, %vm4605
  %v4607 = vsel %vm4606, %v4599, %v4603
  %v4608 = vand.u32 2147483647, %v4598
  %vm4609 = vcmp.eq.f32.partialorder %v4608, 8.507059e+37
  %v4610 = vand.u32 %v4598, 2147483648
  %v4611 = vor.u32 1.1754944e-38, %v4610
  %v4612 = vsel %vm4609, %v4611, %v4607
  %v4613 = vmul.f32 1.0, %v4612
  %v4614 = vmul.f32 %v4593, %v3511
  %v4615 = vmul.f32 %v4574, %v4594
  %v4616 = vadd.f32 %v4614, %v4615
  %v4617 = vtanh.pop %v4616
  %v4618 = vmul.f32 %v4613, %v4617
  %v4619 = vpack.c.bf16 %v4618, %v4618
  %4620 = vst [vmem:[%s6] sm:$0xf] %v4619
  %v4621 = vld [vmem:[%s2] sm:$0xff]
  %v4622 = vld [vmem:[%s2 + $0x8] sm:$0xff]
  %v4623 = vld [vmem:[%s2 + $0x10] sm:$0xff]
  %v4624 = vld [vmem:[%s2 + $0x18] sm:$0xff]
  %v4625 = vld [vmem:[%s2 + $0x20] sm:$0xff]
  %v4626 = vld [vmem:[%s2 + $0x28] sm:$0xff]
  %v4627 = vld [vmem:[%s2 + $0x30] sm:$0xff]
  %v4628 = vld [vmem:[%s2 + $0x38] sm:$0xff]
  %v4629 = vld [vmem:[%s2 + $0x40] sm:$0xff]
  %v4630 = vld [vmem:[%s2 + $0x48] sm:$0xff]
  %v4631 = vld [vmem:[%s2 + $0x50] sm:$0xff]
  %v4632 = vld [vmem:[%s2 + $0x58] sm:$0xff]
  %v4633 = vld [vmem:[%s2 + $0x60] sm:$0xff]
  %v4634 = vld [vmem:[%s2 + $0x68] sm:$0xff]
  %v4635 = vld [vmem:[%s2 + $0x70] sm:$0xff]
  %v4636 = vld [vmem:[%s2 + $0x78] sm:$0xff]
  %v4637 = vld [vmem:[%s2 + $0x80] sm:$0xff]
  %v4638 = vld [vmem:[%s2 + $0x88] sm:$0xff]
  %v4639 = vld [vmem:[%s2 + $0x90] sm:$0xff]
  %v4640 = vld [vmem:[%s2 + $0x98] sm:$0xff]
  %v4641 = vld [vmem:[%s2 + $0xa0] sm:$0xff]
  %v4642 = vld [vmem:[%s2 + $0xa8] sm:$0xff]
  %v4643 = vld [vmem:[%s2 + $0xb0] sm:$0xff]
  %v4644 = vld [vmem:[%s2 + $0xb8] sm:$0xff]
  %v4645 = vld [vmem:[%s2 + $0xc0] sm:$0xff]
  %v4646 = vld [vmem:[%s2 + $0xc8] sm:$0xff]
  %v4647 = vld [vmem:[%s2 + $0xd0] sm:$0xff]
  %v4648 = vld [vmem:[%s2 + $0xd8] sm:$0xff]
  %v4649 = vld [vmem:[%s2 + $0xe0] sm:$0xff]
  %v4650 = vld [vmem:[%s2 + $0xe8] sm:$0xff]
  %v4651 = vld [vmem:[%s2 + $0xf0] sm:$0xff]
  %v4652 = vld [vmem:[%s2 + $0xf8] sm:$0xff]
  %v4653 = vld [vmem:[%s3] sm:$0xf]
  %v4655 = vperm.slane %v4653, 0
  %v4656 = vperm.slane %v4653, 1
  %v4657 = vperm.slane %v4653, 2
  %v4658 = vperm.slane %v4653, 3
  %v4695 = vunpack.c.l.b16 %v4621
  %v4696 = vunpack.c.h.b16 %v4621
  %v4697 = vunpack.c.l.b16 %v4622
  %v4698 = vunpack.c.h.b16 %v4622
  %v4699 = vunpack.c.l.b16 %v4623
  %v4700 = vunpack.c.h.b16 %v4623
  %v4701 = vunpack.c.l.b16 %v4624
  %v4702 = vunpack.c.h.b16 %v4624
  %v4703 = vunpack.c.l.b16 %v4625
  %v4704 = vunpack.c.h.b16 %v4625
  %v4705 = vunpack.c.l.b16 %v4626
  %v4706 = vunpack.c.h.b16 %v4626
  %v4707 = vunpack.c.l.b16 %v4627
  %v4708 = vunpack.c.h.b16 %v4627
  %v4709 = vunpack.c.l.b16 %v4628
  %v4710 = vunpack.c.h.b16 %v4628
  %v4711 = vunpack.c.l.b16 %v4629
  %v4712 = vunpack.c.h.b16 %v4629
  %v4713 = vunpack.c.l.b16 %v4630
  %v4714 = vunpack.c.h.b16 %v4630
  %v4715 = vunpack.c.l.b16 %v4631
  %v4716 = vunpack.c.h.b16 %v4631
  %v4717 = vunpack.c.l.b16 %v4632
  %v4718 = vunpack.c.h.b16 %v4632
  %v4719 = vunpack.c.l.b16 %v4633
  %v4720 = vunpack.c.h.b16 %v4633
  %v4721 = vunpack.c.l.b16 %v4634
  %v4722 = vunpack.c.h.b16 %v4634
  %v4723 = vunpack.c.l.b16 %v4635
  %v4724 = vunpack.c.h.b16 %v4635
  %v4725 = vunpack.c.l.b16 %v4636
  %v4726 = vunpack.c.h.b16 %v4636
  %v4727 = vunpack.c.l.b16 %v4637
  %v4728 = vunpack.c.h.b16 %v4637
  %v4729 = vunpack.c.l.b16 %v4638
  %v4730 = vunpack.c.h.b16 %v4638
  %v4731 = vunpack.c.l.b16 %v4639
  %v4732 = vunpack.c.h.b16 %v4639
  %v4733 = vunpack.c.l.b16 %v4640
  %v4734 = vunpack.c.h.b16 %v4640
  %v4735 = vunpack.c.l.b16 %v4641
  %v4736 = vunpack.c.h.b16 %v4641
  %v4737 = vunpack.c.l.b16 %v4642
  %v4738 = vunpack.c.h.b16 %v4642
  %v4739 = vunpack.c.l.b16 %v4643
  %v4740 = vunpack.c.h.b16 %v4643
  %v4741 = vunpack.c.l.b16 %v4644
  %v4742 = vunpack.c.h.b16 %v4644
  %v4743 = vunpack.c.l.b16 %v4645
  %v4744 = vunpack.c.h.b16 %v4645
  %v4745 = vunpack.c.l.b16 %v4646
  %v4746 = vunpack.c.h.b16 %v4646
  %v4747 = vunpack.c.l.b16 %v4647
  %v4748 = vunpack.c.h.b16 %v4647
  %v4749 = vunpack.c.l.b16 %v4648
  %v4750 = vunpack.c.h.b16 %v4648
  %v4751 = vunpack.c.l.b16 %v4649
  %v4752 = vunpack.c.h.b16 %v4649
  %v4753 = vunpack.c.l.b16 %v4650
  %v4754 = vunpack.c.h.b16 %v4650
  %v4755 = vunpack.c.l.b16 %v4651
  %v4756 = vunpack.c.h.b16 %v4651
  %v4757 = vunpack.c.l.b16 %v4652
  %v4758 = vunpack.c.h.b16 %v4652
  %v4759 = vpack.c.b16 %v4699, %v4695
  %v4760 = vpack.c.b16 %v4700, %v4696
  %v4761 = vpack.c.b16 %v4701, %v4697
  %v4762 = vpack.c.b16 %v4702, %v4698
  %v4763 = vpack.c.b16 %v4707, %v4703
  %v4764 = vpack.c.b16 %v4708, %v4704
  %v4765 = vpack.c.b16 %v4709, %v4705
  %v4766 = vpack.c.b16 %v4710, %v4706
  %v4767 = vpack.c.b16 %v4715, %v4711
  %v4768 = vpack.c.b16 %v4716, %v4712
  %v4769 = vpack.c.b16 %v4717, %v4713
  %v4770 = vpack.c.b16 %v4718, %v4714
  %v4771 = vpack.c.b16 %v4723, %v4719
  %v4772 = vpack.c.b16 %v4724, %v4720
  %v4773 = vpack.c.b16 %v4725, %v4721
  %v4774 = vpack.c.b16 %v4726, %v4722
  %v4775 = vpack.c.b16 %v4731, %v4727
  %v4776 = vpack.c.b16 %v4732, %v4728
  %v4777 = vpack.c.b16 %v4733, %v4729
  %v4778 = vpack.c.b16 %v4734, %v4730
  %v4779 = vpack.c.b16 %v4739, %v4735
  %v4780 = vpack.c.b16 %v4740, %v4736
  %v4781 = vpack.c.b16 %v4741, %v4737
  %v4782 = vpack.c.b16 %v4742, %v4738
  %v4783 = vpack.c.b16 %v4747, %v4743
  %v4784 = vpack.c.b16 %v4748, %v4744
  %v4785 = vpack.c.b16 %v4749, %v4745
  %v4786 = vpack.c.b16 %v4750, %v4746
  %v4787 = vpack.c.b16 %v4755, %v4751
  %v4788 = vpack.c.b16 %v4756, %v4752
  %v4789 = vpack.c.b16 %v4757, %v4753
  %v4790 = vpack.c.b16 %v4758, %v4754
  %4823 = vmatpush.bf16.msra.mxu0 %v4787
  %4824 = vmatpush.bf16.msra.mxu0 %v4783
  %4825 = vmatpush.bf16.msra.mxu0 %v4779
  %4826 = vmatpush.bf16.msra.mxu0 %v4775
  %4827 = vmatpush.bf16.msra.mxu0 %v4771
  %4828 = vmatpush.bf16.msra.mxu0 %v4767
  %4829 = vmatpush.bf16.msra.mxu0 %v4763
  %4830 = vmatpush.bf16.msra.mxu0 %v4759
  %4831 = vmatmul.bf16.gmra.mxu0 %v3821
  %v4832 = vpop.f32.mrf.mxu0
  %v4833 = vadd.f32 %v4655, %v4832
  %v4834 = vpop.f32.mrf.mxu0
  %4835 = vdwg.mxu0
  %4836 = vmatpush.bf16.msra.mxu0 %v4788
  %4837 = vmatpush.bf16.msra.mxu0 %v4784
  %4838 = vmatpush.bf16.msra.mxu0 %v4780
  %4839 = vmatpush.bf16.msra.mxu0 %v4776
  %4840 = vmatpush.bf16.msra.mxu0 %v4772
  %4841 = vmatpush.bf16.msra.mxu0 %v4768
  %4842 = vmatpush.bf16.msra.mxu0 %v4764
  %4843 = vmatpush.bf16.msra.mxu0 %v4760
  %4844 = vmatmul.bf16.gmra.mxu0 %v3821
  %v4845 = vpop.f32.mrf.mxu0
  %v4846 = vadd.f32 %v4656, %v4845
  %v4847 = vpop.f32.mrf.mxu0
  %4848 = vdwg.mxu0
  %4849 = vmatpush.bf16.msra.mxu0 %v4789
  %4850 = vmatpush.bf16.msra.mxu0 %v4785
  %4851 = vmatpush.bf16.msra.mxu0 %v4781
  %4852 = vmatpush.bf16.msra.mxu0 %v4777
  %4853 = vmatpush.bf16.msra.mxu0 %v4773
  %4854 = vmatpush.bf16.msra.mxu0 %v4769
  %4855 = vmatpush.bf16.msra.mxu0 %v4765
  %4856 = vmatpush.bf16.msra.mxu0 %v4761
  %4857 = vmatmul.bf16.gmra.mxu0 %v3821
  %v4858 = vpop.f32.mrf.mxu0
  %v4859 = vadd.f32 %v4657, %v4858
  %v4860 = vpop.f32.mrf.mxu0
  %4861 = vdwg.mxu0
  %4862 = vmatpush.bf16.msra.mxu0 %v4790
  %4863 = vmatpush.bf16.msra.mxu0 %v4786
  %4864 = vmatpush.bf16.msra.mxu0 %v4782
  %4865 = vmatpush.bf16.msra.mxu0 %v4778
  %4866 = vmatpush.bf16.msra.mxu0 %v4774
  %4867 = vmatpush.bf16.msra.mxu0 %v4770
  %4868 = vmatpush.bf16.msra.mxu0 %v4766
  %4869 = vmatpush.bf16.msra.mxu0 %v4762
  %4870 = vmatmul.bf16.gmra.mxu0 %v3821
  %v4871 = vpop.f32.mrf.mxu0
  %v4872 = vadd.f32 %v4658, %v4871
  %v4873 = vpop.f32.mrf.mxu0
  %4874 = vdwg.mxu0
  %v4875 = vxor.u32 %v4833, 2147483648
  %v4876 = vmul.f32 %v4875, 1.442695
  %v4877 = vpow.pop %v4876
  %v4878 = vadd.f32 %v4877, 1.0
  %v4879 = vrcp.pop %v4878
  %v4880 = vmul.f32 %v4878, %v4879
  %v4881 = vsub.f32 1.0, %v4880
  %v4882 = vmul.f32 %v4879, %v4881
  %v4883 = vadd.f32 %v4879, %v4882
  %vm4884 = vweird.f32 %v4878
  %vm4885 = vweird.f32 %v4879
  %vm4886 = vmor %vm4884, %vm4885
  %v4887 = vsel %vm4886, %v4879, %v4883
  %v4888 = vand.u32 2147483647, %v4878
  %vm4889 = vcmp.eq.f32.partialorder %v4888, 8.507059e+37
  %v4890 = vand.u32 %v4878, 2147483648
  %v4891 = vor.u32 1.1754944e-38, %v4890
  %v4892 = vsel %vm4889, %v4891, %v4887
  %v4893 = vmul.f32 1.0, %v4892
  %v4894 = vxor.u32 %v4846, 2147483648
  %v4895 = vmul.f32 %v4894, 1.442695
  %v4896 = vpow.pop %v4895
  %v4897 = vadd.f32 %v4896, 1.0
  %v4898 = vrcp.pop %v4897
  %v4899 = vmul.f32 %v4897, %v4898
  %v4900 = vsub.f32 1.0, %v4899
  %v4901 = vmul.f32 %v4898, %v4900
  %v4902 = vadd.f32 %v4898, %v4901
  %vm4903 = vweird.f32 %v4897
  %vm4904 = vweird.f32 %v4898
  %vm4905 = vmor %vm4903, %vm4904
  %v4906 = vsel %vm4905, %v4898, %v4902
  %v4907 = vand.u32 2147483647, %v4897
  %vm4908 = vcmp.eq.f32.partialorder %v4907, 8.507059e+37
  %v4909 = vand.u32 %v4897, 2147483648
  %v4910 = vor.u32 1.1754944e-38, %v4909
  %v4911 = vsel %vm4908, %v4910, %v4906
  %v4912 = vmul.f32 1.0, %v4911
  %v4913 = vtanh.pop %v4859
  %v4914 = vxor.u32 %v4872, 2147483648
  %v4915 = vmul.f32 %v4914, 1.442695
  %v4916 = vpow.pop %v4915
  %v4917 = vadd.f32 %v4916, 1.0
  %v4918 = vrcp.pop %v4917
  %v4919 = vmul.f32 %v4917, %v4918
  %v4920 = vsub.f32 1.0, %v4919
  %v4921 = vmul.f32 %v4918, %v4920
  %v4922 = vadd.f32 %v4918, %v4921
  %vm4923 = vweird.f32 %v4917
  %vm4924 = vweird.f32 %v4918
  %vm4925 = vmor %vm4923, %vm4924
  %v4926 = vsel %vm4925, %v4918, %v4922
  %v4927 = vand.u32 2147483647, %v4917
  %vm4928 = vcmp.eq.f32.partialorder %v4927, 8.507059e+37
  %v4929 = vand.u32 %v4917, 2147483648
  %v4930 = vor.u32 1.1754944e-38, %v4929
  %v4931 = vsel %vm4928, %v4930, %v4926
  %v4932 = vmul.f32 1.0, %v4931
  %v4933 = vmul.f32 %v4912, %v3818
  %v4934 = vmul.f32 %v4893, %v4913
  %v4935 = vadd.f32 %v4933, %v4934
  %v4936 = vtanh.pop %v4935
  %v4937 = vmul.f32 %v4932, %v4936
  %v4938 = vpack.c.bf16 %v4937, %v4937
  %s4939 = scalar_lea.vmem %s1, 4
  %v4940 = vld [vmem:[%s4939] sm:$0xf]
  %v4941 = vld [vmem:[%s4] sm:$0xff]
  %v4942 = vld [vmem:[%s4 + $0x8] sm:$0xff]
  %v4943 = vld [vmem:[%s4 + $0x10] sm:$0xff]
  %v4944 = vld [vmem:[%s4 + $0x18] sm:$0xff]
  %v4945 = vld [vmem:[%s4 + $0x20] sm:$0xff]
  %v4946 = vld [vmem:[%s4 + $0x28] sm:$0xff]
  %v4947 = vld [vmem:[%s4 + $0x30] sm:$0xff]
  %v4948 = vld [vmem:[%s4 + $0x38] sm:$0xff]
  %v4949 = vld [vmem:[%s4 + $0x40] sm:$0xff]
  %v4950 = vld [vmem:[%s4 + $0x48] sm:$0xff]
  %v4951 = vld [vmem:[%s4 + $0x50] sm:$0xff]
  %v4952 = vld [vmem:[%s4 + $0x58] sm:$0xff]
  %v4953 = vld [vmem:[%s4 + $0x60] sm:$0xff]
  %v4954 = vld [vmem:[%s4 + $0x68] sm:$0xff]
  %v4955 = vld [vmem:[%s4 + $0x70] sm:$0xff]
  %v4956 = vld [vmem:[%s4 + $0x78] sm:$0xff]
  %v4957 = vld [vmem:[%s4 + $0x80] sm:$0xff]
  %v4958 = vld [vmem:[%s4 + $0x88] sm:$0xff]
  %v4959 = vld [vmem:[%s4 + $0x90] sm:$0xff]
  %v4960 = vld [vmem:[%s4 + $0x98] sm:$0xff]
  %v4961 = vld [vmem:[%s4 + $0xa0] sm:$0xff]
  %v4962 = vld [vmem:[%s4 + $0xa8] sm:$0xff]
  %v4963 = vld [vmem:[%s4 + $0xb0] sm:$0xff]
  %v4964 = vld [vmem:[%s4 + $0xb8] sm:$0xff]
  %v4965 = vld [vmem:[%s4 + $0xc0] sm:$0xff]
  %v4966 = vld [vmem:[%s4 + $0xc8] sm:$0xff]
  %v4967 = vld [vmem:[%s4 + $0xd0] sm:$0xff]
  %v4968 = vld [vmem:[%s4 + $0xd8] sm:$0xff]
  %v4969 = vld [vmem:[%s4 + $0xe0] sm:$0xff]
  %v4970 = vld [vmem:[%s4 + $0xe8] sm:$0xff]
  %v4971 = vld [vmem:[%s4 + $0xf0] sm:$0xff]
  %v4972 = vld [vmem:[%s4 + $0xf8] sm:$0xff]
  %v4973 = vld [vmem:[%s4 + $0x100] sm:$0xff]
  %v4974 = vld [vmem:[%s4 + $0x108] sm:$0xff]
  %v4975 = vld [vmem:[%s4 + $0x110] sm:$0xff]
  %v4976 = vld [vmem:[%s4 + $0x118] sm:$0xff]
  %v4977 = vld [vmem:[%s4 + $0x120] sm:$0xff]
  %v4978 = vld [vmem:[%s4 + $0x128] sm:$0xff]
  %v4979 = vld [vmem:[%s4 + $0x130] sm:$0xff]
  %v4980 = vld [vmem:[%s4 + $0x138] sm:$0xff]
  %v4981 = vld [vmem:[%s4 + $0x140] sm:$0xff]
  %v4982 = vld [vmem:[%s4 + $0x148] sm:$0xff]
  %v4983 = vld [vmem:[%s4 + $0x150] sm:$0xff]
  %v4984 = vld [vmem:[%s4 + $0x158] sm:$0xff]
  %v4985 = vld [vmem:[%s4 + $0x160] sm:$0xff]
  %v4986 = vld [vmem:[%s4 + $0x168] sm:$0xff]
  %v4987 = vld [vmem:[%s4 + $0x170] sm:$0xff]
  %v4988 = vld [vmem:[%s4 + $0x178] sm:$0xff]
  %v4989 = vld [vmem:[%s4 + $0x180] sm:$0xff]
  %v4990 = vld [vmem:[%s4 + $0x188] sm:$0xff]
  %v4991 = vld [vmem:[%s4 + $0x190] sm:$0xff]
  %v4992 = vld [vmem:[%s4 + $0x198] sm:$0xff]
  %v4993 = vld [vmem:[%s4 + $0x1a0] sm:$0xff]
  %v4994 = vld [vmem:[%s4 + $0x1a8] sm:$0xff]
  %v4995 = vld [vmem:[%s4 + $0x1b0] sm:$0xff]
  %v4996 = vld [vmem:[%s4 + $0x1b8] sm:$0xff]
  %v4997 = vld [vmem:[%s4 + $0x1c0] sm:$0xff]
  %v4998 = vld [vmem:[%s4 + $0x1c8] sm:$0xff]
  %v4999 = vld [vmem:[%s4 + $0x1d0] sm:$0xff]
  %v5000 = vld [vmem:[%s4 + $0x1d8] sm:$0xff]
  %v5001 = vld [vmem:[%s4 + $0x1e0] sm:$0xff]
  %v5002 = vld [vmem:[%s4 + $0x1e8] sm:$0xff]
  %v5003 = vld [vmem:[%s4 + $0x1f0] sm:$0xff]
  %v5004 = vld [vmem:[%s4 + $0x1f8] sm:$0xff]
  %v5005 = vld [vmem:[%s4 + $0x200] sm:$0xff]
  %v5006 = vld [vmem:[%s4 + $0x208] sm:$0xff]
  %v5007 = vld [vmem:[%s4 + $0x210] sm:$0xff]
  %v5008 = vld [vmem:[%s4 + $0x218] sm:$0xff]
  %v5009 = vld [vmem:[%s4 + $0x220] sm:$0xff]
  %v5010 = vld [vmem:[%s4 + $0x228] sm:$0xff]
  %v5011 = vld [vmem:[%s4 + $0x230] sm:$0xff]
  %v5012 = vld [vmem:[%s4 + $0x238] sm:$0xff]
  %v5013 = vld [vmem:[%s4 + $0x240] sm:$0xff]
  %v5014 = vld [vmem:[%s4 + $0x248] sm:$0xff]
  %v5015 = vld [vmem:[%s4 + $0x250] sm:$0xff]
  %v5016 = vld [vmem:[%s4 + $0x258] sm:$0xff]
  %v5017 = vld [vmem:[%s4 + $0x260] sm:$0xff]
  %v5018 = vld [vmem:[%s4 + $0x268] sm:$0xff]
  %v5019 = vld [vmem:[%s4 + $0x270] sm:$0xff]
  %v5020 = vld [vmem:[%s4 + $0x278] sm:$0xff]
  %v5021 = vld [vmem:[%s4 + $0x280] sm:$0xff]
  %v5022 = vld [vmem:[%s4 + $0x288] sm:$0xff]
  %v5023 = vld [vmem:[%s4 + $0x290] sm:$0xff]
  %v5024 = vld [vmem:[%s4 + $0x298] sm:$0xff]
  %v5025 = vld [vmem:[%s4 + $0x2a0] sm:$0xff]
  %v5026 = vld [vmem:[%s4 + $0x2a8] sm:$0xff]
  %v5027 = vld [vmem:[%s4 + $0x2b0] sm:$0xff]
  %v5028 = vld [vmem:[%s4 + $0x2b8] sm:$0xff]
  %v5029 = vld [vmem:[%s4 + $0x2c0] sm:$0xff]
  %v5030 = vld [vmem:[%s4 + $0x2c8] sm:$0xff]
  %v5031 = vld [vmem:[%s4 + $0x2d0] sm:$0xff]
  %v5032 = vld [vmem:[%s4 + $0x2d8] sm:$0xff]
  %v5033 = vld [vmem:[%s4 + $0x2e0] sm:$0xff]
  %v5034 = vld [vmem:[%s4 + $0x2e8] sm:$0xff]
  %v5035 = vld [vmem:[%s4 + $0x2f0] sm:$0xff]
  %v5036 = vld [vmem:[%s4 + $0x2f8] sm:$0xff]
  %v5037 = vld [vmem:[%s5] sm:$0xf]
  %v5039 = vperm.slane %v5037, 0
  %v5040 = vperm.slane %v5037, 1
  %v5041 = vperm.slane %v5037, 2
  %v5042 = vperm.slane %v5037, 3
  %v5143 = vunpack.c.l.b16 %v4941
  %v5144 = vunpack.c.h.b16 %v4941
  %v5145 = vunpack.c.l.b16 %v4942
  %v5146 = vunpack.c.h.b16 %v4942
  %v5147 = vunpack.c.l.b16 %v4943
  %v5148 = vunpack.c.h.b16 %v4943
  %v5149 = vunpack.c.l.b16 %v4944
  %v5150 = vunpack.c.h.b16 %v4944
  %v5151 = vunpack.c.l.b16 %v4945
  %v5152 = vunpack.c.h.b16 %v4945
  %v5153 = vunpack.c.l.b16 %v4946
  %v5154 = vunpack.c.h.b16 %v4946
  %v5155 = vunpack.c.l.b16 %v4947
  %v5156 = vunpack.c.h.b16 %v4947
  %v5157 = vunpack.c.l.b16 %v4948
  %v5158 = vunpack.c.h.b16 %v4948
  %v5159 = vunpack.c.l.b16 %v4949
  %v5160 = vunpack.c.h.b16 %v4949
  %v5161 = vunpack.c.l.b16 %v4950
  %v5162 = vunpack.c.h.b16 %v4950
  %v5163 = vunpack.c.l.b16 %v4951
  %v5164 = vunpack.c.h.b16 %v4951
  %v5165 = vunpack.c.l.b16 %v4952
  %v5166 = vunpack.c.h.b16 %v4952
  %v5167 = vunpack.c.l.b16 %v4953
  %v5168 = vunpack.c.h.b16 %v4953
  %v5169 = vunpack.c.l.b16 %v4954
  %v5170 = vunpack.c.h.b16 %v4954
  %v5171 = vunpack.c.l.b16 %v4955
  %v5172 = vunpack.c.h.b16 %v4955
  %v5173 = vunpack.c.l.b16 %v4956
  %v5174 = vunpack.c.h.b16 %v4956
  %v5175 = vunpack.c.l.b16 %v4957
  %v5176 = vunpack.c.h.b16 %v4957
  %v5177 = vunpack.c.l.b16 %v4958
  %v5178 = vunpack.c.h.b16 %v4958
  %v5179 = vunpack.c.l.b16 %v4959
  %v5180 = vunpack.c.h.b16 %v4959
  %v5181 = vunpack.c.l.b16 %v4960
  %v5182 = vunpack.c.h.b16 %v4960
  %v5183 = vunpack.c.l.b16 %v4961
  %v5184 = vunpack.c.h.b16 %v4961
  %v5185 = vunpack.c.l.b16 %v4962
  %v5186 = vunpack.c.h.b16 %v4962
  %v5187 = vunpack.c.l.b16 %v4963
  %v5188 = vunpack.c.h.b16 %v4963
  %v5189 = vunpack.c.l.b16 %v4964
  %v5190 = vunpack.c.h.b16 %v4964
  %v5191 = vunpack.c.l.b16 %v4965
  %v5192 = vunpack.c.h.b16 %v4965
  %v5193 = vunpack.c.l.b16 %v4966
  %v5194 = vunpack.c.h.b16 %v4966
  %v5195 = vunpack.c.l.b16 %v4967
  %v5196 = vunpack.c.h.b16 %v4967
  %v5197 = vunpack.c.l.b16 %v4968
  %v5198 = vunpack.c.h.b16 %v4968
  %v5199 = vunpack.c.l.b16 %v4969
  %v5200 = vunpack.c.h.b16 %v4969
  %v5201 = vunpack.c.l.b16 %v4970
  %v5202 = vunpack.c.h.b16 %v4970
  %v5203 = vunpack.c.l.b16 %v4971
  %v5204 = vunpack.c.h.b16 %v4971
  %v5205 = vunpack.c.l.b16 %v4972
  %v5206 = vunpack.c.h.b16 %v4972
  %v5207 = vunpack.c.l.b16 %v4973
  %v5208 = vunpack.c.h.b16 %v4973
  %v5209 = vunpack.c.l.b16 %v4974
  %v5210 = vunpack.c.h.b16 %v4974
  %v5211 = vunpack.c.l.b16 %v4975
  %v5212 = vunpack.c.h.b16 %v4975
  %v5213 = vunpack.c.l.b16 %v4976
  %v5214 = vunpack.c.h.b16 %v4976
  %v5215 = vunpack.c.l.b16 %v4977
  %v5216 = vunpack.c.h.b16 %v4977
  %v5217 = vunpack.c.l.b16 %v4978
  %v5218 = vunpack.c.h.b16 %v4978
  %v5219 = vunpack.c.l.b16 %v4979
  %v5220 = vunpack.c.h.b16 %v4979
  %v5221 = vunpack.c.l.b16 %v4980
  %v5222 = vunpack.c.h.b16 %v4980
  %v5223 = vunpack.c.l.b16 %v4981
  %v5224 = vunpack.c.h.b16 %v4981
  %v5225 = vunpack.c.l.b16 %v4982
  %v5226 = vunpack.c.h.b16 %v4982
  %v5227 = vunpack.c.l.b16 %v4983
  %v5228 = vunpack.c.h.b16 %v4983
  %v5229 = vunpack.c.l.b16 %v4984
  %v5230 = vunpack.c.h.b16 %v4984
  %v5231 = vunpack.c.l.b16 %v4985
  %v5232 = vunpack.c.h.b16 %v4985
  %v5233 = vunpack.c.l.b16 %v4986
  %v5234 = vunpack.c.h.b16 %v4986
  %v5235 = vunpack.c.l.b16 %v4987
  %v5236 = vunpack.c.h.b16 %v4987
  %v5237 = vunpack.c.l.b16 %v4988
  %v5238 = vunpack.c.h.b16 %v4988
  %v5239 = vunpack.c.l.b16 %v4989
  %v5240 = vunpack.c.h.b16 %v4989
  %v5241 = vunpack.c.l.b16 %v4990
  %v5242 = vunpack.c.h.b16 %v4990
  %v5243 = vunpack.c.l.b16 %v4991
  %v5244 = vunpack.c.h.b16 %v4991
  %v5245 = vunpack.c.l.b16 %v4992
  %v5246 = vunpack.c.h.b16 %v4992
  %v5247 = vunpack.c.l.b16 %v4993
  %v5248 = vunpack.c.h.b16 %v4993
  %v5249 = vunpack.c.l.b16 %v4994
  %v5250 = vunpack.c.h.b16 %v4994
  %v5251 = vunpack.c.l.b16 %v4995
  %v5252 = vunpack.c.h.b16 %v4995
  %v5253 = vunpack.c.l.b16 %v4996
  %v5254 = vunpack.c.h.b16 %v4996
  %v5255 = vunpack.c.l.b16 %v4997
  %v5256 = vunpack.c.h.b16 %v4997
  %v5257 = vunpack.c.l.b16 %v4998
  %v5258 = vunpack.c.h.b16 %v4998
  %v5259 = vunpack.c.l.b16 %v4999
  %v5260 = vunpack.c.h.b16 %v4999
  %v5261 = vunpack.c.l.b16 %v5000
  %v5262 = vunpack.c.h.b16 %v5000
  %v5263 = vunpack.c.l.b16 %v5001
  %v5264 = vunpack.c.h.b16 %v5001
  %v5265 = vunpack.c.l.b16 %v5002
  %v5266 = vunpack.c.h.b16 %v5002
  %v5267 = vunpack.c.l.b16 %v5003
  %v5268 = vunpack.c.h.b16 %v5003
  %v5269 = vunpack.c.l.b16 %v5004
  %v5270 = vunpack.c.h.b16 %v5004
  %v5271 = vunpack.c.l.b16 %v5005
  %v5272 = vunpack.c.h.b16 %v5005
  %v5273 = vunpack.c.l.b16 %v5006
  %v5274 = vunpack.c.h.b16 %v5006
  %v5275 = vunpack.c.l.b16 %v5007
  %v5276 = vunpack.c.h.b16 %v5007
  %v5277 = vunpack.c.l.b16 %v5008
  %v5278 = vunpack.c.h.b16 %v5008
  %v5279 = vunpack.c.l.b16 %v5009
  %v5280 = vunpack.c.h.b16 %v5009
  %v5281 = vunpack.c.l.b16 %v5010
  %v5282 = vunpack.c.h.b16 %v5010
  %v5283 = vunpack.c.l.b16 %v5011
  %v5284 = vunpack.c.h.b16 %v5011
  %v5285 = vunpack.c.l.b16 %v5012
  %v5286 = vunpack.c.h.b16 %v5012
  %v5287 = vunpack.c.l.b16 %v5013
  %v5288 = vunpack.c.h.b16 %v5013
  %v5289 = vunpack.c.l.b16 %v5014
  %v5290 = vunpack.c.h.b16 %v5014
  %v5291 = vunpack.c.l.b16 %v5015
  %v5292 = vunpack.c.h.b16 %v5015
  %v5293 = vunpack.c.l.b16 %v5016
  %v5294 = vunpack.c.h.b16 %v5016
  %v5295 = vunpack.c.l.b16 %v5017
  %v5296 = vunpack.c.h.b16 %v5017
  %v5297 = vunpack.c.l.b16 %v5018
  %v5298 = vunpack.c.h.b16 %v5018
  %v5299 = vunpack.c.l.b16 %v5019
  %v5300 = vunpack.c.h.b16 %v5019
  %v5301 = vunpack.c.l.b16 %v5020
  %v5302 = vunpack.c.h.b16 %v5020
  %v5303 = vunpack.c.l.b16 %v5021
  %v5304 = vunpack.c.h.b16 %v5021
  %v5305 = vunpack.c.l.b16 %v5022
  %v5306 = vunpack.c.h.b16 %v5022
  %v5307 = vunpack.c.l.b16 %v5023
  %v5308 = vunpack.c.h.b16 %v5023
  %v5309 = vunpack.c.l.b16 %v5024
  %v5310 = vunpack.c.h.b16 %v5024
  %v5311 = vunpack.c.l.b16 %v5025
  %v5312 = vunpack.c.h.b16 %v5025
  %v5313 = vunpack.c.l.b16 %v5026
  %v5314 = vunpack.c.h.b16 %v5026
  %v5315 = vunpack.c.l.b16 %v5027
  %v5316 = vunpack.c.h.b16 %v5027
  %v5317 = vunpack.c.l.b16 %v5028
  %v5318 = vunpack.c.h.b16 %v5028
  %v5319 = vunpack.c.l.b16 %v5029
  %v5320 = vunpack.c.h.b16 %v5029
  %v5321 = vunpack.c.l.b16 %v5030
  %v5322 = vunpack.c.h.b16 %v5030
  %v5323 = vunpack.c.l.b16 %v5031
  %v5324 = vunpack.c.h.b16 %v5031
  %v5325 = vunpack.c.l.b16 %v5032
  %v5326 = vunpack.c.h.b16 %v5032
  %v5327 = vunpack.c.l.b16 %v5033
  %v5328 = vunpack.c.h.b16 %v5033
  %v5329 = vunpack.c.l.b16 %v5034
  %v5330 = vunpack.c.h.b16 %v5034
  %v5331 = vunpack.c.l.b16 %v5035
  %v5332 = vunpack.c.h.b16 %v5035
  %v5333 = vunpack.c.l.b16 %v5036
  %v5334 = vunpack.c.h.b16 %v5036
  %v5335 = vpack.c.b16 %v5147, %v5143
  %v5336 = vpack.c.b16 %v5148, %v5144
  %v5337 = vpack.c.b16 %v5149, %v5145
  %v5338 = vpack.c.b16 %v5150, %v5146
  %v5339 = vpack.c.b16 %v5155, %v5151
  %v5340 = vpack.c.b16 %v5156, %v5152
  %v5341 = vpack.c.b16 %v5157, %v5153
  %v5342 = vpack.c.b16 %v5158, %v5154
  %v5343 = vpack.c.b16 %v5163, %v5159
  %v5344 = vpack.c.b16 %v5164, %v5160
  %v5345 = vpack.c.b16 %v5165, %v5161
  %v5346 = vpack.c.b16 %v5166, %v5162
  %v5347 = vpack.c.b16 %v5171, %v5167
  %v5348 = vpack.c.b16 %v5172, %v5168
  %v5349 = vpack.c.b16 %v5173, %v5169
  %v5350 = vpack.c.b16 %v5174, %v5170
  %v5351 = vpack.c.b16 %v5179, %v5175
  %v5352 = vpack.c.b16 %v5180, %v5176
  %v5353 = vpack.c.b16 %v5181, %v5177
  %v5354 = vpack.c.b16 %v5182, %v5178
  %v5355 = vpack.c.b16 %v5187, %v5183
  %v5356 = vpack.c.b16 %v5188, %v5184
  %v5357 = vpack.c.b16 %v5189, %v5185
  %v5358 = vpack.c.b16 %v5190, %v5186
  %v5359 = vpack.c.b16 %v5195, %v5191
  %v5360 = vpack.c.b16 %v5196, %v5192
  %v5361 = vpack.c.b16 %v5197, %v5193
  %v5362 = vpack.c.b16 %v5198, %v5194
  %v5363 = vpack.c.b16 %v5203, %v5199
  %v5364 = vpack.c.b16 %v5204, %v5200
  %v5365 = vpack.c.b16 %v5205, %v5201
  %v5366 = vpack.c.b16 %v5206, %v5202
  %v5367 = vpack.c.b16 %v5211, %v5207
  %v5368 = vpack.c.b16 %v5212, %v5208
  %v5369 = vpack.c.b16 %v5213, %v5209
  %v5370 = vpack.c.b16 %v5214, %v5210
  %v5371 = vpack.c.b16 %v5219, %v5215
  %v5372 = vpack.c.b16 %v5220, %v5216
  %v5373 = vpack.c.b16 %v5221, %v5217
  %v5374 = vpack.c.b16 %v5222, %v5218
  %v5375 = vpack.c.b16 %v5227, %v5223
  %v5376 = vpack.c.b16 %v5228, %v5224
  %v5377 = vpack.c.b16 %v5229, %v5225
  %v5378 = vpack.c.b16 %v5230, %v5226
  %v5379 = vpack.c.b16 %v5235, %v5231
  %v5380 = vpack.c.b16 %v5236, %v5232
  %v5381 = vpack.c.b16 %v5237, %v5233
  %v5382 = vpack.c.b16 %v5238, %v5234
  %v5383 = vpack.c.b16 %v5243, %v5239
  %v5384 = vpack.c.b16 %v5244, %v5240
  %v5385 = vpack.c.b16 %v5245, %v5241
  %v5386 = vpack.c.b16 %v5246, %v5242
  %v5387 = vpack.c.b16 %v5251, %v5247
  %v5388 = vpack.c.b16 %v5252, %v5248
  %v5389 = vpack.c.b16 %v5253, %v5249
  %v5390 = vpack.c.b16 %v5254, %v5250
  %v5391 = vpack.c.b16 %v5259, %v5255
  %v5392 = vpack.c.b16 %v5260, %v5256
  %v5393 = vpack.c.b16 %v5261, %v5257
  %v5394 = vpack.c.b16 %v5262, %v5258
  %v5395 = vpack.c.b16 %v5267, %v5263
  %v5396 = vpack.c.b16 %v5268, %v5264
  %v5397 = vpack.c.b16 %v5269, %v5265
  %v5398 = vpack.c.b16 %v5270, %v5266
  %v5399 = vpack.c.b16 %v5275, %v5271
  %v5400 = vpack.c.b16 %v5276, %v5272
  %v5401 = vpack.c.b16 %v5277, %v5273
  %v5402 = vpack.c.b16 %v5278, %v5274
  %v5403 = vpack.c.b16 %v5283, %v5279
  %v5404 = vpack.c.b16 %v5284, %v5280
  %v5405 = vpack.c.b16 %v5285, %v5281
  %v5406 = vpack.c.b16 %v5286, %v5282
  %v5407 = vpack.c.b16 %v5291, %v5287
  %v5408 = vpack.c.b16 %v5292, %v5288
  %v5409 = vpack.c.b16 %v5293, %v5289
  %v5410 = vpack.c.b16 %v5294, %v5290
  %v5411 = vpack.c.b16 %v5299, %v5295
  %v5412 = vpack.c.b16 %v5300, %v5296
  %v5413 = vpack.c.b16 %v5301, %v5297
  %v5414 = vpack.c.b16 %v5302, %v5298
  %v5415 = vpack.c.b16 %v5307, %v5303
  %v5416 = vpack.c.b16 %v5308, %v5304
  %v5417 = vpack.c.b16 %v5309, %v5305
  %v5418 = vpack.c.b16 %v5310, %v5306
  %v5419 = vpack.c.b16 %v5315, %v5311
  %v5420 = vpack.c.b16 %v5316, %v5312
  %v5421 = vpack.c.b16 %v5317, %v5313
  %v5422 = vpack.c.b16 %v5318, %v5314
  %v5423 = vpack.c.b16 %v5323, %v5319
  %v5424 = vpack.c.b16 %v5324, %v5320
  %v5425 = vpack.c.b16 %v5325, %v5321
  %v5426 = vpack.c.b16 %v5326, %v5322
  %v5427 = vpack.c.b16 %v5331, %v5327
  %v5428 = vpack.c.b16 %v5332, %v5328
  %v5429 = vpack.c.b16 %v5333, %v5329
  %v5430 = vpack.c.b16 %v5334, %v5330
  %5527 = vmatpush.bf16.msra.mxu0 %v5363
  %5528 = vmatpush.bf16.msra.mxu0 %v5359
  %5529 = vmatpush.bf16.msra.mxu0 %v5355
  %5530 = vmatpush.bf16.msra.mxu0 %v5351
  %5531 = vmatpush.bf16.msra.mxu0 %v5347
  %5532 = vmatpush.bf16.msra.mxu0 %v5343
  %5533 = vmatpush.bf16.msra.mxu0 %v5339
  %5534 = vmatpush.bf16.msra.mxu0 %v5335
  %5535 = vmatmul.bf16.gmra.mxu0 %v4938
  %v5536 = vpop.f32.mrf.mxu0
  %v5537 = vadd.f32 %v5039, %v5536
  %v5538 = vpop.f32.mrf.mxu0
  %5539 = vdwg.mxu0
  %5540 = vmatpush.bf16.msra.mxu0 %v5395
  %5541 = vmatpush.bf16.msra.mxu0 %v5391
  %5542 = vmatpush.bf16.msra.mxu0 %v5387
  %5543 = vmatpush.bf16.msra.mxu0 %v5383
  %5544 = vmatpush.bf16.msra.mxu0 %v5379
  %5545 = vmatpush.bf16.msra.mxu0 %v5375
  %5546 = vmatpush.bf16.msra.mxu0 %v5371
  %5547 = vmatpush.bf16.msra.mxu0 %v5367
  %5548 = vmatmul.bf16.gmra.mxu0 %v4619
  %v5549 = vpop.f32.mrf.mxu0
  %v5550 = vadd.f32 %v5537, %v5549
  %v5551 = vpop.f32.mrf.mxu0
  %5552 = vdwg.mxu0
  %5553 = vmatpush.bf16.msra.mxu0 %v5427
  %5554 = vmatpush.bf16.msra.mxu0 %v5423
  %5555 = vmatpush.bf16.msra.mxu0 %v5419
  %5556 = vmatpush.bf16.msra.mxu0 %v5415
  %5557 = vmatpush.bf16.msra.mxu0 %v5411
  %5558 = vmatpush.bf16.msra.mxu0 %v5407
  %5559 = vmatpush.bf16.msra.mxu0 %v5403
  %5560 = vmatpush.bf16.msra.mxu0 %v5399
  %5561 = vmatmul.bf16.gmra.mxu0 %v4940
  %v5562 = vpop.f32.mrf.mxu0
  %v5563 = vadd.f32 %v5550, %v5562
  %v5564 = vpop.f32.mrf.mxu0
  %5565 = vdwg.mxu0
  %5566 = vmatpush.bf16.msra.mxu0 %v5364
  %5567 = vmatpush.bf16.msra.mxu0 %v5360
  %5568 = vmatpush.bf16.msra.mxu0 %v5356
  %5569 = vmatpush.bf16.msra.mxu0 %v5352
  %5570 = vmatpush.bf16.msra.mxu0 %v5348
  %5571 = vmatpush.bf16.msra.mxu0 %v5344
  %5572 = vmatpush.bf16.msra.mxu0 %v5340
  %5573 = vmatpush.bf16.msra.mxu0 %v5336
  %5574 = vmatmul.bf16.gmra.mxu0 %v4938
  %v5575 = vpop.f32.mrf.mxu0
  %v5576 = vadd.f32 %v5040, %v5575
  %v5577 = vpop.f32.mrf.mxu0
  %5578 = vdwg.mxu0
  %5579 = vmatpush.bf16.msra.mxu0 %v5396
  %5580 = vmatpush.bf16.msra.mxu0 %v5392
  %5581 = vmatpush.bf16.msra.mxu0 %v5388
  %5582 = vmatpush.bf16.msra.mxu0 %v5384
  %5583 = vmatpush.bf16.msra.mxu0 %v5380
  %5584 = vmatpush.bf16.msra.mxu0 %v5376
  %5585 = vmatpush.bf16.msra.mxu0 %v5372
  %5586 = vmatpush.bf16.msra.mxu0 %v5368
  %5587 = vmatmul.bf16.gmra.mxu0 %v4619
  %v5588 = vpop.f32.mrf.mxu0
  %v5589 = vadd.f32 %v5576, %v5588
  %v5590 = vpop.f32.mrf.mxu0
  %5591 = vdwg.mxu0
  %5592 = vmatpush.bf16.msra.mxu0 %v5428
  %5593 = vmatpush.bf16.msra.mxu0 %v5424
  %5594 = vmatpush.bf16.msra.mxu0 %v5420
  %5595 = vmatpush.bf16.msra.mxu0 %v5416
  %5596 = vmatpush.bf16.msra.mxu0 %v5412
  %5597 = vmatpush.bf16.msra.mxu0 %v5408
  %5598 = vmatpush.bf16.msra.mxu0 %v5404
  %5599 = vmatpush.bf16.msra.mxu0 %v5400
  %5600 = vmatmul.bf16.gmra.mxu0 %v4940
  %v5601 = vpop.f32.mrf.mxu0
  %v5602 = vadd.f32 %v5589, %v5601
  %v5603 = vpop.f32.mrf.mxu0
  %5604 = vdwg.mxu0
  %5605 = vmatpush.bf16.msra.mxu0 %v5365
  %5606 = vmatpush.bf16.msra.mxu0 %v5361
  %5607 = vmatpush.bf16.msra.mxu0 %v5357
  %5608 = vmatpush.bf16.msra.mxu0 %v5353
  %5609 = vmatpush.bf16.msra.mxu0 %v5349
  %5610 = vmatpush.bf16.msra.mxu0 %v5345
  %5611 = vmatpush.bf16.msra.mxu0 %v5341
  %5612 = vmatpush.bf16.msra.mxu0 %v5337
  %5613 = vmatmul.bf16.gmra.mxu0 %v4938
  %v5614 = vpop.f32.mrf.mxu0
  %v5615 = vadd.f32 %v5041, %v5614
  %v5616 = vpop.f32.mrf.mxu0
  %5617 = vdwg.mxu0
  %5618 = vmatpush.bf16.msra.mxu0 %v5397
  %5619 = vmatpush.bf16.msra.mxu0 %v5393
  %5620 = vmatpush.bf16.msra.mxu0 %v5389
  %5621 = vmatpush.bf16.msra.mxu0 %v5385
  %5622 = vmatpush.bf16.msra.mxu0 %v5381
  %5623 = vmatpush.bf16.msra.mxu0 %v5377
  %5624 = vmatpush.bf16.msra.mxu0 %v5373
  %5625 = vmatpush.bf16.msra.mxu0 %v5369
  %5626 = vmatmul.bf16.gmra.mxu0 %v4619
  %v5627 = vpop.f32.mrf.mxu0
  %v5628 = vadd.f32 %v5615, %v5627
  %v5629 = vpop.f32.mrf.mxu0
  %5630 = vdwg.mxu0
  %5631 = vmatpush.bf16.msra.mxu0 %v5429
  %5632 = vmatpush.bf16.msra.mxu0 %v5425
  %5633 = vmatpush.bf16.msra.mxu0 %v5421
  %5634 = vmatpush.bf16.msra.mxu0 %v5417
  %5635 = vmatpush.bf16.msra.mxu0 %v5413
  %5636 = vmatpush.bf16.msra.mxu0 %v5409
  %5637 = vmatpush.bf16.msra.mxu0 %v5405
  %5638 = vmatpush.bf16.msra.mxu0 %v5401
  %5639 = vmatmul.bf16.gmra.mxu0 %v4940
  %v5640 = vpop.f32.mrf.mxu0
  %v5641 = vadd.f32 %v5628, %v5640
  %v5642 = vpop.f32.mrf.mxu0
  %5643 = vdwg.mxu0
  %5644 = vmatpush.bf16.msra.mxu0 %v5366
  %5645 = vmatpush.bf16.msra.mxu0 %v5362
  %5646 = vmatpush.bf16.msra.mxu0 %v5358
  %5647 = vmatpush.bf16.msra.mxu0 %v5354
  %5648 = vmatpush.bf16.msra.mxu0 %v5350
  %5649 = vmatpush.bf16.msra.mxu0 %v5346
  %5650 = vmatpush.bf16.msra.mxu0 %v5342
  %5651 = vmatpush.bf16.msra.mxu0 %v5338
  %5652 = vmatmul.bf16.gmra.mxu0 %v4938
  %v5653 = vpop.f32.mrf.mxu0
  %v5654 = vadd.f32 %v5042, %v5653
  %v5655 = vpop.f32.mrf.mxu0
  %5656 = vdwg.mxu0
  %5657 = vmatpush.bf16.msra.mxu0 %v5398
  %5658 = vmatpush.bf16.msra.mxu0 %v5394
  %5659 = vmatpush.bf16.msra.mxu0 %v5390
  %5660 = vmatpush.bf16.msra.mxu0 %v5386
  %5661 = vmatpush.bf16.msra.mxu0 %v5382
  %5662 = vmatpush.bf16.msra.mxu0 %v5378
  %5663 = vmatpush.bf16.msra.mxu0 %v5374
  %5664 = vmatpush.bf16.msra.mxu0 %v5370
  %5665 = vmatmul.bf16.gmra.mxu0 %v4619
  %v5666 = vpop.f32.mrf.mxu0
  %v5667 = vadd.f32 %v5654, %v5666
  %v5668 = vpop.f32.mrf.mxu0
  %5669 = vdwg.mxu0
  %5670 = vmatpush.bf16.msra.mxu0 %v5430
  %5671 = vmatpush.bf16.msra.mxu0 %v5426
  %5672 = vmatpush.bf16.msra.mxu0 %v5422
  %5673 = vmatpush.bf16.msra.mxu0 %v5418
  %5674 = vmatpush.bf16.msra.mxu0 %v5414
  %5675 = vmatpush.bf16.msra.mxu0 %v5410
  %5676 = vmatpush.bf16.msra.mxu0 %v5406
  %5677 = vmatpush.bf16.msra.mxu0 %v5402
  %5678 = vmatmul.bf16.gmra.mxu0 %v4940
  %v5679 = vpop.f32.mrf.mxu0
  %v5680 = vadd.f32 %v5667, %v5679
  %v5681 = vpop.f32.mrf.mxu0
  %5682 = vdwg.mxu0
  %v5683 = vxor.u32 %v5563, 2147483648
  %v5684 = vmul.f32 %v5683, 1.442695
  %v5685 = vpow.pop %v5684
  %v5686 = vadd.f32 %v5685, 1.0
  %v5687 = vrcp.pop %v5686
  %v5688 = vmul.f32 %v5686, %v5687
  %v5689 = vsub.f32 1.0, %v5688
  %v5690 = vmul.f32 %v5687, %v5689
  %v5691 = vadd.f32 %v5687, %v5690
  %vm5692 = vweird.f32 %v5686
  %vm5693 = vweird.f32 %v5687
  %vm5694 = vmor %vm5692, %vm5693
  %v5695 = vsel %vm5694, %v5687, %v5691
  %v5696 = vand.u32 2147483647, %v5686
  %vm5697 = vcmp.eq.f32.partialorder %v5696, 8.507059e+37
  %v5698 = vand.u32 %v5686, 2147483648
  %v5699 = vor.u32 1.1754944e-38, %v5698
  %v5700 = vsel %vm5697, %v5699, %v5695
  %v5701 = vmul.f32 1.0, %v5700
  %v5702 = vxor.u32 %v5602, 2147483648
  %v5703 = vmul.f32 %v5702, 1.442695
  %v5704 = vpow.pop %v5703
  %v5705 = vadd.f32 %v5704, 1.0
  %v5706 = vrcp.pop %v5705
  %v5707 = vmul.f32 %v5705, %v5706
  %v5708 = vsub.f32 1.0, %v5707
  %v5709 = vmul.f32 %v5706, %v5708
  %v5710 = vadd.f32 %v5706, %v5709
  %vm5711 = vweird.f32 %v5705
  %vm5712 = vweird.f32 %v5706
  %vm5713 = vmor %vm5711, %vm5712
  %v5714 = vsel %vm5713, %v5706, %v5710
  %v5715 = vand.u32 2147483647, %v5705
  %vm5716 = vcmp.eq.f32.partialorder %v5715, 8.507059e+37
  %v5717 = vand.u32 %v5705, 2147483648
  %v5718 = vor.u32 1.1754944e-38, %v5717
  %v5719 = vsel %vm5716, %v5718, %v5714
  %v5720 = vmul.f32 1.0, %v5719
  %v5721 = vtanh.pop %v5641
  %v5722 = vxor.u32 %v5680, 2147483648
  %v5723 = vmul.f32 %v5722, 1.442695
  %v5724 = vpow.pop %v5723
  %v5725 = vadd.f32 %v5724, 1.0
  %v5726 = vrcp.pop %v5725
  %v5727 = vmul.f32 %v5725, %v5726
  %v5728 = vsub.f32 1.0, %v5727
  %v5729 = vmul.f32 %v5726, %v5728
  %v5730 = vadd.f32 %v5726, %v5729
  %vm5731 = vweird.f32 %v5725
  %vm5732 = vweird.f32 %v5726
  %vm5733 = vmor %vm5731, %vm5732
  %v5734 = vsel %vm5733, %v5726, %v5730
  %v5735 = vand.u32 2147483647, %v5725
  %vm5736 = vcmp.eq.f32.partialorder %v5735, 8.507059e+37
  %v5737 = vand.u32 %v5725, 2147483648
  %v5738 = vor.u32 1.1754944e-38, %v5737
  %v5739 = vsel %vm5736, %v5738, %v5734
  %v5740 = vmul.f32 1.0, %v5739
  %v5741 = vmul.f32 %v5720, %v4616
  %v5742 = vmul.f32 %v5701, %v5721
  %v5743 = vadd.f32 %v5741, %v5742
  %v5744 = vtanh.pop %v5743
  %v5745 = vmul.f32 %v5740, %v5744
  %v5746 = vpack.c.bf16 %v5745, %v5745
  %s5747 = scalar_lea.vmem %s6, 4
  %5748 = vst [vmem:[%s5747] sm:$0xf] %v5746
  %v5749 = vld [vmem:[%s2] sm:$0xff]
  %v5750 = vld [vmem:[%s2 + $0x8] sm:$0xff]
  %v5751 = vld [vmem:[%s2 + $0x10] sm:$0xff]
  %v5752 = vld [vmem:[%s2 + $0x18] sm:$0xff]
  %v5753 = vld [vmem:[%s2 + $0x20] sm:$0xff]
  %v5754 = vld [vmem:[%s2 + $0x28] sm:$0xff]
  %v5755 = vld [vmem:[%s2 + $0x30] sm:$0xff]
  %v5756 = vld [vmem:[%s2 + $0x38] sm:$0xff]
  %v5757 = vld [vmem:[%s2 + $0x40] sm:$0xff]
  %v5758 = vld [vmem:[%s2 + $0x48] sm:$0xff]
  %v5759 = vld [vmem:[%s2 + $0x50] sm:$0xff]
  %v5760 = vld [vmem:[%s2 + $0x58] sm:$0xff]
  %v5761 = vld [vmem:[%s2 + $0x60] sm:$0xff]
  %v5762 = vld [vmem:[%s2 + $0x68] sm:$0xff]
  %v5763 = vld [vmem:[%s2 + $0x70] sm:$0xff]
  %v5764 = vld [vmem:[%s2 + $0x78] sm:$0xff]
  %v5765 = vld [vmem:[%s2 + $0x80] sm:$0xff]
  %v5766 = vld [vmem:[%s2 + $0x88] sm:$0xff]
  %v5767 = vld [vmem:[%s2 + $0x90] sm:$0xff]
  %v5768 = vld [vmem:[%s2 + $0x98] sm:$0xff]
  %v5769 = vld [vmem:[%s2 + $0xa0] sm:$0xff]
  %v5770 = vld [vmem:[%s2 + $0xa8] sm:$0xff]
  %v5771 = vld [vmem:[%s2 + $0xb0] sm:$0xff]
  %v5772 = vld [vmem:[%s2 + $0xb8] sm:$0xff]
  %v5773 = vld [vmem:[%s2 + $0xc0] sm:$0xff]
  %v5774 = vld [vmem:[%s2 + $0xc8] sm:$0xff]
  %v5775 = vld [vmem:[%s2 + $0xd0] sm:$0xff]
  %v5776 = vld [vmem:[%s2 + $0xd8] sm:$0xff]
  %v5777 = vld [vmem:[%s2 + $0xe0] sm:$0xff]
  %v5778 = vld [vmem:[%s2 + $0xe8] sm:$0xff]
  %v5779 = vld [vmem:[%s2 + $0xf0] sm:$0xff]
  %v5780 = vld [vmem:[%s2 + $0xf8] sm:$0xff]
  %v5781 = vld [vmem:[%s3] sm:$0xf]
  %v5783 = vperm.slane %v5781, 0
  %v5784 = vperm.slane %v5781, 1
  %v5785 = vperm.slane %v5781, 2
  %v5786 = vperm.slane %v5781, 3
  %v5823 = vunpack.c.l.b16 %v5749
  %v5824 = vunpack.c.h.b16 %v5749
  %v5825 = vunpack.c.l.b16 %v5750
  %v5826 = vunpack.c.h.b16 %v5750
  %v5827 = vunpack.c.l.b16 %v5751
  %v5828 = vunpack.c.h.b16 %v5751
  %v5829 = vunpack.c.l.b16 %v5752
  %v5830 = vunpack.c.h.b16 %v5752
  %v5831 = vunpack.c.l.b16 %v5753
  %v5832 = vunpack.c.h.b16 %v5753
  %v5833 = vunpack.c.l.b16 %v5754
  %v5834 = vunpack.c.h.b16 %v5754
  %v5835 = vunpack.c.l.b16 %v5755
  %v5836 = vunpack.c.h.b16 %v5755
  %v5837 = vunpack.c.l.b16 %v5756
  %v5838 = vunpack.c.h.b16 %v5756
  %v5839 = vunpack.c.l.b16 %v5757
  %v5840 = vunpack.c.h.b16 %v5757
  %v5841 = vunpack.c.l.b16 %v5758
  %v5842 = vunpack.c.h.b16 %v5758
  %v5843 = vunpack.c.l.b16 %v5759
  %v5844 = vunpack.c.h.b16 %v5759
  %v5845 = vunpack.c.l.b16 %v5760
  %v5846 = vunpack.c.h.b16 %v5760
  %v5847 = vunpack.c.l.b16 %v5761
  %v5848 = vunpack.c.h.b16 %v5761
  %v5849 = vunpack.c.l.b16 %v5762
  %v5850 = vunpack.c.h.b16 %v5762
  %v5851 = vunpack.c.l.b16 %v5763
  %v5852 = vunpack.c.h.b16 %v5763
  %v5853 = vunpack.c.l.b16 %v5764
  %v5854 = vunpack.c.h.b16 %v5764
  %v5855 = vunpack.c.l.b16 %v5765
  %v5856 = vunpack.c.h.b16 %v5765
  %v5857 = vunpack.c.l.b16 %v5766
  %v5858 = vunpack.c.h.b16 %v5766
  %v5859 = vunpack.c.l.b16 %v5767
  %v5860 = vunpack.c.h.b16 %v5767
  %v5861 = vunpack.c.l.b16 %v5768
  %v5862 = vunpack.c.h.b16 %v5768
  %v5863 = vunpack.c.l.b16 %v5769
  %v5864 = vunpack.c.h.b16 %v5769
  %v5865 = vunpack.c.l.b16 %v5770
  %v5866 = vunpack.c.h.b16 %v5770
  %v5867 = vunpack.c.l.b16 %v5771
  %v5868 = vunpack.c.h.b16 %v5771
  %v5869 = vunpack.c.l.b16 %v5772
  %v5870 = vunpack.c.h.b16 %v5772
  %v5871 = vunpack.c.l.b16 %v5773
  %v5872 = vunpack.c.h.b16 %v5773
  %v5873 = vunpack.c.l.b16 %v5774
  %v5874 = vunpack.c.h.b16 %v5774
  %v5875 = vunpack.c.l.b16 %v5775
  %v5876 = vunpack.c.h.b16 %v5775
  %v5877 = vunpack.c.l.b16 %v5776
  %v5878 = vunpack.c.h.b16 %v5776
  %v5879 = vunpack.c.l.b16 %v5777
  %v5880 = vunpack.c.h.b16 %v5777
  %v5881 = vunpack.c.l.b16 %v5778
  %v5882 = vunpack.c.h.b16 %v5778
  %v5883 = vunpack.c.l.b16 %v5779
  %v5884 = vunpack.c.h.b16 %v5779
  %v5885 = vunpack.c.l.b16 %v5780
  %v5886 = vunpack.c.h.b16 %v5780
  %v5887 = vpack.c.b16 %v5827, %v5823
  %v5888 = vpack.c.b16 %v5828, %v5824
  %v5889 = vpack.c.b16 %v5829, %v5825
  %v5890 = vpack.c.b16 %v5830, %v5826
  %v5891 = vpack.c.b16 %v5835, %v5831
  %v5892 = vpack.c.b16 %v5836, %v5832
  %v5893 = vpack.c.b16 %v5837, %v5833
  %v5894 = vpack.c.b16 %v5838, %v5834
  %v5895 = vpack.c.b16 %v5843, %v5839
  %v5896 = vpack.c.b16 %v5844, %v5840
  %v5897 = vpack.c.b16 %v5845, %v5841
  %v5898 = vpack.c.b16 %v5846, %v5842
  %v5899 = vpack.c.b16 %v5851, %v5847
  %v5900 = vpack.c.b16 %v5852, %v5848
  %v5901 = vpack.c.b16 %v5853, %v5849
  %v5902 = vpack.c.b16 %v5854, %v5850
  %v5903 = vpack.c.b16 %v5859, %v5855
  %v5904 = vpack.c.b16 %v5860, %v5856
  %v5905 = vpack.c.b16 %v5861, %v5857
  %v5906 = vpack.c.b16 %v5862, %v5858
  %v5907 = vpack.c.b16 %v5867, %v5863
  %v5908 = vpack.c.b16 %v5868, %v5864
  %v5909 = vpack.c.b16 %v5869, %v5865
  %v5910 = vpack.c.b16 %v5870, %v5866
  %v5911 = vpack.c.b16 %v5875, %v5871
  %v5912 = vpack.c.b16 %v5876, %v5872
  %v5913 = vpack.c.b16 %v5877, %v5873
  %v5914 = vpack.c.b16 %v5878, %v5874
  %v5915 = vpack.c.b16 %v5883, %v5879
  %v5916 = vpack.c.b16 %v5884, %v5880
  %v5917 = vpack.c.b16 %v5885, %v5881
  %v5918 = vpack.c.b16 %v5886, %v5882
  %5951 = vmatpush.bf16.msra.mxu0 %v5915
  %5952 = vmatpush.bf16.msra.mxu0 %v5911
  %5953 = vmatpush.bf16.msra.mxu0 %v5907
  %5954 = vmatpush.bf16.msra.mxu0 %v5903
  %5955 = vmatpush.bf16.msra.mxu0 %v5899
  %5956 = vmatpush.bf16.msra.mxu0 %v5895
  %5957 = vmatpush.bf16.msra.mxu0 %v5891
  %5958 = vmatpush.bf16.msra.mxu0 %v5887
  %5959 = vmatmul.bf16.gmra.mxu0 %v4938
  %v5960 = vpop.f32.mrf.mxu0
  %v5961 = vadd.f32 %v5783, %v5960
  %v5962 = vpop.f32.mrf.mxu0
  %5963 = vdwg.mxu0
  %5964 = vmatpush.bf16.msra.mxu0 %v5916
  %5965 = vmatpush.bf16.msra.mxu0 %v5912
  %5966 = vmatpush.bf16.msra.mxu0 %v5908
  %5967 = vmatpush.bf16.msra.mxu0 %v5904
  %5968 = vmatpush.bf16.msra.mxu0 %v5900
  %5969 = vmatpush.bf16.msra.mxu0 %v5896
  %5970 = vmatpush.bf16.msra.mxu0 %v5892
  %5971 = vmatpush.bf16.msra.mxu0 %v5888
  %5972 = vmatmul.bf16.gmra.mxu0 %v4938
  %v5973 = vpop.f32.mrf.mxu0
  %v5974 = vadd.f32 %v5784, %v5973
  %v5975 = vpop.f32.mrf.mxu0
  %5976 = vdwg.mxu0
  %5977 = vmatpush.bf16.msra.mxu0 %v5917
  %5978 = vmatpush.bf16.msra.mxu0 %v5913
  %5979 = vmatpush.bf16.msra.mxu0 %v5909
  %5980 = vmatpush.bf16.msra.mxu0 %v5905
  %5981 = vmatpush.bf16.msra.mxu0 %v5901
  %5982 = vmatpush.bf16.msra.mxu0 %v5897
  %5983 = vmatpush.bf16.msra.mxu0 %v5893
  %5984 = vmatpush.bf16.msra.mxu0 %v5889
  %5985 = vmatmul.bf16.gmra.mxu0 %v4938
  %v5986 = vpop.f32.mrf.mxu0
  %v5987 = vadd.f32 %v5785, %v5986
  %v5988 = vpop.f32.mrf.mxu0
  %5989 = vdwg.mxu0
  %5990 = vmatpush.bf16.msra.mxu0 %v5918
  %5991 = vmatpush.bf16.msra.mxu0 %v5914
  %5992 = vmatpush.bf16.msra.mxu0 %v5910
  %5993 = vmatpush.bf16.msra.mxu0 %v5906
  %5994 = vmatpush.bf16.msra.mxu0 %v5902
  %5995 = vmatpush.bf16.msra.mxu0 %v5898
  %5996 = vmatpush.bf16.msra.mxu0 %v5894
  %5997 = vmatpush.bf16.msra.mxu0 %v5890
  %5998 = vmatmul.bf16.gmra.mxu0 %v4938
  %v5999 = vpop.f32.mrf.mxu0
  %v6000 = vadd.f32 %v5786, %v5999
  %v6001 = vpop.f32.mrf.mxu0
  %6002 = vdwg.mxu0
  %v6003 = vxor.u32 %v5961, 2147483648
  %v6004 = vmul.f32 %v6003, 1.442695
  %v6005 = vpow.pop %v6004
  %v6006 = vadd.f32 %v6005, 1.0
  %v6007 = vrcp.pop %v6006
  %v6008 = vmul.f32 %v6006, %v6007
  %v6009 = vsub.f32 1.0, %v6008
  %v6010 = vmul.f32 %v6007, %v6009
  %v6011 = vadd.f32 %v6007, %v6010
  %vm6012 = vweird.f32 %v6006
  %vm6013 = vweird.f32 %v6007
  %vm6014 = vmor %vm6012, %vm6013
  %v6015 = vsel %vm6014, %v6007, %v6011
  %v6016 = vand.u32 2147483647, %v6006
  %vm6017 = vcmp.eq.f32.partialorder %v6016, 8.507059e+37
  %v6018 = vand.u32 %v6006, 2147483648
  %v6019 = vor.u32 1.1754944e-38, %v6018
  %v6020 = vsel %vm6017, %v6019, %v6015
  %v6021 = vmul.f32 1.0, %v6020
  %v6022 = vxor.u32 %v5974, 2147483648
  %v6023 = vmul.f32 %v6022, 1.442695
  %v6024 = vpow.pop %v6023
  %v6025 = vadd.f32 %v6024, 1.0
  %v6026 = vrcp.pop %v6025
  %v6027 = vmul.f32 %v6025, %v6026
  %v6028 = vsub.f32 1.0, %v6027
  %v6029 = vmul.f32 %v6026, %v6028
  %v6030 = vadd.f32 %v6026, %v6029
  %vm6031 = vweird.f32 %v6025
  %vm6032 = vweird.f32 %v6026
  %vm6033 = vmor %vm6031, %vm6032
  %v6034 = vsel %vm6033, %v6026, %v6030
  %v6035 = vand.u32 2147483647, %v6025
  %vm6036 = vcmp.eq.f32.partialorder %v6035, 8.507059e+37
  %v6037 = vand.u32 %v6025, 2147483648
  %v6038 = vor.u32 1.1754944e-38, %v6037
  %v6039 = vsel %vm6036, %v6038, %v6034
  %v6040 = vmul.f32 1.0, %v6039
  %v6041 = vtanh.pop %v5987
  %v6042 = vxor.u32 %v6000, 2147483648
  %v6043 = vmul.f32 %v6042, 1.442695
  %v6044 = vpow.pop %v6043
  %v6045 = vadd.f32 %v6044, 1.0
  %v6046 = vrcp.pop %v6045
  %v6047 = vmul.f32 %v6045, %v6046
  %v6048 = vsub.f32 1.0, %v6047
  %v6049 = vmul.f32 %v6046, %v6048
  %v6050 = vadd.f32 %v6046, %v6049
  %vm6051 = vweird.f32 %v6045
  %vm6052 = vweird.f32 %v6046
  %vm6053 = vmor %vm6051, %vm6052
  %v6054 = vsel %vm6053, %v6046, %v6050
  %v6055 = vand.u32 2147483647, %v6045
  %vm6056 = vcmp.eq.f32.partialorder %v6055, 8.507059e+37
  %v6057 = vand.u32 %v6045, 2147483648
  %v6058 = vor.u32 1.1754944e-38, %v6057
  %v6059 = vsel %vm6056, %v6058, %v6054
  %v6060 = vmul.f32 1.0, %v6059
  %v6061 = vmul.f32 %v6040, %v4935
  %v6062 = vmul.f32 %v6021, %v6041
  %v6063 = vadd.f32 %v6061, %v6062
  %v6064 = vtanh.pop %v6063
  %v6065 = vmul.f32 %v6060, %v6064
  %v6066 = vpack.c.bf16 %v6065, %v6065
  %s6067 = scalar_lea.vmem %s1, 8
  %v6068 = vld [vmem:[%s6067] sm:$0xf]
  %v6069 = vld [vmem:[%s4] sm:$0xff]
  %v6070 = vld [vmem:[%s4 + $0x8] sm:$0xff]
  %v6071 = vld [vmem:[%s4 + $0x10] sm:$0xff]
  %v6072 = vld [vmem:[%s4 + $0x18] sm:$0xff]
  %v6073 = vld [vmem:[%s4 + $0x20] sm:$0xff]
  %v6074 = vld [vmem:[%s4 + $0x28] sm:$0xff]
  %v6075 = vld [vmem:[%s4 + $0x30] sm:$0xff]
  %v6076 = vld [vmem:[%s4 + $0x38] sm:$0xff]
  %v6077 = vld [vmem:[%s4 + $0x40] sm:$0xff]
  %v6078 = vld [vmem:[%s4 + $0x48] sm:$0xff]
  %v6079 = vld [vmem:[%s4 + $0x50] sm:$0xff]
  %v6080 = vld [vmem:[%s4 + $0x58] sm:$0xff]
  %v6081 = vld [vmem:[%s4 + $0x60] sm:$0xff]
  %v6082 = vld [vmem:[%s4 + $0x68] sm:$0xff]
  %v6083 = vld [vmem:[%s4 + $0x70] sm:$0xff]
  %v6084 = vld [vmem:[%s4 + $0x78] sm:$0xff]
  %v6085 = vld [vmem:[%s4 + $0x80] sm:$0xff]
  %v6086 = vld [vmem:[%s4 + $0x88] sm:$0xff]
  %v6087 = vld [vmem:[%s4 + $0x90] sm:$0xff]
  %v6088 = vld [vmem:[%s4 + $0x98] sm:$0xff]
  %v6089 = vld [vmem:[%s4 + $0xa0] sm:$0xff]
  %v6090 = vld [vmem:[%s4 + $0xa8] sm:$0xff]
  %v6091 = vld [vmem:[%s4 + $0xb0] sm:$0xff]
  %v6092 = vld [vmem:[%s4 + $0xb8] sm:$0xff]
  %v6093 = vld [vmem:[%s4 + $0xc0] sm:$0xff]
  %v6094 = vld [vmem:[%s4 + $0xc8] sm:$0xff]
  %v6095 = vld [vmem:[%s4 + $0xd0] sm:$0xff]
  %v6096 = vld [vmem:[%s4 + $0xd8] sm:$0xff]
  %v6097 = vld [vmem:[%s4 + $0xe0] sm:$0xff]
  %v6098 = vld [vmem:[%s4 + $0xe8] sm:$0xff]
  %v6099 = vld [vmem:[%s4 + $0xf0] sm:$0xff]
  %v6100 = vld [vmem:[%s4 + $0xf8] sm:$0xff]
  %v6101 = vld [vmem:[%s4 + $0x100] sm:$0xff]
  %v6102 = vld [vmem:[%s4 + $0x108] sm:$0xff]
  %v6103 = vld [vmem:[%s4 + $0x110] sm:$0xff]
  %v6104 = vld [vmem:[%s4 + $0x118] sm:$0xff]
  %v6105 = vld [vmem:[%s4 + $0x120] sm:$0xff]
  %v6106 = vld [vmem:[%s4 + $0x128] sm:$0xff]
  %v6107 = vld [vmem:[%s4 + $0x130] sm:$0xff]
  %v6108 = vld [vmem:[%s4 + $0x138] sm:$0xff]
  %v6109 = vld [vmem:[%s4 + $0x140] sm:$0xff]
  %v6110 = vld [vmem:[%s4 + $0x148] sm:$0xff]
  %v6111 = vld [vmem:[%s4 + $0x150] sm:$0xff]
  %v6112 = vld [vmem:[%s4 + $0x158] sm:$0xff]
  %v6113 = vld [vmem:[%s4 + $0x160] sm:$0xff]
  %v6114 = vld [vmem:[%s4 + $0x168] sm:$0xff]
  %v6115 = vld [vmem:[%s4 + $0x170] sm:$0xff]
  %v6116 = vld [vmem:[%s4 + $0x178] sm:$0xff]
  %v6117 = vld [vmem:[%s4 + $0x180] sm:$0xff]
  %v6118 = vld [vmem:[%s4 + $0x188] sm:$0xff]
  %v6119 = vld [vmem:[%s4 + $0x190] sm:$0xff]
  %v6120 = vld [vmem:[%s4 + $0x198] sm:$0xff]
  %v6121 = vld [vmem:[%s4 + $0x1a0] sm:$0xff]
  %v6122 = vld [vmem:[%s4 + $0x1a8] sm:$0xff]
  %v6123 = vld [vmem:[%s4 + $0x1b0] sm:$0xff]
  %v6124 = vld [vmem:[%s4 + $0x1b8] sm:$0xff]
  %v6125 = vld [vmem:[%s4 + $0x1c0] sm:$0xff]
  %v6126 = vld [vmem:[%s4 + $0x1c8] sm:$0xff]
  %v6127 = vld [vmem:[%s4 + $0x1d0] sm:$0xff]
  %v6128 = vld [vmem:[%s4 + $0x1d8] sm:$0xff]
  %v6129 = vld [vmem:[%s4 + $0x1e0] sm:$0xff]
  %v6130 = vld [vmem:[%s4 + $0x1e8] sm:$0xff]
  %v6131 = vld [vmem:[%s4 + $0x1f0] sm:$0xff]
  %v6132 = vld [vmem:[%s4 + $0x1f8] sm:$0xff]
  %v6133 = vld [vmem:[%s4 + $0x200] sm:$0xff]
  %v6134 = vld [vmem:[%s4 + $0x208] sm:$0xff]
  %v6135 = vld [vmem:[%s4 + $0x210] sm:$0xff]
  %v6136 = vld [vmem:[%s4 + $0x218] sm:$0xff]
  %v6137 = vld [vmem:[%s4 + $0x220] sm:$0xff]
  %v6138 = vld [vmem:[%s4 + $0x228] sm:$0xff]
  %v6139 = vld [vmem:[%s4 + $0x230] sm:$0xff]
  %v6140 = vld [vmem:[%s4 + $0x238] sm:$0xff]
  %v6141 = vld [vmem:[%s4 + $0x240] sm:$0xff]
  %v6142 = vld [vmem:[%s4 + $0x248] sm:$0xff]
  %v6143 = vld [vmem:[%s4 + $0x250] sm:$0xff]
  %v6144 = vld [vmem:[%s4 + $0x258] sm:$0xff]
  %v6145 = vld [vmem:[%s4 + $0x260] sm:$0xff]
  %v6146 = vld [vmem:[%s4 + $0x268] sm:$0xff]
  %v6147 = vld [vmem:[%s4 + $0x270] sm:$0xff]
  %v6148 = vld [vmem:[%s4 + $0x278] sm:$0xff]
  %v6149 = vld [vmem:[%s4 + $0x280] sm:$0xff]
  %v6150 = vld [vmem:[%s4 + $0x288] sm:$0xff]
  %v6151 = vld [vmem:[%s4 + $0x290] sm:$0xff]
  %v6152 = vld [vmem:[%s4 + $0x298] sm:$0xff]
  %v6153 = vld [vmem:[%s4 + $0x2a0] sm:$0xff]
  %v6154 = vld [vmem:[%s4 + $0x2a8] sm:$0xff]
  %v6155 = vld [vmem:[%s4 + $0x2b0] sm:$0xff]
  %v6156 = vld [vmem:[%s4 + $0x2b8] sm:$0xff]
  %v6157 = vld [vmem:[%s4 + $0x2c0] sm:$0xff]
  %v6158 = vld [vmem:[%s4 + $0x2c8] sm:$0xff]
  %v6159 = vld [vmem:[%s4 + $0x2d0] sm:$0xff]
  %v6160 = vld [vmem:[%s4 + $0x2d8] sm:$0xff]
  %v6161 = vld [vmem:[%s4 + $0x2e0] sm:$0xff]
  %v6162 = vld [vmem:[%s4 + $0x2e8] sm:$0xff]
  %v6163 = vld [vmem:[%s4 + $0x2f0] sm:$0xff]
  %v6164 = vld [vmem:[%s4 + $0x2f8] sm:$0xff]
  %v6165 = vld [vmem:[%s5] sm:$0xf]
  %v6167 = vperm.slane %v6165, 0
  %v6168 = vperm.slane %v6165, 1
  %v6169 = vperm.slane %v6165, 2
  %v6170 = vperm.slane %v6165, 3
  %v6271 = vunpack.c.l.b16 %v6069
  %v6272 = vunpack.c.h.b16 %v6069
  %v6273 = vunpack.c.l.b16 %v6070
  %v6274 = vunpack.c.h.b16 %v6070
  %v6275 = vunpack.c.l.b16 %v6071
  %v6276 = vunpack.c.h.b16 %v6071
  %v6277 = vunpack.c.l.b16 %v6072
  %v6278 = vunpack.c.h.b16 %v6072
  %v6279 = vunpack.c.l.b16 %v6073
  %v6280 = vunpack.c.h.b16 %v6073
  %v6281 = vunpack.c.l.b16 %v6074
  %v6282 = vunpack.c.h.b16 %v6074
  %v6283 = vunpack.c.l.b16 %v6075
  %v6284 = vunpack.c.h.b16 %v6075
  %v6285 = vunpack.c.l.b16 %v6076
  %v6286 = vunpack.c.h.b16 %v6076
  %v6287 = vunpack.c.l.b16 %v6077
  %v6288 = vunpack.c.h.b16 %v6077
  %v6289 = vunpack.c.l.b16 %v6078
  %v6290 = vunpack.c.h.b16 %v6078
  %v6291 = vunpack.c.l.b16 %v6079
  %v6292 = vunpack.c.h.b16 %v6079
  %v6293 = vunpack.c.l.b16 %v6080
  %v6294 = vunpack.c.h.b16 %v6080
  %v6295 = vunpack.c.l.b16 %v6081
  %v6296 = vunpack.c.h.b16 %v6081
  %v6297 = vunpack.c.l.b16 %v6082
  %v6298 = vunpack.c.h.b16 %v6082
  %v6299 = vunpack.c.l.b16 %v6083
  %v6300 = vunpack.c.h.b16 %v6083
  %v6301 = vunpack.c.l.b16 %v6084
  %v6302 = vunpack.c.h.b16 %v6084
  %v6303 = vunpack.c.l.b16 %v6085
  %v6304 = vunpack.c.h.b16 %v6085
  %v6305 = vunpack.c.l.b16 %v6086
  %v6306 = vunpack.c.h.b16 %v6086
  %v6307 = vunpack.c.l.b16 %v6087
  %v6308 = vunpack.c.h.b16 %v6087
  %v6309 = vunpack.c.l.b16 %v6088
  %v6310 = vunpack.c.h.b16 %v6088
  %v6311 = vunpack.c.l.b16 %v6089
  %v6312 = vunpack.c.h.b16 %v6089
  %v6313 = vunpack.c.l.b16 %v6090
  %v6314 = vunpack.c.h.b16 %v6090
  %v6315 = vunpack.c.l.b16 %v6091
  %v6316 = vunpack.c.h.b16 %v6091
  %v6317 = vunpack.c.l.b16 %v6092
  %v6318 = vunpack.c.h.b16 %v6092
  %v6319 = vunpack.c.l.b16 %v6093
  %v6320 = vunpack.c.h.b16 %v6093
  %v6321 = vunpack.c.l.b16 %v6094
  %v6322 = vunpack.c.h.b16 %v6094
  %v6323 = vunpack.c.l.b16 %v6095
  %v6324 = vunpack.c.h.b16 %v6095
  %v6325 = vunpack.c.l.b16 %v6096
  %v6326 = vunpack.c.h.b16 %v6096
  %v6327 = vunpack.c.l.b16 %v6097
  %v6328 = vunpack.c.h.b16 %v6097
  %v6329 = vunpack.c.l.b16 %v6098
  %v6330 = vunpack.c.h.b16 %v6098
  %v6331 = vunpack.c.l.b16 %v6099
  %v6332 = vunpack.c.h.b16 %v6099
  %v6333 = vunpack.c.l.b16 %v6100
  %v6334 = vunpack.c.h.b16 %v6100
  %v6335 = vunpack.c.l.b16 %v6101
  %v6336 = vunpack.c.h.b16 %v6101
  %v6337 = vunpack.c.l.b16 %v6102
  %v6338 = vunpack.c.h.b16 %v6102
  %v6339 = vunpack.c.l.b16 %v6103
  %v6340 = vunpack.c.h.b16 %v6103
  %v6341 = vunpack.c.l.b16 %v6104
  %v6342 = vunpack.c.h.b16 %v6104
  %v6343 = vunpack.c.l.b16 %v6105
  %v6344 = vunpack.c.h.b16 %v6105
  %v6345 = vunpack.c.l.b16 %v6106
  %v6346 = vunpack.c.h.b16 %v6106
  %v6347 = vunpack.c.l.b16 %v6107
  %v6348 = vunpack.c.h.b16 %v6107
  %v6349 = vunpack.c.l.b16 %v6108
  %v6350 = vunpack.c.h.b16 %v6108
  %v6351 = vunpack.c.l.b16 %v6109
  %v6352 = vunpack.c.h.b16 %v6109
  %v6353 = vunpack.c.l.b16 %v6110
  %v6354 = vunpack.c.h.b16 %v6110
  %v6355 = vunpack.c.l.b16 %v6111
  %v6356 = vunpack.c.h.b16 %v6111
  %v6357 = vunpack.c.l.b16 %v6112
  %v6358 = vunpack.c.h.b16 %v6112
  %v6359 = vunpack.c.l.b16 %v6113
  %v6360 = vunpack.c.h.b16 %v6113
  %v6361 = vunpack.c.l.b16 %v6114
  %v6362 = vunpack.c.h.b16 %v6114
  %v6363 = vunpack.c.l.b16 %v6115
  %v6364 = vunpack.c.h.b16 %v6115
  %v6365 = vunpack.c.l.b16 %v6116
  %v6366 = vunpack.c.h.b16 %v6116
  %v6367 = vunpack.c.l.b16 %v6117
  %v6368 = vunpack.c.h.b16 %v6117
  %v6369 = vunpack.c.l.b16 %v6118
  %v6370 = vunpack.c.h.b16 %v6118
  %v6371 = vunpack.c.l.b16 %v6119
  %v6372 = vunpack.c.h.b16 %v6119
  %v6373 = vunpack.c.l.b16 %v6120
  %v6374 = vunpack.c.h.b16 %v6120
  %v6375 = vunpack.c.l.b16 %v6121
  %v6376 = vunpack.c.h.b16 %v6121
  %v6377 = vunpack.c.l.b16 %v6122
  %v6378 = vunpack.c.h.b16 %v6122
  %v6379 = vunpack.c.l.b16 %v6123
  %v6380 = vunpack.c.h.b16 %v6123
  %v6381 = vunpack.c.l.b16 %v6124
  %v6382 = vunpack.c.h.b16 %v6124
  %v6383 = vunpack.c.l.b16 %v6125
  %v6384 = vunpack.c.h.b16 %v6125
  %v6385 = vunpack.c.l.b16 %v6126
  %v6386 = vunpack.c.h.b16 %v6126
  %v6387 = vunpack.c.l.b16 %v6127
  %v6388 = vunpack.c.h.b16 %v6127
  %v6389 = vunpack.c.l.b16 %v6128
  %v6390 = vunpack.c.h.b16 %v6128
  %v6391 = vunpack.c.l.b16 %v6129
  %v6392 = vunpack.c.h.b16 %v6129
  %v6393 = vunpack.c.l.b16 %v6130
  %v6394 = vunpack.c.h.b16 %v6130
  %v6395 = vunpack.c.l.b16 %v6131
  %v6396 = vunpack.c.h.b16 %v6131
  %v6397 = vunpack.c.l.b16 %v6132
  %v6398 = vunpack.c.h.b16 %v6132
  %v6399 = vunpack.c.l.b16 %v6133
  %v6400 = vunpack.c.h.b16 %v6133
  %v6401 = vunpack.c.l.b16 %v6134
  %v6402 = vunpack.c.h.b16 %v6134
  %v6403 = vunpack.c.l.b16 %v6135
  %v6404 = vunpack.c.h.b16 %v6135
  %v6405 = vunpack.c.l.b16 %v6136
  %v6406 = vunpack.c.h.b16 %v6136
  %v6407 = vunpack.c.l.b16 %v6137
  %v6408 = vunpack.c.h.b16 %v6137
  %v6409 = vunpack.c.l.b16 %v6138
  %v6410 = vunpack.c.h.b16 %v6138
  %v6411 = vunpack.c.l.b16 %v6139
  %v6412 = vunpack.c.h.b16 %v6139
  %v6413 = vunpack.c.l.b16 %v6140
  %v6414 = vunpack.c.h.b16 %v6140
  %v6415 = vunpack.c.l.b16 %v6141
  %v6416 = vunpack.c.h.b16 %v6141
  %v6417 = vunpack.c.l.b16 %v6142
  %v6418 = vunpack.c.h.b16 %v6142
  %v6419 = vunpack.c.l.b16 %v6143
  %v6420 = vunpack.c.h.b16 %v6143
  %v6421 = vunpack.c.l.b16 %v6144
  %v6422 = vunpack.c.h.b16 %v6144
  %v6423 = vunpack.c.l.b16 %v6145
  %v6424 = vunpack.c.h.b16 %v6145
  %v6425 = vunpack.c.l.b16 %v6146
  %v6426 = vunpack.c.h.b16 %v6146
  %v6427 = vunpack.c.l.b16 %v6147
  %v6428 = vunpack.c.h.b16 %v6147
  %v6429 = vunpack.c.l.b16 %v6148
  %v6430 = vunpack.c.h.b16 %v6148
  %v6431 = vunpack.c.l.b16 %v6149
  %v6432 = vunpack.c.h.b16 %v6149
  %v6433 = vunpack.c.l.b16 %v6150
  %v6434 = vunpack.c.h.b16 %v6150
  %v6435 = vunpack.c.l.b16 %v6151
  %v6436 = vunpack.c.h.b16 %v6151
  %v6437 = vunpack.c.l.b16 %v6152
  %v6438 = vunpack.c.h.b16 %v6152
  %v6439 = vunpack.c.l.b16 %v6153
  %v6440 = vunpack.c.h.b16 %v6153
  %v6441 = vunpack.c.l.b16 %v6154
  %v6442 = vunpack.c.h.b16 %v6154
  %v6443 = vunpack.c.l.b16 %v6155
  %v6444 = vunpack.c.h.b16 %v6155
  %v6445 = vunpack.c.l.b16 %v6156
  %v6446 = vunpack.c.h.b16 %v6156
  %v6447 = vunpack.c.l.b16 %v6157
  %v6448 = vunpack.c.h.b16 %v6157
  %v6449 = vunpack.c.l.b16 %v6158
  %v6450 = vunpack.c.h.b16 %v6158
  %v6451 = vunpack.c.l.b16 %v6159
  %v6452 = vunpack.c.h.b16 %v6159
  %v6453 = vunpack.c.l.b16 %v6160
  %v6454 = vunpack.c.h.b16 %v6160
  %v6455 = vunpack.c.l.b16 %v6161
  %v6456 = vunpack.c.h.b16 %v6161
  %v6457 = vunpack.c.l.b16 %v6162
  %v6458 = vunpack.c.h.b16 %v6162
  %v6459 = vunpack.c.l.b16 %v6163
  %v6460 = vunpack.c.h.b16 %v6163
  %v6461 = vunpack.c.l.b16 %v6164
  %v6462 = vunpack.c.h.b16 %v6164
  %v6463 = vpack.c.b16 %v6275, %v6271
  %v6464 = vpack.c.b16 %v6276, %v6272
  %v6465 = vpack.c.b16 %v6277, %v6273
  %v6466 = vpack.c.b16 %v6278, %v6274
  %v6467 = vpack.c.b16 %v6283, %v6279
  %v6468 = vpack.c.b16 %v6284, %v6280
  %v6469 = vpack.c.b16 %v6285, %v6281
  %v6470 = vpack.c.b16 %v6286, %v6282
  %v6471 = vpack.c.b16 %v6291, %v6287
  %v6472 = vpack.c.b16 %v6292, %v6288
  %v6473 = vpack.c.b16 %v6293, %v6289
  %v6474 = vpack.c.b16 %v6294, %v6290
  %v6475 = vpack.c.b16 %v6299, %v6295
  %v6476 = vpack.c.b16 %v6300, %v6296
  %v6477 = vpack.c.b16 %v6301, %v6297
  %v6478 = vpack.c.b16 %v6302, %v6298
  %v6479 = vpack.c.b16 %v6307, %v6303
  %v6480 = vpack.c.b16 %v6308, %v6304
  %v6481 = vpack.c.b16 %v6309, %v6305
  %v6482 = vpack.c.b16 %v6310, %v6306
  %v6483 = vpack.c.b16 %v6315, %v6311
  %v6484 = vpack.c.b16 %v6316, %v6312
  %v6485 = vpack.c.b16 %v6317, %v6313
  %v6486 = vpack.c.b16 %v6318, %v6314
  %v6487 = vpack.c.b16 %v6323, %v6319
  %v6488 = vpack.c.b16 %v6324, %v6320
  %v6489 = vpack.c.b16 %v6325, %v6321
  %v6490 = vpack.c.b16 %v6326, %v6322
  %v6491 = vpack.c.b16 %v6331, %v6327
  %v6492 = vpack.c.b16 %v6332, %v6328
  %v6493 = vpack.c.b16 %v6333, %v6329
  %v6494 = vpack.c.b16 %v6334, %v6330
  %v6495 = vpack.c.b16 %v6339, %v6335
  %v6496 = vpack.c.b16 %v6340, %v6336
  %v6497 = vpack.c.b16 %v6341, %v6337
  %v6498 = vpack.c.b16 %v6342, %v6338
  %v6499 = vpack.c.b16 %v6347, %v6343
  %v6500 = vpack.c.b16 %v6348, %v6344
  %v6501 = vpack.c.b16 %v6349, %v6345
  %v6502 = vpack.c.b16 %v6350, %v6346
  %v6503 = vpack.c.b16 %v6355, %v6351
  %v6504 = vpack.c.b16 %v6356, %v6352
  %v6505 = vpack.c.b16 %v6357, %v6353
  %v6506 = vpack.c.b16 %v6358, %v6354
  %v6507 = vpack.c.b16 %v6363, %v6359
  %v6508 = vpack.c.b16 %v6364, %v6360
  %v6509 = vpack.c.b16 %v6365, %v6361
  %v6510 = vpack.c.b16 %v6366, %v6362
  %v6511 = vpack.c.b16 %v6371, %v6367
  %v6512 = vpack.c.b16 %v6372, %v6368
  %v6513 = vpack.c.b16 %v6373, %v6369
  %v6514 = vpack.c.b16 %v6374, %v6370
  %v6515 = vpack.c.b16 %v6379, %v6375
  %v6516 = vpack.c.b16 %v6380, %v6376
  %v6517 = vpack.c.b16 %v6381, %v6377
  %v6518 = vpack.c.b16 %v6382, %v6378
  %v6519 = vpack.c.b16 %v6387, %v6383
  %v6520 = vpack.c.b16 %v6388, %v6384
  %v6521 = vpack.c.b16 %v6389, %v6385
  %v6522 = vpack.c.b16 %v6390, %v6386
  %v6523 = vpack.c.b16 %v6395, %v6391
  %v6524 = vpack.c.b16 %v6396, %v6392
  %v6525 = vpack.c.b16 %v6397, %v6393
  %v6526 = vpack.c.b16 %v6398, %v6394
  %v6527 = vpack.c.b16 %v6403, %v6399
  %v6528 = vpack.c.b16 %v6404, %v6400
  %v6529 = vpack.c.b16 %v6405, %v6401
  %v6530 = vpack.c.b16 %v6406, %v6402
  %v6531 = vpack.c.b16 %v6411, %v6407
  %v6532 = vpack.c.b16 %v6412, %v6408
  %v6533 = vpack.c.b16 %v6413, %v6409
  %v6534 = vpack.c.b16 %v6414, %v6410
  %v6535 = vpack.c.b16 %v6419, %v6415
  %v6536 = vpack.c.b16 %v6420, %v6416
  %v6537 = vpack.c.b16 %v6421, %v6417
  %v6538 = vpack.c.b16 %v6422, %v6418
  %v6539 = vpack.c.b16 %v6427, %v6423
  %v6540 = vpack.c.b16 %v6428, %v6424
  %v6541 = vpack.c.b16 %v6429, %v6425
  %v6542 = vpack.c.b16 %v6430, %v6426
  %v6543 = vpack.c.b16 %v6435, %v6431
  %v6544 = vpack.c.b16 %v6436, %v6432
  %v6545 = vpack.c.b16 %v6437, %v6433
  %v6546 = vpack.c.b16 %v6438, %v6434
  %v6547 = vpack.c.b16 %v6443, %v6439
  %v6548 = vpack.c.b16 %v6444, %v6440
  %v6549 = vpack.c.b16 %v6445, %v6441
  %v6550 = vpack.c.b16 %v6446, %v6442
  %v6551 = vpack.c.b16 %v6451, %v6447
  %v6552 = vpack.c.b16 %v6452, %v6448
  %v6553 = vpack.c.b16 %v6453, %v6449
  %v6554 = vpack.c.b16 %v6454, %v6450
  %v6555 = vpack.c.b16 %v6459, %v6455
  %v6556 = vpack.c.b16 %v6460, %v6456
  %v6557 = vpack.c.b16 %v6461, %v6457
  %v6558 = vpack.c.b16 %v6462, %v6458
  %6655 = vmatpush.bf16.msra.mxu0 %v6491
  %6656 = vmatpush.bf16.msra.mxu0 %v6487
  %6657 = vmatpush.bf16.msra.mxu0 %v6483
  %6658 = vmatpush.bf16.msra.mxu0 %v6479
  %6659 = vmatpush.bf16.msra.mxu0 %v6475
  %6660 = vmatpush.bf16.msra.mxu0 %v6471
  %6661 = vmatpush.bf16.msra.mxu0 %v6467
  %6662 = vmatpush.bf16.msra.mxu0 %v6463
  %6663 = vmatmul.bf16.gmra.mxu0 %v6066
  %v6664 = vpop.f32.mrf.mxu0
  %v6665 = vadd.f32 %v6167, %v6664
  %v6666 = vpop.f32.mrf.mxu0
  %6667 = vdwg.mxu0
  %6668 = vmatpush.bf16.msra.mxu0 %v6523
  %6669 = vmatpush.bf16.msra.mxu0 %v6519
  %6670 = vmatpush.bf16.msra.mxu0 %v6515
  %6671 = vmatpush.bf16.msra.mxu0 %v6511
  %6672 = vmatpush.bf16.msra.mxu0 %v6507
  %6673 = vmatpush.bf16.msra.mxu0 %v6503
  %6674 = vmatpush.bf16.msra.mxu0 %v6499
  %6675 = vmatpush.bf16.msra.mxu0 %v6495
  %6676 = vmatmul.bf16.gmra.mxu0 %v5746
  %v6677 = vpop.f32.mrf.mxu0
  %v6678 = vadd.f32 %v6665, %v6677
  %v6679 = vpop.f32.mrf.mxu0
  %6680 = vdwg.mxu0
  %6681 = vmatpush.bf16.msra.mxu0 %v6555
  %6682 = vmatpush.bf16.msra.mxu0 %v6551
  %6683 = vmatpush.bf16.msra.mxu0 %v6547
  %6684 = vmatpush.bf16.msra.mxu0 %v6543
  %6685 = vmatpush.bf16.msra.mxu0 %v6539
  %6686 = vmatpush.bf16.msra.mxu0 %v6535
  %6687 = vmatpush.bf16.msra.mxu0 %v6531
  %6688 = vmatpush.bf16.msra.mxu0 %v6527
  %6689 = vmatmul.bf16.gmra.mxu0 %v6068
  %v6690 = vpop.f32.mrf.mxu0
  %v6691 = vadd.f32 %v6678, %v6690
  %v6692 = vpop.f32.mrf.mxu0
  %6693 = vdwg.mxu0
  %6694 = vmatpush.bf16.msra.mxu0 %v6492
  %6695 = vmatpush.bf16.msra.mxu0 %v6488
  %6696 = vmatpush.bf16.msra.mxu0 %v6484
  %6697 = vmatpush.bf16.msra.mxu0 %v6480
  %6698 = vmatpush.bf16.msra.mxu0 %v6476
  %6699 = vmatpush.bf16.msra.mxu0 %v6472
  %6700 = vmatpush.bf16.msra.mxu0 %v6468
  %6701 = vmatpush.bf16.msra.mxu0 %v6464
  %6702 = vmatmul.bf16.gmra.mxu0 %v6066
  %v6703 = vpop.f32.mrf.mxu0
  %v6704 = vadd.f32 %v6168, %v6703
  %v6705 = vpop.f32.mrf.mxu0
  %6706 = vdwg.mxu0
  %6707 = vmatpush.bf16.msra.mxu0 %v6524
  %6708 = vmatpush.bf16.msra.mxu0 %v6520
  %6709 = vmatpush.bf16.msra.mxu0 %v6516
  %6710 = vmatpush.bf16.msra.mxu0 %v6512
  %6711 = vmatpush.bf16.msra.mxu0 %v6508
  %6712 = vmatpush.bf16.msra.mxu0 %v6504
  %6713 = vmatpush.bf16.msra.mxu0 %v6500
  %6714 = vmatpush.bf16.msra.mxu0 %v6496
  %6715 = vmatmul.bf16.gmra.mxu0 %v5746
  %v6716 = vpop.f32.mrf.mxu0
  %v6717 = vadd.f32 %v6704, %v6716
  %v6718 = vpop.f32.mrf.mxu0
  %6719 = vdwg.mxu0
  %6720 = vmatpush.bf16.msra.mxu0 %v6556
  %6721 = vmatpush.bf16.msra.mxu0 %v6552
  %6722 = vmatpush.bf16.msra.mxu0 %v6548
  %6723 = vmatpush.bf16.msra.mxu0 %v6544
  %6724 = vmatpush.bf16.msra.mxu0 %v6540
  %6725 = vmatpush.bf16.msra.mxu0 %v6536
  %6726 = vmatpush.bf16.msra.mxu0 %v6532
  %6727 = vmatpush.bf16.msra.mxu0 %v6528
  %6728 = vmatmul.bf16.gmra.mxu0 %v6068
  %v6729 = vpop.f32.mrf.mxu0
  %v6730 = vadd.f32 %v6717, %v6729
  %v6731 = vpop.f32.mrf.mxu0
  %6732 = vdwg.mxu0
  %6733 = vmatpush.bf16.msra.mxu0 %v6493
  %6734 = vmatpush.bf16.msra.mxu0 %v6489
  %6735 = vmatpush.bf16.msra.mxu0 %v6485
  %6736 = vmatpush.bf16.msra.mxu0 %v6481
  %6737 = vmatpush.bf16.msra.mxu0 %v6477
  %6738 = vmatpush.bf16.msra.mxu0 %v6473
  %6739 = vmatpush.bf16.msra.mxu0 %v6469
  %6740 = vmatpush.bf16.msra.mxu0 %v6465
  %6741 = vmatmul.bf16.gmra.mxu0 %v6066
  %v6742 = vpop.f32.mrf.mxu0
  %v6743 = vadd.f32 %v6169, %v6742
  %v6744 = vpop.f32.mrf.mxu0
  %6745 = vdwg.mxu0
  %6746 = vmatpush.bf16.msra.mxu0 %v6525
  %6747 = vmatpush.bf16.msra.mxu0 %v6521
  %6748 = vmatpush.bf16.msra.mxu0 %v6517
  %6749 = vmatpush.bf16.msra.mxu0 %v6513
  %6750 = vmatpush.bf16.msra.mxu0 %v6509
  %6751 = vmatpush.bf16.msra.mxu0 %v6505
  %6752 = vmatpush.bf16.msra.mxu0 %v6501
  %6753 = vmatpush.bf16.msra.mxu0 %v6497
  %6754 = vmatmul.bf16.gmra.mxu0 %v5746
  %v6755 = vpop.f32.mrf.mxu0
  %v6756 = vadd.f32 %v6743, %v6755
  %v6757 = vpop.f32.mrf.mxu0
  %6758 = vdwg.mxu0
  %6759 = vmatpush.bf16.msra.mxu0 %v6557
  %6760 = vmatpush.bf16.msra.mxu0 %v6553
  %6761 = vmatpush.bf16.msra.mxu0 %v6549
  %6762 = vmatpush.bf16.msra.mxu0 %v6545
  %6763 = vmatpush.bf16.msra.mxu0 %v6541
  %6764 = vmatpush.bf16.msra.mxu0 %v6537
  %6765 = vmatpush.bf16.msra.mxu0 %v6533
  %6766 = vmatpush.bf16.msra.mxu0 %v6529
  %6767 = vmatmul.bf16.gmra.mxu0 %v6068
  %v6768 = vpop.f32.mrf.mxu0
  %v6769 = vadd.f32 %v6756, %v6768
  %v6770 = vpop.f32.mrf.mxu0
  %6771 = vdwg.mxu0
  %6772 = vmatpush.bf16.msra.mxu0 %v6494
  %6773 = vmatpush.bf16.msra.mxu0 %v6490
  %6774 = vmatpush.bf16.msra.mxu0 %v6486
  %6775 = vmatpush.bf16.msra.mxu0 %v6482
  %6776 = vmatpush.bf16.msra.mxu0 %v6478
  %6777 = vmatpush.bf16.msra.mxu0 %v6474
  %6778 = vmatpush.bf16.msra.mxu0 %v6470
  %6779 = vmatpush.bf16.msra.mxu0 %v6466
  %6780 = vmatmul.bf16.gmra.mxu0 %v6066
  %v6781 = vpop.f32.mrf.mxu0
  %v6782 = vadd.f32 %v6170, %v6781
  %v6783 = vpop.f32.mrf.mxu0
  %6784 = vdwg.mxu0
  %6785 = vmatpush.bf16.msra.mxu0 %v6526
  %6786 = vmatpush.bf16.msra.mxu0 %v6522
  %6787 = vmatpush.bf16.msra.mxu0 %v6518
  %6788 = vmatpush.bf16.msra.mxu0 %v6514
  %6789 = vmatpush.bf16.msra.mxu0 %v6510
  %6790 = vmatpush.bf16.msra.mxu0 %v6506
  %6791 = vmatpush.bf16.msra.mxu0 %v6502
  %6792 = vmatpush.bf16.msra.mxu0 %v6498
  %6793 = vmatmul.bf16.gmra.mxu0 %v5746
  %v6794 = vpop.f32.mrf.mxu0
  %v6795 = vadd.f32 %v6782, %v6794
  %v6796 = vpop.f32.mrf.mxu0
  %6797 = vdwg.mxu0
  %6798 = vmatpush.bf16.msra.mxu0 %v6558
  %6799 = vmatpush.bf16.msra.mxu0 %v6554
  %6800 = vmatpush.bf16.msra.mxu0 %v6550
  %6801 = vmatpush.bf16.msra.mxu0 %v6546
  %6802 = vmatpush.bf16.msra.mxu0 %v6542
  %6803 = vmatpush.bf16.msra.mxu0 %v6538
  %6804 = vmatpush.bf16.msra.mxu0 %v6534
  %6805 = vmatpush.bf16.msra.mxu0 %v6530
  %6806 = vmatmul.bf16.gmra.mxu0 %v6068
  %v6807 = vpop.f32.mrf.mxu0
  %v6808 = vadd.f32 %v6795, %v6807
  %v6809 = vpop.f32.mrf.mxu0
  %6810 = vdwg.mxu0
  %v6811 = vxor.u32 %v6691, 2147483648
  %v6812 = vmul.f32 %v6811, 1.442695
  %v6813 = vpow.pop %v6812
  %v6814 = vadd.f32 %v6813, 1.0
  %v6815 = vrcp.pop %v6814
  %v6816 = vmul.f32 %v6814, %v6815
  %v6817 = vsub.f32 1.0, %v6816
  %v6818 = vmul.f32 %v6815, %v6817
  %v6819 = vadd.f32 %v6815, %v6818
  %vm6820 = vweird.f32 %v6814
  %vm6821 = vweird.f32 %v6815
  %vm6822 = vmor %vm6820, %vm6821
  %v6823 = vsel %vm6822, %v6815, %v6819
  %v6824 = vand.u32 2147483647, %v6814
  %vm6825 = vcmp.eq.f32.partialorder %v6824, 8.507059e+37
  %v6826 = vand.u32 %v6814, 2147483648
  %v6827 = vor.u32 1.1754944e-38, %v6826
  %v6828 = vsel %vm6825, %v6827, %v6823
  %v6829 = vmul.f32 1.0, %v6828
  %v6830 = vxor.u32 %v6730, 2147483648
  %v6831 = vmul.f32 %v6830, 1.442695
  %v6832 = vpow.pop %v6831
  %v6833 = vadd.f32 %v6832, 1.0
  %v6834 = vrcp.pop %v6833
  %v6835 = vmul.f32 %v6833, %v6834
  %v6836 = vsub.f32 1.0, %v6835
  %v6837 = vmul.f32 %v6834, %v6836
  %v6838 = vadd.f32 %v6834, %v6837
  %vm6839 = vweird.f32 %v6833
  %vm6840 = vweird.f32 %v6834
  %vm6841 = vmor %vm6839, %vm6840
  %v6842 = vsel %vm6841, %v6834, %v6838
  %v6843 = vand.u32 2147483647, %v6833
  %vm6844 = vcmp.eq.f32.partialorder %v6843, 8.507059e+37
  %v6845 = vand.u32 %v6833, 2147483648
  %v6846 = vor.u32 1.1754944e-38, %v6845
  %v6847 = vsel %vm6844, %v6846, %v6842
  %v6848 = vmul.f32 1.0, %v6847
  %v6849 = vtanh.pop %v6769
  %v6850 = vxor.u32 %v6808, 2147483648
  %v6851 = vmul.f32 %v6850, 1.442695
  %v6852 = vpow.pop %v6851
  %v6853 = vadd.f32 %v6852, 1.0
  %v6854 = vrcp.pop %v6853
  %v6855 = vmul.f32 %v6853, %v6854
  %v6856 = vsub.f32 1.0, %v6855
  %v6857 = vmul.f32 %v6854, %v6856
  %v6858 = vadd.f32 %v6854, %v6857
  %vm6859 = vweird.f32 %v6853
  %vm6860 = vweird.f32 %v6854
  %vm6861 = vmor %vm6859, %vm6860
  %v6862 = vsel %vm6861, %v6854, %v6858
  %v6863 = vand.u32 2147483647, %v6853
  %vm6864 = vcmp.eq.f32.partialorder %v6863, 8.507059e+37
  %v6865 = vand.u32 %v6853, 2147483648
  %v6866 = vor.u32 1.1754944e-38, %v6865
  %v6867 = vsel %vm6864, %v6866, %v6862
  %v6868 = vmul.f32 1.0, %v6867
  %v6869 = vmul.f32 %v6848, %v5743
  %v6870 = vmul.f32 %v6829, %v6849
  %v6871 = vadd.f32 %v6869, %v6870
  %v6872 = vtanh.pop %v6871
  %v6873 = vmul.f32 %v6868, %v6872
  %v6874 = vpack.c.bf16 %v6873, %v6873
  %s6875 = scalar_lea.vmem %s6, 8
  %6876 = vst [vmem:[%s6875] sm:$0xf] %v6874
  %v6877 = vld [vmem:[%s2] sm:$0xff]
  %v6878 = vld [vmem:[%s2 + $0x8] sm:$0xff]
  %v6879 = vld [vmem:[%s2 + $0x10] sm:$0xff]
  %v6880 = vld [vmem:[%s2 + $0x18] sm:$0xff]
  %v6881 = vld [vmem:[%s2 + $0x20] sm:$0xff]
  %v6882 = vld [vmem:[%s2 + $0x28] sm:$0xff]
  %v6883 = vld [vmem:[%s2 + $0x30] sm:$0xff]
  %v6884 = vld [vmem:[%s2 + $0x38] sm:$0xff]
  %v6885 = vld [vmem:[%s2 + $0x40] sm:$0xff]
  %v6886 = vld [vmem:[%s2 + $0x48] sm:$0xff]
  %v6887 = vld [vmem:[%s2 + $0x50] sm:$0xff]
  %v6888 = vld [vmem:[%s2 + $0x58] sm:$0xff]
  %v6889 = vld [vmem:[%s2 + $0x60] sm:$0xff]
  %v6890 = vld [vmem:[%s2 + $0x68] sm:$0xff]
  %v6891 = vld [vmem:[%s2 + $0x70] sm:$0xff]
  %v6892 = vld [vmem:[%s2 + $0x78] sm:$0xff]
  %v6893 = vld [vmem:[%s2 + $0x80] sm:$0xff]
  %v6894 = vld [vmem:[%s2 + $0x88] sm:$0xff]
  %v6895 = vld [vmem:[%s2 + $0x90] sm:$0xff]
  %v6896 = vld [vmem:[%s2 + $0x98] sm:$0xff]
  %v6897 = vld [vmem:[%s2 + $0xa0] sm:$0xff]
  %v6898 = vld [vmem:[%s2 + $0xa8] sm:$0xff]
  %v6899 = vld [vmem:[%s2 + $0xb0] sm:$0xff]
  %v6900 = vld [vmem:[%s2 + $0xb8] sm:$0xff]
  %v6901 = vld [vmem:[%s2 + $0xc0] sm:$0xff]
  %v6902 = vld [vmem:[%s2 + $0xc8] sm:$0xff]
  %v6903 = vld [vmem:[%s2 + $0xd0] sm:$0xff]
  %v6904 = vld [vmem:[%s2 + $0xd8] sm:$0xff]
  %v6905 = vld [vmem:[%s2 + $0xe0] sm:$0xff]
  %v6906 = vld [vmem:[%s2 + $0xe8] sm:$0xff]
  %v6907 = vld [vmem:[%s2 + $0xf0] sm:$0xff]
  %v6908 = vld [vmem:[%s2 + $0xf8] sm:$0xff]
  %v6909 = vld [vmem:[%s3] sm:$0xf]
  %v6911 = vperm.slane %v6909, 0
  %v6912 = vperm.slane %v6909, 1
  %v6913 = vperm.slane %v6909, 2
  %v6914 = vperm.slane %v6909, 3
  %v6951 = vunpack.c.l.b16 %v6877
  %v6952 = vunpack.c.h.b16 %v6877
  %v6953 = vunpack.c.l.b16 %v6878
  %v6954 = vunpack.c.h.b16 %v6878
  %v6955 = vunpack.c.l.b16 %v6879
  %v6956 = vunpack.c.h.b16 %v6879
  %v6957 = vunpack.c.l.b16 %v6880
  %v6958 = vunpack.c.h.b16 %v6880
  %v6959 = vunpack.c.l.b16 %v6881
  %v6960 = vunpack.c.h.b16 %v6881
  %v6961 = vunpack.c.l.b16 %v6882
  %v6962 = vunpack.c.h.b16 %v6882
  %v6963 = vunpack.c.l.b16 %v6883
  %v6964 = vunpack.c.h.b16 %v6883
  %v6965 = vunpack.c.l.b16 %v6884
  %v6966 = vunpack.c.h.b16 %v6884
  %v6967 = vunpack.c.l.b16 %v6885
  %v6968 = vunpack.c.h.b16 %v6885
  %v6969 = vunpack.c.l.b16 %v6886
  %v6970 = vunpack.c.h.b16 %v6886
  %v6971 = vunpack.c.l.b16 %v6887
  %v6972 = vunpack.c.h.b16 %v6887
  %v6973 = vunpack.c.l.b16 %v6888
  %v6974 = vunpack.c.h.b16 %v6888
  %v6975 = vunpack.c.l.b16 %v6889
  %v6976 = vunpack.c.h.b16 %v6889
  %v6977 = vunpack.c.l.b16 %v6890
  %v6978 = vunpack.c.h.b16 %v6890
  %v6979 = vunpack.c.l.b16 %v6891
  %v6980 = vunpack.c.h.b16 %v6891
  %v6981 = vunpack.c.l.b16 %v6892
  %v6982 = vunpack.c.h.b16 %v6892
  %v6983 = vunpack.c.l.b16 %v6893
  %v6984 = vunpack.c.h.b16 %v6893
  %v6985 = vunpack.c.l.b16 %v6894
  %v6986 = vunpack.c.h.b16 %v6894
  %v6987 = vunpack.c.l.b16 %v6895
  %v6988 = vunpack.c.h.b16 %v6895
  %v6989 = vunpack.c.l.b16 %v6896
  %v6990 = vunpack.c.h.b16 %v6896
  %v6991 = vunpack.c.l.b16 %v6897
  %v6992 = vunpack.c.h.b16 %v6897
  %v6993 = vunpack.c.l.b16 %v6898
  %v6994 = vunpack.c.h.b16 %v6898
  %v6995 = vunpack.c.l.b16 %v6899
  %v6996 = vunpack.c.h.b16 %v6899
  %v6997 = vunpack.c.l.b16 %v6900
  %v6998 = vunpack.c.h.b16 %v6900
  %v6999 = vunpack.c.l.b16 %v6901
  %v7000 = vunpack.c.h.b16 %v6901
  %v7001 = vunpack.c.l.b16 %v6902
  %v7002 = vunpack.c.h.b16 %v6902
  %v7003 = vunpack.c.l.b16 %v6903
  %v7004 = vunpack.c.h.b16 %v6903
  %v7005 = vunpack.c.l.b16 %v6904
  %v7006 = vunpack.c.h.b16 %v6904
  %v7007 = vunpack.c.l.b16 %v6905
  %v7008 = vunpack.c.h.b16 %v6905
  %v7009 = vunpack.c.l.b16 %v6906
  %v7010 = vunpack.c.h.b16 %v6906
  %v7011 = vunpack.c.l.b16 %v6907
  %v7012 = vunpack.c.h.b16 %v6907
  %v7013 = vunpack.c.l.b16 %v6908
  %v7014 = vunpack.c.h.b16 %v6908
  %v7015 = vpack.c.b16 %v6955, %v6951
  %v7016 = vpack.c.b16 %v6956, %v6952
  %v7017 = vpack.c.b16 %v6957, %v6953
  %v7018 = vpack.c.b16 %v6958, %v6954
  %v7019 = vpack.c.b16 %v6963, %v6959
  %v7020 = vpack.c.b16 %v6964, %v6960
  %v7021 = vpack.c.b16 %v6965, %v6961
  %v7022 = vpack.c.b16 %v6966, %v6962
  %v7023 = vpack.c.b16 %v6971, %v6967
  %v7024 = vpack.c.b16 %v6972, %v6968
  %v7025 = vpack.c.b16 %v6973, %v6969
  %v7026 = vpack.c.b16 %v6974, %v6970
  %v7027 = vpack.c.b16 %v6979, %v6975
  %v7028 = vpack.c.b16 %v6980, %v6976
  %v7029 = vpack.c.b16 %v6981, %v6977
  %v7030 = vpack.c.b16 %v6982, %v6978
  %v7031 = vpack.c.b16 %v6987, %v6983
  %v7032 = vpack.c.b16 %v6988, %v6984
  %v7033 = vpack.c.b16 %v6989, %v6985
  %v7034 = vpack.c.b16 %v6990, %v6986
  %v7035 = vpack.c.b16 %v6995, %v6991
  %v7036 = vpack.c.b16 %v6996, %v6992
  %v7037 = vpack.c.b16 %v6997, %v6993
  %v7038 = vpack.c.b16 %v6998, %v6994
  %v7039 = vpack.c.b16 %v7003, %v6999
  %v7040 = vpack.c.b16 %v7004, %v7000
  %v7041 = vpack.c.b16 %v7005, %v7001
  %v7042 = vpack.c.b16 %v7006, %v7002
  %v7043 = vpack.c.b16 %v7011, %v7007
  %v7044 = vpack.c.b16 %v7012, %v7008
  %v7045 = vpack.c.b16 %v7013, %v7009
  %v7046 = vpack.c.b16 %v7014, %v7010
  %7079 = vmatpush.bf16.msra.mxu0 %v7043
  %7080 = vmatpush.bf16.msra.mxu0 %v7039
  %7081 = vmatpush.bf16.msra.mxu0 %v7035
  %7082 = vmatpush.bf16.msra.mxu0 %v7031
  %7083 = vmatpush.bf16.msra.mxu0 %v7027
  %7084 = vmatpush.bf16.msra.mxu0 %v7023
  %7085 = vmatpush.bf16.msra.mxu0 %v7019
  %7086 = vmatpush.bf16.msra.mxu0 %v7015
  %7087 = vmatmul.bf16.gmra.mxu0 %v6066
  %v7088 = vpop.f32.mrf.mxu0
  %v7089 = vadd.f32 %v6911, %v7088
  %v7090 = vpop.f32.mrf.mxu0
  %7091 = vdwg.mxu0
  %7092 = vmatpush.bf16.msra.mxu0 %v7044
  %7093 = vmatpush.bf16.msra.mxu0 %v7040
  %7094 = vmatpush.bf16.msra.mxu0 %v7036
  %7095 = vmatpush.bf16.msra.mxu0 %v7032
  %7096 = vmatpush.bf16.msra.mxu0 %v7028
  %7097 = vmatpush.bf16.msra.mxu0 %v7024
  %7098 = vmatpush.bf16.msra.mxu0 %v7020
  %7099 = vmatpush.bf16.msra.mxu0 %v7016
  %7100 = vmatmul.bf16.gmra.mxu0 %v6066
  %v7101 = vpop.f32.mrf.mxu0
  %v7102 = vadd.f32 %v6912, %v7101
  %v7103 = vpop.f32.mrf.mxu0
  %7104 = vdwg.mxu0
  %7105 = vmatpush.bf16.msra.mxu0 %v7045
  %7106 = vmatpush.bf16.msra.mxu0 %v7041
  %7107 = vmatpush.bf16.msra.mxu0 %v7037
  %7108 = vmatpush.bf16.msra.mxu0 %v7033
  %7109 = vmatpush.bf16.msra.mxu0 %v7029
  %7110 = vmatpush.bf16.msra.mxu0 %v7025
  %7111 = vmatpush.bf16.msra.mxu0 %v7021
  %7112 = vmatpush.bf16.msra.mxu0 %v7017
  %7113 = vmatmul.bf16.gmra.mxu0 %v6066
  %v7114 = vpop.f32.mrf.mxu0
  %v7115 = vadd.f32 %v6913, %v7114
  %v7116 = vpop.f32.mrf.mxu0
  %7117 = vdwg.mxu0
  %7118 = vmatpush.bf16.msra.mxu0 %v7046
  %7119 = vmatpush.bf16.msra.mxu0 %v7042
  %7120 = vmatpush.bf16.msra.mxu0 %v7038
  %7121 = vmatpush.bf16.msra.mxu0 %v7034
  %7122 = vmatpush.bf16.msra.mxu0 %v7030
  %7123 = vmatpush.bf16.msra.mxu0 %v7026
  %7124 = vmatpush.bf16.msra.mxu0 %v7022
  %7125 = vmatpush.bf16.msra.mxu0 %v7018
  %7126 = vmatmul.bf16.gmra.mxu0 %v6066
  %v7127 = vpop.f32.mrf.mxu0
  %v7128 = vadd.f32 %v6914, %v7127
  %v7129 = vpop.f32.mrf.mxu0
  %7130 = vdwg.mxu0
  %v7131 = vxor.u32 %v7089, 2147483648
  %v7132 = vmul.f32 %v7131, 1.442695
  %v7133 = vpow.pop %v7132
  %v7134 = vadd.f32 %v7133, 1.0
  %v7135 = vrcp.pop %v7134
  %v7136 = vmul.f32 %v7134, %v7135
  %v7137 = vsub.f32 1.0, %v7136
  %v7138 = vmul.f32 %v7135, %v7137
  %v7139 = vadd.f32 %v7135, %v7138
  %vm7140 = vweird.f32 %v7134
  %vm7141 = vweird.f32 %v7135
  %vm7142 = vmor %vm7140, %vm7141
  %v7143 = vsel %vm7142, %v7135, %v7139
  %v7144 = vand.u32 2147483647, %v7134
  %vm7145 = vcmp.eq.f32.partialorder %v7144, 8.507059e+37
  %v7146 = vand.u32 %v7134, 2147483648
  %v7147 = vor.u32 1.1754944e-38, %v7146
  %v7148 = vsel %vm7145, %v7147, %v7143
  %v7149 = vmul.f32 1.0, %v7148
  %v7150 = vxor.u32 %v7102, 2147483648
  %v7151 = vmul.f32 %v7150, 1.442695
  %v7152 = vpow.pop %v7151
  %v7153 = vadd.f32 %v7152, 1.0
  %v7154 = vrcp.pop %v7153
  %v7155 = vmul.f32 %v7153, %v7154
  %v7156 = vsub.f32 1.0, %v7155
  %v7157 = vmul.f32 %v7154, %v7156
  %v7158 = vadd.f32 %v7154, %v7157
  %vm7159 = vweird.f32 %v7153
  %vm7160 = vweird.f32 %v7154
  %vm7161 = vmor %vm7159, %vm7160
  %v7162 = vsel %vm7161, %v7154, %v7158
  %v7163 = vand.u32 2147483647, %v7153
  %vm7164 = vcmp.eq.f32.partialorder %v7163, 8.507059e+37
  %v7165 = vand.u32 %v7153, 2147483648
  %v7166 = vor.u32 1.1754944e-38, %v7165
  %v7167 = vsel %vm7164, %v7166, %v7162
  %v7168 = vmul.f32 1.0, %v7167
  %v7169 = vtanh.pop %v7115
  %v7170 = vxor.u32 %v7128, 2147483648
  %v7171 = vmul.f32 %v7170, 1.442695
  %v7172 = vpow.pop %v7171
  %v7173 = vadd.f32 %v7172, 1.0
  %v7174 = vrcp.pop %v7173
  %v7175 = vmul.f32 %v7173, %v7174
  %v7176 = vsub.f32 1.0, %v7175
  %v7177 = vmul.f32 %v7174, %v7176
  %v7178 = vadd.f32 %v7174, %v7177
  %vm7179 = vweird.f32 %v7173
  %vm7180 = vweird.f32 %v7174
  %vm7181 = vmor %vm7179, %vm7180
  %v7182 = vsel %vm7181, %v7174, %v7178
  %v7183 = vand.u32 2147483647, %v7173
  %vm7184 = vcmp.eq.f32.partialorder %v7183, 8.507059e+37
  %v7185 = vand.u32 %v7173, 2147483648
  %v7186 = vor.u32 1.1754944e-38, %v7185
  %v7187 = vsel %vm7184, %v7186, %v7182
  %v7188 = vmul.f32 1.0, %v7187
  %v7189 = vmul.f32 %v7168, %v6063
  %v7190 = vmul.f32 %v7149, %v7169
  %v7191 = vadd.f32 %v7189, %v7190
  %v7192 = vtanh.pop %v7191
  %v7193 = vmul.f32 %v7188, %v7192
  %v7194 = vpack.c.bf16 %v7193, %v7193
  %s7195 = scalar_lea.vmem %s1, 12
  %v7196 = vld [vmem:[%s7195] sm:$0xf]
  %v7197 = vld [vmem:[%s4] sm:$0xff]
  %v7198 = vld [vmem:[%s4 + $0x8] sm:$0xff]
  %v7199 = vld [vmem:[%s4 + $0x10] sm:$0xff]
  %v7200 = vld [vmem:[%s4 + $0x18] sm:$0xff]
  %v7201 = vld [vmem:[%s4 + $0x20] sm:$0xff]
  %v7202 = vld [vmem:[%s4 + $0x28] sm:$0xff]
  %v7203 = vld [vmem:[%s4 + $0x30] sm:$0xff]
  %v7204 = vld [vmem:[%s4 + $0x38] sm:$0xff]
  %v7205 = vld [vmem:[%s4 + $0x40] sm:$0xff]
  %v7206 = vld [vmem:[%s4 + $0x48] sm:$0xff]
  %v7207 = vld [vmem:[%s4 + $0x50] sm:$0xff]
  %v7208 = vld [vmem:[%s4 + $0x58] sm:$0xff]
  %v7209 = vld [vmem:[%s4 + $0x60] sm:$0xff]
  %v7210 = vld [vmem:[%s4 + $0x68] sm:$0xff]
  %v7211 = vld [vmem:[%s4 + $0x70] sm:$0xff]
  %v7212 = vld [vmem:[%s4 + $0x78] sm:$0xff]
  %v7213 = vld [vmem:[%s4 + $0x80] sm:$0xff]
  %v7214 = vld [vmem:[%s4 + $0x88] sm:$0xff]
  %v7215 = vld [vmem:[%s4 + $0x90] sm:$0xff]
  %v7216 = vld [vmem:[%s4 + $0x98] sm:$0xff]
  %v7217 = vld [vmem:[%s4 + $0xa0] sm:$0xff]
  %v7218 = vld [vmem:[%s4 + $0xa8] sm:$0xff]
  %v7219 = vld [vmem:[%s4 + $0xb0] sm:$0xff]
  %v7220 = vld [vmem:[%s4 + $0xb8] sm:$0xff]
  %v7221 = vld [vmem:[%s4 + $0xc0] sm:$0xff]
  %v7222 = vld [vmem:[%s4 + $0xc8] sm:$0xff]
  %v7223 = vld [vmem:[%s4 + $0xd0] sm:$0xff]
  %v7224 = vld [vmem:[%s4 + $0xd8] sm:$0xff]
  %v7225 = vld [vmem:[%s4 + $0xe0] sm:$0xff]
  %v7226 = vld [vmem:[%s4 + $0xe8] sm:$0xff]
  %v7227 = vld [vmem:[%s4 + $0xf0] sm:$0xff]
  %v7228 = vld [vmem:[%s4 + $0xf8] sm:$0xff]
  %v7229 = vld [vmem:[%s4 + $0x100] sm:$0xff]
  %v7230 = vld [vmem:[%s4 + $0x108] sm:$0xff]
  %v7231 = vld [vmem:[%s4 + $0x110] sm:$0xff]
  %v7232 = vld [vmem:[%s4 + $0x118] sm:$0xff]
  %v7233 = vld [vmem:[%s4 + $0x120] sm:$0xff]
  %v7234 = vld [vmem:[%s4 + $0x128] sm:$0xff]
  %v7235 = vld [vmem:[%s4 + $0x130] sm:$0xff]
  %v7236 = vld [vmem:[%s4 + $0x138] sm:$0xff]
  %v7237 = vld [vmem:[%s4 + $0x140] sm:$0xff]
  %v7238 = vld [vmem:[%s4 + $0x148] sm:$0xff]
  %v7239 = vld [vmem:[%s4 + $0x150] sm:$0xff]
  %v7240 = vld [vmem:[%s4 + $0x158] sm:$0xff]
  %v7241 = vld [vmem:[%s4 + $0x160] sm:$0xff]
  %v7242 = vld [vmem:[%s4 + $0x168] sm:$0xff]
  %v7243 = vld [vmem:[%s4 + $0x170] sm:$0xff]
  %v7244 = vld [vmem:[%s4 + $0x178] sm:$0xff]
  %v7245 = vld [vmem:[%s4 + $0x180] sm:$0xff]
  %v7246 = vld [vmem:[%s4 + $0x188] sm:$0xff]
  %v7247 = vld [vmem:[%s4 + $0x190] sm:$0xff]
  %v7248 = vld [vmem:[%s4 + $0x198] sm:$0xff]
  %v7249 = vld [vmem:[%s4 + $0x1a0] sm:$0xff]
  %v7250 = vld [vmem:[%s4 + $0x1a8] sm:$0xff]
  %v7251 = vld [vmem:[%s4 + $0x1b0] sm:$0xff]
  %v7252 = vld [vmem:[%s4 + $0x1b8] sm:$0xff]
  %v7253 = vld [vmem:[%s4 + $0x1c0] sm:$0xff]
  %v7254 = vld [vmem:[%s4 + $0x1c8] sm:$0xff]
  %v7255 = vld [vmem:[%s4 + $0x1d0] sm:$0xff]
  %v7256 = vld [vmem:[%s4 + $0x1d8] sm:$0xff]
  %v7257 = vld [vmem:[%s4 + $0x1e0] sm:$0xff]
  %v7258 = vld [vmem:[%s4 + $0x1e8] sm:$0xff]
  %v7259 = vld [vmem:[%s4 + $0x1f0] sm:$0xff]
  %v7260 = vld [vmem:[%s4 + $0x1f8] sm:$0xff]
  %v7261 = vld [vmem:[%s4 + $0x200] sm:$0xff]
  %v7262 = vld [vmem:[%s4 + $0x208] sm:$0xff]
  %v7263 = vld [vmem:[%s4 + $0x210] sm:$0xff]
  %v7264 = vld [vmem:[%s4 + $0x218] sm:$0xff]
  %v7265 = vld [vmem:[%s4 + $0x220] sm:$0xff]
  %v7266 = vld [vmem:[%s4 + $0x228] sm:$0xff]
  %v7267 = vld [vmem:[%s4 + $0x230] sm:$0xff]
  %v7268 = vld [vmem:[%s4 + $0x238] sm:$0xff]
  %v7269 = vld [vmem:[%s4 + $0x240] sm:$0xff]
  %v7270 = vld [vmem:[%s4 + $0x248] sm:$0xff]
  %v7271 = vld [vmem:[%s4 + $0x250] sm:$0xff]
  %v7272 = vld [vmem:[%s4 + $0x258] sm:$0xff]
  %v7273 = vld [vmem:[%s4 + $0x260] sm:$0xff]
  %v7274 = vld [vmem:[%s4 + $0x268] sm:$0xff]
  %v7275 = vld [vmem:[%s4 + $0x270] sm:$0xff]
  %v7276 = vld [vmem:[%s4 + $0x278] sm:$0xff]
  %v7277 = vld [vmem:[%s4 + $0x280] sm:$0xff]
  %v7278 = vld [vmem:[%s4 + $0x288] sm:$0xff]
  %v7279 = vld [vmem:[%s4 + $0x290] sm:$0xff]
  %v7280 = vld [vmem:[%s4 + $0x298] sm:$0xff]
  %v7281 = vld [vmem:[%s4 + $0x2a0] sm:$0xff]
  %v7282 = vld [vmem:[%s4 + $0x2a8] sm:$0xff]
  %v7283 = vld [vmem:[%s4 + $0x2b0] sm:$0xff]
  %v7284 = vld [vmem:[%s4 + $0x2b8] sm:$0xff]
  %v7285 = vld [vmem:[%s4 + $0x2c0] sm:$0xff]
  %v7286 = vld [vmem:[%s4 + $0x2c8] sm:$0xff]
  %v7287 = vld [vmem:[%s4 + $0x2d0] sm:$0xff]
  %v7288 = vld [vmem:[%s4 + $0x2d8] sm:$0xff]
  %v7289 = vld [vmem:[%s4 + $0x2e0] sm:$0xff]
  %v7290 = vld [vmem:[%s4 + $0x2e8] sm:$0xff]
  %v7291 = vld [vmem:[%s4 + $0x2f0] sm:$0xff]
  %v7292 = vld [vmem:[%s4 + $0x2f8] sm:$0xff]
  %v7293 = vld [vmem:[%s5] sm:$0xf]
  %v7295 = vperm.slane %v7293, 0
  %v7296 = vperm.slane %v7293, 1
  %v7297 = vperm.slane %v7293, 2
  %v7298 = vperm.slane %v7293, 3
  %v7399 = vunpack.c.l.b16 %v7197
  %v7400 = vunpack.c.h.b16 %v7197
  %v7401 = vunpack.c.l.b16 %v7198
  %v7402 = vunpack.c.h.b16 %v7198
  %v7403 = vunpack.c.l.b16 %v7199
  %v7404 = vunpack.c.h.b16 %v7199
  %v7405 = vunpack.c.l.b16 %v7200
  %v7406 = vunpack.c.h.b16 %v7200
  %v7407 = vunpack.c.l.b16 %v7201
  %v7408 = vunpack.c.h.b16 %v7201
  %v7409 = vunpack.c.l.b16 %v7202
  %v7410 = vunpack.c.h.b16 %v7202
  %v7411 = vunpack.c.l.b16 %v7203
  %v7412 = vunpack.c.h.b16 %v7203
  %v7413 = vunpack.c.l.b16 %v7204
  %v7414 = vunpack.c.h.b16 %v7204
  %v7415 = vunpack.c.l.b16 %v7205
  %v7416 = vunpack.c.h.b16 %v7205
  %v7417 = vunpack.c.l.b16 %v7206
  %v7418 = vunpack.c.h.b16 %v7206
  %v7419 = vunpack.c.l.b16 %v7207
  %v7420 = vunpack.c.h.b16 %v7207
  %v7421 = vunpack.c.l.b16 %v7208
  %v7422 = vunpack.c.h.b16 %v7208
  %v7423 = vunpack.c.l.b16 %v7209
  %v7424 = vunpack.c.h.b16 %v7209
  %v7425 = vunpack.c.l.b16 %v7210
  %v7426 = vunpack.c.h.b16 %v7210
  %v7427 = vunpack.c.l.b16 %v7211
  %v7428 = vunpack.c.h.b16 %v7211
  %v7429 = vunpack.c.l.b16 %v7212
  %v7430 = vunpack.c.h.b16 %v7212
  %v7431 = vunpack.c.l.b16 %v7213
  %v7432 = vunpack.c.h.b16 %v7213
  %v7433 = vunpack.c.l.b16 %v7214
  %v7434 = vunpack.c.h.b16 %v7214
  %v7435 = vunpack.c.l.b16 %v7215
  %v7436 = vunpack.c.h.b16 %v7215
  %v7437 = vunpack.c.l.b16 %v7216
  %v7438 = vunpack.c.h.b16 %v7216
  %v7439 = vunpack.c.l.b16 %v7217
  %v7440 = vunpack.c.h.b16 %v7217
  %v7441 = vunpack.c.l.b16 %v7218
  %v7442 = vunpack.c.h.b16 %v7218
  %v7443 = vunpack.c.l.b16 %v7219
  %v7444 = vunpack.c.h.b16 %v7219
  %v7445 = vunpack.c.l.b16 %v7220
  %v7446 = vunpack.c.h.b16 %v7220
  %v7447 = vunpack.c.l.b16 %v7221
  %v7448 = vunpack.c.h.b16 %v7221
  %v7449 = vunpack.c.l.b16 %v7222
  %v7450 = vunpack.c.h.b16 %v7222
  %v7451 = vunpack.c.l.b16 %v7223
  %v7452 = vunpack.c.h.b16 %v7223
  %v7453 = vunpack.c.l.b16 %v7224
  %v7454 = vunpack.c.h.b16 %v7224
  %v7455 = vunpack.c.l.b16 %v7225
  %v7456 = vunpack.c.h.b16 %v7225
  %v7457 = vunpack.c.l.b16 %v7226
  %v7458 = vunpack.c.h.b16 %v7226
  %v7459 = vunpack.c.l.b16 %v7227
  %v7460 = vunpack.c.h.b16 %v7227
  %v7461 = vunpack.c.l.b16 %v7228
  %v7462 = vunpack.c.h.b16 %v7228
  %v7463 = vunpack.c.l.b16 %v7229
  %v7464 = vunpack.c.h.b16 %v7229
  %v7465 = vunpack.c.l.b16 %v7230
  %v7466 = vunpack.c.h.b16 %v7230
  %v7467 = vunpack.c.l.b16 %v7231
  %v7468 = vunpack.c.h.b16 %v7231
  %v7469 = vunpack.c.l.b16 %v7232
  %v7470 = vunpack.c.h.b16 %v7232
  %v7471 = vunpack.c.l.b16 %v7233
  %v7472 = vunpack.c.h.b16 %v7233
  %v7473 = vunpack.c.l.b16 %v7234
  %v7474 = vunpack.c.h.b16 %v7234
  %v7475 = vunpack.c.l.b16 %v7235
  %v7476 = vunpack.c.h.b16 %v7235
  %v7477 = vunpack.c.l.b16 %v7236
  %v7478 = vunpack.c.h.b16 %v7236
  %v7479 = vunpack.c.l.b16 %v7237
  %v7480 = vunpack.c.h.b16 %v7237
  %v7481 = vunpack.c.l.b16 %v7238
  %v7482 = vunpack.c.h.b16 %v7238
  %v7483 = vunpack.c.l.b16 %v7239
  %v7484 = vunpack.c.h.b16 %v7239
  %v7485 = vunpack.c.l.b16 %v7240
  %v7486 = vunpack.c.h.b16 %v7240
  %v7487 = vunpack.c.l.b16 %v7241
  %v7488 = vunpack.c.h.b16 %v7241
  %v7489 = vunpack.c.l.b16 %v7242
  %v7490 = vunpack.c.h.b16 %v7242
  %v7491 = vunpack.c.l.b16 %v7243
  %v7492 = vunpack.c.h.b16 %v7243
  %v7493 = vunpack.c.l.b16 %v7244
  %v7494 = vunpack.c.h.b16 %v7244
  %v7495 = vunpack.c.l.b16 %v7245
  %v7496 = vunpack.c.h.b16 %v7245
  %v7497 = vunpack.c.l.b16 %v7246
  %v7498 = vunpack.c.h.b16 %v7246
  %v7499 = vunpack.c.l.b16 %v7247
  %v7500 = vunpack.c.h.b16 %v7247
  %v7501 = vunpack.c.l.b16 %v7248
  %v7502 = vunpack.c.h.b16 %v7248
  %v7503 = vunpack.c.l.b16 %v7249
  %v7504 = vunpack.c.h.b16 %v7249
  %v7505 = vunpack.c.l.b16 %v7250
  %v7506 = vunpack.c.h.b16 %v7250
  %v7507 = vunpack.c.l.b16 %v7251
  %v7508 = vunpack.c.h.b16 %v7251
  %v7509 = vunpack.c.l.b16 %v7252
  %v7510 = vunpack.c.h.b16 %v7252
  %v7511 = vunpack.c.l.b16 %v7253
  %v7512 = vunpack.c.h.b16 %v7253
  %v7513 = vunpack.c.l.b16 %v7254
  %v7514 = vunpack.c.h.b16 %v7254
  %v7515 = vunpack.c.l.b16 %v7255
  %v7516 = vunpack.c.h.b16 %v7255
  %v7517 = vunpack.c.l.b16 %v7256
  %v7518 = vunpack.c.h.b16 %v7256
  %v7519 = vunpack.c.l.b16 %v7257
  %v7520 = vunpack.c.h.b16 %v7257
  %v7521 = vunpack.c.l.b16 %v7258
  %v7522 = vunpack.c.h.b16 %v7258
  %v7523 = vunpack.c.l.b16 %v7259
  %v7524 = vunpack.c.h.b16 %v7259
  %v7525 = vunpack.c.l.b16 %v7260
  %v7526 = vunpack.c.h.b16 %v7260
  %v7527 = vunpack.c.l.b16 %v7261
  %v7528 = vunpack.c.h.b16 %v7261
  %v7529 = vunpack.c.l.b16 %v7262
  %v7530 = vunpack.c.h.b16 %v7262
  %v7531 = vunpack.c.l.b16 %v7263
  %v7532 = vunpack.c.h.b16 %v7263
  %v7533 = vunpack.c.l.b16 %v7264
  %v7534 = vunpack.c.h.b16 %v7264
  %v7535 = vunpack.c.l.b16 %v7265
  %v7536 = vunpack.c.h.b16 %v7265
  %v7537 = vunpack.c.l.b16 %v7266
  %v7538 = vunpack.c.h.b16 %v7266
  %v7539 = vunpack.c.l.b16 %v7267
  %v7540 = vunpack.c.h.b16 %v7267
  %v7541 = vunpack.c.l.b16 %v7268
  %v7542 = vunpack.c.h.b16 %v7268
  %v7543 = vunpack.c.l.b16 %v7269
  %v7544 = vunpack.c.h.b16 %v7269
  %v7545 = vunpack.c.l.b16 %v7270
  %v7546 = vunpack.c.h.b16 %v7270
  %v7547 = vunpack.c.l.b16 %v7271
  %v7548 = vunpack.c.h.b16 %v7271
  %v7549 = vunpack.c.l.b16 %v7272
  %v7550 = vunpack.c.h.b16 %v7272
  %v7551 = vunpack.c.l.b16 %v7273
  %v7552 = vunpack.c.h.b16 %v7273
  %v7553 = vunpack.c.l.b16 %v7274
  %v7554 = vunpack.c.h.b16 %v7274
  %v7555 = vunpack.c.l.b16 %v7275
  %v7556 = vunpack.c.h.b16 %v7275
  %v7557 = vunpack.c.l.b16 %v7276
  %v7558 = vunpack.c.h.b16 %v7276
  %v7559 = vunpack.c.l.b16 %v7277
  %v7560 = vunpack.c.h.b16 %v7277
  %v7561 = vunpack.c.l.b16 %v7278
  %v7562 = vunpack.c.h.b16 %v7278
  %v7563 = vunpack.c.l.b16 %v7279
  %v7564 = vunpack.c.h.b16 %v7279
  %v7565 = vunpack.c.l.b16 %v7280
  %v7566 = vunpack.c.h.b16 %v7280
  %v7567 = vunpack.c.l.b16 %v7281
  %v7568 = vunpack.c.h.b16 %v7281
  %v7569 = vunpack.c.l.b16 %v7282
  %v7570 = vunpack.c.h.b16 %v7282
  %v7571 = vunpack.c.l.b16 %v7283
  %v7572 = vunpack.c.h.b16 %v7283
  %v7573 = vunpack.c.l.b16 %v7284
  %v7574 = vunpack.c.h.b16 %v7284
  %v7575 = vunpack.c.l.b16 %v7285
  %v7576 = vunpack.c.h.b16 %v7285
  %v7577 = vunpack.c.l.b16 %v7286
  %v7578 = vunpack.c.h.b16 %v7286
  %v7579 = vunpack.c.l.b16 %v7287
  %v7580 = vunpack.c.h.b16 %v7287
  %v7581 = vunpack.c.l.b16 %v7288
  %v7582 = vunpack.c.h.b16 %v7288
  %v7583 = vunpack.c.l.b16 %v7289
  %v7584 = vunpack.c.h.b16 %v7289
  %v7585 = vunpack.c.l.b16 %v7290
  %v7586 = vunpack.c.h.b16 %v7290
  %v7587 = vunpack.c.l.b16 %v7291
  %v7588 = vunpack.c.h.b16 %v7291
  %v7589 = vunpack.c.l.b16 %v7292
  %v7590 = vunpack.c.h.b16 %v7292
  %v7591 = vpack.c.b16 %v7403, %v7399
  %v7592 = vpack.c.b16 %v7404, %v7400
  %v7593 = vpack.c.b16 %v7405, %v7401
  %v7594 = vpack.c.b16 %v7406, %v7402
  %v7595 = vpack.c.b16 %v7411, %v7407
  %v7596 = vpack.c.b16 %v7412, %v7408
  %v7597 = vpack.c.b16 %v7413, %v7409
  %v7598 = vpack.c.b16 %v7414, %v7410
  %v7599 = vpack.c.b16 %v7419, %v7415
  %v7600 = vpack.c.b16 %v7420, %v7416
  %v7601 = vpack.c.b16 %v7421, %v7417
  %v7602 = vpack.c.b16 %v7422, %v7418
  %v7603 = vpack.c.b16 %v7427, %v7423
  %v7604 = vpack.c.b16 %v7428, %v7424
  %v7605 = vpack.c.b16 %v7429, %v7425
  %v7606 = vpack.c.b16 %v7430, %v7426
  %v7607 = vpack.c.b16 %v7435, %v7431
  %v7608 = vpack.c.b16 %v7436, %v7432
  %v7609 = vpack.c.b16 %v7437, %v7433
  %v7610 = vpack.c.b16 %v7438, %v7434
  %v7611 = vpack.c.b16 %v7443, %v7439
  %v7612 = vpack.c.b16 %v7444, %v7440
  %v7613 = vpack.c.b16 %v7445, %v7441
  %v7614 = vpack.c.b16 %v7446, %v7442
  %v7615 = vpack.c.b16 %v7451, %v7447
  %v7616 = vpack.c.b16 %v7452, %v7448
  %v7617 = vpack.c.b16 %v7453, %v7449
  %v7618 = vpack.c.b16 %v7454, %v7450
  %v7619 = vpack.c.b16 %v7459, %v7455
  %v7620 = vpack.c.b16 %v7460, %v7456
  %v7621 = vpack.c.b16 %v7461, %v7457
  %v7622 = vpack.c.b16 %v7462, %v7458
  %v7623 = vpack.c.b16 %v7467, %v7463
  %v7624 = vpack.c.b16 %v7468, %v7464
  %v7625 = vpack.c.b16 %v7469, %v7465
  %v7626 = vpack.c.b16 %v7470, %v7466
  %v7627 = vpack.c.b16 %v7475, %v7471
  %v7628 = vpack.c.b16 %v7476, %v7472
  %v7629 = vpack.c.b16 %v7477, %v7473
  %v7630 = vpack.c.b16 %v7478, %v7474
  %v7631 = vpack.c.b16 %v7483, %v7479
  %v7632 = vpack.c.b16 %v7484, %v7480
  %v7633 = vpack.c.b16 %v7485, %v7481
  %v7634 = vpack.c.b16 %v7486, %v7482
  %v7635 = vpack.c.b16 %v7491, %v7487
  %v7636 = vpack.c.b16 %v7492, %v7488
  %v7637 = vpack.c.b16 %v7493, %v7489
  %v7638 = vpack.c.b16 %v7494, %v7490
  %v7639 = vpack.c.b16 %v7499, %v7495
  %v7640 = vpack.c.b16 %v7500, %v7496
  %v7641 = vpack.c.b16 %v7501, %v7497
  %v7642 = vpack.c.b16 %v7502, %v7498
  %v7643 = vpack.c.b16 %v7507, %v7503
  %v7644 = vpack.c.b16 %v7508, %v7504
  %v7645 = vpack.c.b16 %v7509, %v7505
  %v7646 = vpack.c.b16 %v7510, %v7506
  %v7647 = vpack.c.b16 %v7515, %v7511
  %v7648 = vpack.c.b16 %v7516, %v7512
  %v7649 = vpack.c.b16 %v7517, %v7513
  %v7650 = vpack.c.b16 %v7518, %v7514
  %v7651 = vpack.c.b16 %v7523, %v7519
  %v7652 = vpack.c.b16 %v7524, %v7520
  %v7653 = vpack.c.b16 %v7525, %v7521
  %v7654 = vpack.c.b16 %v7526, %v7522
  %v7655 = vpack.c.b16 %v7531, %v7527
  %v7656 = vpack.c.b16 %v7532, %v7528
  %v7657 = vpack.c.b16 %v7533, %v7529
  %v7658 = vpack.c.b16 %v7534, %v7530
  %v7659 = vpack.c.b16 %v7539, %v7535
  %v7660 = vpack.c.b16 %v7540, %v7536
  %v7661 = vpack.c.b16 %v7541, %v7537
  %v7662 = vpack.c.b16 %v7542, %v7538
  %v7663 = vpack.c.b16 %v7547, %v7543
  %v7664 = vpack.c.b16 %v7548, %v7544
  %v7665 = vpack.c.b16 %v7549, %v7545
  %v7666 = vpack.c.b16 %v7550, %v7546
  %v7667 = vpack.c.b16 %v7555, %v7551
  %v7668 = vpack.c.b16 %v7556, %v7552
  %v7669 = vpack.c.b16 %v7557, %v7553
  %v7670 = vpack.c.b16 %v7558, %v7554
  %v7671 = vpack.c.b16 %v7563, %v7559
  %v7672 = vpack.c.b16 %v7564, %v7560
  %v7673 = vpack.c.b16 %v7565, %v7561
  %v7674 = vpack.c.b16 %v7566, %v7562
  %v7675 = vpack.c.b16 %v7571, %v7567
  %v7676 = vpack.c.b16 %v7572, %v7568
  %v7677 = vpack.c.b16 %v7573, %v7569
  %v7678 = vpack.c.b16 %v7574, %v7570
  %v7679 = vpack.c.b16 %v7579, %v7575
  %v7680 = vpack.c.b16 %v7580, %v7576
  %v7681 = vpack.c.b16 %v7581, %v7577
  %v7682 = vpack.c.b16 %v7582, %v7578
  %v7683 = vpack.c.b16 %v7587, %v7583
  %v7684 = vpack.c.b16 %v7588, %v7584
  %v7685 = vpack.c.b16 %v7589, %v7585
  %v7686 = vpack.c.b16 %v7590, %v7586
  %7783 = vmatpush.bf16.msra.mxu0 %v7619
  %7784 = vmatpush.bf16.msra.mxu0 %v7615
  %7785 = vmatpush.bf16.msra.mxu0 %v7611
  %7786 = vmatpush.bf16.msra.mxu0 %v7607
  %7787 = vmatpush.bf16.msra.mxu0 %v7603
  %7788 = vmatpush.bf16.msra.mxu0 %v7599
  %7789 = vmatpush.bf16.msra.mxu0 %v7595
  %7790 = vmatpush.bf16.msra.mxu0 %v7591
  %7791 = vmatmul.bf16.gmra.mxu0 %v7194
  %v7792 = vpop.f32.mrf.mxu0
  %v7793 = vadd.f32 %v7295, %v7792
  %v7794 = vpop.f32.mrf.mxu0
  %7795 = vdwg.mxu0
  %7796 = vmatpush.bf16.msra.mxu0 %v7651
  %7797 = vmatpush.bf16.msra.mxu0 %v7647
  %7798 = vmatpush.bf16.msra.mxu0 %v7643
  %7799 = vmatpush.bf16.msra.mxu0 %v7639
  %7800 = vmatpush.bf16.msra.mxu0 %v7635
  %7801 = vmatpush.bf16.msra.mxu0 %v7631
  %7802 = vmatpush.bf16.msra.mxu0 %v7627
  %7803 = vmatpush.bf16.msra.mxu0 %v7623
  %7804 = vmatmul.bf16.gmra.mxu0 %v6874
  %v7805 = vpop.f32.mrf.mxu0
  %v7806 = vadd.f32 %v7793, %v7805
  %v7807 = vpop.f32.mrf.mxu0
  %7808 = vdwg.mxu0
  %7809 = vmatpush.bf16.msra.mxu0 %v7683
  %7810 = vmatpush.bf16.msra.mxu0 %v7679
  %7811 = vmatpush.bf16.msra.mxu0 %v7675
  %7812 = vmatpush.bf16.msra.mxu0 %v7671
  %7813 = vmatpush.bf16.msra.mxu0 %v7667
  %7814 = vmatpush.bf16.msra.mxu0 %v7663
  %7815 = vmatpush.bf16.msra.mxu0 %v7659
  %7816 = vmatpush.bf16.msra.mxu0 %v7655
  %7817 = vmatmul.bf16.gmra.mxu0 %v7196
  %v7818 = vpop.f32.mrf.mxu0
  %v7819 = vadd.f32 %v7806, %v7818
  %v7820 = vpop.f32.mrf.mxu0
  %7821 = vdwg.mxu0
  %7822 = vmatpush.bf16.msra.mxu0 %v7620
  %7823 = vmatpush.bf16.msra.mxu0 %v7616
  %7824 = vmatpush.bf16.msra.mxu0 %v7612
  %7825 = vmatpush.bf16.msra.mxu0 %v7608
  %7826 = vmatpush.bf16.msra.mxu0 %v7604
  %7827 = vmatpush.bf16.msra.mxu0 %v7600
  %7828 = vmatpush.bf16.msra.mxu0 %v7596
  %7829 = vmatpush.bf16.msra.mxu0 %v7592
  %7830 = vmatmul.bf16.gmra.mxu0 %v7194
  %v7831 = vpop.f32.mrf.mxu0
  %v7832 = vadd.f32 %v7296, %v7831
  %v7833 = vpop.f32.mrf.mxu0
  %7834 = vdwg.mxu0
  %7835 = vmatpush.bf16.msra.mxu0 %v7652
  %7836 = vmatpush.bf16.msra.mxu0 %v7648
  %7837 = vmatpush.bf16.msra.mxu0 %v7644
  %7838 = vmatpush.bf16.msra.mxu0 %v7640
  %7839 = vmatpush.bf16.msra.mxu0 %v7636
  %7840 = vmatpush.bf16.msra.mxu0 %v7632
  %7841 = vmatpush.bf16.msra.mxu0 %v7628
  %7842 = vmatpush.bf16.msra.mxu0 %v7624
  %7843 = vmatmul.bf16.gmra.mxu0 %v6874
  %v7844 = vpop.f32.mrf.mxu0
  %v7845 = vadd.f32 %v7832, %v7844
  %v7846 = vpop.f32.mrf.mxu0
  %7847 = vdwg.mxu0
  %7848 = vmatpush.bf16.msra.mxu0 %v7684
  %7849 = vmatpush.bf16.msra.mxu0 %v7680
  %7850 = vmatpush.bf16.msra.mxu0 %v7676
  %7851 = vmatpush.bf16.msra.mxu0 %v7672
  %7852 = vmatpush.bf16.msra.mxu0 %v7668
  %7853 = vmatpush.bf16.msra.mxu0 %v7664
  %7854 = vmatpush.bf16.msra.mxu0 %v7660
  %7855 = vmatpush.bf16.msra.mxu0 %v7656
  %7856 = vmatmul.bf16.gmra.mxu0 %v7196
  %v7857 = vpop.f32.mrf.mxu0
  %v7858 = vadd.f32 %v7845, %v7857
  %v7859 = vpop.f32.mrf.mxu0
  %7860 = vdwg.mxu0
  %7861 = vmatpush.bf16.msra.mxu0 %v7621
  %7862 = vmatpush.bf16.msra.mxu0 %v7617
  %7863 = vmatpush.bf16.msra.mxu0 %v7613
  %7864 = vmatpush.bf16.msra.mxu0 %v7609
  %7865 = vmatpush.bf16.msra.mxu0 %v7605
  %7866 = vmatpush.bf16.msra.mxu0 %v7601
  %7867 = vmatpush.bf16.msra.mxu0 %v7597
  %7868 = vmatpush.bf16.msra.mxu0 %v7593
  %7869 = vmatmul.bf16.gmra.mxu0 %v7194
  %v7870 = vpop.f32.mrf.mxu0
  %v7871 = vadd.f32 %v7297, %v7870
  %v7872 = vpop.f32.mrf.mxu0
  %7873 = vdwg.mxu0
  %7874 = vmatpush.bf16.msra.mxu0 %v7653
  %7875 = vmatpush.bf16.msra.mxu0 %v7649
  %7876 = vmatpush.bf16.msra.mxu0 %v7645
  %7877 = vmatpush.bf16.msra.mxu0 %v7641
  %7878 = vmatpush.bf16.msra.mxu0 %v7637
  %7879 = vmatpush.bf16.msra.mxu0 %v7633
  %7880 = vmatpush.bf16.msra.mxu0 %v7629
  %7881 = vmatpush.bf16.msra.mxu0 %v7625
  %7882 = vmatmul.bf16.gmra.mxu0 %v6874
  %v7883 = vpop.f32.mrf.mxu0
  %v7884 = vadd.f32 %v7871, %v7883
  %v7885 = vpop.f32.mrf.mxu0
  %7886 = vdwg.mxu0
  %7887 = vmatpush.bf16.msra.mxu0 %v7685
  %7888 = vmatpush.bf16.msra.mxu0 %v7681
  %7889 = vmatpush.bf16.msra.mxu0 %v7677
  %7890 = vmatpush.bf16.msra.mxu0 %v7673
  %7891 = vmatpush.bf16.msra.mxu0 %v7669
  %7892 = vmatpush.bf16.msra.mxu0 %v7665
  %7893 = vmatpush.bf16.msra.mxu0 %v7661
  %7894 = vmatpush.bf16.msra.mxu0 %v7657
  %7895 = vmatmul.bf16.gmra.mxu0 %v7196
  %v7896 = vpop.f32.mrf.mxu0
  %v7897 = vadd.f32 %v7884, %v7896
  %v7898 = vpop.f32.mrf.mxu0
  %7899 = vdwg.mxu0
  %7900 = vmatpush.bf16.msra.mxu0 %v7622
  %7901 = vmatpush.bf16.msra.mxu0 %v7618
  %7902 = vmatpush.bf16.msra.mxu0 %v7614
  %7903 = vmatpush.bf16.msra.mxu0 %v7610
  %7904 = vmatpush.bf16.msra.mxu0 %v7606
  %7905 = vmatpush.bf16.msra.mxu0 %v7602
  %7906 = vmatpush.bf16.msra.mxu0 %v7598
  %7907 = vmatpush.bf16.msra.mxu0 %v7594
  %7908 = vmatmul.bf16.gmra.mxu0 %v7194
  %v7909 = vpop.f32.mrf.mxu0
  %v7910 = vadd.f32 %v7298, %v7909
  %v7911 = vpop.f32.mrf.mxu0
  %7912 = vdwg.mxu0
  %7913 = vmatpush.bf16.msra.mxu0 %v7654
  %7914 = vmatpush.bf16.msra.mxu0 %v7650
  %7915 = vmatpush.bf16.msra.mxu0 %v7646
  %7916 = vmatpush.bf16.msra.mxu0 %v7642
  %7917 = vmatpush.bf16.msra.mxu0 %v7638
  %7918 = vmatpush.bf16.msra.mxu0 %v7634
  %7919 = vmatpush.bf16.msra.mxu0 %v7630
  %7920 = vmatpush.bf16.msra.mxu0 %v7626
  %7921 = vmatmul.bf16.gmra.mxu0 %v6874
  %v7922 = vpop.f32.mrf.mxu0
  %v7923 = vadd.f32 %v7910, %v7922
  %v7924 = vpop.f32.mrf.mxu0
  %7925 = vdwg.mxu0
  %7926 = vmatpush.bf16.msra.mxu0 %v7686
  %7927 = vmatpush.bf16.msra.mxu0 %v7682
  %7928 = vmatpush.bf16.msra.mxu0 %v7678
  %7929 = vmatpush.bf16.msra.mxu0 %v7674
  %7930 = vmatpush.bf16.msra.mxu0 %v7670
  %7931 = vmatpush.bf16.msra.mxu0 %v7666
  %7932 = vmatpush.bf16.msra.mxu0 %v7662
  %7933 = vmatpush.bf16.msra.mxu0 %v7658
  %7934 = vmatmul.bf16.gmra.mxu0 %v7196
  %v7935 = vpop.f32.mrf.mxu0
  %v7936 = vadd.f32 %v7923, %v7935
  %v7937 = vpop.f32.mrf.mxu0
  %7938 = vdwg.mxu0
  %v7939 = vxor.u32 %v7819, 2147483648
  %v7940 = vmul.f32 %v7939, 1.442695
  %v7941 = vpow.pop %v7940
  %v7942 = vadd.f32 %v7941, 1.0
  %v7943 = vrcp.pop %v7942
  %v7944 = vmul.f32 %v7942, %v7943
  %v7945 = vsub.f32 1.0, %v7944
  %v7946 = vmul.f32 %v7943, %v7945
  %v7947 = vadd.f32 %v7943, %v7946
  %vm7948 = vweird.f32 %v7942
  %vm7949 = vweird.f32 %v7943
  %vm7950 = vmor %vm7948, %vm7949
  %v7951 = vsel %vm7950, %v7943, %v7947
  %v7952 = vand.u32 2147483647, %v7942
  %vm7953 = vcmp.eq.f32.partialorder %v7952, 8.507059e+37
  %v7954 = vand.u32 %v7942, 2147483648
  %v7955 = vor.u32 1.1754944e-38, %v7954
  %v7956 = vsel %vm7953, %v7955, %v7951
  %v7957 = vmul.f32 1.0, %v7956
  %v7958 = vxor.u32 %v7858, 2147483648
  %v7959 = vmul.f32 %v7958, 1.442695
  %v7960 = vpow.pop %v7959
  %v7961 = vadd.f32 %v7960, 1.0
  %v7962 = vrcp.pop %v7961
  %v7963 = vmul.f32 %v7961, %v7962
  %v7964 = vsub.f32 1.0, %v7963
  %v7965 = vmul.f32 %v7962, %v7964
  %v7966 = vadd.f32 %v7962, %v7965
  %vm7967 = vweird.f32 %v7961
  %vm7968 = vweird.f32 %v7962
  %vm7969 = vmor %vm7967, %vm7968
  %v7970 = vsel %vm7969, %v7962, %v7966
  %v7971 = vand.u32 2147483647, %v7961
  %vm7972 = vcmp.eq.f32.partialorder %v7971, 8.507059e+37
  %v7973 = vand.u32 %v7961, 2147483648
  %v7974 = vor.u32 1.1754944e-38, %v7973
  %v7975 = vsel %vm7972, %v7974, %v7970
  %v7976 = vmul.f32 1.0, %v7975
  %v7977 = vtanh.pop %v7897
  %v7978 = vxor.u32 %v7936, 2147483648
  %v7979 = vmul.f32 %v7978, 1.442695
  %v7980 = vpow.pop %v7979
  %v7981 = vadd.f32 %v7980, 1.0
  %v7982 = vrcp.pop %v7981
  %v7983 = vmul.f32 %v7981, %v7982
  %v7984 = vsub.f32 1.0, %v7983
  %v7985 = vmul.f32 %v7982, %v7984
  %v7986 = vadd.f32 %v7982, %v7985
  %vm7987 = vweird.f32 %v7981
  %vm7988 = vweird.f32 %v7982
  %vm7989 = vmor %vm7987, %vm7988
  %v7990 = vsel %vm7989, %v7982, %v7986
  %v7991 = vand.u32 2147483647, %v7981
  %vm7992 = vcmp.eq.f32.partialorder %v7991, 8.507059e+37
  %v7993 = vand.u32 %v7981, 2147483648
  %v7994 = vor.u32 1.1754944e-38, %v7993
  %v7995 = vsel %vm7992, %v7994, %v7990
  %v7996 = vmul.f32 1.0, %v7995
  %v7997 = vmul.f32 %v7976, %v6871
  %v7998 = vmul.f32 %v7957, %v7977
  %v7999 = vadd.f32 %v7997, %v7998
  %v8000 = vtanh.pop %v7999
  %v8001 = vmul.f32 %v7996, %v8000
  %v8002 = vpack.c.bf16 %v8001, %v8001
  %s8003 = scalar_lea.vmem %s6, 12
  %8004 = vst [vmem:[%s8003] sm:$0xf] %v8002
  %v8005 = vld [vmem:[%s2] sm:$0xff]
  %v8006 = vld [vmem:[%s2 + $0x8] sm:$0xff]
  %v8007 = vld [vmem:[%s2 + $0x10] sm:$0xff]
  %v8008 = vld [vmem:[%s2 + $0x18] sm:$0xff]
  %v8009 = vld [vmem:[%s2 + $0x20] sm:$0xff]
  %v8010 = vld [vmem:[%s2 + $0x28] sm:$0xff]
  %v8011 = vld [vmem:[%s2 + $0x30] sm:$0xff]
  %v8012 = vld [vmem:[%s2 + $0x38] sm:$0xff]
  %v8013 = vld [vmem:[%s2 + $0x40] sm:$0xff]
  %v8014 = vld [vmem:[%s2 + $0x48] sm:$0xff]
  %v8015 = vld [vmem:[%s2 + $0x50] sm:$0xff]
  %v8016 = vld [vmem:[%s2 + $0x58] sm:$0xff]
  %v8017 = vld [vmem:[%s2 + $0x60] sm:$0xff]
  %v8018 = vld [vmem:[%s2 + $0x68] sm:$0xff]
  %v8019 = vld [vmem:[%s2 + $0x70] sm:$0xff]
  %v8020 = vld [vmem:[%s2 + $0x78] sm:$0xff]
  %v8021 = vld [vmem:[%s2 + $0x80] sm:$0xff]
  %v8022 = vld [vmem:[%s2 + $0x88] sm:$0xff]
  %v8023 = vld [vmem:[%s2 + $0x90] sm:$0xff]
  %v8024 = vld [vmem:[%s2 + $0x98] sm:$0xff]
  %v8025 = vld [vmem:[%s2 + $0xa0] sm:$0xff]
  %v8026 = vld [vmem:[%s2 + $0xa8] sm:$0xff]
  %v8027 = vld [vmem:[%s2 + $0xb0] sm:$0xff]
  %v8028 = vld [vmem:[%s2 + $0xb8] sm:$0xff]
  %v8029 = vld [vmem:[%s2 + $0xc0] sm:$0xff]
  %v8030 = vld [vmem:[%s2 + $0xc8] sm:$0xff]
  %v8031 = vld [vmem:[%s2 + $0xd0] sm:$0xff]
  %v8032 = vld [vmem:[%s2 + $0xd8] sm:$0xff]
  %v8033 = vld [vmem:[%s2 + $0xe0] sm:$0xff]
  %v8034 = vld [vmem:[%s2 + $0xe8] sm:$0xff]
  %v8035 = vld [vmem:[%s2 + $0xf0] sm:$0xff]
  %v8036 = vld [vmem:[%s2 + $0xf8] sm:$0xff]
  %v8037 = vld [vmem:[%s3] sm:$0xf]
  %v8039 = vperm.slane %v8037, 0
  %v8040 = vperm.slane %v8037, 1
  %v8041 = vperm.slane %v8037, 2
  %v8042 = vperm.slane %v8037, 3
  %v8079 = vunpack.c.l.b16 %v8005
  %v8080 = vunpack.c.h.b16 %v8005
  %v8081 = vunpack.c.l.b16 %v8006
  %v8082 = vunpack.c.h.b16 %v8006
  %v8083 = vunpack.c.l.b16 %v8007
  %v8084 = vunpack.c.h.b16 %v8007
  %v8085 = vunpack.c.l.b16 %v8008
  %v8086 = vunpack.c.h.b16 %v8008
  %v8087 = vunpack.c.l.b16 %v8009
  %v8088 = vunpack.c.h.b16 %v8009
  %v8089 = vunpack.c.l.b16 %v8010
  %v8090 = vunpack.c.h.b16 %v8010
  %v8091 = vunpack.c.l.b16 %v8011
  %v8092 = vunpack.c.h.b16 %v8011
  %v8093 = vunpack.c.l.b16 %v8012
  %v8094 = vunpack.c.h.b16 %v8012
  %v8095 = vunpack.c.l.b16 %v8013
  %v8096 = vunpack.c.h.b16 %v8013
  %v8097 = vunpack.c.l.b16 %v8014
  %v8098 = vunpack.c.h.b16 %v8014
  %v8099 = vunpack.c.l.b16 %v8015
  %v8100 = vunpack.c.h.b16 %v8015
  %v8101 = vunpack.c.l.b16 %v8016
  %v8102 = vunpack.c.h.b16 %v8016
  %v8103 = vunpack.c.l.b16 %v8017
  %v8104 = vunpack.c.h.b16 %v8017
  %v8105 = vunpack.c.l.b16 %v8018
  %v8106 = vunpack.c.h.b16 %v8018
  %v8107 = vunpack.c.l.b16 %v8019
  %v8108 = vunpack.c.h.b16 %v8019
  %v8109 = vunpack.c.l.b16 %v8020
  %v8110 = vunpack.c.h.b16 %v8020
  %v8111 = vunpack.c.l.b16 %v8021
  %v8112 = vunpack.c.h.b16 %v8021
  %v8113 = vunpack.c.l.b16 %v8022
  %v8114 = vunpack.c.h.b16 %v8022
  %v8115 = vunpack.c.l.b16 %v8023
  %v8116 = vunpack.c.h.b16 %v8023
  %v8117 = vunpack.c.l.b16 %v8024
  %v8118 = vunpack.c.h.b16 %v8024
  %v8119 = vunpack.c.l.b16 %v8025
  %v8120 = vunpack.c.h.b16 %v8025
  %v8121 = vunpack.c.l.b16 %v8026
  %v8122 = vunpack.c.h.b16 %v8026
  %v8123 = vunpack.c.l.b16 %v8027
  %v8124 = vunpack.c.h.b16 %v8027
  %v8125 = vunpack.c.l.b16 %v8028
  %v8126 = vunpack.c.h.b16 %v8028
  %v8127 = vunpack.c.l.b16 %v8029
  %v8128 = vunpack.c.h.b16 %v8029
  %v8129 = vunpack.c.l.b16 %v8030
  %v8130 = vunpack.c.h.b16 %v8030
  %v8131 = vunpack.c.l.b16 %v8031
  %v8132 = vunpack.c.h.b16 %v8031
  %v8133 = vunpack.c.l.b16 %v8032
  %v8134 = vunpack.c.h.b16 %v8032
  %v8135 = vunpack.c.l.b16 %v8033
  %v8136 = vunpack.c.h.b16 %v8033
  %v8137 = vunpack.c.l.b16 %v8034
  %v8138 = vunpack.c.h.b16 %v8034
  %v8139 = vunpack.c.l.b16 %v8035
  %v8140 = vunpack.c.h.b16 %v8035
  %v8141 = vunpack.c.l.b16 %v8036
  %v8142 = vunpack.c.h.b16 %v8036
  %v8143 = vpack.c.b16 %v8083, %v8079
  %v8144 = vpack.c.b16 %v8084, %v8080
  %v8145 = vpack.c.b16 %v8085, %v8081
  %v8146 = vpack.c.b16 %v8086, %v8082
  %v8147 = vpack.c.b16 %v8091, %v8087
  %v8148 = vpack.c.b16 %v8092, %v8088
  %v8149 = vpack.c.b16 %v8093, %v8089
  %v8150 = vpack.c.b16 %v8094, %v8090
  %v8151 = vpack.c.b16 %v8099, %v8095
  %v8152 = vpack.c.b16 %v8100, %v8096
  %v8153 = vpack.c.b16 %v8101, %v8097
  %v8154 = vpack.c.b16 %v8102, %v8098
  %v8155 = vpack.c.b16 %v8107, %v8103
  %v8156 = vpack.c.b16 %v8108, %v8104
  %v8157 = vpack.c.b16 %v8109, %v8105
  %v8158 = vpack.c.b16 %v8110, %v8106
  %v8159 = vpack.c.b16 %v8115, %v8111
  %v8160 = vpack.c.b16 %v8116, %v8112
  %v8161 = vpack.c.b16 %v8117, %v8113
  %v8162 = vpack.c.b16 %v8118, %v8114
  %v8163 = vpack.c.b16 %v8123, %v8119
  %v8164 = vpack.c.b16 %v8124, %v8120
  %v8165 = vpack.c.b16 %v8125, %v8121
  %v8166 = vpack.c.b16 %v8126, %v8122
  %v8167 = vpack.c.b16 %v8131, %v8127
  %v8168 = vpack.c.b16 %v8132, %v8128
  %v8169 = vpack.c.b16 %v8133, %v8129
  %v8170 = vpack.c.b16 %v8134, %v8130
  %v8171 = vpack.c.b16 %v8139, %v8135
  %v8172 = vpack.c.b16 %v8140, %v8136
  %v8173 = vpack.c.b16 %v8141, %v8137
  %v8174 = vpack.c.b16 %v8142, %v8138
  %8207 = vmatpush.bf16.msra.mxu0 %v8171
  %8208 = vmatpush.bf16.msra.mxu0 %v8167
  %8209 = vmatpush.bf16.msra.mxu0 %v8163
  %8210 = vmatpush.bf16.msra.mxu0 %v8159
  %8211 = vmatpush.bf16.msra.mxu0 %v8155
  %8212 = vmatpush.bf16.msra.mxu0 %v8151
  %8213 = vmatpush.bf16.msra.mxu0 %v8147
  %8214 = vmatpush.bf16.msra.mxu0 %v8143
  %8215 = vmatmul.bf16.gmra.mxu0 %v7194
  %v8216 = vpop.f32.mrf.mxu0
  %v8217 = vadd.f32 %v8039, %v8216
  %v8218 = vpop.f32.mrf.mxu0
  %8219 = vdwg.mxu0
  %8220 = vmatpush.bf16.msra.mxu0 %v8172
  %8221 = vmatpush.bf16.msra.mxu0 %v8168
  %8222 = vmatpush.bf16.msra.mxu0 %v8164
  %8223 = vmatpush.bf16.msra.mxu0 %v8160
  %8224 = vmatpush.bf16.msra.mxu0 %v8156
  %8225 = vmatpush.bf16.msra.mxu0 %v8152
  %8226 = vmatpush.bf16.msra.mxu0 %v8148
  %8227 = vmatpush.bf16.msra.mxu0 %v8144
  %8228 = vmatmul.bf16.gmra.mxu0 %v7194
  %v8229 = vpop.f32.mrf.mxu0
  %v8230 = vadd.f32 %v8040, %v8229
  %v8231 = vpop.f32.mrf.mxu0
  %8232 = vdwg.mxu0
  %8233 = vmatpush.bf16.msra.mxu0 %v8173
  %8234 = vmatpush.bf16.msra.mxu0 %v8169
  %8235 = vmatpush.bf16.msra.mxu0 %v8165
  %8236 = vmatpush.bf16.msra.mxu0 %v8161
  %8237 = vmatpush.bf16.msra.mxu0 %v8157
  %8238 = vmatpush.bf16.msra.mxu0 %v8153
  %8239 = vmatpush.bf16.msra.mxu0 %v8149
  %8240 = vmatpush.bf16.msra.mxu0 %v8145
  %8241 = vmatmul.bf16.gmra.mxu0 %v7194
  %v8242 = vpop.f32.mrf.mxu0
  %v8243 = vadd.f32 %v8041, %v8242
  %v8244 = vpop.f32.mrf.mxu0
  %8245 = vdwg.mxu0
  %8246 = vmatpush.bf16.msra.mxu0 %v8174
  %8247 = vmatpush.bf16.msra.mxu0 %v8170
  %8248 = vmatpush.bf16.msra.mxu0 %v8166
  %8249 = vmatpush.bf16.msra.mxu0 %v8162
  %8250 = vmatpush.bf16.msra.mxu0 %v8158
  %8251 = vmatpush.bf16.msra.mxu0 %v8154
  %8252 = vmatpush.bf16.msra.mxu0 %v8150
  %8253 = vmatpush.bf16.msra.mxu0 %v8146
  %8254 = vmatmul.bf16.gmra.mxu0 %v7194
  %v8255 = vpop.f32.mrf.mxu0
  %v8256 = vadd.f32 %v8042, %v8255
  %v8257 = vpop.f32.mrf.mxu0
  %8258 = vdwg.mxu0
  %v8259 = vxor.u32 %v8217, 2147483648
  %v8260 = vmul.f32 %v8259, 1.442695
  %v8261 = vpow.pop %v8260
  %v8262 = vadd.f32 %v8261, 1.0
  %v8263 = vrcp.pop %v8262
  %v8264 = vmul.f32 %v8262, %v8263
  %v8265 = vsub.f32 1.0, %v8264
  %v8266 = vmul.f32 %v8263, %v8265
  %v8267 = vadd.f32 %v8263, %v8266
  %vm8268 = vweird.f32 %v8262
  %vm8269 = vweird.f32 %v8263
  %vm8270 = vmor %vm8268, %vm8269
  %v8271 = vsel %vm8270, %v8263, %v8267
  %v8272 = vand.u32 2147483647, %v8262
  %vm8273 = vcmp.eq.f32.partialorder %v8272, 8.507059e+37
  %v8274 = vand.u32 %v8262, 2147483648
  %v8275 = vor.u32 1.1754944e-38, %v8274
  %v8276 = vsel %vm8273, %v8275, %v8271
  %v8277 = vmul.f32 1.0, %v8276
  %v8278 = vxor.u32 %v8230, 2147483648
  %v8279 = vmul.f32 %v8278, 1.442695
  %v8280 = vpow.pop %v8279
  %v8281 = vadd.f32 %v8280, 1.0
  %v8282 = vrcp.pop %v8281
  %v8283 = vmul.f32 %v8281, %v8282
  %v8284 = vsub.f32 1.0, %v8283
  %v8285 = vmul.f32 %v8282, %v8284
  %v8286 = vadd.f32 %v8282, %v8285
  %vm8287 = vweird.f32 %v8281
  %vm8288 = vweird.f32 %v8282
  %vm8289 = vmor %vm8287, %vm8288
  %v8290 = vsel %vm8289, %v8282, %v8286
  %v8291 = vand.u32 2147483647, %v8281
  %vm8292 = vcmp.eq.f32.partialorder %v8291, 8.507059e+37
  %v8293 = vand.u32 %v8281, 2147483648
  %v8294 = vor.u32 1.1754944e-38, %v8293
  %v8295 = vsel %vm8292, %v8294, %v8290
  %v8296 = vmul.f32 1.0, %v8295
  %v8297 = vtanh.pop %v8243
  %v8298 = vxor.u32 %v8256, 2147483648
  %v8299 = vmul.f32 %v8298, 1.442695
  %v8300 = vpow.pop %v8299
  %v8301 = vadd.f32 %v8300, 1.0
  %v8302 = vrcp.pop %v8301
  %v8303 = vmul.f32 %v8301, %v8302
  %v8304 = vsub.f32 1.0, %v8303
  %v8305 = vmul.f32 %v8302, %v8304
  %v8306 = vadd.f32 %v8302, %v8305
  %vm8307 = vweird.f32 %v8301
  %vm8308 = vweird.f32 %v8302
  %vm8309 = vmor %vm8307, %vm8308
  %v8310 = vsel %vm8309, %v8302, %v8306
  %v8311 = vand.u32 2147483647, %v8301
  %vm8312 = vcmp.eq.f32.partialorder %v8311, 8.507059e+37
  %v8313 = vand.u32 %v8301, 2147483648
  %v8314 = vor.u32 1.1754944e-38, %v8313
  %v8315 = vsel %vm8312, %v8314, %v8310
  %v8316 = vmul.f32 1.0, %v8315
  %v8317 = vmul.f32 %v8296, %v7191
  %v8318 = vmul.f32 %v8277, %v8297
  %v8319 = vadd.f32 %v8317, %v8318
  %v8320 = vtanh.pop %v8319
  %v8321 = vmul.f32 %v8316, %v8320
  %v8322 = vpack.c.bf16 %v8321, %v8321
  %s8323 = scalar_lea.vmem %s1, 16
  %v8324 = vld [vmem:[%s8323] sm:$0xf]
  %v8325 = vld [vmem:[%s4] sm:$0xff]
  %v8326 = vld [vmem:[%s4 + $0x8] sm:$0xff]
  %v8327 = vld [vmem:[%s4 + $0x10] sm:$0xff]
  %v8328 = vld [vmem:[%s4 + $0x18] sm:$0xff]
  %v8329 = vld [vmem:[%s4 + $0x20] sm:$0xff]
  %v8330 = vld [vmem:[%s4 + $0x28] sm:$0xff]
  %v8331 = vld [vmem:[%s4 + $0x30] sm:$0xff]
  %v8332 = vld [vmem:[%s4 + $0x38] sm:$0xff]
  %v8333 = vld [vmem:[%s4 + $0x40] sm:$0xff]
  %v8334 = vld [vmem:[%s4 + $0x48] sm:$0xff]
  %v8335 = vld [vmem:[%s4 + $0x50] sm:$0xff]
  %v8336 = vld [vmem:[%s4 + $0x58] sm:$0xff]
  %v8337 = vld [vmem:[%s4 + $0x60] sm:$0xff]
  %v8338 = vld [vmem:[%s4 + $0x68] sm:$0xff]
  %v8339 = vld [vmem:[%s4 + $0x70] sm:$0xff]
  %v8340 = vld [vmem:[%s4 + $0x78] sm:$0xff]
  %v8341 = vld [vmem:[%s4 + $0x80] sm:$0xff]
  %v8342 = vld [vmem:[%s4 + $0x88] sm:$0xff]
  %v8343 = vld [vmem:[%s4 + $0x90] sm:$0xff]
  %v8344 = vld [vmem:[%s4 + $0x98] sm:$0xff]
  %v8345 = vld [vmem:[%s4 + $0xa0] sm:$0xff]
  %v8346 = vld [vmem:[%s4 + $0xa8] sm:$0xff]
  %v8347 = vld [vmem:[%s4 + $0xb0] sm:$0xff]
  %v8348 = vld [vmem:[%s4 + $0xb8] sm:$0xff]
  %v8349 = vld [vmem:[%s4 + $0xc0] sm:$0xff]
  %v8350 = vld [vmem:[%s4 + $0xc8] sm:$0xff]
  %v8351 = vld [vmem:[%s4 + $0xd0] sm:$0xff]
  %v8352 = vld [vmem:[%s4 + $0xd8] sm:$0xff]
  %v8353 = vld [vmem:[%s4 + $0xe0] sm:$0xff]
  %v8354 = vld [vmem:[%s4 + $0xe8] sm:$0xff]
  %v8355 = vld [vmem:[%s4 + $0xf0] sm:$0xff]
  %v8356 = vld [vmem:[%s4 + $0xf8] sm:$0xff]
  %v8357 = vld [vmem:[%s4 + $0x100] sm:$0xff]
  %v8358 = vld [vmem:[%s4 + $0x108] sm:$0xff]
  %v8359 = vld [vmem:[%s4 + $0x110] sm:$0xff]
  %v8360 = vld [vmem:[%s4 + $0x118] sm:$0xff]
  %v8361 = vld [vmem:[%s4 + $0x120] sm:$0xff]
  %v8362 = vld [vmem:[%s4 + $0x128] sm:$0xff]
  %v8363 = vld [vmem:[%s4 + $0x130] sm:$0xff]
  %v8364 = vld [vmem:[%s4 + $0x138] sm:$0xff]
  %v8365 = vld [vmem:[%s4 + $0x140] sm:$0xff]
  %v8366 = vld [vmem:[%s4 + $0x148] sm:$0xff]
  %v8367 = vld [vmem:[%s4 + $0x150] sm:$0xff]
  %v8368 = vld [vmem:[%s4 + $0x158] sm:$0xff]
  %v8369 = vld [vmem:[%s4 + $0x160] sm:$0xff]
  %v8370 = vld [vmem:[%s4 + $0x168] sm:$0xff]
  %v8371 = vld [vmem:[%s4 + $0x170] sm:$0xff]
  %v8372 = vld [vmem:[%s4 + $0x178] sm:$0xff]
  %v8373 = vld [vmem:[%s4 + $0x180] sm:$0xff]
  %v8374 = vld [vmem:[%s4 + $0x188] sm:$0xff]
  %v8375 = vld [vmem:[%s4 + $0x190] sm:$0xff]
  %v8376 = vld [vmem:[%s4 + $0x198] sm:$0xff]
  %v8377 = vld [vmem:[%s4 + $0x1a0] sm:$0xff]
  %v8378 = vld [vmem:[%s4 + $0x1a8] sm:$0xff]
  %v8379 = vld [vmem:[%s4 + $0x1b0] sm:$0xff]
  %v8380 = vld [vmem:[%s4 + $0x1b8] sm:$0xff]
  %v8381 = vld [vmem:[%s4 + $0x1c0] sm:$0xff]
  %v8382 = vld [vmem:[%s4 + $0x1c8] sm:$0xff]
  %v8383 = vld [vmem:[%s4 + $0x1d0] sm:$0xff]
  %v8384 = vld [vmem:[%s4 + $0x1d8] sm:$0xff]
  %v8385 = vld [vmem:[%s4 + $0x1e0] sm:$0xff]
  %v8386 = vld [vmem:[%s4 + $0x1e8] sm:$0xff]
  %v8387 = vld [vmem:[%s4 + $0x1f0] sm:$0xff]
  %v8388 = vld [vmem:[%s4 + $0x1f8] sm:$0xff]
  %v8389 = vld [vmem:[%s4 + $0x200] sm:$0xff]
  %v8390 = vld [vmem:[%s4 + $0x208] sm:$0xff]
  %v8391 = vld [vmem:[%s4 + $0x210] sm:$0xff]
  %v8392 = vld [vmem:[%s4 + $0x218] sm:$0xff]
  %v8393 = vld [vmem:[%s4 + $0x220] sm:$0xff]
  %v8394 = vld [vmem:[%s4 + $0x228] sm:$0xff]
  %v8395 = vld [vmem:[%s4 + $0x230] sm:$0xff]
  %v8396 = vld [vmem:[%s4 + $0x238] sm:$0xff]
  %v8397 = vld [vmem:[%s4 + $0x240] sm:$0xff]
  %v8398 = vld [vmem:[%s4 + $0x248] sm:$0xff]
  %v8399 = vld [vmem:[%s4 + $0x250] sm:$0xff]
  %v8400 = vld [vmem:[%s4 + $0x258] sm:$0xff]
  %v8401 = vld [vmem:[%s4 + $0x260] sm:$0xff]
  %v8402 = vld [vmem:[%s4 + $0x268] sm:$0xff]
  %v8403 = vld [vmem:[%s4 + $0x270] sm:$0xff]
  %v8404 = vld [vmem:[%s4 + $0x278] sm:$0xff]
  %v8405 = vld [vmem:[%s4 + $0x280] sm:$0xff]
  %v8406 = vld [vmem:[%s4 + $0x288] sm:$0xff]
  %v8407 = vld [vmem:[%s4 + $0x290] sm:$0xff]
  %v8408 = vld [vmem:[%s4 + $0x298] sm:$0xff]
  %v8409 = vld [vmem:[%s4 + $0x2a0] sm:$0xff]
  %v8410 = vld [vmem:[%s4 + $0x2a8] sm:$0xff]
  %v8411 = vld [vmem:[%s4 + $0x2b0] sm:$0xff]
  %v8412 = vld [vmem:[%s4 + $0x2b8] sm:$0xff]
  %v8413 = vld [vmem:[%s4 + $0x2c0] sm:$0xff]
  %v8414 = vld [vmem:[%s4 + $0x2c8] sm:$0xff]
  %v8415 = vld [vmem:[%s4 + $0x2d0] sm:$0xff]
  %v8416 = vld [vmem:[%s4 + $0x2d8] sm:$0xff]
  %v8417 = vld [vmem:[%s4 + $0x2e0] sm:$0xff]
  %v8418 = vld [vmem:[%s4 + $0x2e8] sm:$0xff]
  %v8419 = vld [vmem:[%s4 + $0x2f0] sm:$0xff]
  %v8420 = vld [vmem:[%s4 + $0x2f8] sm:$0xff]
  %v8421 = vld [vmem:[%s5] sm:$0xf]
  %v8423 = vperm.slane %v8421, 0
  %v8424 = vperm.slane %v8421, 1
  %v8425 = vperm.slane %v8421, 2
  %v8426 = vperm.slane %v8421, 3
  %v8527 = vunpack.c.l.b16 %v8325
  %v8528 = vunpack.c.h.b16 %v8325
  %v8529 = vunpack.c.l.b16 %v8326
  %v8530 = vunpack.c.h.b16 %v8326
  %v8531 = vunpack.c.l.b16 %v8327
  %v8532 = vunpack.c.h.b16 %v8327
  %v8533 = vunpack.c.l.b16 %v8328
  %v8534 = vunpack.c.h.b16 %v8328
  %v8535 = vunpack.c.l.b16 %v8329
  %v8536 = vunpack.c.h.b16 %v8329
  %v8537 = vunpack.c.l.b16 %v8330
  %v8538 = vunpack.c.h.b16 %v8330
  %v8539 = vunpack.c.l.b16 %v8331
  %v8540 = vunpack.c.h.b16 %v8331
  %v8541 = vunpack.c.l.b16 %v8332
  %v8542 = vunpack.c.h.b16 %v8332
  %v8543 = vunpack.c.l.b16 %v8333
  %v8544 = vunpack.c.h.b16 %v8333
  %v8545 = vunpack.c.l.b16 %v8334
  %v8546 = vunpack.c.h.b16 %v8334
  %v8547 = vunpack.c.l.b16 %v8335
  %v8548 = vunpack.c.h.b16 %v8335
  %v8549 = vunpack.c.l.b16 %v8336
  %v8550 = vunpack.c.h.b16 %v8336
  %v8551 = vunpack.c.l.b16 %v8337
  %v8552 = vunpack.c.h.b16 %v8337
  %v8553 = vunpack.c.l.b16 %v8338
  %v8554 = vunpack.c.h.b16 %v8338
  %v8555 = vunpack.c.l.b16 %v8339
  %v8556 = vunpack.c.h.b16 %v8339
  %v8557 = vunpack.c.l.b16 %v8340
  %v8558 = vunpack.c.h.b16 %v8340
  %v8559 = vunpack.c.l.b16 %v8341
  %v8560 = vunpack.c.h.b16 %v8341
  %v8561 = vunpack.c.l.b16 %v8342
  %v8562 = vunpack.c.h.b16 %v8342
  %v8563 = vunpack.c.l.b16 %v8343
  %v8564 = vunpack.c.h.b16 %v8343
  %v8565 = vunpack.c.l.b16 %v8344
  %v8566 = vunpack.c.h.b16 %v8344
  %v8567 = vunpack.c.l.b16 %v8345
  %v8568 = vunpack.c.h.b16 %v8345
  %v8569 = vunpack.c.l.b16 %v8346
  %v8570 = vunpack.c.h.b16 %v8346
  %v8571 = vunpack.c.l.b16 %v8347
  %v8572 = vunpack.c.h.b16 %v8347
  %v8573 = vunpack.c.l.b16 %v8348
  %v8574 = vunpack.c.h.b16 %v8348
  %v8575 = vunpack.c.l.b16 %v8349
  %v8576 = vunpack.c.h.b16 %v8349
  %v8577 = vunpack.c.l.b16 %v8350
  %v8578 = vunpack.c.h.b16 %v8350
  %v8579 = vunpack.c.l.b16 %v8351
  %v8580 = vunpack.c.h.b16 %v8351
  %v8581 = vunpack.c.l.b16 %v8352
  %v8582 = vunpack.c.h.b16 %v8352
  %v8583 = vunpack.c.l.b16 %v8353
  %v8584 = vunpack.c.h.b16 %v8353
  %v8585 = vunpack.c.l.b16 %v8354
  %v8586 = vunpack.c.h.b16 %v8354
  %v8587 = vunpack.c.l.b16 %v8355
  %v8588 = vunpack.c.h.b16 %v8355
  %v8589 = vunpack.c.l.b16 %v8356
  %v8590 = vunpack.c.h.b16 %v8356
  %v8591 = vunpack.c.l.b16 %v8357
  %v8592 = vunpack.c.h.b16 %v8357
  %v8593 = vunpack.c.l.b16 %v8358
  %v8594 = vunpack.c.h.b16 %v8358
  %v8595 = vunpack.c.l.b16 %v8359
  %v8596 = vunpack.c.h.b16 %v8359
  %v8597 = vunpack.c.l.b16 %v8360
  %v8598 = vunpack.c.h.b16 %v8360
  %v8599 = vunpack.c.l.b16 %v8361
  %v8600 = vunpack.c.h.b16 %v8361
  %v8601 = vunpack.c.l.b16 %v8362
  %v8602 = vunpack.c.h.b16 %v8362
  %v8603 = vunpack.c.l.b16 %v8363
  %v8604 = vunpack.c.h.b16 %v8363
  %v8605 = vunpack.c.l.b16 %v8364
  %v8606 = vunpack.c.h.b16 %v8364
  %v8607 = vunpack.c.l.b16 %v8365
  %v8608 = vunpack.c.h.b16 %v8365
  %v8609 = vunpack.c.l.b16 %v8366
  %v8610 = vunpack.c.h.b16 %v8366
  %v8611 = vunpack.c.l.b16 %v8367
  %v8612 = vunpack.c.h.b16 %v8367
  %v8613 = vunpack.c.l.b16 %v8368
  %v8614 = vunpack.c.h.b16 %v8368
  %v8615 = vunpack.c.l.b16 %v8369
  %v8616 = vunpack.c.h.b16 %v8369
  %v8617 = vunpack.c.l.b16 %v8370
  %v8618 = vunpack.c.h.b16 %v8370
  %v8619 = vunpack.c.l.b16 %v8371
  %v8620 = vunpack.c.h.b16 %v8371
  %v8621 = vunpack.c.l.b16 %v8372
  %v8622 = vunpack.c.h.b16 %v8372
  %v8623 = vunpack.c.l.b16 %v8373
  %v8624 = vunpack.c.h.b16 %v8373
  %v8625 = vunpack.c.l.b16 %v8374
  %v8626 = vunpack.c.h.b16 %v8374
  %v8627 = vunpack.c.l.b16 %v8375
  %v8628 = vunpack.c.h.b16 %v8375
  %v8629 = vunpack.c.l.b16 %v8376
  %v8630 = vunpack.c.h.b16 %v8376
  %v8631 = vunpack.c.l.b16 %v8377
  %v8632 = vunpack.c.h.b16 %v8377
  %v8633 = vunpack.c.l.b16 %v8378
  %v8634 = vunpack.c.h.b16 %v8378
  %v8635 = vunpack.c.l.b16 %v8379
  %v8636 = vunpack.c.h.b16 %v8379
  %v8637 = vunpack.c.l.b16 %v8380
  %v8638 = vunpack.c.h.b16 %v8380
  %v8639 = vunpack.c.l.b16 %v8381
  %v8640 = vunpack.c.h.b16 %v8381
  %v8641 = vunpack.c.l.b16 %v8382
  %v8642 = vunpack.c.h.b16 %v8382
  %v8643 = vunpack.c.l.b16 %v8383
  %v8644 = vunpack.c.h.b16 %v8383
  %v8645 = vunpack.c.l.b16 %v8384
  %v8646 = vunpack.c.h.b16 %v8384
  %v8647 = vunpack.c.l.b16 %v8385
  %v8648 = vunpack.c.h.b16 %v8385
  %v8649 = vunpack.c.l.b16 %v8386
  %v8650 = vunpack.c.h.b16 %v8386
  %v8651 = vunpack.c.l.b16 %v8387
  %v8652 = vunpack.c.h.b16 %v8387
  %v8653 = vunpack.c.l.b16 %v8388
  %v8654 = vunpack.c.h.b16 %v8388
  %v8655 = vunpack.c.l.b16 %v8389
  %v8656 = vunpack.c.h.b16 %v8389
  %v8657 = vunpack.c.l.b16 %v8390
  %v8658 = vunpack.c.h.b16 %v8390
  %v8659 = vunpack.c.l.b16 %v8391
  %v8660 = vunpack.c.h.b16 %v8391
  %v8661 = vunpack.c.l.b16 %v8392
  %v8662 = vunpack.c.h.b16 %v8392
  %v8663 = vunpack.c.l.b16 %v8393
  %v8664 = vunpack.c.h.b16 %v8393
  %v8665 = vunpack.c.l.b16 %v8394
  %v8666 = vunpack.c.h.b16 %v8394
  %v8667 = vunpack.c.l.b16 %v8395
  %v8668 = vunpack.c.h.b16 %v8395
  %v8669 = vunpack.c.l.b16 %v8396
  %v8670 = vunpack.c.h.b16 %v8396
  %v8671 = vunpack.c.l.b16 %v8397
  %v8672 = vunpack.c.h.b16 %v8397
  %v8673 = vunpack.c.l.b16 %v8398
  %v8674 = vunpack.c.h.b16 %v8398
  %v8675 = vunpack.c.l.b16 %v8399
  %v8676 = vunpack.c.h.b16 %v8399
  %v8677 = vunpack.c.l.b16 %v8400
  %v8678 = vunpack.c.h.b16 %v8400
  %v8679 = vunpack.c.l.b16 %v8401
  %v8680 = vunpack.c.h.b16 %v8401
  %v8681 = vunpack.c.l.b16 %v8402
  %v8682 = vunpack.c.h.b16 %v8402
  %v8683 = vunpack.c.l.b16 %v8403
  %v8684 = vunpack.c.h.b16 %v8403
  %v8685 = vunpack.c.l.b16 %v8404
  %v8686 = vunpack.c.h.b16 %v8404
  %v8687 = vunpack.c.l.b16 %v8405
  %v8688 = vunpack.c.h.b16 %v8405
  %v8689 = vunpack.c.l.b16 %v8406
  %v8690 = vunpack.c.h.b16 %v8406
  %v8691 = vunpack.c.l.b16 %v8407
  %v8692 = vunpack.c.h.b16 %v8407
  %v8693 = vunpack.c.l.b16 %v8408
  %v8694 = vunpack.c.h.b16 %v8408
  %v8695 = vunpack.c.l.b16 %v8409
  %v8696 = vunpack.c.h.b16 %v8409
  %v8697 = vunpack.c.l.b16 %v8410
  %v8698 = vunpack.c.h.b16 %v8410
  %v8699 = vunpack.c.l.b16 %v8411
  %v8700 = vunpack.c.h.b16 %v8411
  %v8701 = vunpack.c.l.b16 %v8412
  %v8702 = vunpack.c.h.b16 %v8412
  %v8703 = vunpack.c.l.b16 %v8413
  %v8704 = vunpack.c.h.b16 %v8413
  %v8705 = vunpack.c.l.b16 %v8414
  %v8706 = vunpack.c.h.b16 %v8414
  %v8707 = vunpack.c.l.b16 %v8415
  %v8708 = vunpack.c.h.b16 %v8415
  %v8709 = vunpack.c.l.b16 %v8416
  %v8710 = vunpack.c.h.b16 %v8416
  %v8711 = vunpack.c.l.b16 %v8417
  %v8712 = vunpack.c.h.b16 %v8417
  %v8713 = vunpack.c.l.b16 %v8418
  %v8714 = vunpack.c.h.b16 %v8418
  %v8715 = vunpack.c.l.b16 %v8419
  %v8716 = vunpack.c.h.b16 %v8419
  %v8717 = vunpack.c.l.b16 %v8420
  %v8718 = vunpack.c.h.b16 %v8420
  %v8719 = vpack.c.b16 %v8531, %v8527
  %v8720 = vpack.c.b16 %v8532, %v8528
  %v8721 = vpack.c.b16 %v8533, %v8529
  %v8722 = vpack.c.b16 %v8534, %v8530
  %v8723 = vpack.c.b16 %v8539, %v8535
  %v8724 = vpack.c.b16 %v8540, %v8536
  %v8725 = vpack.c.b16 %v8541, %v8537
  %v8726 = vpack.c.b16 %v8542, %v8538
  %v8727 = vpack.c.b16 %v8547, %v8543
  %v8728 = vpack.c.b16 %v8548, %v8544
  %v8729 = vpack.c.b16 %v8549, %v8545
  %v8730 = vpack.c.b16 %v8550, %v8546
  %v8731 = vpack.c.b16 %v8555, %v8551
  %v8732 = vpack.c.b16 %v8556, %v8552
  %v8733 = vpack.c.b16 %v8557, %v8553
  %v8734 = vpack.c.b16 %v8558, %v8554
  %v8735 = vpack.c.b16 %v8563, %v8559
  %v8736 = vpack.c.b16 %v8564, %v8560
  %v8737 = vpack.c.b16 %v8565, %v8561
  %v8738 = vpack.c.b16 %v8566, %v8562
  %v8739 = vpack.c.b16 %v8571, %v8567
  %v8740 = vpack.c.b16 %v8572, %v8568
  %v8741 = vpack.c.b16 %v8573, %v8569
  %v8742 = vpack.c.b16 %v8574, %v8570
  %v8743 = vpack.c.b16 %v8579, %v8575
  %v8744 = vpack.c.b16 %v8580, %v8576
  %v8745 = vpack.c.b16 %v8581, %v8577
  %v8746 = vpack.c.b16 %v8582, %v8578
  %v8747 = vpack.c.b16 %v8587, %v8583
  %v8748 = vpack.c.b16 %v8588, %v8584
  %v8749 = vpack.c.b16 %v8589, %v8585
  %v8750 = vpack.c.b16 %v8590, %v8586
  %v8751 = vpack.c.b16 %v8595, %v8591
  %v8752 = vpack.c.b16 %v8596, %v8592
  %v8753 = vpack.c.b16 %v8597, %v8593
  %v8754 = vpack.c.b16 %v8598, %v8594
  %v8755 = vpack.c.b16 %v8603, %v8599
  %v8756 = vpack.c.b16 %v8604, %v8600
  %v8757 = vpack.c.b16 %v8605, %v8601
  %v8758 = vpack.c.b16 %v8606, %v8602
  %v8759 = vpack.c.b16 %v8611, %v8607
  %v8760 = vpack.c.b16 %v8612, %v8608
  %v8761 = vpack.c.b16 %v8613, %v8609
  %v8762 = vpack.c.b16 %v8614, %v8610
  %v8763 = vpack.c.b16 %v8619, %v8615
  %v8764 = vpack.c.b16 %v8620, %v8616
  %v8765 = vpack.c.b16 %v8621, %v8617
  %v8766 = vpack.c.b16 %v8622, %v8618
  %v8767 = vpack.c.b16 %v8627, %v8623
  %v8768 = vpack.c.b16 %v8628, %v8624
  %v8769 = vpack.c.b16 %v8629, %v8625
  %v8770 = vpack.c.b16 %v8630, %v8626
  %v8771 = vpack.c.b16 %v8635, %v8631
  %v8772 = vpack.c.b16 %v8636, %v8632
  %v8773 = vpack.c.b16 %v8637, %v8633
  %v8774 = vpack.c.b16 %v8638, %v8634
  %v8775 = vpack.c.b16 %v8643, %v8639
  %v8776 = vpack.c.b16 %v8644, %v8640
  %v8777 = vpack.c.b16 %v8645, %v8641
  %v8778 = vpack.c.b16 %v8646, %v8642
  %v8779 = vpack.c.b16 %v8651, %v8647
  %v8780 = vpack.c.b16 %v8652, %v8648
  %v8781 = vpack.c.b16 %v8653, %v8649
  %v8782 = vpack.c.b16 %v8654, %v8650
  %v8783 = vpack.c.b16 %v8659, %v8655
  %v8784 = vpack.c.b16 %v8660, %v8656
  %v8785 = vpack.c.b16 %v8661, %v8657
  %v8786 = vpack.c.b16 %v8662, %v8658
  %v8787 = vpack.c.b16 %v8667, %v8663
  %v8788 = vpack.c.b16 %v8668, %v8664
  %v8789 = vpack.c.b16 %v8669, %v8665
  %v8790 = vpack.c.b16 %v8670, %v8666
  %v8791 = vpack.c.b16 %v8675, %v8671
  %v8792 = vpack.c.b16 %v8676, %v8672
  %v8793 = vpack.c.b16 %v8677, %v8673
  %v8794 = vpack.c.b16 %v8678, %v8674
  %v8795 = vpack.c.b16 %v8683, %v8679
  %v8796 = vpack.c.b16 %v8684, %v8680
  %v8797 = vpack.c.b16 %v8685, %v8681
  %v8798 = vpack.c.b16 %v8686, %v8682
  %v8799 = vpack.c.b16 %v8691, %v8687
  %v8800 = vpack.c.b16 %v8692, %v8688
  %v8801 = vpack.c.b16 %v8693, %v8689
  %v8802 = vpack.c.b16 %v8694, %v8690
  %v8803 = vpack.c.b16 %v8699, %v8695
  %v8804 = vpack.c.b16 %v8700, %v8696
  %v8805 = vpack.c.b16 %v8701, %v8697
  %v8806 = vpack.c.b16 %v8702, %v8698
  %v8807 = vpack.c.b16 %v8707, %v8703
  %v8808 = vpack.c.b16 %v8708, %v8704
  %v8809 = vpack.c.b16 %v8709, %v8705
  %v8810 = vpack.c.b16 %v8710, %v8706
  %v8811 = vpack.c.b16 %v8715, %v8711
  %v8812 = vpack.c.b16 %v8716, %v8712
  %v8813 = vpack.c.b16 %v8717, %v8713
  %v8814 = vpack.c.b16 %v8718, %v8714
  %8911 = vmatpush.bf16.msra.mxu0 %v8747
  %8912 = vmatpush.bf16.msra.mxu0 %v8743
  %8913 = vmatpush.bf16.msra.mxu0 %v8739
  %8914 = vmatpush.bf16.msra.mxu0 %v8735
  %8915 = vmatpush.bf16.msra.mxu0 %v8731
  %8916 = vmatpush.bf16.msra.mxu0 %v8727
  %8917 = vmatpush.bf16.msra.mxu0 %v8723
  %8918 = vmatpush.bf16.msra.mxu0 %v8719
  %8919 = vmatmul.bf16.gmra.mxu0 %v8322
  %v8920 = vpop.f32.mrf.mxu0
  %v8921 = vadd.f32 %v8423, %v8920
  %v8922 = vpop.f32.mrf.mxu0
  %8923 = vdwg.mxu0
  %8924 = vmatpush.bf16.msra.mxu0 %v8779
  %8925 = vmatpush.bf16.msra.mxu0 %v8775
  %8926 = vmatpush.bf16.msra.mxu0 %v8771
  %8927 = vmatpush.bf16.msra.mxu0 %v8767
  %8928 = vmatpush.bf16.msra.mxu0 %v8763
  %8929 = vmatpush.bf16.msra.mxu0 %v8759
  %8930 = vmatpush.bf16.msra.mxu0 %v8755
  %8931 = vmatpush.bf16.msra.mxu0 %v8751
  %8932 = vmatmul.bf16.gmra.mxu0 %v8002
  %v8933 = vpop.f32.mrf.mxu0
  %v8934 = vadd.f32 %v8921, %v8933
  %v8935 = vpop.f32.mrf.mxu0
  %8936 = vdwg.mxu0
  %8937 = vmatpush.bf16.msra.mxu0 %v8811
  %8938 = vmatpush.bf16.msra.mxu0 %v8807
  %8939 = vmatpush.bf16.msra.mxu0 %v8803
  %8940 = vmatpush.bf16.msra.mxu0 %v8799
  %8941 = vmatpush.bf16.msra.mxu0 %v8795
  %8942 = vmatpush.bf16.msra.mxu0 %v8791
  %8943 = vmatpush.bf16.msra.mxu0 %v8787
  %8944 = vmatpush.bf16.msra.mxu0 %v8783
  %8945 = vmatmul.bf16.gmra.mxu0 %v8324
  %v8946 = vpop.f32.mrf.mxu0
  %v8947 = vadd.f32 %v8934, %v8946
  %v8948 = vpop.f32.mrf.mxu0
  %8949 = vdwg.mxu0
  %8950 = vmatpush.bf16.msra.mxu0 %v8748
  %8951 = vmatpush.bf16.msra.mxu0 %v8744
  %8952 = vmatpush.bf16.msra.mxu0 %v8740
  %8953 = vmatpush.bf16.msra.mxu0 %v8736
  %8954 = vmatpush.bf16.msra.mxu0 %v8732
  %8955 = vmatpush.bf16.msra.mxu0 %v8728
  %8956 = vmatpush.bf16.msra.mxu0 %v8724
  %8957 = vmatpush.bf16.msra.mxu0 %v8720
  %8958 = vmatmul.bf16.gmra.mxu0 %v8322
  %v8959 = vpop.f32.mrf.mxu0
  %v8960 = vadd.f32 %v8424, %v8959
  %v8961 = vpop.f32.mrf.mxu0
  %8962 = vdwg.mxu0
  %8963 = vmatpush.bf16.msra.mxu0 %v8780
  %8964 = vmatpush.bf16.msra.mxu0 %v8776
  %8965 = vmatpush.bf16.msra.mxu0 %v8772
  %8966 = vmatpush.bf16.msra.mxu0 %v8768
  %8967 = vmatpush.bf16.msra.mxu0 %v8764
  %8968 = vmatpush.bf16.msra.mxu0 %v8760
  %8969 = vmatpush.bf16.msra.mxu0 %v8756
  %8970 = vmatpush.bf16.msra.mxu0 %v8752
  %8971 = vmatmul.bf16.gmra.mxu0 %v8002
  %v8972 = vpop.f32.mrf.mxu0
  %v8973 = vadd.f32 %v8960, %v8972
  %v8974 = vpop.f32.mrf.mxu0
  %8975 = vdwg.mxu0
  %8976 = vmatpush.bf16.msra.mxu0 %v8812
  %8977 = vmatpush.bf16.msra.mxu0 %v8808
  %8978 = vmatpush.bf16.msra.mxu0 %v8804
  %8979 = vmatpush.bf16.msra.mxu0 %v8800
  %8980 = vmatpush.bf16.msra.mxu0 %v8796
  %8981 = vmatpush.bf16.msra.mxu0 %v8792
  %8982 = vmatpush.bf16.msra.mxu0 %v8788
  %8983 = vmatpush.bf16.msra.mxu0 %v8784
  %8984 = vmatmul.bf16.gmra.mxu0 %v8324
  %v8985 = vpop.f32.mrf.mxu0
  %v8986 = vadd.f32 %v8973, %v8985
  %v8987 = vpop.f32.mrf.mxu0
  %8988 = vdwg.mxu0
  %8989 = vmatpush.bf16.msra.mxu0 %v8749
  %8990 = vmatpush.bf16.msra.mxu0 %v8745
  %8991 = vmatpush.bf16.msra.mxu0 %v8741
  %8992 = vmatpush.bf16.msra.mxu0 %v8737
  %8993 = vmatpush.bf16.msra.mxu0 %v8733
  %8994 = vmatpush.bf16.msra.mxu0 %v8729
  %8995 = vmatpush.bf16.msra.mxu0 %v8725
  %8996 = vmatpush.bf16.msra.mxu0 %v8721
  %8997 = vmatmul.bf16.gmra.mxu0 %v8322
  %v8998 = vpop.f32.mrf.mxu0
  %v8999 = vadd.f32 %v8425, %v8998
  %v9000 = vpop.f32.mrf.mxu0
  %9001 = vdwg.mxu0
  %9002 = vmatpush.bf16.msra.mxu0 %v8781
  %9003 = vmatpush.bf16.msra.mxu0 %v8777
  %9004 = vmatpush.bf16.msra.mxu0 %v8773
  %9005 = vmatpush.bf16.msra.mxu0 %v8769
  %9006 = vmatpush.bf16.msra.mxu0 %v8765
  %9007 = vmatpush.bf16.msra.mxu0 %v8761
  %9008 = vmatpush.bf16.msra.mxu0 %v8757
  %9009 = vmatpush.bf16.msra.mxu0 %v8753
  %9010 = vmatmul.bf16.gmra.mxu0 %v8002
  %v9011 = vpop.f32.mrf.mxu0
  %v9012 = vadd.f32 %v8999, %v9011
  %v9013 = vpop.f32.mrf.mxu0
  %9014 = vdwg.mxu0
  %9015 = vmatpush.bf16.msra.mxu0 %v8813
  %9016 = vmatpush.bf16.msra.mxu0 %v8809
  %9017 = vmatpush.bf16.msra.mxu0 %v8805
  %9018 = vmatpush.bf16.msra.mxu0 %v8801
  %9019 = vmatpush.bf16.msra.mxu0 %v8797
  %9020 = vmatpush.bf16.msra.mxu0 %v8793
  %9021 = vmatpush.bf16.msra.mxu0 %v8789
  %9022 = vmatpush.bf16.msra.mxu0 %v8785
  %9023 = vmatmul.bf16.gmra.mxu0 %v8324
  %v9024 = vpop.f32.mrf.mxu0
  %v9025 = vadd.f32 %v9012, %v9024
  %v9026 = vpop.f32.mrf.mxu0
  %9027 = vdwg.mxu0
  %9028 = vmatpush.bf16.msra.mxu0 %v8750
  %9029 = vmatpush.bf16.msra.mxu0 %v8746
  %9030 = vmatpush.bf16.msra.mxu0 %v8742
  %9031 = vmatpush.bf16.msra.mxu0 %v8738
  %9032 = vmatpush.bf16.msra.mxu0 %v8734
  %9033 = vmatpush.bf16.msra.mxu0 %v8730
  %9034 = vmatpush.bf16.msra.mxu0 %v8726
  %9035 = vmatpush.bf16.msra.mxu0 %v8722
  %9036 = vmatmul.bf16.gmra.mxu0 %v8322
  %v9037 = vpop.f32.mrf.mxu0
  %v9038 = vadd.f32 %v8426, %v9037
  %v9039 = vpop.f32.mrf.mxu0
  %9040 = vdwg.mxu0
  %9041 = vmatpush.bf16.msra.mxu0 %v8782
  %9042 = vmatpush.bf16.msra.mxu0 %v8778
  %9043 = vmatpush.bf16.msra.mxu0 %v8774
  %9044 = vmatpush.bf16.msra.mxu0 %v8770
  %9045 = vmatpush.bf16.msra.mxu0 %v8766
  %9046 = vmatpush.bf16.msra.mxu0 %v8762
  %9047 = vmatpush.bf16.msra.mxu0 %v8758
  %9048 = vmatpush.bf16.msra.mxu0 %v8754
  %9049 = vmatmul.bf16.gmra.mxu0 %v8002
  %v9050 = vpop.f32.mrf.mxu0
  %v9051 = vadd.f32 %v9038, %v9050
  %v9052 = vpop.f32.mrf.mxu0
  %9053 = vdwg.mxu0
  %9054 = vmatpush.bf16.msra.mxu0 %v8814
  %9055 = vmatpush.bf16.msra.mxu0 %v8810
  %9056 = vmatpush.bf16.msra.mxu0 %v8806
  %9057 = vmatpush.bf16.msra.mxu0 %v8802
  %9058 = vmatpush.bf16.msra.mxu0 %v8798
  %9059 = vmatpush.bf16.msra.mxu0 %v8794
  %9060 = vmatpush.bf16.msra.mxu0 %v8790
  %9061 = vmatpush.bf16.msra.mxu0 %v8786
  %9062 = vmatmul.bf16.gmra.mxu0 %v8324
  %v9063 = vpop.f32.mrf.mxu0
  %v9064 = vadd.f32 %v9051, %v9063
  %v9065 = vpop.f32.mrf.mxu0
  %9066 = vdwg.mxu0
  %v9067 = vxor.u32 %v8947, 2147483648
  %v9068 = vmul.f32 %v9067, 1.442695
  %v9069 = vpow.pop %v9068
  %v9070 = vadd.f32 %v9069, 1.0
  %v9071 = vrcp.pop %v9070
  %v9072 = vmul.f32 %v9070, %v9071
  %v9073 = vsub.f32 1.0, %v9072
  %v9074 = vmul.f32 %v9071, %v9073
  %v9075 = vadd.f32 %v9071, %v9074
  %vm9076 = vweird.f32 %v9070
  %vm9077 = vweird.f32 %v9071
  %vm9078 = vmor %vm9076, %vm9077
  %v9079 = vsel %vm9078, %v9071, %v9075
  %v9080 = vand.u32 2147483647, %v9070
  %vm9081 = vcmp.eq.f32.partialorder %v9080, 8.507059e+37
  %v9082 = vand.u32 %v9070, 2147483648
  %v9083 = vor.u32 1.1754944e-38, %v9082
  %v9084 = vsel %vm9081, %v9083, %v9079
  %v9085 = vmul.f32 1.0, %v9084
  %v9086 = vxor.u32 %v8986, 2147483648
  %v9087 = vmul.f32 %v9086, 1.442695
  %v9088 = vpow.pop %v9087
  %v9089 = vadd.f32 %v9088, 1.0
  %v9090 = vrcp.pop %v9089
  %v9091 = vmul.f32 %v9089, %v9090
  %v9092 = vsub.f32 1.0, %v9091
  %v9093 = vmul.f32 %v9090, %v9092
  %v9094 = vadd.f32 %v9090, %v9093
  %vm9095 = vweird.f32 %v9089
  %vm9096 = vweird.f32 %v9090
  %vm9097 = vmor %vm9095, %vm9096
  %v9098 = vsel %vm9097, %v9090, %v9094
  %v9099 = vand.u32 2147483647, %v9089
  %vm9100 = vcmp.eq.f32.partialorder %v9099, 8.507059e+37
  %v9101 = vand.u32 %v9089, 2147483648
  %v9102 = vor.u32 1.1754944e-38, %v9101
  %v9103 = vsel %vm9100, %v9102, %v9098
  %v9104 = vmul.f32 1.0, %v9103
  %v9105 = vtanh.pop %v9025
  %v9106 = vxor.u32 %v9064, 2147483648
  %v9107 = vmul.f32 %v9106, 1.442695
  %v9108 = vpow.pop %v9107
  %v9109 = vadd.f32 %v9108, 1.0
  %v9110 = vrcp.pop %v9109
  %v9111 = vmul.f32 %v9109, %v9110
  %v9112 = vsub.f32 1.0, %v9111
  %v9113 = vmul.f32 %v9110, %v9112
  %v9114 = vadd.f32 %v9110, %v9113
  %vm9115 = vweird.f32 %v9109
  %vm9116 = vweird.f32 %v9110
  %vm9117 = vmor %vm9115, %vm9116
  %v9118 = vsel %vm9117, %v9110, %v9114
  %v9119 = vand.u32 2147483647, %v9109
  %vm9120 = vcmp.eq.f32.partialorder %v9119, 8.507059e+37
  %v9121 = vand.u32 %v9109, 2147483648
  %v9122 = vor.u32 1.1754944e-38, %v9121
  %v9123 = vsel %vm9120, %v9122, %v9118
  %v9124 = vmul.f32 1.0, %v9123
  %v9125 = vmul.f32 %v9104, %v7999
  %v9126 = vmul.f32 %v9085, %v9105
  %v9127 = vadd.f32 %v9125, %v9126
  %v9128 = vtanh.pop %v9127
  %v9129 = vmul.f32 %v9124, %v9128
  %v9130 = vpack.c.bf16 %v9129, %v9129
  %s9131 = scalar_lea.vmem %s6, 16
  %9132 = vst [vmem:[%s9131] sm:$0xf] %v9130
  %v9133 = vld [vmem:[%s2] sm:$0xff]
  %v9134 = vld [vmem:[%s2 + $0x8] sm:$0xff]
  %v9135 = vld [vmem:[%s2 + $0x10] sm:$0xff]
  %v9136 = vld [vmem:[%s2 + $0x18] sm:$0xff]
  %v9137 = vld [vmem:[%s2 + $0x20] sm:$0xff]
  %v9138 = vld [vmem:[%s2 + $0x28] sm:$0xff]
  %v9139 = vld [vmem:[%s2 + $0x30] sm:$0xff]
  %v9140 = vld [vmem:[%s2 + $0x38] sm:$0xff]
  %v9141 = vld [vmem:[%s2 + $0x40] sm:$0xff]
  %v9142 = vld [vmem:[%s2 + $0x48] sm:$0xff]
  %v9143 = vld [vmem:[%s2 + $0x50] sm:$0xff]
  %v9144 = vld [vmem:[%s2 + $0x58] sm:$0xff]
  %v9145 = vld [vmem:[%s2 + $0x60] sm:$0xff]
  %v9146 = vld [vmem:[%s2 + $0x68] sm:$0xff]
  %v9147 = vld [vmem:[%s2 + $0x70] sm:$0xff]
  %v9148 = vld [vmem:[%s2 + $0x78] sm:$0xff]
  %v9149 = vld [vmem:[%s2 + $0x80] sm:$0xff]
  %v9150 = vld [vmem:[%s2 + $0x88] sm:$0xff]
  %v9151 = vld [vmem:[%s2 + $0x90] sm:$0xff]
  %v9152 = vld [vmem:[%s2 + $0x98] sm:$0xff]
  %v9153 = vld [vmem:[%s2 + $0xa0] sm:$0xff]
  %v9154 = vld [vmem:[%s2 + $0xa8] sm:$0xff]
  %v9155 = vld [vmem:[%s2 + $0xb0] sm:$0xff]
  %v9156 = vld [vmem:[%s2 + $0xb8] sm:$0xff]
  %v9157 = vld [vmem:[%s2 + $0xc0] sm:$0xff]
  %v9158 = vld [vmem:[%s2 + $0xc8] sm:$0xff]
  %v9159 = vld [vmem:[%s2 + $0xd0] sm:$0xff]
  %v9160 = vld [vmem:[%s2 + $0xd8] sm:$0xff]
  %v9161 = vld [vmem:[%s2 + $0xe0] sm:$0xff]
  %v9162 = vld [vmem:[%s2 + $0xe8] sm:$0xff]
  %v9163 = vld [vmem:[%s2 + $0xf0] sm:$0xff]
  %v9164 = vld [vmem:[%s2 + $0xf8] sm:$0xff]
  %v9165 = vld [vmem:[%s3] sm:$0xf]
  %v9167 = vperm.slane %v9165, 0
  %v9168 = vperm.slane %v9165, 1
  %v9169 = vperm.slane %v9165, 2
  %v9170 = vperm.slane %v9165, 3
  %v9207 = vunpack.c.l.b16 %v9133
  %v9208 = vunpack.c.h.b16 %v9133
  %v9209 = vunpack.c.l.b16 %v9134
  %v9210 = vunpack.c.h.b16 %v9134
  %v9211 = vunpack.c.l.b16 %v9135
  %v9212 = vunpack.c.h.b16 %v9135
  %v9213 = vunpack.c.l.b16 %v9136
  %v9214 = vunpack.c.h.b16 %v9136
  %v9215 = vunpack.c.l.b16 %v9137
  %v9216 = vunpack.c.h.b16 %v9137
  %v9217 = vunpack.c.l.b16 %v9138
  %v9218 = vunpack.c.h.b16 %v9138
  %v9219 = vunpack.c.l.b16 %v9139
  %v9220 = vunpack.c.h.b16 %v9139
  %v9221 = vunpack.c.l.b16 %v9140
  %v9222 = vunpack.c.h.b16 %v9140
  %v9223 = vunpack.c.l.b16 %v9141
  %v9224 = vunpack.c.h.b16 %v9141
  %v9225 = vunpack.c.l.b16 %v9142
  %v9226 = vunpack.c.h.b16 %v9142
  %v9227 = vunpack.c.l.b16 %v9143
  %v9228 = vunpack.c.h.b16 %v9143
  %v9229 = vunpack.c.l.b16 %v9144
  %v9230 = vunpack.c.h.b16 %v9144
  %v9231 = vunpack.c.l.b16 %v9145
  %v9232 = vunpack.c.h.b16 %v9145
  %v9233 = vunpack.c.l.b16 %v9146
  %v9234 = vunpack.c.h.b16 %v9146
  %v9235 = vunpack.c.l.b16 %v9147
  %v9236 = vunpack.c.h.b16 %v9147
  %v9237 = vunpack.c.l.b16 %v9148
  %v9238 = vunpack.c.h.b16 %v9148
  %v9239 = vunpack.c.l.b16 %v9149
  %v9240 = vunpack.c.h.b16 %v9149
  %v9241 = vunpack.c.l.b16 %v9150
  %v9242 = vunpack.c.h.b16 %v9150
  %v9243 = vunpack.c.l.b16 %v9151
  %v9244 = vunpack.c.h.b16 %v9151
  %v9245 = vunpack.c.l.b16 %v9152
  %v9246 = vunpack.c.h.b16 %v9152
  %v9247 = vunpack.c.l.b16 %v9153
  %v9248 = vunpack.c.h.b16 %v9153
  %v9249 = vunpack.c.l.b16 %v9154
  %v9250 = vunpack.c.h.b16 %v9154
  %v9251 = vunpack.c.l.b16 %v9155
  %v9252 = vunpack.c.h.b16 %v9155
  %v9253 = vunpack.c.l.b16 %v9156
  %v9254 = vunpack.c.h.b16 %v9156
  %v9255 = vunpack.c.l.b16 %v9157
  %v9256 = vunpack.c.h.b16 %v9157
  %v9257 = vunpack.c.l.b16 %v9158
  %v9258 = vunpack.c.h.b16 %v9158
  %v9259 = vunpack.c.l.b16 %v9159
  %v9260 = vunpack.c.h.b16 %v9159
  %v9261 = vunpack.c.l.b16 %v9160
  %v9262 = vunpack.c.h.b16 %v9160
  %v9263 = vunpack.c.l.b16 %v9161
  %v9264 = vunpack.c.h.b16 %v9161
  %v9265 = vunpack.c.l.b16 %v9162
  %v9266 = vunpack.c.h.b16 %v9162
  %v9267 = vunpack.c.l.b16 %v9163
  %v9268 = vunpack.c.h.b16 %v9163
  %v9269 = vunpack.c.l.b16 %v9164
  %v9270 = vunpack.c.h.b16 %v9164
  %v9271 = vpack.c.b16 %v9211, %v9207
  %v9272 = vpack.c.b16 %v9212, %v9208
  %v9273 = vpack.c.b16 %v9213, %v9209
  %v9274 = vpack.c.b16 %v9214, %v9210
  %v9275 = vpack.c.b16 %v9219, %v9215
  %v9276 = vpack.c.b16 %v9220, %v9216
  %v9277 = vpack.c.b16 %v9221, %v9217
  %v9278 = vpack.c.b16 %v9222, %v9218
  %v9279 = vpack.c.b16 %v9227, %v9223
  %v9280 = vpack.c.b16 %v9228, %v9224
  %v9281 = vpack.c.b16 %v9229, %v9225
  %v9282 = vpack.c.b16 %v9230, %v9226
  %v9283 = vpack.c.b16 %v9235, %v9231
  %v9284 = vpack.c.b16 %v9236, %v9232
  %v9285 = vpack.c.b16 %v9237, %v9233
  %v9286 = vpack.c.b16 %v9238, %v9234
  %v9287 = vpack.c.b16 %v9243, %v9239
  %v9288 = vpack.c.b16 %v9244, %v9240
  %v9289 = vpack.c.b16 %v9245, %v9241
  %v9290 = vpack.c.b16 %v9246, %v9242
  %v9291 = vpack.c.b16 %v9251, %v9247
  %v9292 = vpack.c.b16 %v9252, %v9248
  %v9293 = vpack.c.b16 %v9253, %v9249
  %v9294 = vpack.c.b16 %v9254, %v9250
  %v9295 = vpack.c.b16 %v9259, %v9255
  %v9296 = vpack.c.b16 %v9260, %v9256
  %v9297 = vpack.c.b16 %v9261, %v9257
  %v9298 = vpack.c.b16 %v9262, %v9258
  %v9299 = vpack.c.b16 %v9267, %v9263
  %v9300 = vpack.c.b16 %v9268, %v9264
  %v9301 = vpack.c.b16 %v9269, %v9265
  %v9302 = vpack.c.b16 %v9270, %v9266
  %9335 = vmatpush.bf16.msra.mxu0 %v9299
  %9336 = vmatpush.bf16.msra.mxu0 %v9295
  %9337 = vmatpush.bf16.msra.mxu0 %v9291
  %9338 = vmatpush.bf16.msra.mxu0 %v9287
  %9339 = vmatpush.bf16.msra.mxu0 %v9283
  %9340 = vmatpush.bf16.msra.mxu0 %v9279
  %9341 = vmatpush.bf16.msra.mxu0 %v9275
  %9342 = vmatpush.bf16.msra.mxu0 %v9271
  %9343 = vmatmul.bf16.gmra.mxu0 %v8322
  %v9344 = vpop.f32.mrf.mxu0
  %v9345 = vadd.f32 %v9167, %v9344
  %v9346 = vpop.f32.mrf.mxu0
  %9347 = vdwg.mxu0
  %9348 = vmatpush.bf16.msra.mxu0 %v9300
  %9349 = vmatpush.bf16.msra.mxu0 %v9296
  %9350 = vmatpush.bf16.msra.mxu0 %v9292
  %9351 = vmatpush.bf16.msra.mxu0 %v9288
  %9352 = vmatpush.bf16.msra.mxu0 %v9284
  %9353 = vmatpush.bf16.msra.mxu0 %v9280
  %9354 = vmatpush.bf16.msra.mxu0 %v9276
  %9355 = vmatpush.bf16.msra.mxu0 %v9272
  %9356 = vmatmul.bf16.gmra.mxu0 %v8322
  %v9357 = vpop.f32.mrf.mxu0
  %v9358 = vadd.f32 %v9168, %v9357
  %v9359 = vpop.f32.mrf.mxu0
  %9360 = vdwg.mxu0
  %9361 = vmatpush.bf16.msra.mxu0 %v9301
  %9362 = vmatpush.bf16.msra.mxu0 %v9297
  %9363 = vmatpush.bf16.msra.mxu0 %v9293
  %9364 = vmatpush.bf16.msra.mxu0 %v9289
  %9365 = vmatpush.bf16.msra.mxu0 %v9285
  %9366 = vmatpush.bf16.msra.mxu0 %v9281
  %9367 = vmatpush.bf16.msra.mxu0 %v9277
  %9368 = vmatpush.bf16.msra.mxu0 %v9273
  %9369 = vmatmul.bf16.gmra.mxu0 %v8322
  %v9370 = vpop.f32.mrf.mxu0
  %v9371 = vadd.f32 %v9169, %v9370
  %v9372 = vpop.f32.mrf.mxu0
  %9373 = vdwg.mxu0
  %9374 = vmatpush.bf16.msra.mxu0 %v9302
  %9375 = vmatpush.bf16.msra.mxu0 %v9298
  %9376 = vmatpush.bf16.msra.mxu0 %v9294
  %9377 = vmatpush.bf16.msra.mxu0 %v9290
  %9378 = vmatpush.bf16.msra.mxu0 %v9286
  %9379 = vmatpush.bf16.msra.mxu0 %v9282
  %9380 = vmatpush.bf16.msra.mxu0 %v9278
  %9381 = vmatpush.bf16.msra.mxu0 %v9274
  %9382 = vmatmul.bf16.gmra.mxu0 %v8322
  %v9383 = vpop.f32.mrf.mxu0
  %v9384 = vadd.f32 %v9170, %v9383
  %v9385 = vpop.f32.mrf.mxu0
  %9386 = vdwg.mxu0
  %v9387 = vxor.u32 %v9345, 2147483648
  %v9388 = vmul.f32 %v9387, 1.442695
  %v9389 = vpow.pop %v9388
  %v9390 = vadd.f32 %v9389, 1.0
  %v9391 = vrcp.pop %v9390
  %v9392 = vmul.f32 %v9390, %v9391
  %v9393 = vsub.f32 1.0, %v9392
  %v9394 = vmul.f32 %v9391, %v9393
  %v9395 = vadd.f32 %v9391, %v9394
  %vm9396 = vweird.f32 %v9390
  %vm9397 = vweird.f32 %v9391
  %vm9398 = vmor %vm9396, %vm9397
  %v9399 = vsel %vm9398, %v9391, %v9395
  %v9400 = vand.u32 2147483647, %v9390
  %vm9401 = vcmp.eq.f32.partialorder %v9400, 8.507059e+37
  %v9402 = vand.u32 %v9390, 2147483648
  %v9403 = vor.u32 1.1754944e-38, %v9402
  %v9404 = vsel %vm9401, %v9403, %v9399
  %v9405 = vmul.f32 1.0, %v9404
  %v9406 = vxor.u32 %v9358, 2147483648
  %v9407 = vmul.f32 %v9406, 1.442695
  %v9408 = vpow.pop %v9407
  %v9409 = vadd.f32 %v9408, 1.0
  %v9410 = vrcp.pop %v9409
  %v9411 = vmul.f32 %v9409, %v9410
  %v9412 = vsub.f32 1.0, %v9411
  %v9413 = vmul.f32 %v9410, %v9412
  %v9414 = vadd.f32 %v9410, %v9413
  %vm9415 = vweird.f32 %v9409
  %vm9416 = vweird.f32 %v9410
  %vm9417 = vmor %vm9415, %vm9416
  %v9418 = vsel %vm9417, %v9410, %v9414
  %v9419 = vand.u32 2147483647, %v9409
  %vm9420 = vcmp.eq.f32.partialorder %v9419, 8.507059e+37
  %v9421 = vand.u32 %v9409, 2147483648
  %v9422 = vor.u32 1.1754944e-38, %v9421
  %v9423 = vsel %vm9420, %v9422, %v9418
  %v9424 = vmul.f32 1.0, %v9423
  %v9425 = vtanh.pop %v9371
  %v9426 = vxor.u32 %v9384, 2147483648
  %v9427 = vmul.f32 %v9426, 1.442695
  %v9428 = vpow.pop %v9427
  %v9429 = vadd.f32 %v9428, 1.0
  %v9430 = vrcp.pop %v9429
  %v9431 = vmul.f32 %v9429, %v9430
  %v9432 = vsub.f32 1.0, %v9431
  %v9433 = vmul.f32 %v9430, %v9432
  %v9434 = vadd.f32 %v9430, %v9433
  %vm9435 = vweird.f32 %v9429
  %vm9436 = vweird.f32 %v9430
  %vm9437 = vmor %vm9435, %vm9436
  %v9438 = vsel %vm9437, %v9430, %v9434
  %v9439 = vand.u32 2147483647, %v9429
  %vm9440 = vcmp.eq.f32.partialorder %v9439, 8.507059e+37
  %v9441 = vand.u32 %v9429, 2147483648
  %v9442 = vor.u32 1.1754944e-38, %v9441
  %v9443 = vsel %vm9440, %v9442, %v9438
  %v9444 = vmul.f32 1.0, %v9443
  %v9445 = vmul.f32 %v9424, %v8319
  %v9446 = vmul.f32 %v9405, %v9425
  %v9447 = vadd.f32 %v9445, %v9446
  %v9448 = vtanh.pop %v9447
  %v9449 = vmul.f32 %v9444, %v9448
  %v9450 = vpack.c.bf16 %v9449, %v9449
  %s9451 = scalar_lea.vmem %s1, 20
  %v9452 = vld [vmem:[%s9451] sm:$0xf]
  %v9453 = vld [vmem:[%s4] sm:$0xff]
  %v9454 = vld [vmem:[%s4 + $0x8] sm:$0xff]
  %v9455 = vld [vmem:[%s4 + $0x10] sm:$0xff]
  %v9456 = vld [vmem:[%s4 + $0x18] sm:$0xff]
  %v9457 = vld [vmem:[%s4 + $0x20] sm:$0xff]
  %v9458 = vld [vmem:[%s4 + $0x28] sm:$0xff]
  %v9459 = vld [vmem:[%s4 + $0x30] sm:$0xff]
  %v9460 = vld [vmem:[%s4 + $0x38] sm:$0xff]
  %v9461 = vld [vmem:[%s4 + $0x40] sm:$0xff]
  %v9462 = vld [vmem:[%s4 + $0x48] sm:$0xff]
  %v9463 = vld [vmem:[%s4 + $0x50] sm:$0xff]
  %v9464 = vld [vmem:[%s4 + $0x58] sm:$0xff]
  %v9465 = vld [vmem:[%s4 + $0x60] sm:$0xff]
  %v9466 = vld [vmem:[%s4 + $0x68] sm:$0xff]
  %v9467 = vld [vmem:[%s4 + $0x70] sm:$0xff]
  %v9468 = vld [vmem:[%s4 + $0x78] sm:$0xff]
  %v9469 = vld [vmem:[%s4 + $0x80] sm:$0xff]
  %v9470 = vld [vmem:[%s4 + $0x88] sm:$0xff]
  %v9471 = vld [vmem:[%s4 + $0x90] sm:$0xff]
  %v9472 = vld [vmem:[%s4 + $0x98] sm:$0xff]
  %v9473 = vld [vmem:[%s4 + $0xa0] sm:$0xff]
  %v9474 = vld [vmem:[%s4 + $0xa8] sm:$0xff]
  %v9475 = vld [vmem:[%s4 + $0xb0] sm:$0xff]
  %v9476 = vld [vmem:[%s4 + $0xb8] sm:$0xff]
  %v9477 = vld [vmem:[%s4 + $0xc0] sm:$0xff]
  %v9478 = vld [vmem:[%s4 + $0xc8] sm:$0xff]
  %v9479 = vld [vmem:[%s4 + $0xd0] sm:$0xff]
  %v9480 = vld [vmem:[%s4 + $0xd8] sm:$0xff]
  %v9481 = vld [vmem:[%s4 + $0xe0] sm:$0xff]
  %v9482 = vld [vmem:[%s4 + $0xe8] sm:$0xff]
  %v9483 = vld [vmem:[%s4 + $0xf0] sm:$0xff]
  %v9484 = vld [vmem:[%s4 + $0xf8] sm:$0xff]
  %v9485 = vld [vmem:[%s4 + $0x100] sm:$0xff]
  %v9486 = vld [vmem:[%s4 + $0x108] sm:$0xff]
  %v9487 = vld [vmem:[%s4 + $0x110] sm:$0xff]
  %v9488 = vld [vmem:[%s4 + $0x118] sm:$0xff]
  %v9489 = vld [vmem:[%s4 + $0x120] sm:$0xff]
  %v9490 = vld [vmem:[%s4 + $0x128] sm:$0xff]
  %v9491 = vld [vmem:[%s4 + $0x130] sm:$0xff]
  %v9492 = vld [vmem:[%s4 + $0x138] sm:$0xff]
  %v9493 = vld [vmem:[%s4 + $0x140] sm:$0xff]
  %v9494 = vld [vmem:[%s4 + $0x148] sm:$0xff]
  %v9495 = vld [vmem:[%s4 + $0x150] sm:$0xff]
  %v9496 = vld [vmem:[%s4 + $0x158] sm:$0xff]
  %v9497 = vld [vmem:[%s4 + $0x160] sm:$0xff]
  %v9498 = vld [vmem:[%s4 + $0x168] sm:$0xff]
  %v9499 = vld [vmem:[%s4 + $0x170] sm:$0xff]
  %v9500 = vld [vmem:[%s4 + $0x178] sm:$0xff]
  %v9501 = vld [vmem:[%s4 + $0x180] sm:$0xff]
  %v9502 = vld [vmem:[%s4 + $0x188] sm:$0xff]
  %v9503 = vld [vmem:[%s4 + $0x190] sm:$0xff]
  %v9504 = vld [vmem:[%s4 + $0x198] sm:$0xff]
  %v9505 = vld [vmem:[%s4 + $0x1a0] sm:$0xff]
  %v9506 = vld [vmem:[%s4 + $0x1a8] sm:$0xff]
  %v9507 = vld [vmem:[%s4 + $0x1b0] sm:$0xff]
  %v9508 = vld [vmem:[%s4 + $0x1b8] sm:$0xff]
  %v9509 = vld [vmem:[%s4 + $0x1c0] sm:$0xff]
  %v9510 = vld [vmem:[%s4 + $0x1c8] sm:$0xff]
  %v9511 = vld [vmem:[%s4 + $0x1d0] sm:$0xff]
  %v9512 = vld [vmem:[%s4 + $0x1d8] sm:$0xff]
  %v9513 = vld [vmem:[%s4 + $0x1e0] sm:$0xff]
  %v9514 = vld [vmem:[%s4 + $0x1e8] sm:$0xff]
  %v9515 = vld [vmem:[%s4 + $0x1f0] sm:$0xff]
  %v9516 = vld [vmem:[%s4 + $0x1f8] sm:$0xff]
  %v9517 = vld [vmem:[%s4 + $0x200] sm:$0xff]
  %v9518 = vld [vmem:[%s4 + $0x208] sm:$0xff]
  %v9519 = vld [vmem:[%s4 + $0x210] sm:$0xff]
  %v9520 = vld [vmem:[%s4 + $0x218] sm:$0xff]
  %v9521 = vld [vmem:[%s4 + $0x220] sm:$0xff]
  %v9522 = vld [vmem:[%s4 + $0x228] sm:$0xff]
  %v9523 = vld [vmem:[%s4 + $0x230] sm:$0xff]
  %v9524 = vld [vmem:[%s4 + $0x238] sm:$0xff]
  %v9525 = vld [vmem:[%s4 + $0x240] sm:$0xff]
  %v9526 = vld [vmem:[%s4 + $0x248] sm:$0xff]
  %v9527 = vld [vmem:[%s4 + $0x250] sm:$0xff]
  %v9528 = vld [vmem:[%s4 + $0x258] sm:$0xff]
  %v9529 = vld [vmem:[%s4 + $0x260] sm:$0xff]
  %v9530 = vld [vmem:[%s4 + $0x268] sm:$0xff]
  %v9531 = vld [vmem:[%s4 + $0x270] sm:$0xff]
  %v9532 = vld [vmem:[%s4 + $0x278] sm:$0xff]
  %v9533 = vld [vmem:[%s4 + $0x280] sm:$0xff]
  %v9534 = vld [vmem:[%s4 + $0x288] sm:$0xff]
  %v9535 = vld [vmem:[%s4 + $0x290] sm:$0xff]
  %v9536 = vld [vmem:[%s4 + $0x298] sm:$0xff]
  %v9537 = vld [vmem:[%s4 + $0x2a0] sm:$0xff]
  %v9538 = vld [vmem:[%s4 + $0x2a8] sm:$0xff]
  %v9539 = vld [vmem:[%s4 + $0x2b0] sm:$0xff]
  %v9540 = vld [vmem:[%s4 + $0x2b8] sm:$0xff]
  %v9541 = vld [vmem:[%s4 + $0x2c0] sm:$0xff]
  %v9542 = vld [vmem:[%s4 + $0x2c8] sm:$0xff]
  %v9543 = vld [vmem:[%s4 + $0x2d0] sm:$0xff]
  %v9544 = vld [vmem:[%s4 + $0x2d8] sm:$0xff]
  %v9545 = vld [vmem:[%s4 + $0x2e0] sm:$0xff]
  %v9546 = vld [vmem:[%s4 + $0x2e8] sm:$0xff]
  %v9547 = vld [vmem:[%s4 + $0x2f0] sm:$0xff]
  %v9548 = vld [vmem:[%s4 + $0x2f8] sm:$0xff]
  %v9549 = vld [vmem:[%s5] sm:$0xf]
  %v9551 = vperm.slane %v9549, 0
  %v9552 = vperm.slane %v9549, 1
  %v9553 = vperm.slane %v9549, 2
  %v9554 = vperm.slane %v9549, 3
  %v9655 = vunpack.c.l.b16 %v9453
  %v9656 = vunpack.c.h.b16 %v9453
  %v9657 = vunpack.c.l.b16 %v9454
  %v9658 = vunpack.c.h.b16 %v9454
  %v9659 = vunpack.c.l.b16 %v9455
  %v9660 = vunpack.c.h.b16 %v9455
  %v9661 = vunpack.c.l.b16 %v9456
  %v9662 = vunpack.c.h.b16 %v9456
  %v9663 = vunpack.c.l.b16 %v9457
  %v9664 = vunpack.c.h.b16 %v9457
  %v9665 = vunpack.c.l.b16 %v9458
  %v9666 = vunpack.c.h.b16 %v9458
  %v9667 = vunpack.c.l.b16 %v9459
  %v9668 = vunpack.c.h.b16 %v9459
  %v9669 = vunpack.c.l.b16 %v9460
  %v9670 = vunpack.c.h.b16 %v9460
  %v9671 = vunpack.c.l.b16 %v9461
  %v9672 = vunpack.c.h.b16 %v9461
  %v9673 = vunpack.c.l.b16 %v9462
  %v9674 = vunpack.c.h.b16 %v9462
  %v9675 = vunpack.c.l.b16 %v9463
  %v9676 = vunpack.c.h.b16 %v9463
  %v9677 = vunpack.c.l.b16 %v9464
  %v9678 = vunpack.c.h.b16 %v9464
  %v9679 = vunpack.c.l.b16 %v9465
  %v9680 = vunpack.c.h.b16 %v9465
  %v9681 = vunpack.c.l.b16 %v9466
  %v9682 = vunpack.c.h.b16 %v9466
  %v9683 = vunpack.c.l.b16 %v9467
  %v9684 = vunpack.c.h.b16 %v9467
  %v9685 = vunpack.c.l.b16 %v9468
  %v9686 = vunpack.c.h.b16 %v9468
  %v9687 = vunpack.c.l.b16 %v9469
  %v9688 = vunpack.c.h.b16 %v9469
  %v9689 = vunpack.c.l.b16 %v9470
  %v9690 = vunpack.c.h.b16 %v9470
  %v9691 = vunpack.c.l.b16 %v9471
  %v9692 = vunpack.c.h.b16 %v9471
  %v9693 = vunpack.c.l.b16 %v9472
  %v9694 = vunpack.c.h.b16 %v9472
  %v9695 = vunpack.c.l.b16 %v9473
  %v9696 = vunpack.c.h.b16 %v9473
  %v9697 = vunpack.c.l.b16 %v9474
  %v9698 = vunpack.c.h.b16 %v9474
  %v9699 = vunpack.c.l.b16 %v9475
  %v9700 = vunpack.c.h.b16 %v9475
  %v9701 = vunpack.c.l.b16 %v9476
  %v9702 = vunpack.c.h.b16 %v9476
  %v9703 = vunpack.c.l.b16 %v9477
  %v9704 = vunpack.c.h.b16 %v9477
  %v9705 = vunpack.c.l.b16 %v9478
  %v9706 = vunpack.c.h.b16 %v9478
  %v9707 = vunpack.c.l.b16 %v9479
  %v9708 = vunpack.c.h.b16 %v9479
  %v9709 = vunpack.c.l.b16 %v9480
  %v9710 = vunpack.c.h.b16 %v9480
  %v9711 = vunpack.c.l.b16 %v9481
  %v9712 = vunpack.c.h.b16 %v9481
  %v9713 = vunpack.c.l.b16 %v9482
  %v9714 = vunpack.c.h.b16 %v9482
  %v9715 = vunpack.c.l.b16 %v9483
  %v9716 = vunpack.c.h.b16 %v9483
  %v9717 = vunpack.c.l.b16 %v9484
  %v9718 = vunpack.c.h.b16 %v9484
  %v9719 = vunpack.c.l.b16 %v9485
  %v9720 = vunpack.c.h.b16 %v9485
  %v9721 = vunpack.c.l.b16 %v9486
  %v9722 = vunpack.c.h.b16 %v9486
  %v9723 = vunpack.c.l.b16 %v9487
  %v9724 = vunpack.c.h.b16 %v9487
  %v9725 = vunpack.c.l.b16 %v9488
  %v9726 = vunpack.c.h.b16 %v9488
  %v9727 = vunpack.c.l.b16 %v9489
  %v9728 = vunpack.c.h.b16 %v9489
  %v9729 = vunpack.c.l.b16 %v9490
  %v9730 = vunpack.c.h.b16 %v9490
  %v9731 = vunpack.c.l.b16 %v9491
  %v9732 = vunpack.c.h.b16 %v9491
  %v9733 = vunpack.c.l.b16 %v9492
  %v9734 = vunpack.c.h.b16 %v9492
  %v9735 = vunpack.c.l.b16 %v9493
  %v9736 = vunpack.c.h.b16 %v9493
  %v9737 = vunpack.c.l.b16 %v9494
  %v9738 = vunpack.c.h.b16 %v9494
  %v9739 = vunpack.c.l.b16 %v9495
  %v9740 = vunpack.c.h.b16 %v9495
  %v9741 = vunpack.c.l.b16 %v9496
  %v9742 = vunpack.c.h.b16 %v9496
  %v9743 = vunpack.c.l.b16 %v9497
  %v9744 = vunpack.c.h.b16 %v9497
  %v9745 = vunpack.c.l.b16 %v9498
  %v9746 = vunpack.c.h.b16 %v9498
  %v9747 = vunpack.c.l.b16 %v9499
  %v9748 = vunpack.c.h.b16 %v9499
  %v9749 = vunpack.c.l.b16 %v9500
  %v9750 = vunpack.c.h.b16 %v9500
  %v9751 = vunpack.c.l.b16 %v9501
  %v9752 = vunpack.c.h.b16 %v9501
  %v9753 = vunpack.c.l.b16 %v9502
  %v9754 = vunpack.c.h.b16 %v9502
  %v9755 = vunpack.c.l.b16 %v9503
  %v9756 = vunpack.c.h.b16 %v9503
  %v9757 = vunpack.c.l.b16 %v9504
  %v9758 = vunpack.c.h.b16 %v9504
  %v9759 = vunpack.c.l.b16 %v9505
  %v9760 = vunpack.c.h.b16 %v9505
  %v9761 = vunpack.c.l.b16 %v9506
  %v9762 = vunpack.c.h.b16 %v9506
  %v9763 = vunpack.c.l.b16 %v9507
  %v9764 = vunpack.c.h.b16 %v9507
  %v9765 = vunpack.c.l.b16 %v9508
  %v9766 = vunpack.c.h.b16 %v9508
  %v9767 = vunpack.c.l.b16 %v9509
  %v9768 = vunpack.c.h.b16 %v9509
  %v9769 = vunpack.c.l.b16 %v9510
  %v9770 = vunpack.c.h.b16 %v9510
  %v9771 = vunpack.c.l.b16 %v9511
  %v9772 = vunpack.c.h.b16 %v9511
  %v9773 = vunpack.c.l.b16 %v9512
  %v9774 = vunpack.c.h.b16 %v9512
  %v9775 = vunpack.c.l.b16 %v9513
  %v9776 = vunpack.c.h.b16 %v9513
  %v9777 = vunpack.c.l.b16 %v9514
  %v9778 = vunpack.c.h.b16 %v9514
  %v9779 = vunpack.c.l.b16 %v9515
  %v9780 = vunpack.c.h.b16 %v9515
  %v9781 = vunpack.c.l.b16 %v9516
  %v9782 = vunpack.c.h.b16 %v9516
  %v9783 = vunpack.c.l.b16 %v9517
  %v9784 = vunpack.c.h.b16 %v9517
  %v9785 = vunpack.c.l.b16 %v9518
  %v9786 = vunpack.c.h.b16 %v9518
  %v9787 = vunpack.c.l.b16 %v9519
  %v9788 = vunpack.c.h.b16 %v9519
  %v9789 = vunpack.c.l.b16 %v9520
  %v9790 = vunpack.c.h.b16 %v9520
  %v9791 = vunpack.c.l.b16 %v9521
  %v9792 = vunpack.c.h.b16 %v9521
  %v9793 = vunpack.c.l.b16 %v9522
  %v9794 = vunpack.c.h.b16 %v9522
  %v9795 = vunpack.c.l.b16 %v9523
  %v9796 = vunpack.c.h.b16 %v9523
  %v9797 = vunpack.c.l.b16 %v9524
  %v9798 = vunpack.c.h.b16 %v9524
  %v9799 = vunpack.c.l.b16 %v9525
  %v9800 = vunpack.c.h.b16 %v9525
  %v9801 = vunpack.c.l.b16 %v9526
  %v9802 = vunpack.c.h.b16 %v9526
  %v9803 = vunpack.c.l.b16 %v9527
  %v9804 = vunpack.c.h.b16 %v9527
  %v9805 = vunpack.c.l.b16 %v9528
  %v9806 = vunpack.c.h.b16 %v9528
  %v9807 = vunpack.c.l.b16 %v9529
  %v9808 = vunpack.c.h.b16 %v9529
  %v9809 = vunpack.c.l.b16 %v9530
  %v9810 = vunpack.c.h.b16 %v9530
  %v9811 = vunpack.c.l.b16 %v9531
  %v9812 = vunpack.c.h.b16 %v9531
  %v9813 = vunpack.c.l.b16 %v9532
  %v9814 = vunpack.c.h.b16 %v9532
  %v9815 = vunpack.c.l.b16 %v9533
  %v9816 = vunpack.c.h.b16 %v9533
  %v9817 = vunpack.c.l.b16 %v9534
  %v9818 = vunpack.c.h.b16 %v9534
  %v9819 = vunpack.c.l.b16 %v9535
  %v9820 = vunpack.c.h.b16 %v9535
  %v9821 = vunpack.c.l.b16 %v9536
  %v9822 = vunpack.c.h.b16 %v9536
  %v9823 = vunpack.c.l.b16 %v9537
  %v9824 = vunpack.c.h.b16 %v9537
  %v9825 = vunpack.c.l.b16 %v9538
  %v9826 = vunpack.c.h.b16 %v9538
  %v9827 = vunpack.c.l.b16 %v9539
  %v9828 = vunpack.c.h.b16 %v9539
  %v9829 = vunpack.c.l.b16 %v9540
  %v9830 = vunpack.c.h.b16 %v9540
  %v9831 = vunpack.c.l.b16 %v9541
  %v9832 = vunpack.c.h.b16 %v9541
  %v9833 = vunpack.c.l.b16 %v9542
  %v9834 = vunpack.c.h.b16 %v9542
  %v9835 = vunpack.c.l.b16 %v9543
  %v9836 = vunpack.c.h.b16 %v9543
  %v9837 = vunpack.c.l.b16 %v9544
  %v9838 = vunpack.c.h.b16 %v9544
  %v9839 = vunpack.c.l.b16 %v9545
  %v9840 = vunpack.c.h.b16 %v9545
  %v9841 = vunpack.c.l.b16 %v9546
  %v9842 = vunpack.c.h.b16 %v9546
  %v9843 = vunpack.c.l.b16 %v9547
  %v9844 = vunpack.c.h.b16 %v9547
  %v9845 = vunpack.c.l.b16 %v9548
  %v9846 = vunpack.c.h.b16 %v9548
  %v9847 = vpack.c.b16 %v9659, %v9655
  %v9848 = vpack.c.b16 %v9660, %v9656
  %v9849 = vpack.c.b16 %v9661, %v9657
  %v9850 = vpack.c.b16 %v9662, %v9658
  %v9851 = vpack.c.b16 %v9667, %v9663
  %v9852 = vpack.c.b16 %v9668, %v9664
  %v9853 = vpack.c.b16 %v9669, %v9665
  %v9854 = vpack.c.b16 %v9670, %v9666
  %v9855 = vpack.c.b16 %v9675, %v9671
  %v9856 = vpack.c.b16 %v9676, %v9672
  %v9857 = vpack.c.b16 %v9677, %v9673
  %v9858 = vpack.c.b16 %v9678, %v9674
  %v9859 = vpack.c.b16 %v9683, %v9679
  %v9860 = vpack.c.b16 %v9684, %v9680
  %v9861 = vpack.c.b16 %v9685, %v9681
  %v9862 = vpack.c.b16 %v9686, %v9682
  %v9863 = vpack.c.b16 %v9691, %v9687
  %v9864 = vpack.c.b16 %v9692, %v9688
  %v9865 = vpack.c.b16 %v9693, %v9689
  %v9866 = vpack.c.b16 %v9694, %v9690
  %v9867 = vpack.c.b16 %v9699, %v9695
  %v9868 = vpack.c.b16 %v9700, %v9696
  %v9869 = vpack.c.b16 %v9701, %v9697
  %v9870 = vpack.c.b16 %v9702, %v9698
  %v9871 = vpack.c.b16 %v9707, %v9703
  %v9872 = vpack.c.b16 %v9708, %v9704
  %v9873 = vpack.c.b16 %v9709, %v9705
  %v9874 = vpack.c.b16 %v9710, %v9706
  %v9875 = vpack.c.b16 %v9715, %v9711
  %v9876 = vpack.c.b16 %v9716, %v9712
  %v9877 = vpack.c.b16 %v9717, %v9713
  %v9878 = vpack.c.b16 %v9718, %v9714
  %v9879 = vpack.c.b16 %v9723, %v9719
  %v9880 = vpack.c.b16 %v9724, %v9720
  %v9881 = vpack.c.b16 %v9725, %v9721
  %v9882 = vpack.c.b16 %v9726, %v9722
  %v9883 = vpack.c.b16 %v9731, %v9727
  %v9884 = vpack.c.b16 %v9732, %v9728
  %v9885 = vpack.c.b16 %v9733, %v9729
  %v9886 = vpack.c.b16 %v9734, %v9730
  %v9887 = vpack.c.b16 %v9739, %v9735
  %v9888 = vpack.c.b16 %v9740, %v9736
  %v9889 = vpack.c.b16 %v9741, %v9737
  %v9890 = vpack.c.b16 %v9742, %v9738
  %v9891 = vpack.c.b16 %v9747, %v9743
  %v9892 = vpack.c.b16 %v9748, %v9744
  %v9893 = vpack.c.b16 %v9749, %v9745
  %v9894 = vpack.c.b16 %v9750, %v9746
  %v9895 = vpack.c.b16 %v9755, %v9751
  %v9896 = vpack.c.b16 %v9756, %v9752
  %v9897 = vpack.c.b16 %v9757, %v9753
  %v9898 = vpack.c.b16 %v9758, %v9754
  %v9899 = vpack.c.b16 %v9763, %v9759
  %v9900 = vpack.c.b16 %v9764, %v9760
  %v9901 = vpack.c.b16 %v9765, %v9761
  %v9902 = vpack.c.b16 %v9766, %v9762
  %v9903 = vpack.c.b16 %v9771, %v9767
  %v9904 = vpack.c.b16 %v9772, %v9768
  %v9905 = vpack.c.b16 %v9773, %v9769
  %v9906 = vpack.c.b16 %v9774, %v9770
  %v9907 = vpack.c.b16 %v9779, %v9775
  %v9908 = vpack.c.b16 %v9780, %v9776
  %v9909 = vpack.c.b16 %v9781, %v9777
  %v9910 = vpack.c.b16 %v9782, %v9778
  %v9911 = vpack.c.b16 %v9787, %v9783
  %v9912 = vpack.c.b16 %v9788, %v9784
  %v9913 = vpack.c.b16 %v9789, %v9785
  %v9914 = vpack.c.b16 %v9790, %v9786
  %v9915 = vpack.c.b16 %v9795, %v9791
  %v9916 = vpack.c.b16 %v9796, %v9792
  %v9917 = vpack.c.b16 %v9797, %v9793
  %v9918 = vpack.c.b16 %v9798, %v9794
  %v9919 = vpack.c.b16 %v9803, %v9799
  %v9920 = vpack.c.b16 %v9804, %v9800
  %v9921 = vpack.c.b16 %v9805, %v9801
  %v9922 = vpack.c.b16 %v9806, %v9802
  %v9923 = vpack.c.b16 %v9811, %v9807
  %v9924 = vpack.c.b16 %v9812, %v9808
  %v9925 = vpack.c.b16 %v9813, %v9809
  %v9926 = vpack.c.b16 %v9814, %v9810
  %v9927 = vpack.c.b16 %v9819, %v9815
  %v9928 = vpack.c.b16 %v9820, %v9816
  %v9929 = vpack.c.b16 %v9821, %v9817
  %v9930 = vpack.c.b16 %v9822, %v9818
  %v9931 = vpack.c.b16 %v9827, %v9823
  %v9932 = vpack.c.b16 %v9828, %v9824
  %v9933 = vpack.c.b16 %v9829, %v9825
  %v9934 = vpack.c.b16 %v9830, %v9826
  %v9935 = vpack.c.b16 %v9835, %v9831
  %v9936 = vpack.c.b16 %v9836, %v9832
  %v9937 = vpack.c.b16 %v9837, %v9833
  %v9938 = vpack.c.b16 %v9838, %v9834
  %v9939 = vpack.c.b16 %v9843, %v9839
  %v9940 = vpack.c.b16 %v9844, %v9840
  %v9941 = vpack.c.b16 %v9845, %v9841
  %v9942 = vpack.c.b16 %v9846, %v9842
  %10039 = vmatpush.bf16.msra.mxu0 %v9875
  %10040 = vmatpush.bf16.msra.mxu0 %v9871
  %10041 = vmatpush.bf16.msra.mxu0 %v9867
  %10042 = vmatpush.bf16.msra.mxu0 %v9863
  %10043 = vmatpush.bf16.msra.mxu0 %v9859
  %10044 = vmatpush.bf16.msra.mxu0 %v9855
  %10045 = vmatpush.bf16.msra.mxu0 %v9851
  %10046 = vmatpush.bf16.msra.mxu0 %v9847
  %10047 = vmatmul.bf16.gmra.mxu0 %v9450
  %v10048 = vpop.f32.mrf.mxu0
  %v10049 = vadd.f32 %v9551, %v10048
  %v10050 = vpop.f32.mrf.mxu0
  %10051 = vdwg.mxu0
  %10052 = vmatpush.bf16.msra.mxu0 %v9907
  %10053 = vmatpush.bf16.msra.mxu0 %v9903
  %10054 = vmatpush.bf16.msra.mxu0 %v9899
  %10055 = vmatpush.bf16.msra.mxu0 %v9895
  %10056 = vmatpush.bf16.msra.mxu0 %v9891
  %10057 = vmatpush.bf16.msra.mxu0 %v9887
  %10058 = vmatpush.bf16.msra.mxu0 %v9883
  %10059 = vmatpush.bf16.msra.mxu0 %v9879
  %10060 = vmatmul.bf16.gmra.mxu0 %v9130
  %v10061 = vpop.f32.mrf.mxu0
  %v10062 = vadd.f32 %v10049, %v10061
  %v10063 = vpop.f32.mrf.mxu0
  %10064 = vdwg.mxu0
  %10065 = vmatpush.bf16.msra.mxu0 %v9939
  %10066 = vmatpush.bf16.msra.mxu0 %v9935
  %10067 = vmatpush.bf16.msra.mxu0 %v9931
  %10068 = vmatpush.bf16.msra.mxu0 %v9927
  %10069 = vmatpush.bf16.msra.mxu0 %v9923
  %10070 = vmatpush.bf16.msra.mxu0 %v9919
  %10071 = vmatpush.bf16.msra.mxu0 %v9915
  %10072 = vmatpush.bf16.msra.mxu0 %v9911
  %10073 = vmatmul.bf16.gmra.mxu0 %v9452
  %v10074 = vpop.f32.mrf.mxu0
  %v10075 = vadd.f32 %v10062, %v10074
  %v10076 = vpop.f32.mrf.mxu0
  %10077 = vdwg.mxu0
  %10078 = vmatpush.bf16.msra.mxu0 %v9876
  %10079 = vmatpush.bf16.msra.mxu0 %v9872
  %10080 = vmatpush.bf16.msra.mxu0 %v9868
  %10081 = vmatpush.bf16.msra.mxu0 %v9864
  %10082 = vmatpush.bf16.msra.mxu0 %v9860
  %10083 = vmatpush.bf16.msra.mxu0 %v9856
  %10084 = vmatpush.bf16.msra.mxu0 %v9852
  %10085 = vmatpush.bf16.msra.mxu0 %v9848
  %10086 = vmatmul.bf16.gmra.mxu0 %v9450
  %v10087 = vpop.f32.mrf.mxu0
  %v10088 = vadd.f32 %v9552, %v10087
  %v10089 = vpop.f32.mrf.mxu0
  %10090 = vdwg.mxu0
  %10091 = vmatpush.bf16.msra.mxu0 %v9908
  %10092 = vmatpush.bf16.msra.mxu0 %v9904
  %10093 = vmatpush.bf16.msra.mxu0 %v9900
  %10094 = vmatpush.bf16.msra.mxu0 %v9896
  %10095 = vmatpush.bf16.msra.mxu0 %v9892
  %10096 = vmatpush.bf16.msra.mxu0 %v9888
  %10097 = vmatpush.bf16.msra.mxu0 %v9884
  %10098 = vmatpush.bf16.msra.mxu0 %v9880
  %10099 = vmatmul.bf16.gmra.mxu0 %v9130
  %v10100 = vpop.f32.mrf.mxu0
  %v10101 = vadd.f32 %v10088, %v10100
  %v10102 = vpop.f32.mrf.mxu0
  %10103 = vdwg.mxu0
  %10104 = vmatpush.bf16.msra.mxu0 %v9940
  %10105 = vmatpush.bf16.msra.mxu0 %v9936
  %10106 = vmatpush.bf16.msra.mxu0 %v9932
  %10107 = vmatpush.bf16.msra.mxu0 %v9928
  %10108 = vmatpush.bf16.msra.mxu0 %v9924
  %10109 = vmatpush.bf16.msra.mxu0 %v9920
  %10110 = vmatpush.bf16.msra.mxu0 %v9916
  %10111 = vmatpush.bf16.msra.mxu0 %v9912
  %10112 = vmatmul.bf16.gmra.mxu0 %v9452
  %v10113 = vpop.f32.mrf.mxu0
  %v10114 = vadd.f32 %v10101, %v10113
  %v10115 = vpop.f32.mrf.mxu0
  %10116 = vdwg.mxu0
  %10117 = vmatpush.bf16.msra.mxu0 %v9877
  %10118 = vmatpush.bf16.msra.mxu0 %v9873
  %10119 = vmatpush.bf16.msra.mxu0 %v9869
  %10120 = vmatpush.bf16.msra.mxu0 %v9865
  %10121 = vmatpush.bf16.msra.mxu0 %v9861
  %10122 = vmatpush.bf16.msra.mxu0 %v9857
  %10123 = vmatpush.bf16.msra.mxu0 %v9853
  %10124 = vmatpush.bf16.msra.mxu0 %v9849
  %10125 = vmatmul.bf16.gmra.mxu0 %v9450
  %v10126 = vpop.f32.mrf.mxu0
  %v10127 = vadd.f32 %v9553, %v10126
  %v10128 = vpop.f32.mrf.mxu0
  %10129 = vdwg.mxu0
  %10130 = vmatpush.bf16.msra.mxu0 %v9909
  %10131 = vmatpush.bf16.msra.mxu0 %v9905
  %10132 = vmatpush.bf16.msra.mxu0 %v9901
  %10133 = vmatpush.bf16.msra.mxu0 %v9897
  %10134 = vmatpush.bf16.msra.mxu0 %v9893
  %10135 = vmatpush.bf16.msra.mxu0 %v9889
  %10136 = vmatpush.bf16.msra.mxu0 %v9885
  %10137 = vmatpush.bf16.msra.mxu0 %v9881
  %10138 = vmatmul.bf16.gmra.mxu0 %v9130
  %v10139 = vpop.f32.mrf.mxu0
  %v10140 = vadd.f32 %v10127, %v10139
  %v10141 = vpop.f32.mrf.mxu0
  %10142 = vdwg.mxu0
  %10143 = vmatpush.bf16.msra.mxu0 %v9941
  %10144 = vmatpush.bf16.msra.mxu0 %v9937
  %10145 = vmatpush.bf16.msra.mxu0 %v9933
  %10146 = vmatpush.bf16.msra.mxu0 %v9929
  %10147 = vmatpush.bf16.msra.mxu0 %v9925
  %10148 = vmatpush.bf16.msra.mxu0 %v9921
  %10149 = vmatpush.bf16.msra.mxu0 %v9917
  %10150 = vmatpush.bf16.msra.mxu0 %v9913
  %10151 = vmatmul.bf16.gmra.mxu0 %v9452
  %v10152 = vpop.f32.mrf.mxu0
  %v10153 = vadd.f32 %v10140, %v10152
  %v10154 = vpop.f32.mrf.mxu0
  %10155 = vdwg.mxu0
  %10156 = vmatpush.bf16.msra.mxu0 %v9878
  %10157 = vmatpush.bf16.msra.mxu0 %v9874
  %10158 = vmatpush.bf16.msra.mxu0 %v9870
  %10159 = vmatpush.bf16.msra.mxu0 %v9866
  %10160 = vmatpush.bf16.msra.mxu0 %v9862
  %10161 = vmatpush.bf16.msra.mxu0 %v9858
  %10162 = vmatpush.bf16.msra.mxu0 %v9854
  %10163 = vmatpush.bf16.msra.mxu0 %v9850
  %10164 = vmatmul.bf16.gmra.mxu0 %v9450
  %v10165 = vpop.f32.mrf.mxu0
  %v10166 = vadd.f32 %v9554, %v10165
  %v10167 = vpop.f32.mrf.mxu0
  %10168 = vdwg.mxu0
  %10169 = vmatpush.bf16.msra.mxu0 %v9910
  %10170 = vmatpush.bf16.msra.mxu0 %v9906
  %10171 = vmatpush.bf16.msra.mxu0 %v9902
  %10172 = vmatpush.bf16.msra.mxu0 %v9898
  %10173 = vmatpush.bf16.msra.mxu0 %v9894
  %10174 = vmatpush.bf16.msra.mxu0 %v9890
  %10175 = vmatpush.bf16.msra.mxu0 %v9886
  %10176 = vmatpush.bf16.msra.mxu0 %v9882
  %10177 = vmatmul.bf16.gmra.mxu0 %v9130
  %v10178 = vpop.f32.mrf.mxu0
  %v10179 = vadd.f32 %v10166, %v10178
  %v10180 = vpop.f32.mrf.mxu0
  %10181 = vdwg.mxu0
  %10182 = vmatpush.bf16.msra.mxu0 %v9942
  %10183 = vmatpush.bf16.msra.mxu0 %v9938
  %10184 = vmatpush.bf16.msra.mxu0 %v9934
  %10185 = vmatpush.bf16.msra.mxu0 %v9930
  %10186 = vmatpush.bf16.msra.mxu0 %v9926
  %10187 = vmatpush.bf16.msra.mxu0 %v9922
  %10188 = vmatpush.bf16.msra.mxu0 %v9918
  %10189 = vmatpush.bf16.msra.mxu0 %v9914
  %10190 = vmatmul.bf16.gmra.mxu0 %v9452
  %v10191 = vpop.f32.mrf.mxu0
  %v10192 = vadd.f32 %v10179, %v10191
  %v10193 = vpop.f32.mrf.mxu0
  %10194 = vdwg.mxu0
  %v10195 = vxor.u32 %v10075, 2147483648
  %v10196 = vmul.f32 %v10195, 1.442695
  %v10197 = vpow.pop %v10196
  %v10198 = vadd.f32 %v10197, 1.0
  %v10199 = vrcp.pop %v10198
  %v10200 = vmul.f32 %v10198, %v10199
  %v10201 = vsub.f32 1.0, %v10200
  %v10202 = vmul.f32 %v10199, %v10201
  %v10203 = vadd.f32 %v10199, %v10202
  %vm10204 = vweird.f32 %v10198
  %vm10205 = vweird.f32 %v10199
  %vm10206 = vmor %vm10204, %vm10205
  %v10207 = vsel %vm10206, %v10199, %v10203
  %v10208 = vand.u32 2147483647, %v10198
  %vm10209 = vcmp.eq.f32.partialorder %v10208, 8.507059e+37
  %v10210 = vand.u32 %v10198, 2147483648
  %v10211 = vor.u32 1.1754944e-38, %v10210
  %v10212 = vsel %vm10209, %v10211, %v10207
  %v10213 = vmul.f32 1.0, %v10212
  %v10214 = vxor.u32 %v10114, 2147483648
  %v10215 = vmul.f32 %v10214, 1.442695
  %v10216 = vpow.pop %v10215
  %v10217 = vadd.f32 %v10216, 1.0
  %v10218 = vrcp.pop %v10217
  %v10219 = vmul.f32 %v10217, %v10218
  %v10220 = vsub.f32 1.0, %v10219
  %v10221 = vmul.f32 %v10218, %v10220
  %v10222 = vadd.f32 %v10218, %v10221
  %vm10223 = vweird.f32 %v10217
  %vm10224 = vweird.f32 %v10218
  %vm10225 = vmor %vm10223, %vm10224
  %v10226 = vsel %vm10225, %v10218, %v10222
  %v10227 = vand.u32 2147483647, %v10217
  %vm10228 = vcmp.eq.f32.partialorder %v10227, 8.507059e+37
  %v10229 = vand.u32 %v10217, 2147483648
  %v10230 = vor.u32 1.1754944e-38, %v10229
  %v10231 = vsel %vm10228, %v10230, %v10226
  %v10232 = vmul.f32 1.0, %v10231
  %v10233 = vtanh.pop %v10153
  %v10234 = vxor.u32 %v10192, 2147483648
  %v10235 = vmul.f32 %v10234, 1.442695
  %v10236 = vpow.pop %v10235
  %v10237 = vadd.f32 %v10236, 1.0
  %v10238 = vrcp.pop %v10237
  %v10239 = vmul.f32 %v10237, %v10238
  %v10240 = vsub.f32 1.0, %v10239
  %v10241 = vmul.f32 %v10238, %v10240
  %v10242 = vadd.f32 %v10238, %v10241
  %vm10243 = vweird.f32 %v10237
  %vm10244 = vweird.f32 %v10238
  %vm10245 = vmor %vm10243, %vm10244
  %v10246 = vsel %vm10245, %v10238, %v10242
  %v10247 = vand.u32 2147483647, %v10237
  %vm10248 = vcmp.eq.f32.partialorder %v10247, 8.507059e+37
  %v10249 = vand.u32 %v10237, 2147483648
  %v10250 = vor.u32 1.1754944e-38, %v10249
  %v10251 = vsel %vm10248, %v10250, %v10246
  %v10252 = vmul.f32 1.0, %v10251
  %v10253 = vmul.f32 %v10232, %v9127
  %v10254 = vmul.f32 %v10213, %v10233
  %v10255 = vadd.f32 %v10253, %v10254
  %v10256 = vtanh.pop %v10255
  %v10257 = vmul.f32 %v10252, %v10256
  %v10258 = vpack.c.bf16 %v10257, %v10257
  %s10259 = scalar_lea.vmem %s6, 20
  %10260 = vst [vmem:[%s10259] sm:$0xf] %v10258
  %v10261 = vld [vmem:[%s2] sm:$0xff]
  %v10262 = vld [vmem:[%s2 + $0x8] sm:$0xff]
  %v10263 = vld [vmem:[%s2 + $0x10] sm:$0xff]
  %v10264 = vld [vmem:[%s2 + $0x18] sm:$0xff]
  %v10265 = vld [vmem:[%s2 + $0x20] sm:$0xff]
  %v10266 = vld [vmem:[%s2 + $0x28] sm:$0xff]
  %v10267 = vld [vmem:[%s2 + $0x30] sm:$0xff]
  %v10268 = vld [vmem:[%s2 + $0x38] sm:$0xff]
  %v10269 = vld [vmem:[%s2 + $0x40] sm:$0xff]
  %v10270 = vld [vmem:[%s2 + $0x48] sm:$0xff]
  %v10271 = vld [vmem:[%s2 + $0x50] sm:$0xff]
  %v10272 = vld [vmem:[%s2 + $0x58] sm:$0xff]
  %v10273 = vld [vmem:[%s2 + $0x60] sm:$0xff]
  %v10274 = vld [vmem:[%s2 + $0x68] sm:$0xff]
  %v10275 = vld [vmem:[%s2 + $0x70] sm:$0xff]
  %v10276 = vld [vmem:[%s2 + $0x78] sm:$0xff]
  %v10277 = vld [vmem:[%s2 + $0x80] sm:$0xff]
  %v10278 = vld [vmem:[%s2 + $0x88] sm:$0xff]
  %v10279 = vld [vmem:[%s2 + $0x90] sm:$0xff]
  %v10280 = vld [vmem:[%s2 + $0x98] sm:$0xff]
  %v10281 = vld [vmem:[%s2 + $0xa0] sm:$0xff]
  %v10282 = vld [vmem:[%s2 + $0xa8] sm:$0xff]
  %v10283 = vld [vmem:[%s2 + $0xb0] sm:$0xff]
  %v10284 = vld [vmem:[%s2 + $0xb8] sm:$0xff]
  %v10285 = vld [vmem:[%s2 + $0xc0] sm:$0xff]
  %v10286 = vld [vmem:[%s2 + $0xc8] sm:$0xff]
  %v10287 = vld [vmem:[%s2 + $0xd0] sm:$0xff]
  %v10288 = vld [vmem:[%s2 + $0xd8] sm:$0xff]
  %v10289 = vld [vmem:[%s2 + $0xe0] sm:$0xff]
  %v10290 = vld [vmem:[%s2 + $0xe8] sm:$0xff]
  %v10291 = vld [vmem:[%s2 + $0xf0] sm:$0xff]
  %v10292 = vld [vmem:[%s2 + $0xf8] sm:$0xff]
  %v10293 = vld [vmem:[%s3] sm:$0xf]
  %v10295 = vperm.slane %v10293, 0
  %v10296 = vperm.slane %v10293, 1
  %v10297 = vperm.slane %v10293, 2
  %v10298 = vperm.slane %v10293, 3
  %v10335 = vunpack.c.l.b16 %v10261
  %v10336 = vunpack.c.h.b16 %v10261
  %v10337 = vunpack.c.l.b16 %v10262
  %v10338 = vunpack.c.h.b16 %v10262
  %v10339 = vunpack.c.l.b16 %v10263
  %v10340 = vunpack.c.h.b16 %v10263
  %v10341 = vunpack.c.l.b16 %v10264
  %v10342 = vunpack.c.h.b16 %v10264
  %v10343 = vunpack.c.l.b16 %v10265
  %v10344 = vunpack.c.h.b16 %v10265
  %v10345 = vunpack.c.l.b16 %v10266
  %v10346 = vunpack.c.h.b16 %v10266
  %v10347 = vunpack.c.l.b16 %v10267
  %v10348 = vunpack.c.h.b16 %v10267
  %v10349 = vunpack.c.l.b16 %v10268
  %v10350 = vunpack.c.h.b16 %v10268
  %v10351 = vunpack.c.l.b16 %v10269
  %v10352 = vunpack.c.h.b16 %v10269
  %v10353 = vunpack.c.l.b16 %v10270
  %v10354 = vunpack.c.h.b16 %v10270
  %v10355 = vunpack.c.l.b16 %v10271
  %v10356 = vunpack.c.h.b16 %v10271
  %v10357 = vunpack.c.l.b16 %v10272
  %v10358 = vunpack.c.h.b16 %v10272
  %v10359 = vunpack.c.l.b16 %v10273
  %v10360 = vunpack.c.h.b16 %v10273
  %v10361 = vunpack.c.l.b16 %v10274
  %v10362 = vunpack.c.h.b16 %v10274
  %v10363 = vunpack.c.l.b16 %v10275
  %v10364 = vunpack.c.h.b16 %v10275
  %v10365 = vunpack.c.l.b16 %v10276
  %v10366 = vunpack.c.h.b16 %v10276
  %v10367 = vunpack.c.l.b16 %v10277
  %v10368 = vunpack.c.h.b16 %v10277
  %v10369 = vunpack.c.l.b16 %v10278
  %v10370 = vunpack.c.h.b16 %v10278
  %v10371 = vunpack.c.l.b16 %v10279
  %v10372 = vunpack.c.h.b16 %v10279
  %v10373 = vunpack.c.l.b16 %v10280
  %v10374 = vunpack.c.h.b16 %v10280
  %v10375 = vunpack.c.l.b16 %v10281
  %v10376 = vunpack.c.h.b16 %v10281
  %v10377 = vunpack.c.l.b16 %v10282
  %v10378 = vunpack.c.h.b16 %v10282
  %v10379 = vunpack.c.l.b16 %v10283
  %v10380 = vunpack.c.h.b16 %v10283
  %v10381 = vunpack.c.l.b16 %v10284
  %v10382 = vunpack.c.h.b16 %v10284
  %v10383 = vunpack.c.l.b16 %v10285
  %v10384 = vunpack.c.h.b16 %v10285
  %v10385 = vunpack.c.l.b16 %v10286
  %v10386 = vunpack.c.h.b16 %v10286
  %v10387 = vunpack.c.l.b16 %v10287
  %v10388 = vunpack.c.h.b16 %v10287
  %v10389 = vunpack.c.l.b16 %v10288
  %v10390 = vunpack.c.h.b16 %v10288
  %v10391 = vunpack.c.l.b16 %v10289
  %v10392 = vunpack.c.h.b16 %v10289
  %v10393 = vunpack.c.l.b16 %v10290
  %v10394 = vunpack.c.h.b16 %v10290
  %v10395 = vunpack.c.l.b16 %v10291
  %v10396 = vunpack.c.h.b16 %v10291
  %v10397 = vunpack.c.l.b16 %v10292
  %v10398 = vunpack.c.h.b16 %v10292
  %v10399 = vpack.c.b16 %v10339, %v10335
  %v10400 = vpack.c.b16 %v10340, %v10336
  %v10401 = vpack.c.b16 %v10341, %v10337
  %v10402 = vpack.c.b16 %v10342, %v10338
  %v10403 = vpack.c.b16 %v10347, %v10343
  %v10404 = vpack.c.b16 %v10348, %v10344
  %v10405 = vpack.c.b16 %v10349, %v10345
  %v10406 = vpack.c.b16 %v10350, %v10346
  %v10407 = vpack.c.b16 %v10355, %v10351
  %v10408 = vpack.c.b16 %v10356, %v10352
  %v10409 = vpack.c.b16 %v10357, %v10353
  %v10410 = vpack.c.b16 %v10358, %v10354
  %v10411 = vpack.c.b16 %v10363, %v10359
  %v10412 = vpack.c.b16 %v10364, %v10360
  %v10413 = vpack.c.b16 %v10365, %v10361
  %v10414 = vpack.c.b16 %v10366, %v10362
  %v10415 = vpack.c.b16 %v10371, %v10367
  %v10416 = vpack.c.b16 %v10372, %v10368
  %v10417 = vpack.c.b16 %v10373, %v10369
  %v10418 = vpack.c.b16 %v10374, %v10370
  %v10419 = vpack.c.b16 %v10379, %v10375
  %v10420 = vpack.c.b16 %v10380, %v10376
  %v10421 = vpack.c.b16 %v10381, %v10377
  %v10422 = vpack.c.b16 %v10382, %v10378
  %v10423 = vpack.c.b16 %v10387, %v10383
  %v10424 = vpack.c.b16 %v10388, %v10384
  %v10425 = vpack.c.b16 %v10389, %v10385
  %v10426 = vpack.c.b16 %v10390, %v10386
  %v10427 = vpack.c.b16 %v10395, %v10391
  %v10428 = vpack.c.b16 %v10396, %v10392
  %v10429 = vpack.c.b16 %v10397, %v10393
  %v10430 = vpack.c.b16 %v10398, %v10394
  %10463 = vmatpush.bf16.msra.mxu0 %v10427
  %10464 = vmatpush.bf16.msra.mxu0 %v10423
  %10465 = vmatpush.bf16.msra.mxu0 %v10419
  %10466 = vmatpush.bf16.msra.mxu0 %v10415
  %10467 = vmatpush.bf16.msra.mxu0 %v10411
  %10468 = vmatpush.bf16.msra.mxu0 %v10407
  %10469 = vmatpush.bf16.msra.mxu0 %v10403
  %10470 = vmatpush.bf16.msra.mxu0 %v10399
  %10471 = vmatmul.bf16.gmra.mxu0 %v9450
  %v10472 = vpop.f32.mrf.mxu0
  %v10473 = vadd.f32 %v10295, %v10472
  %v10474 = vpop.f32.mrf.mxu0
  %10475 = vdwg.mxu0
  %10476 = vmatpush.bf16.msra.mxu0 %v10428
  %10477 = vmatpush.bf16.msra.mxu0 %v10424
  %10478 = vmatpush.bf16.msra.mxu0 %v10420
  %10479 = vmatpush.bf16.msra.mxu0 %v10416
  %10480 = vmatpush.bf16.msra.mxu0 %v10412
  %10481 = vmatpush.bf16.msra.mxu0 %v10408
  %10482 = vmatpush.bf16.msra.mxu0 %v10404
  %10483 = vmatpush.bf16.msra.mxu0 %v10400
  %10484 = vmatmul.bf16.gmra.mxu0 %v9450
  %v10485 = vpop.f32.mrf.mxu0
  %v10486 = vadd.f32 %v10296, %v10485
  %v10487 = vpop.f32.mrf.mxu0
  %10488 = vdwg.mxu0
  %10489 = vmatpush.bf16.msra.mxu0 %v10429
  %10490 = vmatpush.bf16.msra.mxu0 %v10425
  %10491 = vmatpush.bf16.msra.mxu0 %v10421
  %10492 = vmatpush.bf16.msra.mxu0 %v10417
  %10493 = vmatpush.bf16.msra.mxu0 %v10413
  %10494 = vmatpush.bf16.msra.mxu0 %v10409
  %10495 = vmatpush.bf16.msra.mxu0 %v10405
  %10496 = vmatpush.bf16.msra.mxu0 %v10401
  %10497 = vmatmul.bf16.gmra.mxu0 %v9450
  %v10498 = vpop.f32.mrf.mxu0
  %v10499 = vadd.f32 %v10297, %v10498
  %v10500 = vpop.f32.mrf.mxu0
  %10501 = vdwg.mxu0
  %10502 = vmatpush.bf16.msra.mxu0 %v10430
  %10503 = vmatpush.bf16.msra.mxu0 %v10426
  %10504 = vmatpush.bf16.msra.mxu0 %v10422
  %10505 = vmatpush.bf16.msra.mxu0 %v10418
  %10506 = vmatpush.bf16.msra.mxu0 %v10414
  %10507 = vmatpush.bf16.msra.mxu0 %v10410
  %10508 = vmatpush.bf16.msra.mxu0 %v10406
  %10509 = vmatpush.bf16.msra.mxu0 %v10402
  %10510 = vmatmul.bf16.gmra.mxu0 %v9450
  %v10511 = vpop.f32.mrf.mxu0
  %v10512 = vadd.f32 %v10298, %v10511
  %v10513 = vpop.f32.mrf.mxu0
  %10514 = vdwg.mxu0
  %v10515 = vxor.u32 %v10473, 2147483648
  %v10516 = vmul.f32 %v10515, 1.442695
  %v10517 = vpow.pop %v10516
  %v10518 = vadd.f32 %v10517, 1.0
  %v10519 = vrcp.pop %v10518
  %v10520 = vmul.f32 %v10518, %v10519
  %v10521 = vsub.f32 1.0, %v10520
  %v10522 = vmul.f32 %v10519, %v10521
  %v10523 = vadd.f32 %v10519, %v10522
  %vm10524 = vweird.f32 %v10518
  %vm10525 = vweird.f32 %v10519
  %vm10526 = vmor %vm10524, %vm10525
  %v10527 = vsel %vm10526, %v10519, %v10523
  %v10528 = vand.u32 2147483647, %v10518
  %vm10529 = vcmp.eq.f32.partialorder %v10528, 8.507059e+37
  %v10530 = vand.u32 %v10518, 2147483648
  %v10531 = vor.u32 1.1754944e-38, %v10530
  %v10532 = vsel %vm10529, %v10531, %v10527
  %v10533 = vmul.f32 1.0, %v10532
  %v10534 = vxor.u32 %v10486, 2147483648
  %v10535 = vmul.f32 %v10534, 1.442695
  %v10536 = vpow.pop %v10535
  %v10537 = vadd.f32 %v10536, 1.0
  %v10538 = vrcp.pop %v10537
  %v10539 = vmul.f32 %v10537, %v10538
  %v10540 = vsub.f32 1.0, %v10539
  %v10541 = vmul.f32 %v10538, %v10540
  %v10542 = vadd.f32 %v10538, %v10541
  %vm10543 = vweird.f32 %v10537
  %vm10544 = vweird.f32 %v10538
  %vm10545 = vmor %vm10543, %vm10544
  %v10546 = vsel %vm10545, %v10538, %v10542
  %v10547 = vand.u32 2147483647, %v10537
  %vm10548 = vcmp.eq.f32.partialorder %v10547, 8.507059e+37
  %v10549 = vand.u32 %v10537, 2147483648
  %v10550 = vor.u32 1.1754944e-38, %v10549
  %v10551 = vsel %vm10548, %v10550, %v10546
  %v10552 = vmul.f32 1.0, %v10551
  %v10553 = vtanh.pop %v10499
  %v10554 = vxor.u32 %v10512, 2147483648
  %v10555 = vmul.f32 %v10554, 1.442695
  %v10556 = vpow.pop %v10555
  %v10557 = vadd.f32 %v10556, 1.0
  %v10558 = vrcp.pop %v10557
  %v10559 = vmul.f32 %v10557, %v10558
  %v10560 = vsub.f32 1.0, %v10559
  %v10561 = vmul.f32 %v10558, %v10560
  %v10562 = vadd.f32 %v10558, %v10561
  %vm10563 = vweird.f32 %v10557
  %vm10564 = vweird.f32 %v10558
  %vm10565 = vmor %vm10563, %vm10564
  %v10566 = vsel %vm10565, %v10558, %v10562
  %v10567 = vand.u32 2147483647, %v10557
  %vm10568 = vcmp.eq.f32.partialorder %v10567, 8.507059e+37
  %v10569 = vand.u32 %v10557, 2147483648
  %v10570 = vor.u32 1.1754944e-38, %v10569
  %v10571 = vsel %vm10568, %v10570, %v10566
  %v10572 = vmul.f32 1.0, %v10571
  %v10573 = vmul.f32 %v10552, %v9447
  %v10574 = vmul.f32 %v10533, %v10553
  %v10575 = vadd.f32 %v10573, %v10574
  %v10576 = vtanh.pop %v10575
  %v10577 = vmul.f32 %v10572, %v10576
  %v10578 = vpack.c.bf16 %v10577, %v10577
  %s10579 = scalar_lea.vmem %s1, 24
  %v10580 = vld [vmem:[%s10579] sm:$0xf]
  %v10581 = vld [vmem:[%s4] sm:$0xff]
  %v10582 = vld [vmem:[%s4 + $0x8] sm:$0xff]
  %v10583 = vld [vmem:[%s4 + $0x10] sm:$0xff]
  %v10584 = vld [vmem:[%s4 + $0x18] sm:$0xff]
  %v10585 = vld [vmem:[%s4 + $0x20] sm:$0xff]
  %v10586 = vld [vmem:[%s4 + $0x28] sm:$0xff]
  %v10587 = vld [vmem:[%s4 + $0x30] sm:$0xff]
  %v10588 = vld [vmem:[%s4 + $0x38] sm:$0xff]
  %v10589 = vld [vmem:[%s4 + $0x40] sm:$0xff]
  %v10590 = vld [vmem:[%s4 + $0x48] sm:$0xff]
  %v10591 = vld [vmem:[%s4 + $0x50] sm:$0xff]
  %v10592 = vld [vmem:[%s4 + $0x58] sm:$0xff]
  %v10593 = vld [vmem:[%s4 + $0x60] sm:$0xff]
  %v10594 = vld [vmem:[%s4 + $0x68] sm:$0xff]
  %v10595 = vld [vmem:[%s4 + $0x70] sm:$0xff]
  %v10596 = vld [vmem:[%s4 + $0x78] sm:$0xff]
  %v10597 = vld [vmem:[%s4 + $0x80] sm:$0xff]
  %v10598 = vld [vmem:[%s4 + $0x88] sm:$0xff]
  %v10599 = vld [vmem:[%s4 + $0x90] sm:$0xff]
  %v10600 = vld [vmem:[%s4 + $0x98] sm:$0xff]
  %v10601 = vld [vmem:[%s4 + $0xa0] sm:$0xff]
  %v10602 = vld [vmem:[%s4 + $0xa8] sm:$0xff]
  %v10603 = vld [vmem:[%s4 + $0xb0] sm:$0xff]
  %v10604 = vld [vmem:[%s4 + $0xb8] sm:$0xff]
  %v10605 = vld [vmem:[%s4 + $0xc0] sm:$0xff]
  %v10606 = vld [vmem:[%s4 + $0xc8] sm:$0xff]
  %v10607 = vld [vmem:[%s4 + $0xd0] sm:$0xff]
  %v10608 = vld [vmem:[%s4 + $0xd8] sm:$0xff]
  %v10609 = vld [vmem:[%s4 + $0xe0] sm:$0xff]
  %v10610 = vld [vmem:[%s4 + $0xe8] sm:$0xff]
  %v10611 = vld [vmem:[%s4 + $0xf0] sm:$0xff]
  %v10612 = vld [vmem:[%s4 + $0xf8] sm:$0xff]
  %v10613 = vld [vmem:[%s4 + $0x100] sm:$0xff]
  %v10614 = vld [vmem:[%s4 + $0x108] sm:$0xff]
  %v10615 = vld [vmem:[%s4 + $0x110] sm:$0xff]
  %v10616 = vld [vmem:[%s4 + $0x118] sm:$0xff]
  %v10617 = vld [vmem:[%s4 + $0x120] sm:$0xff]
  %v10618 = vld [vmem:[%s4 + $0x128] sm:$0xff]
  %v10619 = vld [vmem:[%s4 + $0x130] sm:$0xff]
  %v10620 = vld [vmem:[%s4 + $0x138] sm:$0xff]
  %v10621 = vld [vmem:[%s4 + $0x140] sm:$0xff]
  %v10622 = vld [vmem:[%s4 + $0x148] sm:$0xff]
  %v10623 = vld [vmem:[%s4 + $0x150] sm:$0xff]
  %v10624 = vld [vmem:[%s4 + $0x158] sm:$0xff]
  %v10625 = vld [vmem:[%s4 + $0x160] sm:$0xff]
  %v10626 = vld [vmem:[%s4 + $0x168] sm:$0xff]
  %v10627 = vld [vmem:[%s4 + $0x170] sm:$0xff]
  %v10628 = vld [vmem:[%s4 + $0x178] sm:$0xff]
  %v10629 = vld [vmem:[%s4 + $0x180] sm:$0xff]
  %v10630 = vld [vmem:[%s4 + $0x188] sm:$0xff]
  %v10631 = vld [vmem:[%s4 + $0x190] sm:$0xff]
  %v10632 = vld [vmem:[%s4 + $0x198] sm:$0xff]
  %v10633 = vld [vmem:[%s4 + $0x1a0] sm:$0xff]
  %v10634 = vld [vmem:[%s4 + $0x1a8] sm:$0xff]
  %v10635 = vld [vmem:[%s4 + $0x1b0] sm:$0xff]
  %v10636 = vld [vmem:[%s4 + $0x1b8] sm:$0xff]
  %v10637 = vld [vmem:[%s4 + $0x1c0] sm:$0xff]
  %v10638 = vld [vmem:[%s4 + $0x1c8] sm:$0xff]
  %v10639 = vld [vmem:[%s4 + $0x1d0] sm:$0xff]
  %v10640 = vld [vmem:[%s4 + $0x1d8] sm:$0xff]
  %v10641 = vld [vmem:[%s4 + $0x1e0] sm:$0xff]
  %v10642 = vld [vmem:[%s4 + $0x1e8] sm:$0xff]
  %v10643 = vld [vmem:[%s4 + $0x1f0] sm:$0xff]
  %v10644 = vld [vmem:[%s4 + $0x1f8] sm:$0xff]
  %v10645 = vld [vmem:[%s4 + $0x200] sm:$0xff]
  %v10646 = vld [vmem:[%s4 + $0x208] sm:$0xff]
  %v10647 = vld [vmem:[%s4 + $0x210] sm:$0xff]
  %v10648 = vld [vmem:[%s4 + $0x218] sm:$0xff]
  %v10649 = vld [vmem:[%s4 + $0x220] sm:$0xff]
  %v10650 = vld [vmem:[%s4 + $0x228] sm:$0xff]
  %v10651 = vld [vmem:[%s4 + $0x230] sm:$0xff]
  %v10652 = vld [vmem:[%s4 + $0x238] sm:$0xff]
  %v10653 = vld [vmem:[%s4 + $0x240] sm:$0xff]
  %v10654 = vld [vmem:[%s4 + $0x248] sm:$0xff]
  %v10655 = vld [vmem:[%s4 + $0x250] sm:$0xff]
  %v10656 = vld [vmem:[%s4 + $0x258] sm:$0xff]
  %v10657 = vld [vmem:[%s4 + $0x260] sm:$0xff]
  %v10658 = vld [vmem:[%s4 + $0x268] sm:$0xff]
  %v10659 = vld [vmem:[%s4 + $0x270] sm:$0xff]
  %v10660 = vld [vmem:[%s4 + $0x278] sm:$0xff]
  %v10661 = vld [vmem:[%s4 + $0x280] sm:$0xff]
  %v10662 = vld [vmem:[%s4 + $0x288] sm:$0xff]
  %v10663 = vld [vmem:[%s4 + $0x290] sm:$0xff]
  %v10664 = vld [vmem:[%s4 + $0x298] sm:$0xff]
  %v10665 = vld [vmem:[%s4 + $0x2a0] sm:$0xff]
  %v10666 = vld [vmem:[%s4 + $0x2a8] sm:$0xff]
  %v10667 = vld [vmem:[%s4 + $0x2b0] sm:$0xff]
  %v10668 = vld [vmem:[%s4 + $0x2b8] sm:$0xff]
  %v10669 = vld [vmem:[%s4 + $0x2c0] sm:$0xff]
  %v10670 = vld [vmem:[%s4 + $0x2c8] sm:$0xff]
  %v10671 = vld [vmem:[%s4 + $0x2d0] sm:$0xff]
  %v10672 = vld [vmem:[%s4 + $0x2d8] sm:$0xff]
  %v10673 = vld [vmem:[%s4 + $0x2e0] sm:$0xff]
  %v10674 = vld [vmem:[%s4 + $0x2e8] sm:$0xff]
  %v10675 = vld [vmem:[%s4 + $0x2f0] sm:$0xff]
  %v10676 = vld [vmem:[%s4 + $0x2f8] sm:$0xff]
  %v10677 = vld [vmem:[%s5] sm:$0xf]
  %v10679 = vperm.slane %v10677, 0
  %v10680 = vperm.slane %v10677, 1
  %v10681 = vperm.slane %v10677, 2
  %v10682 = vperm.slane %v10677, 3
  %v10783 = vunpack.c.l.b16 %v10581
  %v10784 = vunpack.c.h.b16 %v10581
  %v10785 = vunpack.c.l.b16 %v10582
  %v10786 = vunpack.c.h.b16 %v10582
  %v10787 = vunpack.c.l.b16 %v10583
  %v10788 = vunpack.c.h.b16 %v10583
  %v10789 = vunpack.c.l.b16 %v10584
  %v10790 = vunpack.c.h.b16 %v10584
  %v10791 = vunpack.c.l.b16 %v10585
  %v10792 = vunpack.c.h.b16 %v10585
  %v10793 = vunpack.c.l.b16 %v10586
  %v10794 = vunpack.c.h.b16 %v10586
  %v10795 = vunpack.c.l.b16 %v10587
  %v10796 = vunpack.c.h.b16 %v10587
  %v10797 = vunpack.c.l.b16 %v10588
  %v10798 = vunpack.c.h.b16 %v10588
  %v10799 = vunpack.c.l.b16 %v10589
  %v10800 = vunpack.c.h.b16 %v10589
  %v10801 = vunpack.c.l.b16 %v10590
  %v10802 = vunpack.c.h.b16 %v10590
  %v10803 = vunpack.c.l.b16 %v10591
  %v10804 = vunpack.c.h.b16 %v10591
  %v10805 = vunpack.c.l.b16 %v10592
  %v10806 = vunpack.c.h.b16 %v10592
  %v10807 = vunpack.c.l.b16 %v10593
  %v10808 = vunpack.c.h.b16 %v10593
  %v10809 = vunpack.c.l.b16 %v10594
  %v10810 = vunpack.c.h.b16 %v10594
  %v10811 = vunpack.c.l.b16 %v10595
  %v10812 = vunpack.c.h.b16 %v10595
  %v10813 = vunpack.c.l.b16 %v10596
  %v10814 = vunpack.c.h.b16 %v10596
  %v10815 = vunpack.c.l.b16 %v10597
  %v10816 = vunpack.c.h.b16 %v10597
  %v10817 = vunpack.c.l.b16 %v10598
  %v10818 = vunpack.c.h.b16 %v10598
  %v10819 = vunpack.c.l.b16 %v10599
  %v10820 = vunpack.c.h.b16 %v10599
  %v10821 = vunpack.c.l.b16 %v10600
  %v10822 = vunpack.c.h.b16 %v10600
  %v10823 = vunpack.c.l.b16 %v10601
  %v10824 = vunpack.c.h.b16 %v10601
  %v10825 = vunpack.c.l.b16 %v10602
  %v10826 = vunpack.c.h.b16 %v10602
  %v10827 = vunpack.c.l.b16 %v10603
  %v10828 = vunpack.c.h.b16 %v10603
  %v10829 = vunpack.c.l.b16 %v10604
  %v10830 = vunpack.c.h.b16 %v10604
  %v10831 = vunpack.c.l.b16 %v10605
  %v10832 = vunpack.c.h.b16 %v10605
  %v10833 = vunpack.c.l.b16 %v10606
  %v10834 = vunpack.c.h.b16 %v10606
  %v10835 = vunpack.c.l.b16 %v10607
  %v10836 = vunpack.c.h.b16 %v10607
  %v10837 = vunpack.c.l.b16 %v10608
  %v10838 = vunpack.c.h.b16 %v10608
  %v10839 = vunpack.c.l.b16 %v10609
  %v10840 = vunpack.c.h.b16 %v10609
  %v10841 = vunpack.c.l.b16 %v10610
  %v10842 = vunpack.c.h.b16 %v10610
  %v10843 = vunpack.c.l.b16 %v10611
  %v10844 = vunpack.c.h.b16 %v10611
  %v10845 = vunpack.c.l.b16 %v10612
  %v10846 = vunpack.c.h.b16 %v10612
  %v10847 = vunpack.c.l.b16 %v10613
  %v10848 = vunpack.c.h.b16 %v10613
  %v10849 = vunpack.c.l.b16 %v10614
  %v10850 = vunpack.c.h.b16 %v10614
  %v10851 = vunpack.c.l.b16 %v10615
  %v10852 = vunpack.c.h.b16 %v10615
  %v10853 = vunpack.c.l.b16 %v10616
  %v10854 = vunpack.c.h.b16 %v10616
  %v10855 = vunpack.c.l.b16 %v10617
  %v10856 = vunpack.c.h.b16 %v10617
  %v10857 = vunpack.c.l.b16 %v10618
  %v10858 = vunpack.c.h.b16 %v10618
  %v10859 = vunpack.c.l.b16 %v10619
  %v10860 = vunpack.c.h.b16 %v10619
  %v10861 = vunpack.c.l.b16 %v10620
  %v10862 = vunpack.c.h.b16 %v10620
  %v10863 = vunpack.c.l.b16 %v10621
  %v10864 = vunpack.c.h.b16 %v10621
  %v10865 = vunpack.c.l.b16 %v10622
  %v10866 = vunpack.c.h.b16 %v10622
  %v10867 = vunpack.c.l.b16 %v10623
  %v10868 = vunpack.c.h.b16 %v10623
  %v10869 = vunpack.c.l.b16 %v10624
  %v10870 = vunpack.c.h.b16 %v10624
  %v10871 = vunpack.c.l.b16 %v10625
  %v10872 = vunpack.c.h.b16 %v10625
  %v10873 = vunpack.c.l.b16 %v10626
  %v10874 = vunpack.c.h.b16 %v10626
  %v10875 = vunpack.c.l.b16 %v10627
  %v10876 = vunpack.c.h.b16 %v10627
  %v10877 = vunpack.c.l.b16 %v10628
  %v10878 = vunpack.c.h.b16 %v10628
  %v10879 = vunpack.c.l.b16 %v10629
  %v10880 = vunpack.c.h.b16 %v10629
  %v10881 = vunpack.c.l.b16 %v10630
  %v10882 = vunpack.c.h.b16 %v10630
  %v10883 = vunpack.c.l.b16 %v10631
  %v10884 = vunpack.c.h.b16 %v10631
  %v10885 = vunpack.c.l.b16 %v10632
  %v10886 = vunpack.c.h.b16 %v10632
  %v10887 = vunpack.c.l.b16 %v10633
  %v10888 = vunpack.c.h.b16 %v10633
  %v10889 = vunpack.c.l.b16 %v10634
  %v10890 = vunpack.c.h.b16 %v10634
  %v10891 = vunpack.c.l.b16 %v10635
  %v10892 = vunpack.c.h.b16 %v10635
  %v10893 = vunpack.c.l.b16 %v10636
  %v10894 = vunpack.c.h.b16 %v10636
  %v10895 = vunpack.c.l.b16 %v10637
  %v10896 = vunpack.c.h.b16 %v10637
  %v10897 = vunpack.c.l.b16 %v10638
  %v10898 = vunpack.c.h.b16 %v10638
  %v10899 = vunpack.c.l.b16 %v10639
  %v10900 = vunpack.c.h.b16 %v10639
  %v10901 = vunpack.c.l.b16 %v10640
  %v10902 = vunpack.c.h.b16 %v10640
  %v10903 = vunpack.c.l.b16 %v10641
  %v10904 = vunpack.c.h.b16 %v10641
  %v10905 = vunpack.c.l.b16 %v10642
  %v10906 = vunpack.c.h.b16 %v10642
  %v10907 = vunpack.c.l.b16 %v10643
  %v10908 = vunpack.c.h.b16 %v10643
  %v10909 = vunpack.c.l.b16 %v10644
  %v10910 = vunpack.c.h.b16 %v10644
  %v10911 = vunpack.c.l.b16 %v10645
  %v10912 = vunpack.c.h.b16 %v10645
  %v10913 = vunpack.c.l.b16 %v10646
  %v10914 = vunpack.c.h.b16 %v10646
  %v10915 = vunpack.c.l.b16 %v10647
  %v10916 = vunpack.c.h.b16 %v10647
  %v10917 = vunpack.c.l.b16 %v10648
  %v10918 = vunpack.c.h.b16 %v10648
  %v10919 = vunpack.c.l.b16 %v10649
  %v10920 = vunpack.c.h.b16 %v10649
  %v10921 = vunpack.c.l.b16 %v10650
  %v10922 = vunpack.c.h.b16 %v10650
  %v10923 = vunpack.c.l.b16 %v10651
  %v10924 = vunpack.c.h.b16 %v10651
  %v10925 = vunpack.c.l.b16 %v10652
  %v10926 = vunpack.c.h.b16 %v10652
  %v10927 = vunpack.c.l.b16 %v10653
  %v10928 = vunpack.c.h.b16 %v10653
  %v10929 = vunpack.c.l.b16 %v10654
  %v10930 = vunpack.c.h.b16 %v10654
  %v10931 = vunpack.c.l.b16 %v10655
  %v10932 = vunpack.c.h.b16 %v10655
  %v10933 = vunpack.c.l.b16 %v10656
  %v10934 = vunpack.c.h.b16 %v10656
  %v10935 = vunpack.c.l.b16 %v10657
  %v10936 = vunpack.c.h.b16 %v10657
  %v10937 = vunpack.c.l.b16 %v10658
  %v10938 = vunpack.c.h.b16 %v10658
  %v10939 = vunpack.c.l.b16 %v10659
  %v10940 = vunpack.c.h.b16 %v10659
  %v10941 = vunpack.c.l.b16 %v10660
  %v10942 = vunpack.c.h.b16 %v10660
  %v10943 = vunpack.c.l.b16 %v10661
  %v10944 = vunpack.c.h.b16 %v10661
  %v10945 = vunpack.c.l.b16 %v10662
  %v10946 = vunpack.c.h.b16 %v10662
  %v10947 = vunpack.c.l.b16 %v10663
  %v10948 = vunpack.c.h.b16 %v10663
  %v10949 = vunpack.c.l.b16 %v10664
  %v10950 = vunpack.c.h.b16 %v10664
  %v10951 = vunpack.c.l.b16 %v10665
  %v10952 = vunpack.c.h.b16 %v10665
  %v10953 = vunpack.c.l.b16 %v10666
  %v10954 = vunpack.c.h.b16 %v10666
  %v10955 = vunpack.c.l.b16 %v10667
  %v10956 = vunpack.c.h.b16 %v10667
  %v10957 = vunpack.c.l.b16 %v10668
  %v10958 = vunpack.c.h.b16 %v10668
  %v10959 = vunpack.c.l.b16 %v10669
  %v10960 = vunpack.c.h.b16 %v10669
  %v10961 = vunpack.c.l.b16 %v10670
  %v10962 = vunpack.c.h.b16 %v10670
  %v10963 = vunpack.c.l.b16 %v10671
  %v10964 = vunpack.c.h.b16 %v10671
  %v10965 = vunpack.c.l.b16 %v10672
  %v10966 = vunpack.c.h.b16 %v10672
  %v10967 = vunpack.c.l.b16 %v10673
  %v10968 = vunpack.c.h.b16 %v10673
  %v10969 = vunpack.c.l.b16 %v10674
  %v10970 = vunpack.c.h.b16 %v10674
  %v10971 = vunpack.c.l.b16 %v10675
  %v10972 = vunpack.c.h.b16 %v10675
  %v10973 = vunpack.c.l.b16 %v10676
  %v10974 = vunpack.c.h.b16 %v10676
  %v10975 = vpack.c.b16 %v10787, %v10783
  %v10976 = vpack.c.b16 %v10788, %v10784
  %v10977 = vpack.c.b16 %v10789, %v10785
  %v10978 = vpack.c.b16 %v10790, %v10786
  %v10979 = vpack.c.b16 %v10795, %v10791
  %v10980 = vpack.c.b16 %v10796, %v10792
  %v10981 = vpack.c.b16 %v10797, %v10793
  %v10982 = vpack.c.b16 %v10798, %v10794
  %v10983 = vpack.c.b16 %v10803, %v10799
  %v10984 = vpack.c.b16 %v10804, %v10800
  %v10985 = vpack.c.b16 %v10805, %v10801
  %v10986 = vpack.c.b16 %v10806, %v10802
  %v10987 = vpack.c.b16 %v10811, %v10807
  %v10988 = vpack.c.b16 %v10812, %v10808
  %v10989 = vpack.c.b16 %v10813, %v10809
  %v10990 = vpack.c.b16 %v10814, %v10810
  %v10991 = vpack.c.b16 %v10819, %v10815
  %v10992 = vpack.c.b16 %v10820, %v10816
  %v10993 = vpack.c.b16 %v10821, %v10817
  %v10994 = vpack.c.b16 %v10822, %v10818
  %v10995 = vpack.c.b16 %v10827, %v10823
  %v10996 = vpack.c.b16 %v10828, %v10824
  %v10997 = vpack.c.b16 %v10829, %v10825
  %v10998 = vpack.c.b16 %v10830, %v10826
  %v10999 = vpack.c.b16 %v10835, %v10831
  %v11000 = vpack.c.b16 %v10836, %v10832
  %v11001 = vpack.c.b16 %v10837, %v10833
  %v11002 = vpack.c.b16 %v10838, %v10834
  %v11003 = vpack.c.b16 %v10843, %v10839
  %v11004 = vpack.c.b16 %v10844, %v10840
  %v11005 = vpack.c.b16 %v10845, %v10841
  %v11006 = vpack.c.b16 %v10846, %v10842
  %v11007 = vpack.c.b16 %v10851, %v10847
  %v11008 = vpack.c.b16 %v10852, %v10848
  %v11009 = vpack.c.b16 %v10853, %v10849
  %v11010 = vpack.c.b16 %v10854, %v10850
  %v11011 = vpack.c.b16 %v10859, %v10855
  %v11012 = vpack.c.b16 %v10860, %v10856
  %v11013 = vpack.c.b16 %v10861, %v10857
  %v11014 = vpack.c.b16 %v10862, %v10858
  %v11015 = vpack.c.b16 %v10867, %v10863
  %v11016 = vpack.c.b16 %v10868, %v10864
  %v11017 = vpack.c.b16 %v10869, %v10865
  %v11018 = vpack.c.b16 %v10870, %v10866
  %v11019 = vpack.c.b16 %v10875, %v10871
  %v11020 = vpack.c.b16 %v10876, %v10872
  %v11021 = vpack.c.b16 %v10877, %v10873
  %v11022 = vpack.c.b16 %v10878, %v10874
  %v11023 = vpack.c.b16 %v10883, %v10879
  %v11024 = vpack.c.b16 %v10884, %v10880
  %v11025 = vpack.c.b16 %v10885, %v10881
  %v11026 = vpack.c.b16 %v10886, %v10882
  %v11027 = vpack.c.b16 %v10891, %v10887
  %v11028 = vpack.c.b16 %v10892, %v10888
  %v11029 = vpack.c.b16 %v10893, %v10889
  %v11030 = vpack.c.b16 %v10894, %v10890
  %v11031 = vpack.c.b16 %v10899, %v10895
  %v11032 = vpack.c.b16 %v10900, %v10896
  %v11033 = vpack.c.b16 %v10901, %v10897
  %v11034 = vpack.c.b16 %v10902, %v10898
  %v11035 = vpack.c.b16 %v10907, %v10903
  %v11036 = vpack.c.b16 %v10908, %v10904
  %v11037 = vpack.c.b16 %v10909, %v10905
  %v11038 = vpack.c.b16 %v10910, %v10906
  %v11039 = vpack.c.b16 %v10915, %v10911
  %v11040 = vpack.c.b16 %v10916, %v10912
  %v11041 = vpack.c.b16 %v10917, %v10913
  %v11042 = vpack.c.b16 %v10918, %v10914
  %v11043 = vpack.c.b16 %v10923, %v10919
  %v11044 = vpack.c.b16 %v10924, %v10920
  %v11045 = vpack.c.b16 %v10925, %v10921
  %v11046 = vpack.c.b16 %v10926, %v10922
  %v11047 = vpack.c.b16 %v10931, %v10927
  %v11048 = vpack.c.b16 %v10932, %v10928
  %v11049 = vpack.c.b16 %v10933, %v10929
  %v11050 = vpack.c.b16 %v10934, %v10930
  %v11051 = vpack.c.b16 %v10939, %v10935
  %v11052 = vpack.c.b16 %v10940, %v10936
  %v11053 = vpack.c.b16 %v10941, %v10937
  %v11054 = vpack.c.b16 %v10942, %v10938
  %v11055 = vpack.c.b16 %v10947, %v10943
  %v11056 = vpack.c.b16 %v10948, %v10944
  %v11057 = vpack.c.b16 %v10949, %v10945
  %v11058 = vpack.c.b16 %v10950, %v10946
  %v11059 = vpack.c.b16 %v10955, %v10951
  %v11060 = vpack.c.b16 %v10956, %v10952
  %v11061 = vpack.c.b16 %v10957, %v10953
  %v11062 = vpack.c.b16 %v10958, %v10954
  %v11063 = vpack.c.b16 %v10963, %v10959
  %v11064 = vpack.c.b16 %v10964, %v10960
  %v11065 = vpack.c.b16 %v10965, %v10961
  %v11066 = vpack.c.b16 %v10966, %v10962
  %v11067 = vpack.c.b16 %v10971, %v10967
  %v11068 = vpack.c.b16 %v10972, %v10968
  %v11069 = vpack.c.b16 %v10973, %v10969
  %v11070 = vpack.c.b16 %v10974, %v10970
  %11167 = vmatpush.bf16.msra.mxu0 %v11003
  %11168 = vmatpush.bf16.msra.mxu0 %v10999
  %11169 = vmatpush.bf16.msra.mxu0 %v10995
  %11170 = vmatpush.bf16.msra.mxu0 %v10991
  %11171 = vmatpush.bf16.msra.mxu0 %v10987
  %11172 = vmatpush.bf16.msra.mxu0 %v10983
  %11173 = vmatpush.bf16.msra.mxu0 %v10979
  %11174 = vmatpush.bf16.msra.mxu0 %v10975
  %11175 = vmatmul.bf16.gmra.mxu0 %v10578
  %v11176 = vpop.f32.mrf.mxu0
  %v11177 = vadd.f32 %v10679, %v11176
  %v11178 = vpop.f32.mrf.mxu0
  %11179 = vdwg.mxu0
  %11180 = vmatpush.bf16.msra.mxu0 %v11035
  %11181 = vmatpush.bf16.msra.mxu0 %v11031
  %11182 = vmatpush.bf16.msra.mxu0 %v11027
  %11183 = vmatpush.bf16.msra.mxu0 %v11023
  %11184 = vmatpush.bf16.msra.mxu0 %v11019
  %11185 = vmatpush.bf16.msra.mxu0 %v11015
  %11186 = vmatpush.bf16.msra.mxu0 %v11011
  %11187 = vmatpush.bf16.msra.mxu0 %v11007
  %11188 = vmatmul.bf16.gmra.mxu0 %v10258
  %v11189 = vpop.f32.mrf.mxu0
  %v11190 = vadd.f32 %v11177, %v11189
  %v11191 = vpop.f32.mrf.mxu0
  %11192 = vdwg.mxu0
  %11193 = vmatpush.bf16.msra.mxu0 %v11067
  %11194 = vmatpush.bf16.msra.mxu0 %v11063
  %11195 = vmatpush.bf16.msra.mxu0 %v11059
  %11196 = vmatpush.bf16.msra.mxu0 %v11055
  %11197 = vmatpush.bf16.msra.mxu0 %v11051
  %11198 = vmatpush.bf16.msra.mxu0 %v11047
  %11199 = vmatpush.bf16.msra.mxu0 %v11043
  %11200 = vmatpush.bf16.msra.mxu0 %v11039
  %11201 = vmatmul.bf16.gmra.mxu0 %v10580
  %v11202 = vpop.f32.mrf.mxu0
  %v11203 = vadd.f32 %v11190, %v11202
  %v11204 = vpop.f32.mrf.mxu0
  %11205 = vdwg.mxu0
  %11206 = vmatpush.bf16.msra.mxu0 %v11004
  %11207 = vmatpush.bf16.msra.mxu0 %v11000
  %11208 = vmatpush.bf16.msra.mxu0 %v10996
  %11209 = vmatpush.bf16.msra.mxu0 %v10992
  %11210 = vmatpush.bf16.msra.mxu0 %v10988
  %11211 = vmatpush.bf16.msra.mxu0 %v10984
  %11212 = vmatpush.bf16.msra.mxu0 %v10980
  %11213 = vmatpush.bf16.msra.mxu0 %v10976
  %11214 = vmatmul.bf16.gmra.mxu0 %v10578
  %v11215 = vpop.f32.mrf.mxu0
  %v11216 = vadd.f32 %v10680, %v11215
  %v11217 = vpop.f32.mrf.mxu0
  %11218 = vdwg.mxu0
  %11219 = vmatpush.bf16.msra.mxu0 %v11036
  %11220 = vmatpush.bf16.msra.mxu0 %v11032
  %11221 = vmatpush.bf16.msra.mxu0 %v11028
  %11222 = vmatpush.bf16.msra.mxu0 %v11024
  %11223 = vmatpush.bf16.msra.mxu0 %v11020
  %11224 = vmatpush.bf16.msra.mxu0 %v11016
  %11225 = vmatpush.bf16.msra.mxu0 %v11012
  %11226 = vmatpush.bf16.msra.mxu0 %v11008
  %11227 = vmatmul.bf16.gmra.mxu0 %v10258
  %v11228 = vpop.f32.mrf.mxu0
  %v11229 = vadd.f32 %v11216, %v11228
  %v11230 = vpop.f32.mrf.mxu0
  %11231 = vdwg.mxu0
  %11232 = vmatpush.bf16.msra.mxu0 %v11068
  %11233 = vmatpush.bf16.msra.mxu0 %v11064
  %11234 = vmatpush.bf16.msra.mxu0 %v11060
  %11235 = vmatpush.bf16.msra.mxu0 %v11056
  %11236 = vmatpush.bf16.msra.mxu0 %v11052
  %11237 = vmatpush.bf16.msra.mxu0 %v11048
  %11238 = vmatpush.bf16.msra.mxu0 %v11044
  %11239 = vmatpush.bf16.msra.mxu0 %v11040
  %11240 = vmatmul.bf16.gmra.mxu0 %v10580
  %v11241 = vpop.f32.mrf.mxu0
  %v11242 = vadd.f32 %v11229, %v11241
  %v11243 = vpop.f32.mrf.mxu0
  %11244 = vdwg.mxu0
  %11245 = vmatpush.bf16.msra.mxu0 %v11005
  %11246 = vmatpush.bf16.msra.mxu0 %v11001
  %11247 = vmatpush.bf16.msra.mxu0 %v10997
  %11248 = vmatpush.bf16.msra.mxu0 %v10993
  %11249 = vmatpush.bf16.msra.mxu0 %v10989
  %11250 = vmatpush.bf16.msra.mxu0 %v10985
  %11251 = vmatpush.bf16.msra.mxu0 %v10981
  %11252 = vmatpush.bf16.msra.mxu0 %v10977
  %11253 = vmatmul.bf16.gmra.mxu0 %v10578
  %v11254 = vpop.f32.mrf.mxu0
  %v11255 = vadd.f32 %v10681, %v11254
  %v11256 = vpop.f32.mrf.mxu0
  %11257 = vdwg.mxu0
  %11258 = vmatpush.bf16.msra.mxu0 %v11037
  %11259 = vmatpush.bf16.msra.mxu0 %v11033
  %11260 = vmatpush.bf16.msra.mxu0 %v11029
  %11261 = vmatpush.bf16.msra.mxu0 %v11025
  %11262 = vmatpush.bf16.msra.mxu0 %v11021
  %11263 = vmatpush.bf16.msra.mxu0 %v11017
  %11264 = vmatpush.bf16.msra.mxu0 %v11013
  %11265 = vmatpush.bf16.msra.mxu0 %v11009
  %11266 = vmatmul.bf16.gmra.mxu0 %v10258
  %v11267 = vpop.f32.mrf.mxu0
  %v11268 = vadd.f32 %v11255, %v11267
  %v11269 = vpop.f32.mrf.mxu0
  %11270 = vdwg.mxu0
  %11271 = vmatpush.bf16.msra.mxu0 %v11069
  %11272 = vmatpush.bf16.msra.mxu0 %v11065
  %11273 = vmatpush.bf16.msra.mxu0 %v11061
  %11274 = vmatpush.bf16.msra.mxu0 %v11057
  %11275 = vmatpush.bf16.msra.mxu0 %v11053
  %11276 = vmatpush.bf16.msra.mxu0 %v11049
  %11277 = vmatpush.bf16.msra.mxu0 %v11045
  %11278 = vmatpush.bf16.msra.mxu0 %v11041
  %11279 = vmatmul.bf16.gmra.mxu0 %v10580
  %v11280 = vpop.f32.mrf.mxu0
  %v11281 = vadd.f32 %v11268, %v11280
  %v11282 = vpop.f32.mrf.mxu0
  %11283 = vdwg.mxu0
  %11284 = vmatpush.bf16.msra.mxu0 %v11006
  %11285 = vmatpush.bf16.msra.mxu0 %v11002
  %11286 = vmatpush.bf16.msra.mxu0 %v10998
  %11287 = vmatpush.bf16.msra.mxu0 %v10994
  %11288 = vmatpush.bf16.msra.mxu0 %v10990
  %11289 = vmatpush.bf16.msra.mxu0 %v10986
  %11290 = vmatpush.bf16.msra.mxu0 %v10982
  %11291 = vmatpush.bf16.msra.mxu0 %v10978
  %11292 = vmatmul.bf16.gmra.mxu0 %v10578
  %v11293 = vpop.f32.mrf.mxu0
  %v11294 = vadd.f32 %v10682, %v11293
  %v11295 = vpop.f32.mrf.mxu0
  %11296 = vdwg.mxu0
  %11297 = vmatpush.bf16.msra.mxu0 %v11038
  %11298 = vmatpush.bf16.msra.mxu0 %v11034
  %11299 = vmatpush.bf16.msra.mxu0 %v11030
  %11300 = vmatpush.bf16.msra.mxu0 %v11026
  %11301 = vmatpush.bf16.msra.mxu0 %v11022
  %11302 = vmatpush.bf16.msra.mxu0 %v11018
  %11303 = vmatpush.bf16.msra.mxu0 %v11014
  %11304 = vmatpush.bf16.msra.mxu0 %v11010
  %11305 = vmatmul.bf16.gmra.mxu0 %v10258
  %v11306 = vpop.f32.mrf.mxu0
  %v11307 = vadd.f32 %v11294, %v11306
  %v11308 = vpop.f32.mrf.mxu0
  %11309 = vdwg.mxu0
  %11310 = vmatpush.bf16.msra.mxu0 %v11070
  %11311 = vmatpush.bf16.msra.mxu0 %v11066
  %11312 = vmatpush.bf16.msra.mxu0 %v11062
  %11313 = vmatpush.bf16.msra.mxu0 %v11058
  %11314 = vmatpush.bf16.msra.mxu0 %v11054
  %11315 = vmatpush.bf16.msra.mxu0 %v11050
  %11316 = vmatpush.bf16.msra.mxu0 %v11046
  %11317 = vmatpush.bf16.msra.mxu0 %v11042
  %11318 = vmatmul.bf16.gmra.mxu0 %v10580
  %v11319 = vpop.f32.mrf.mxu0
  %v11320 = vadd.f32 %v11307, %v11319
  %v11321 = vpop.f32.mrf.mxu0
  %11322 = vdwg.mxu0
  %v11323 = vxor.u32 %v11203, 2147483648
  %v11324 = vmul.f32 %v11323, 1.442695
  %v11325 = vpow.pop %v11324
  %v11326 = vadd.f32 %v11325, 1.0
  %v11327 = vrcp.pop %v11326
  %v11328 = vmul.f32 %v11326, %v11327
  %v11329 = vsub.f32 1.0, %v11328
  %v11330 = vmul.f32 %v11327, %v11329
  %v11331 = vadd.f32 %v11327, %v11330
  %vm11332 = vweird.f32 %v11326
  %vm11333 = vweird.f32 %v11327
  %vm11334 = vmor %vm11332, %vm11333
  %v11335 = vsel %vm11334, %v11327, %v11331
  %v11336 = vand.u32 2147483647, %v11326
  %vm11337 = vcmp.eq.f32.partialorder %v11336, 8.507059e+37
  %v11338 = vand.u32 %v11326, 2147483648
  %v11339 = vor.u32 1.1754944e-38, %v11338
  %v11340 = vsel %vm11337, %v11339, %v11335
  %v11341 = vmul.f32 1.0, %v11340
  %v11342 = vxor.u32 %v11242, 2147483648
  %v11343 = vmul.f32 %v11342, 1.442695
  %v11344 = vpow.pop %v11343
  %v11345 = vadd.f32 %v11344, 1.0
  %v11346 = vrcp.pop %v11345
  %v11347 = vmul.f32 %v11345, %v11346
  %v11348 = vsub.f32 1.0, %v11347
  %v11349 = vmul.f32 %v11346, %v11348
  %v11350 = vadd.f32 %v11346, %v11349
  %vm11351 = vweird.f32 %v11345
  %vm11352 = vweird.f32 %v11346
  %vm11353 = vmor %vm11351, %vm11352
  %v11354 = vsel %vm11353, %v11346, %v11350
  %v11355 = vand.u32 2147483647, %v11345
  %vm11356 = vcmp.eq.f32.partialorder %v11355, 8.507059e+37
  %v11357 = vand.u32 %v11345, 2147483648
  %v11358 = vor.u32 1.1754944e-38, %v11357
  %v11359 = vsel %vm11356, %v11358, %v11354
  %v11360 = vmul.f32 1.0, %v11359
  %v11361 = vtanh.pop %v11281
  %v11362 = vxor.u32 %v11320, 2147483648
  %v11363 = vmul.f32 %v11362, 1.442695
  %v11364 = vpow.pop %v11363
  %v11365 = vadd.f32 %v11364, 1.0
  %v11366 = vrcp.pop %v11365
  %v11367 = vmul.f32 %v11365, %v11366
  %v11368 = vsub.f32 1.0, %v11367
  %v11369 = vmul.f32 %v11366, %v11368
  %v11370 = vadd.f32 %v11366, %v11369
  %vm11371 = vweird.f32 %v11365
  %vm11372 = vweird.f32 %v11366
  %vm11373 = vmor %vm11371, %vm11372
  %v11374 = vsel %vm11373, %v11366, %v11370
  %v11375 = vand.u32 2147483647, %v11365
  %vm11376 = vcmp.eq.f32.partialorder %v11375, 8.507059e+37
  %v11377 = vand.u32 %v11365, 2147483648
  %v11378 = vor.u32 1.1754944e-38, %v11377
  %v11379 = vsel %vm11376, %v11378, %v11374
  %v11380 = vmul.f32 1.0, %v11379
  %v11381 = vmul.f32 %v11360, %v10255
  %v11382 = vmul.f32 %v11341, %v11361
  %v11383 = vadd.f32 %v11381, %v11382
  %v11384 = vtanh.pop %v11383
  %v11385 = vmul.f32 %v11380, %v11384
  %v11386 = vpack.c.bf16 %v11385, %v11385
  %s11387 = scalar_lea.vmem %s6, 24
  %11388 = vst [vmem:[%s11387] sm:$0xf] %v11386
  // Predicated region
  $region26: #{s2vt_forward_train.3} parent=0 // pred_check
    _
  $region27: #{s2vt_forward_train.3} parent=0 // pred_check_branch
    %11390 = sbr.rel (0) target = $region29
  $region28: #{s2vt_forward_train.3} parent=0 // pred_region
    _
  $region29: #{s2vt_forward_train.3} parent=0 // pred_fallthru
    _
  // Predicated region
  $region30: #{s2vt_forward_train.3} parent=0 // pred_check
    _
  $region31: #{s2vt_forward_train.3} parent=0 // pred_check_branch
    %11392 = sbr.rel (0) target = $region33
  $region32: #{s2vt_forward_train.3} parent=0 // pred_region
    _
  $region33: #{s2vt_forward_train.3} parent=0 // pred_fallthru
    _

</llo_original>
